<compile_context>
chip_gen: v7x
topology: tpu7x:2x2x1
jax: 0.10.0
libtpu: 0.0.40
codegen_flags: <defaults>
</compile_context>

<pallas_src>
import math
import jax
import jax.numpy as jnp
from jax.experimental import pallas as pl
from jax.experimental.pallas import tpu as pltpu


def _make_kernel(d_model, nhead, dim_ff):
    D = d_model
    hd = D // nhead
    f32 = jnp.float32
    bf16 = jnp.bfloat16

    def layer_norm(x, w, b):
        mu = jnp.mean(x, axis=-1, keepdims=True)
        xc = x - mu
        var = jnp.mean(xc * xc, axis=-1, keepdims=True)
        return xc * jax.lax.rsqrt(var + 1e-5) * w + b

    def softmax_rows(s):
        m = jnp.max(s, axis=-1, keepdims=True)
        p = jnp.exp(s - m)
        denom = jnp.sum(p, axis=-1, keepdims=True)
        # reciprocal goes to the EUP slot (free next to exp); rows sum to ~1.
        return p * pl.reciprocal(denom, approx=True)

    def mha(ctx_ref, Q, K, V, wo_ref, bo):
        # Q: (T, D) f32 (softmax scale already folded into the Q projection),
        # K/V: (N, D) f32, wo_ref: (D, D) bf16 (pre-transposed), bo: (D,) f32.
        Qb = Q.astype(bf16)
        Kb = K.astype(bf16)
        Vb = V.astype(bf16)
        # TODO(synk): for nhead >= 8 turn this static unroll into a
        # lax.fori_loop over heads with pl.ds lane slices (there is no carried
        # accumulator any more -- ctx goes straight to the scratch ref); kept
        # unrolled here because dynamic lane offsets at hd < 128 have a less
        # predictable Mosaic lowering at these demo shapes.
        for h in range(nhead):
            sl = slice(h * hd, (h + 1) * hd)
            # QK^T via contraction on the head dim (no explicit transpose).
            s = jax.lax.dot_general(
                Qb[:, sl], Kb[:, sl],
                dimension_numbers=(((1,), (1,)), ((), ())),
                preferred_element_type=f32)
            p = softmax_rows(s).astype(bf16)
            # Per-head context goes to its lane slice of the bf16 scratch
            # (heads are lane-contiguous -> plain sliced store).
            ctx_ref[:, sl] = jnp.dot(
                p, Vb[:, sl], preferred_element_type=f32).astype(bf16)
        # One full-depth (T, D) x (D, D) output projection on the MXU.
        return jnp.dot(ctx_ref[...], wo_ref[...],
                       preferred_element_type=f32) + bo

    def kernel(tgt_ref, mem_ref, qpos_ref, pos_ref,
               sa_wqk_ref, sa_bqk_ref, sa_wv_ref, sa_bv_ref, sa_wo_ref, sa_bo_ref,
               ca_wq_ref, ca_bq_ref, ca_wk_ref, ca_bk_ref, ca_wv_ref, ca_bv_ref,
               ca_wo_ref, ca_bo_ref,
               l1w_ref, l1b_ref, l2w_ref, l2b_ref,
               n1w_ref, n1b_ref, n2w_ref, n2b_ref, n3w_ref, n3b_ref,
               out_ref, ctx_ref):
        tgt = tgt_ref[0].astype(f32)      # (T, D)
        mem = mem_ref[0].astype(f32)      # (S, D)
        qpos = qpos_ref[0].astype(f32)    # (T, D)
        pos = pos_ref[0].astype(f32)      # (S, D)

        # ---- self-attention: q = k = tgt + query_pos, v = tgt -----------------
        q = tgt + qpos
        # Fused Q/K projection: one (T, D) x (D, 2D) bf16 matmul, f32 accum.
        # (1/sqrt(hd) is folded into the Q half of the weight/bias host-side.)
        qk = jnp.dot(q.astype(bf16), sa_wqk_ref[...],
                     preferred_element_type=f32) + sa_bqk_ref[0]
        v = jnp.dot(tgt.astype(bf16), sa_wv_ref[...],
                    preferred_element_type=f32) + sa_bv_ref[0]
        attn = mha(ctx_ref, qk[:, :D], qk[:, D:], v, sa_wo_ref, sa_bo_ref[0])
        tgt = layer_norm(tgt + attn, n1w_ref[0], n1b_ref[0])   # dropout1 == id

        # ---- cross-attention: q = tgt + qpos, k = mem + pos, v = mem ----------
        qc = (tgt + qpos).astype(bf16)
        kc = (mem + pos).astype(bf16)
        vc = mem.astype(bf16)
        Q = jnp.dot(qc, ca_wq_ref[...], preferred_element_type=f32) + ca_bq_ref[0]
        K = jnp.dot(kc, ca_wk_ref[...], preferred_element_type=f32) + ca_bk_ref[0]
        V = jnp.dot(vc, ca_wv_ref[...], preferred_element_type=f32) + ca_bv_ref[0]
        # TODO(synk): for DETR-scale memory lengths, tile S flash-attention
        # style (online softmax over K/V blocks DMA'd from HBM) instead of
        # keeping full (S, D) memory/pos in VMEM and materialising per-head
        # (T, S) scores.
        attn = mha(ctx_ref, Q, K, V, ca_wo_ref, ca_bo_ref[0])
        tgt = layer_norm(tgt + attn, n2w_ref[0], n2b_ref[0])   # dropout2 == id

        # ---- feed-forward -------------------------------------------------------
        h = jnp.dot(tgt.astype(bf16), l1w_ref[...],
                    preferred_element_type=f32) + l1b_ref[0]
        h = jnp.maximum(h, 0.0)                                 # ReLU; dropout == id
        y = jnp.dot(h.astype(bf16), l2w_ref[...],
                    preferred_element_type=f32) + l2b_ref[0]
        tgt = layer_norm(tgt + y, n3w_ref[0], n3b_ref[0])       # dropout3 == id

        out_ref[0] = tgt.astype(out_ref.dtype)

    return kernel


def _prepare_weights(params, d_model, nhead):
    """Host-side: pre-transpose / split / bf16-cast all matmul weights so the
    kernel does jnp.dot(x, w) on bf16 MXU inputs with no in-kernel transposes.
    The 1/sqrt(head_dim) softmax scale is folded into the Q projections
    (weight and bias). Biases and LayerNorm params stay f32 (VPU math)."""
    D = d_model
    hd = D // nhead
    scale = 1.0 / math.sqrt(hd)
    bf16, f32 = jnp.bfloat16, jnp.float32
    p = params
    sa_inw, sa_inb = p['sa_inw'], p['sa_inb']
    ca_inw, ca_inb = p['ca_inw'], p['ca_inb']

    # Self-attention: Q and K share the same input (tgt + query_pos) -> fused
    # (D, 2D) projection; softmax scale folded into the Q half.
    sa_wq = jnp.transpose(sa_inw[:D, :]) * scale
    sa_wk = jnp.transpose(sa_inw[D:2 * D, :])
    sa_wqk = jnp.concatenate([sa_wq, sa_wk], axis=1).astype(bf16)       # (D, 2D)
    sa_bqk = jnp.concatenate([sa_inb[:, :D] * scale, sa_inb[:, D:2 * D]],
                             axis=1).astype(f32)                         # (1, 2D)

    return [
        sa_wqk,                                            # sa_wqk (D, 2D)
        sa_bqk,                                            # sa_bqk (1, 2D)
        jnp.transpose(sa_inw[2 * D:, :]).astype(bf16),     # sa_wv  (D, D)
        sa_inb[:, 2 * D:].astype(f32),                     # sa_bv  (1, D)
        jnp.transpose(p['sa_ow']).astype(bf16),            # sa_wo  (D, D)
        p['sa_ob'].astype(f32),                            # sa_bo  (1, D)
        # cross-attention (softmax scale folded into Q weight + bias)
        (jnp.transpose(ca_inw[:D, :]) * scale).astype(bf16),   # ca_wq
        (ca_inb[:, :D] * scale).astype(f32),                    # ca_bq
        jnp.transpose(ca_inw[D:2 * D, :]).astype(bf16),         # ca_wk
        ca_inb[:, D:2 * D].astype(f32),
        jnp.transpose(ca_inw[2 * D:, :]).astype(bf16),          # ca_wv
        ca_inb[:, 2 * D:].astype(f32),
        jnp.transpose(p['ca_ow']).astype(bf16),                 # ca_wo
        p['ca_ob'].astype(f32),
        # feed-forward
        jnp.transpose(p['l1w']).astype(bf16),              # (D, FF)
        p['l1b'].astype(f32),
        jnp.transpose(p['l2w']).astype(bf16),              # (FF, D)
        p['l2b'].astype(f32),
        # layer norms
        p['n1w'].astype(f32), p['n1b'].astype(f32),
        p['n2w'].astype(f32), p['n2b'].astype(f32),
        p['n3w'].astype(f32), p['n3b'].astype(f32),
    ]


def _vmem_limit_bytes():
    """Generation-aware VMEM budget: ~3/4 of physical per-core VMEM
    (~48 MiB on v7x, ~96 MiB on v5e/v6e), capped at 100 MiB."""
    try:
        cap = int(pltpu.get_tpu_info().vmem_capacity_bytes)
    except Exception:  # query unavailable -> conservative, previously-proven value
        cap = 128 * 1024 * 1024
    return min(100 * 1024 * 1024, (cap * 3) // 4)


def _call_pallas(tgt, memory, query_pos, pos, weights, nhead, dim_ff,
                 single_buffer_weights):
    B, T, D = tgt.shape
    S = memory.shape[1]
    kernel = _make_kernel(D, nhead, dim_ff)

    def batch_spec(rows):
        return pl.BlockSpec((1, rows, D), lambda b: (b, 0, 0))

    def weight_spec(a):
        nd = a.ndim
        if single_buffer_weights:
            # Constant index_map across the grid -> nothing to pipeline;
            # single buffering halves the weights' VMEM footprint.
            return pl.BlockSpec(a.shape, lambda b, _nd=nd: (0,) * _nd,
                                pipeline_mode=pl.Buffered(1))
        return pl.BlockSpec(a.shape, lambda b, _nd=nd: (0,) * _nd)

    in_specs = [batch_spec(T), batch_spec(S), batch_spec(T), batch_spec(S)]
    in_specs += [weight_spec(w) for w in weights]

    # Advisory cost estimate for the XLA scheduler.
    attn_self = 2 * T * D * (2 * D) + 2 * T * D * D + 4 * T * T * D + 2 * T * D * D
    attn_cross = 2 * (T + 2 * S) * D * D + 4 * T * S * D + 2 * T * D * D
    ffn = 4 * T * D * dim_ff
    flops = B * (attn_self + attn_cross + ffn)
    transcendentals = B * (nhead * (T * T + T * S) + 6 * T)
    io_bytes = sum(int(a.size) * a.dtype.itemsize
                   for a in (tgt, memory, query_pos, pos, *weights))
    io_bytes += int(tgt.size) * tgt.dtype.itemsize      # output

    # TODO(synk): for large T add a "parallel" row-tile grid axis (>=256 rows
    # on v6e/v7x, >=128 on v5e) with the self-attention K/V projection held in
    # a VMEM scratch, so megacore has work when B is small and activations
    # stay bounded; production D (and hd) should be multiples of 128 to avoid
    # masked partial stores on the output lane axis.
    return pl.pallas_call(
        kernel,
        out_shape=jax.ShapeDtypeStruct((B, T, D), tgt.dtype),
        grid=(B,),
        in_specs=in_specs,
        out_specs=pl.BlockSpec((1, T, D), lambda b: (b, 0, 0)),
        scratch_shapes=[pltpu.VMEM((T, D), jnp.bfloat16)],   # per-head ctx buffer
        compiler_params=pltpu.CompilerParams(
            dimension_semantics=("parallel",),
            vmem_limit_bytes=_vmem_limit_bytes()),
        cost_estimate=pl.CostEstimate(
            flops=int(flops),
            transcendentals=int(transcendentals),
            bytes_accessed=int(io_bytes)),
    )(tgt, memory, query_pos, pos, *weights)


def transformer_decoder_layer(tgt, memory, query_pos, pos, params, nhead):
    D = tgt.shape[-1]
    dim_ff = params['l1w'].shape[0]
    weights = _prepare_weights(params, D, nhead)
    try:
        out = _call_pallas(tgt, memory, query_pos, pos, weights, nhead, dim_ff,
                           single_buffer_weights=True)
        return jax.block_until_ready(out)
    except Exception:
        # pipeline_mode=pl.Buffered(1) not supported by this jax / backend:
        # retry with default (double-buffered) weight BlockSpecs.
        out = _call_pallas(tgt, memory, query_pos, pos, weights, nhead, dim_ff,
                           single_buffer_weights=False)
        return jax.block_until_ready(out)


def reference(tgt, memory, qpos, pos, p, nhead):
    """Pure-JAX f32 reference of forward_post (dropout in eval mode)."""
    def ln(x, w, b):
        mu = x.mean(-1, keepdims=True)
        var = ((x - mu) ** 2).mean(-1, keepdims=True)
        return (x - mu) / jnp.sqrt(var + 1e-5) * w + b

    def mha(q, k, v, inw, inb, ow, ob):
        B, T, D = q.shape
        S = k.shape[1]
        hd = D // nhead
        Q = q @ inw[:D].T + inb[0, :D]
        K = k @ inw[D:2 * D].T + inb[0, D:2 * D]
        V = v @ inw[2 * D:].T + inb[0, 2 * D:]
        Q = Q.reshape(B, T, nhead, hd).transpose(0, 2, 1, 3) / math.sqrt(hd)
        K = K.reshape(B, S, nhead, hd).transpose(0, 2, 1, 3)
        V = V.reshape(B, S, nhead, hd).transpose(0, 2, 1, 3)
        s = Q @ jnp.swapaxes(K, -1, -2)
        a = jax.nn.softmax(s, axis=-1)
        ctx = (a @ V).transpose(0, 2, 1, 3).reshape(B, T, D)
        return ctx @ ow.T + ob[0]

    x = tgt
    x2 = mha(x + qpos, x + qpos, x, p['sa_inw'], p['sa_inb'], p['sa_ow'], p['sa_ob'])
    x = ln(x + x2, p['n1w'][0], p['n1b'][0])
    x2 = mha(x + qpos, memory + pos, memory, p['ca_inw'], p['ca_inb'], p['ca_ow'], p['ca_ob'])
    x = ln(x + x2, p['n2w'][0], p['n2b'][0])
    h = jnp.maximum(x @ p['l1w'].T + p['l1b'][0], 0.0)
    x2 = h @ p['l2w'].T + p['l2b'][0]
    x = ln(x + x2, p['n3w'][0], p['n3b'][0])
    return x


def init_params(key, d_model, nhead, dim_ff):
    ks = jax.random.split(key, 32)
    u = lambda k, shape: jax.random.uniform(k, shape, jnp.float32, -0.1, 0.1)
    return {
        'sa_inw': u(ks[0], (3 * d_model, d_model)),
        'sa_inb': u(ks[1], (1, 3 * d_model)),
        'sa_ow':  u(ks[2], (d_model, d_model)),
        'sa_ob':  u(ks[3], (1, d_model)),
        'ca_inw': u(ks[4], (3 * d_model, d_model)),
        'ca_inb': u(ks[5], (1, 3 * d_model)),
        'ca_ow':  u(ks[6], (d_model, d_model)),
        'ca_ob':  u(ks[7], (1, d_model)),
        'l1w':    u(ks[8], (dim_ff, d_model)),
        'l1b':    u(ks[9], (1, dim_ff)),
        'l2w':    u(ks[10], (d_model, dim_ff)),
        'l2b':    u(ks[11], (1, d_model)),
        'n1w':    jnp.ones((1, d_model), jnp.float32),
        'n1b':    jnp.zeros((1, d_model), jnp.float32),
        'n2w':    jnp.ones((1, d_model), jnp.float32),
        'n2b':    jnp.zeros((1, d_model), jnp.float32),
        'n3w':    jnp.ones((1, d_model), jnp.float32),
        'n3b':    jnp.zeros((1, d_model), jnp.float32),
    }


if __name__ == "__main__":
    B, T, S, D, NHEAD, FF = 2, 8, 8, 32, 4, 64

    key = jax.random.PRNGKey(0)
    k_t, k_m, k_qp, k_p, k_w = jax.random.split(key, 5)
    tgt = jax.random.normal(k_t, (B, T, D), jnp.float32)
    memory = jax.random.normal(k_m, (B, S, D), jnp.float32)
    query_pos = jax.random.normal(k_qp, (B, T, D), jnp.float32)
    pos = jax.random.normal(k_p, (B, S, D), jnp.float32)
    params = init_params(k_w, D, NHEAD, FF)

    out = transformer_decoder_layer(tgt, memory, query_pos, pos, params, NHEAD)
    out = jax.block_until_ready(out)

    ref = reference(tgt, memory, query_pos, pos, params, NHEAD)
    assert out.shape == (B, T, D)
    # Tolerance loosened vs. f32 reference because MXU inputs are bf16
    # (f32 accumulation, approx reciprocal in softmax); errors propagate
    # through three residual+LN blocks.
    assert jnp.allclose(out, ref, atol=3e-2, rtol=3e-2), "mismatch vs reference"

    print("KERNEL_OK")
</pallas_src>

<mosaic_0001>
module attributes {stable_mosaic.version = 11 : i64} {
  func.func @kernel(%arg0: i32, %arg1: memref<1x8x32xf32, #tpu.memory_space<vmem>>, %arg2: memref<1x8x32xf32, #tpu.memory_space<vmem>>, %arg3: memref<1x8x32xf32, #tpu.memory_space<vmem>>, %arg4: memref<1x8x32xf32, #tpu.memory_space<vmem>>, %arg5: memref<32x64xbf16, #tpu.memory_space<vmem>>, %arg6: memref<1x64xf32, #tpu.memory_space<vmem>>, %arg7: memref<32x32xbf16, #tpu.memory_space<vmem>>, %arg8: memref<1x32xf32, #tpu.memory_space<vmem>>, %arg9: memref<32x32xbf16, #tpu.memory_space<vmem>>, %arg10: memref<1x32xf32, #tpu.memory_space<vmem>>, %arg11: memref<32x32xbf16, #tpu.memory_space<vmem>>, %arg12: memref<1x32xf32, #tpu.memory_space<vmem>>, %arg13: memref<32x32xbf16, #tpu.memory_space<vmem>>, %arg14: memref<1x32xf32, #tpu.memory_space<vmem>>, %arg15: memref<32x32xbf16, #tpu.memory_space<vmem>>, %arg16: memref<1x32xf32, #tpu.memory_space<vmem>>, %arg17: memref<32x32xbf16, #tpu.memory_space<vmem>>, %arg18: memref<1x32xf32, #tpu.memory_space<vmem>>, %arg19: memref<32x64xbf16, #tpu.memory_space<vmem>>, %arg20: memref<1x64xf32, #tpu.memory_space<vmem>>, %arg21: memref<64x32xbf16, #tpu.memory_space<vmem>>, %arg22: memref<1x32xf32, #tpu.memory_space<vmem>>, %arg23: memref<1x32xf32, #tpu.memory_space<vmem>>, %arg24: memref<1x32xf32, #tpu.memory_space<vmem>>, %arg25: memref<1x32xf32, #tpu.memory_space<vmem>>, %arg26: memref<1x32xf32, #tpu.memory_space<vmem>>, %arg27: memref<1x32xf32, #tpu.memory_space<vmem>>, %arg28: memref<1x32xf32, #tpu.memory_space<vmem>>, %arg29: memref<1x8x32xf32, #tpu.memory_space<vmem>>, %arg30: memref<8x32xbf16, #tpu.memory_space<vmem>>) attributes {dimension_semantics = [#tpu.dimension_semantics<parallel>], iteration_bounds = array<i64: 2>, scalar_prefetch = 0 : i64, scratch_operands = 1 : i64, tpu.core_type = #tpu.core_type<tc>, window_params = [{transform_indices = @transform_0, window_bounds = array<i64: 1, 8, 32>}, {transform_indices = @transform_1, window_bounds = array<i64: 1, 8, 32>}, {transform_indices = @transform_2, window_bounds = array<i64: 1, 8, 32>}, {transform_indices = @transform_3, window_bounds = array<i64: 1, 8, 32>}, {pipeline_mode = #tpu.pipeline_mode<synchronous>, transform_indices = @transform_4, window_bounds = array<i64: 32, 64>}, {pipeline_mode = #tpu.pipeline_mode<synchronous>, transform_indices = @transform_5, window_bounds = array<i64: 1, 64>}, {pipeline_mode = #tpu.pipeline_mode<synchronous>, transform_indices = @transform_6, window_bounds = array<i64: 32, 32>}, {pipeline_mode = #tpu.pipeline_mode<synchronous>, transform_indices = @transform_7, window_bounds = array<i64: 1, 32>}, {pipeline_mode = #tpu.pipeline_mode<synchronous>, transform_indices = @transform_8, window_bounds = array<i64: 32, 32>}, {pipeline_mode = #tpu.pipeline_mode<synchronous>, transform_indices = @transform_9, window_bounds = array<i64: 1, 32>}, {pipeline_mode = #tpu.pipeline_mode<synchronous>, transform_indices = @transform_10, window_bounds = array<i64: 32, 32>}, {pipeline_mode = #tpu.pipeline_mode<synchronous>, transform_indices = @transform_11, window_bounds = array<i64: 1, 32>}, {pipeline_mode = #tpu.pipeline_mode<synchronous>, transform_indices = @transform_12, window_bounds = array<i64: 32, 32>}, {pipeline_mode = #tpu.pipeline_mode<synchronous>, transform_indices = @transform_13, window_bounds = array<i64: 1, 32>}, {pipeline_mode = #tpu.pipeline_mode<synchronous>, transform_indices = @transform_14, window_bounds = array<i64: 32, 32>}, {pipeline_mode = #tpu.pipeline_mode<synchronous>, transform_indices = @transform_15, window_bounds = array<i64: 1, 32>}, {pipeline_mode = #tpu.pipeline_mode<synchronous>, transform_indices = @transform_16, window_bounds = array<i64: 32, 32>}, {pipeline_mode = #tpu.pipeline_mode<synchronous>, transform_indices = @transform_17, window_bounds = array<i64: 1, 32>}, {pipeline_mode = #tpu.pipeline_mode<synchronous>, transform_indices = @transform_18, window_bounds = array<i64: 32, 64>}, {pipeline_mode = #tpu.pipeline_mode<synchronous>, transform_indices = @transform_19, window_bounds = array<i64: 1, 64>}, {pipeline_mode = #tpu.pipeline_mode<synchronous>, transform_indices = @transform_20, window_bounds = array<i64: 64, 32>}, {pipeline_mode = #tpu.pipeline_mode<synchronous>, transform_indices = @transform_21, window_bounds = array<i64: 1, 32>}, {pipeline_mode = #tpu.pipeline_mode<synchronous>, transform_indices = @transform_22, window_bounds = array<i64: 1, 32>}, {pipeline_mode = #tpu.pipeline_mode<synchronous>, transform_indices = @transform_23, window_bounds = array<i64: 1, 32>}, {pipeline_mode = #tpu.pipeline_mode<synchronous>, transform_indices = @transform_24, window_bounds = array<i64: 1, 32>}, {pipeline_mode = #tpu.pipeline_mode<synchronous>, transform_indices = @transform_25, window_bounds = array<i64: 1, 32>}, {pipeline_mode = #tpu.pipeline_mode<synchronous>, transform_indices = @transform_26, window_bounds = array<i64: 1, 32>}, {pipeline_mode = #tpu.pipeline_mode<synchronous>, transform_indices = @transform_27, window_bounds = array<i64: 1, 32>}, {transform_indices = @transform_28, window_bounds = array<i64: 1, 8, 32>}]} {
    %c0 = arith.constant 0 : index
    %c0_0 = arith.constant 0 : index
    %c0_1 = arith.constant 0 : index
    %0 = vector.load %arg1[%c0, %c0_0, %c0_1] : memref<1x8x32xf32, #tpu.memory_space<vmem>>, vector<1x8x32xf32>
    %1 = vector.shape_cast %0 : vector<1x8x32xf32> to vector<8x32xf32>
    %c0_2 = arith.constant 0 : index
    %c0_3 = arith.constant 0 : index
    %c0_4 = arith.constant 0 : index
    %2 = vector.load %arg2[%c0_2, %c0_3, %c0_4] : memref<1x8x32xf32, #tpu.memory_space<vmem>>, vector<1x8x32xf32>
    %3 = vector.shape_cast %2 : vector<1x8x32xf32> to vector<8x32xf32>
    %c0_5 = arith.constant 0 : index
    %c0_6 = arith.constant 0 : index
    %c0_7 = arith.constant 0 : index
    %4 = vector.load %arg3[%c0_5, %c0_6, %c0_7] : memref<1x8x32xf32, #tpu.memory_space<vmem>>, vector<1x8x32xf32>
    %5 = vector.shape_cast %4 : vector<1x8x32xf32> to vector<8x32xf32>
    %c0_8 = arith.constant 0 : index
    %c0_9 = arith.constant 0 : index
    %c0_10 = arith.constant 0 : index
    %6 = vector.load %arg4[%c0_8, %c0_9, %c0_10] : memref<1x8x32xf32, #tpu.memory_space<vmem>>, vector<1x8x32xf32>
    %7 = vector.shape_cast %6 : vector<1x8x32xf32> to vector<8x32xf32>
    %8 = arith.addf %1, %5 : vector<8x32xf32>
    %9 = arith.truncf %8 : vector<8x32xf32> to vector<8x32xbf16>
    %c0_11 = arith.constant 0 : index
    %c0_12 = arith.constant 0 : index
    %10 = vector.load %arg5[%c0_11, %c0_12] : memref<32x64xbf16, #tpu.memory_space<vmem>>, vector<32x64xbf16>
    %cst = arith.constant dense<0.000000e+00> : vector<8x64xf32>
    %11 = tpu.matmul %9, %10, %cst {dimension_numbers = #tpu.dot_dimension_numbers<[1], [0], [0], [1], [0, 0, 1, 1], [], []>} : vector<8x32xbf16>, vector<32x64xbf16>, vector<8x64xf32> -> vector<8x64xf32>
    %c0_13 = arith.constant 0 : index
    %c0_14 = arith.constant 0 : index
    %12 = vector.load %arg6[%c0_13, %c0_14] : memref<1x64xf32, #tpu.memory_space<vmem>>, vector<1x64xf32>
    %13 = vector.shape_cast %12 : vector<1x64xf32> to vector<64xf32>
    %14 = vector.shape_cast %13 : vector<64xf32> to vector<1x64xf32>
    %15 = vector.broadcast %14 : vector<1x64xf32> to vector<8x64xf32>
    %16 = arith.addf %11, %15 : vector<8x64xf32>
    %17 = arith.truncf %1 : vector<8x32xf32> to vector<8x32xbf16>
    %c0_15 = arith.constant 0 : index
    %c0_16 = arith.constant 0 : index
    %18 = vector.load %arg7[%c0_15, %c0_16] : memref<32x32xbf16, #tpu.memory_space<vmem>>, vector<32x32xbf16>
    %cst_17 = arith.constant dense<0.000000e+00> : vector<8x32xf32>
    %19 = tpu.matmul %17, %18, %cst_17 {dimension_numbers = #tpu.dot_dimension_numbers<[1], [0], [0], [1], [0, 0, 1, 1], [], []>} : vector<8x32xbf16>, vector<32x32xbf16>, vector<8x32xf32> -> vector<8x32xf32>
    %c0_18 = arith.constant 0 : index
    %c0_19 = arith.constant 0 : index
    %20 = vector.load %arg8[%c0_18, %c0_19] : memref<1x32xf32, #tpu.memory_space<vmem>>, vector<1x32xf32>
    %21 = vector.shape_cast %20 : vector<1x32xf32> to vector<32xf32>
    %22 = vector.shape_cast %21 : vector<32xf32> to vector<1x32xf32>
    %23 = vector.broadcast %22 : vector<1x32xf32> to vector<8x32xf32>
    %24 = arith.addf %19, %23 : vector<8x32xf32>
    %25 = vector.extract_strided_slice %16 {offsets = [0, 0], sizes = [8, 32], strides = [1, 1]} : vector<8x64xf32> to vector<8x32xf32>
    %26 = vector.extract_strided_slice %16 {offsets = [0, 32], sizes = [8, 32], strides = [1, 1]} : vector<8x64xf32> to vector<8x32xf32>
    %c0_20 = arith.constant 0 : index
    %c0_21 = arith.constant 0 : index
    %27 = vector.load %arg10[%c0_20, %c0_21] : memref<1x32xf32, #tpu.memory_space<vmem>>, vector<1x32xf32>
    %28 = vector.shape_cast %27 : vector<1x32xf32> to vector<32xf32>
    %29 = arith.truncf %25 : vector<8x32xf32> to vector<8x32xbf16>
    %30 = arith.truncf %26 : vector<8x32xf32> to vector<8x32xbf16>
    %31 = arith.truncf %24 : vector<8x32xf32> to vector<8x32xbf16>
    %32 = vector.extract_strided_slice %29 {offsets = [0, 0], sizes = [8, 8], strides = [1, 1]} : vector<8x32xbf16> to vector<8x8xbf16>
    %33 = vector.extract_strided_slice %30 {offsets = [0, 0], sizes = [8, 8], strides = [1, 1]} : vector<8x32xbf16> to vector<8x8xbf16>
    %cst_22 = arith.constant dense<0.000000e+00> : vector<8x8xf32>
    %34 = tpu.matmul %32, %33, %cst_22 {dimension_numbers = #tpu.dot_dimension_numbers<[1], [1], [0], [0], [0, 0, 1, 0], [], []>} : vector<8x8xbf16>, vector<8x8xbf16>, vector<8x8xf32> -> vector<8x8xf32>
    %cst_23 = arith.constant dense<0xFF800000> : vector<8xf32>
    %35 = vector.multi_reduction <maximumf>, %34, %cst_23 [1] : vector<8x8xf32> to vector<8xf32>
    %36 = vector.shape_cast %35 : vector<8xf32> to vector<8x1xf32>
    %37 = vector.broadcast %36 : vector<8x1xf32> to vector<8x8xf32>
    %38 = arith.subf %34, %37 : vector<8x8xf32>
    %39 = math.exp %38 : vector<8x8xf32>
    %cst_24 = arith.constant dense<0.000000e+00> : vector<8xf32>
    %40 = vector.multi_reduction <add>, %39, %cst_24 [1] : vector<8x8xf32> to vector<8xf32>
    %41 = vector.shape_cast %40 : vector<8xf32> to vector<8x1xf32>
    %42 = tpu.reciprocal %41 {approx = true} : vector<8x1xf32> -> vector<8x1xf32>
    %43 = vector.broadcast %42 : vector<8x1xf32> to vector<8x8xf32>
    %44 = arith.mulf %39, %43 : vector<8x8xf32>
    %45 = arith.truncf %44 : vector<8x8xf32> to vector<8x8xbf16>
    %46 = vector.extract_strided_slice %31 {offsets = [0, 0], sizes = [8, 8], strides = [1, 1]} : vector<8x32xbf16> to vector<8x8xbf16>
    %cst_25 = arith.constant dense<0.000000e+00> : vector<8x8xf32>
    %47 = tpu.matmul %45, %46, %cst_25 {dimension_numbers = #tpu.dot_dimension_numbers<[1], [0], [0], [1], [0, 0, 1, 1], [], []>} : vector<8x8xbf16>, vector<8x8xbf16>, vector<8x8xf32> -> vector<8x8xf32>
    %48 = arith.truncf %47 : vector<8x8xf32> to vector<8x8xbf16>
    %c0_26 = arith.constant 0 : index
    %c0_27 = arith.constant 0 : index
    %49 = vector.load %arg30[%c0_26, %c0_27] : memref<8x32xbf16, #tpu.memory_space<vmem>>, vector<8x8xbf16>
    tpu.vector_store %arg30[%c0_26, %c0_27], %48 {strides = array<i32>} : memref<8x32xbf16, #tpu.memory_space<vmem>>, vector<8x8xbf16>,
    %50 = vector.extract_strided_slice %29 {offsets = [0, 8], sizes = [8, 8], strides = [1, 1]} : vector<8x32xbf16> to vector<8x8xbf16>
    %51 = vector.extract_strided_slice %30 {offsets = [0, 8], sizes = [8, 8], strides = [1, 1]} : vector<8x32xbf16> to vector<8x8xbf16>
    %cst_28 = arith.constant dense<0.000000e+00> : vector<8x8xf32>
    %52 = tpu.matmul %50, %51, %cst_28 {dimension_numbers = #tpu.dot_dimension_numbers<[1], [1], [0], [0], [0, 0, 1, 0], [], []>} : vector<8x8xbf16>, vector<8x8xbf16>, vector<8x8xf32> -> vector<8x8xf32>
    %cst_29 = arith.constant dense<0xFF800000> : vector<8xf32>
    %53 = vector.multi_reduction <maximumf>, %52, %cst_29 [1] : vector<8x8xf32> to vector<8xf32>
    %54 = vector.shape_cast %53 : vector<8xf32> to vector<8x1xf32>
    %55 = vector.broadcast %54 : vector<8x1xf32> to vector<8x8xf32>
    %56 = arith.subf %52, %55 : vector<8x8xf32>
    %57 = math.exp %56 : vector<8x8xf32>
    %cst_30 = arith.constant dense<0.000000e+00> : vector<8xf32>
    %58 = vector.multi_reduction <add>, %57, %cst_30 [1] : vector<8x8xf32> to vector<8xf32>
    %59 = vector.shape_cast %58 : vector<8xf32> to vector<8x1xf32>
    %60 = tpu.reciprocal %59 {approx = true} : vector<8x1xf32> -> vector<8x1xf32>
    %61 = vector.broadcast %60 : vector<8x1xf32> to vector<8x8xf32>
    %62 = arith.mulf %57, %61 : vector<8x8xf32>
    %63 = arith.truncf %62 : vector<8x8xf32> to vector<8x8xbf16>
    %64 = vector.extract_strided_slice %31 {offsets = [0, 8], sizes = [8, 8], strides = [1, 1]} : vector<8x32xbf16> to vector<8x8xbf16>
    %cst_31 = arith.constant dense<0.000000e+00> : vector<8x8xf32>
    %65 = tpu.matmul %63, %64, %cst_31 {dimension_numbers = #tpu.dot_dimension_numbers<[1], [0], [0], [1], [0, 0, 1, 1], [], []>} : vector<8x8xbf16>, vector<8x8xbf16>, vector<8x8xf32> -> vector<8x8xf32>
    %66 = arith.truncf %65 : vector<8x8xf32> to vector<8x8xbf16>
    %c0_32 = arith.constant 0 : index
    %c8 = arith.constant 8 : index
    %67 = vector.load %arg30[%c0_32, %c8] : memref<8x32xbf16, #tpu.memory_space<vmem>>, vector<8x8xbf16>
    tpu.vector_store %arg30[%c0_32, %c8], %66 {strides = array<i32>} : memref<8x32xbf16, #tpu.memory_space<vmem>>, vector<8x8xbf16>,
    %68 = vector.extract_strided_slice %29 {offsets = [0, 16], sizes = [8, 8], strides = [1, 1]} : vector<8x32xbf16> to vector<8x8xbf16>
    %69 = vector.extract_strided_slice %30 {offsets = [0, 16], sizes = [8, 8], strides = [1, 1]} : vector<8x32xbf16> to vector<8x8xbf16>
    %cst_33 = arith.constant dense<0.000000e+00> : vector<8x8xf32>
    %70 = tpu.matmul %68, %69, %cst_33 {dimension_numbers = #tpu.dot_dimension_numbers<[1], [1], [0], [0], [0, 0, 1, 0], [], []>} : vector<8x8xbf16>, vector<8x8xbf16>, vector<8x8xf32> -> vector<8x8xf32>
    %cst_34 = arith.constant dense<0xFF800000> : vector<8xf32>
    %71 = vector.multi_reduction <maximumf>, %70, %cst_34 [1] : vector<8x8xf32> to vector<8xf32>
    %72 = vector.shape_cast %71 : vector<8xf32> to vector<8x1xf32>
    %73 = vector.broadcast %72 : vector<8x1xf32> to vector<8x8xf32>
    %74 = arith.subf %70, %73 : vector<8x8xf32>
    %75 = math.exp %74 : vector<8x8xf32>
    %cst_35 = arith.constant dense<0.000000e+00> : vector<8xf32>
    %76 = vector.multi_reduction <add>, %75, %cst_35 [1] : vector<8x8xf32> to vector<8xf32>
    %77 = vector.shape_cast %76 : vector<8xf32> to vector<8x1xf32>
    %78 = tpu.reciprocal %77 {approx = true} : vector<8x1xf32> -> vector<8x1xf32>
    %79 = vector.broadcast %78 : vector<8x1xf32> to vector<8x8xf32>
    %80 = arith.mulf %75, %79 : vector<8x8xf32>
    %81 = arith.truncf %80 : vector<8x8xf32> to vector<8x8xbf16>
    %82 = vector.extract_strided_slice %31 {offsets = [0, 16], sizes = [8, 8], strides = [1, 1]} : vector<8x32xbf16> to vector<8x8xbf16>
    %cst_36 = arith.constant dense<0.000000e+00> : vector<8x8xf32>
    %83 = tpu.matmul %81, %82, %cst_36 {dimension_numbers = #tpu.dot_dimension_numbers<[1], [0], [0], [1], [0, 0, 1, 1], [], []>} : vector<8x8xbf16>, vector<8x8xbf16>, vector<8x8xf32> -> vector<8x8xf32>
    %84 = arith.truncf %83 : vector<8x8xf32> to vector<8x8xbf16>
    %c0_37 = arith.constant 0 : index
    %c16 = arith.constant 16 : index
    %85 = vector.load %arg30[%c0_37, %c16] : memref<8x32xbf16, #tpu.memory_space<vmem>>, vector<8x8xbf16>
    tpu.vector_store %arg30[%c0_37, %c16], %84 {strides = array<i32>} : memref<8x32xbf16, #tpu.memory_space<vmem>>, vector<8x8xbf16>,
    %86 = vector.extract_strided_slice %29 {offsets = [0, 24], sizes = [8, 8], strides = [1, 1]} : vector<8x32xbf16> to vector<8x8xbf16>
    %87 = vector.extract_strided_slice %30 {offsets = [0, 24], sizes = [8, 8], strides = [1, 1]} : vector<8x32xbf16> to vector<8x8xbf16>
    %cst_38 = arith.constant dense<0.000000e+00> : vector<8x8xf32>
    %88 = tpu.matmul %86, %87, %cst_38 {dimension_numbers = #tpu.dot_dimension_numbers<[1], [1], [0], [0], [0, 0, 1, 0], [], []>} : vector<8x8xbf16>, vector<8x8xbf16>, vector<8x8xf32> -> vector<8x8xf32>
    %cst_39 = arith.constant dense<0xFF800000> : vector<8xf32>
    %89 = vector.multi_reduction <maximumf>, %88, %cst_39 [1] : vector<8x8xf32> to vector<8xf32>
    %90 = vector.shape_cast %89 : vector<8xf32> to vector<8x1xf32>
    %91 = vector.broadcast %90 : vector<8x1xf32> to vector<8x8xf32>
    %92 = arith.subf %88, %91 : vector<8x8xf32>
    %93 = math.exp %92 : vector<8x8xf32>
    %cst_40 = arith.constant dense<0.000000e+00> : vector<8xf32>
    %94 = vector.multi_reduction <add>, %93, %cst_40 [1] : vector<8x8xf32> to vector<8xf32>
    %95 = vector.shape_cast %94 : vector<8xf32> to vector<8x1xf32>
    %96 = tpu.reciprocal %95 {approx = true} : vector<8x1xf32> -> vector<8x1xf32>
    %97 = vector.broadcast %96 : vector<8x1xf32> to vector<8x8xf32>
    %98 = arith.mulf %93, %97 : vector<8x8xf32>
    %99 = arith.truncf %98 : vector<8x8xf32> to vector<8x8xbf16>
    %100 = vector.extract_strided_slice %31 {offsets = [0, 24], sizes = [8, 8], strides = [1, 1]} : vector<8x32xbf16> to vector<8x8xbf16>
    %cst_41 = arith.constant dense<0.000000e+00> : vector<8x8xf32>
    %101 = tpu.matmul %99, %100, %cst_41 {dimension_numbers = #tpu.dot_dimension_numbers<[1], [0], [0], [1], [0, 0, 1, 1], [], []>} : vector<8x8xbf16>, vector<8x8xbf16>, vector<8x8xf32> -> vector<8x8xf32>
    %102 = arith.truncf %101 : vector<8x8xf32> to vector<8x8xbf16>
    %c0_42 = arith.constant 0 : index
    %c24 = arith.constant 24 : index
    %103 = vector.load %arg30[%c0_42, %c24] : memref<8x32xbf16, #tpu.memory_space<vmem>>, vector<8x8xbf16>
    tpu.vector_store %arg30[%c0_42, %c24], %102 {strides = array<i32>} : memref<8x32xbf16, #tpu.memory_space<vmem>>, vector<8x8xbf16>,
    %c0_43 = arith.constant 0 : index
    %c0_44 = arith.constant 0 : index
    %104 = vector.load %arg30[%c0_43, %c0_44] : memref<8x32xbf16, #tpu.memory_space<vmem>>, vector<8x32xbf16>
    %c0_45 = arith.constant 0 : index
    %c0_46 = arith.constant 0 : index
    %105 = vector.load %arg9[%c0_45, %c0_46] : memref<32x32xbf16, #tpu.memory_space<vmem>>, vector<32x32xbf16>
    %cst_47 = arith.constant dense<0.000000e+00> : vector<8x32xf32>
    %106 = tpu.matmul %104, %105, %cst_47 {dimension_numbers = #tpu.dot_dimension_numbers<[1], [0], [0], [1], [0, 0, 1, 1], [], []>} : vector<8x32xbf16>, vector<32x32xbf16>, vector<8x32xf32> -> vector<8x32xf32>
    %107 = vector.shape_cast %28 : vector<32xf32> to vector<1x32xf32>
    %108 = vector.broadcast %107 : vector<1x32xf32> to vector<8x32xf32>
    %109 = arith.addf %106, %108 : vector<8x32xf32>
    %110 = arith.addf %1, %109 : vector<8x32xf32>
    %c0_48 = arith.constant 0 : index
    %c0_49 = arith.constant 0 : index
    %111 = vector.load %arg23[%c0_48, %c0_49] : memref<1x32xf32, #tpu.memory_space<vmem>>, vector<1x32xf32>
    %112 = vector.shape_cast %111 : vector<1x32xf32> to vector<32xf32>
    %c0_50 = arith.constant 0 : index
    %c0_51 = arith.constant 0 : index
    %113 = vector.load %arg24[%c0_50, %c0_51] : memref<1x32xf32, #tpu.memory_space<vmem>>, vector<1x32xf32>
    %114 = vector.shape_cast %113 : vector<1x32xf32> to vector<32xf32>
    %cst_52 = arith.constant dense<0.000000e+00> : vector<8xf32>
    %115 = vector.multi_reduction <add>, %110, %cst_52 [1] : vector<8x32xf32> to vector<8xf32>
    %116 = vector.shape_cast %115 : vector<8xf32> to vector<8x1xf32>
    %cst_53 = arith.constant 3.200000e+01 : f32
    %117 = vector.broadcast %cst_53 : f32 to vector<8x1xf32>
    %118 = arith.divf %116, %117 : vector<8x1xf32>
    %119 = vector.broadcast %118 : vector<8x1xf32> to vector<8x32xf32>
    %120 = arith.subf %110, %119 : vector<8x32xf32>
    %121 = arith.mulf %120, %120 : vector<8x32xf32>
    %cst_54 = arith.constant dense<0.000000e+00> : vector<8xf32>
    %122 = vector.multi_reduction <add>, %121, %cst_54 [1] : vector<8x32xf32> to vector<8xf32>
    %123 = vector.shape_cast %122 : vector<8xf32> to vector<8x1xf32>
    %cst_55 = arith.constant 3.200000e+01 : f32
    %124 = vector.broadcast %cst_55 : f32 to vector<8x1xf32>
    %125 = arith.divf %123, %124 : vector<8x1xf32>
    %cst_56 = arith.constant 9.99999974E-6 : f32
    %126 = vector.broadcast %cst_56 : f32 to vector<8x1xf32>
    %127 = arith.addf %125, %126 : vector<8x1xf32>
    %128 = math.rsqrt %127 : vector<8x1xf32>
    %129 = vector.broadcast %128 : vector<8x1xf32> to vector<8x32xf32>
    %130 = arith.mulf %120, %129 : vector<8x32xf32>
    %131 = vector.shape_cast %112 : vector<32xf32> to vector<1x32xf32>
    %132 = vector.broadcast %131 : vector<1x32xf32> to vector<8x32xf32>
    %133 = arith.mulf %130, %132 : vector<8x32xf32>
    %134 = vector.shape_cast %114 : vector<32xf32> to vector<1x32xf32>
    %135 = vector.broadcast %134 : vector<1x32xf32> to vector<8x32xf32>
    %136 = arith.addf %133, %135 : vector<8x32xf32>
    %137 = arith.addf %136, %5 : vector<8x32xf32>
    %138 = arith.truncf %137 : vector<8x32xf32> to vector<8x32xbf16>
    %139 = arith.addf %3, %7 : vector<8x32xf32>
    %140 = arith.truncf %139 : vector<8x32xf32> to vector<8x32xbf16>
    %141 = arith.truncf %3 : vector<8x32xf32> to vector<8x32xbf16>
    %c0_57 = arith.constant 0 : index
    %c0_58 = arith.constant 0 : index
    %142 = vector.load %arg11[%c0_57, %c0_58] : memref<32x32xbf16, #tpu.memory_space<vmem>>, vector<32x32xbf16>
    %cst_59 = arith.constant dense<0.000000e+00> : vector<8x32xf32>
    %143 = tpu.matmul %138, %142, %cst_59 {dimension_numbers = #tpu.dot_dimension_numbers<[1], [0], [0], [1], [0, 0, 1, 1], [], []>} : vector<8x32xbf16>, vector<32x32xbf16>, vector<8x32xf32> -> vector<8x32xf32>
    %c0_60 = arith.constant 0 : index
    %c0_61 = arith.constant 0 : index
    %144 = vector.load %arg12[%c0_60, %c0_61] : memref<1x32xf32, #tpu.memory_space<vmem>>, vector<1x32xf32>
    %145 = vector.shape_cast %144 : vector<1x32xf32> to vector<32xf32>
    %146 = vector.shape_cast %145 : vector<32xf32> to vector<1x32xf32>
    %147 = vector.broadcast %146 : vector<1x32xf32> to vector<8x32xf32>
    %148 = arith.addf %143, %147 : vector<8x32xf32>
    %c0_62 = arith.constant 0 : index
    %c0_63 = arith.constant 0 : index
    %149 = vector.load %arg13[%c0_62, %c0_63] : memref<32x32xbf16, #tpu.memory_space<vmem>>, vector<32x32xbf16>
    %cst_64 = arith.constant dense<0.000000e+00> : vector<8x32xf32>
    %150 = tpu.matmul %140, %149, %cst_64 {dimension_numbers = #tpu.dot_dimension_numbers<[1], [0], [0], [1], [0, 0, 1, 1], [], []>} : vector<8x32xbf16>, vector<32x32xbf16>, vector<8x32xf32> -> vector<8x32xf32>
    %c0_65 = arith.constant 0 : index
    %c0_66 = arith.constant 0 : index
    %151 = vector.load %arg14[%c0_65, %c0_66] : memref<1x32xf32, #tpu.memory_space<vmem>>, vector<1x32xf32>
    %152 = vector.shape_cast %151 : vector<1x32xf32> to vector<32xf32>
    %153 = vector.shape_cast %152 : vector<32xf32> to vector<1x32xf32>
    %154 = vector.broadcast %153 : vector<1x32xf32> to vector<8x32xf32>
    %155 = arith.addf %150, %154 : vector<8x32xf32>
    %c0_67 = arith.constant 0 : index
    %c0_68 = arith.constant 0 : index
    %156 = vector.load %arg15[%c0_67, %c0_68] : memref<32x32xbf16, #tpu.memory_space<vmem>>, vector<32x32xbf16>
    %cst_69 = arith.constant dense<0.000000e+00> : vector<8x32xf32>
    %157 = tpu.matmul %141, %156, %cst_69 {dimension_numbers = #tpu.dot_dimension_numbers<[1], [0], [0], [1], [0, 0, 1, 1], [], []>} : vector<8x32xbf16>, vector<32x32xbf16>, vector<8x32xf32> -> vector<8x32xf32>
    %c0_70 = arith.constant 0 : index
    %c0_71 = arith.constant 0 : index
    %158 = vector.load %arg16[%c0_70, %c0_71] : memref<1x32xf32, #tpu.memory_space<vmem>>, vector<1x32xf32>
    %159 = vector.shape_cast %158 : vector<1x32xf32> to vector<32xf32>
    %160 = vector.shape_cast %159 : vector<32xf32> to vector<1x32xf32>
    %161 = vector.broadcast %160 : vector<1x32xf32> to vector<8x32xf32>
    %162 = arith.addf %157, %161 : vector<8x32xf32>
    %c0_72 = arith.constant 0 : index
    %c0_73 = arith.constant 0 : index
    %163 = vector.load %arg18[%c0_72, %c0_73] : memref<1x32xf32, #tpu.memory_space<vmem>>, vector<1x32xf32>
    %164 = vector.shape_cast %163 : vector<1x32xf32> to vector<32xf32>
    %165 = arith.truncf %148 : vector<8x32xf32> to vector<8x32xbf16>
    %166 = arith.truncf %155 : vector<8x32xf32> to vector<8x32xbf16>
    %167 = arith.truncf %162 : vector<8x32xf32> to vector<8x32xbf16>
    %168 = vector.extract_strided_slice %165 {offsets = [0, 0], sizes = [8, 8], strides = [1, 1]} : vector<8x32xbf16> to vector<8x8xbf16>
    %169 = vector.extract_strided_slice %166 {offsets = [0, 0], sizes = [8, 8], strides = [1, 1]} : vector<8x32xbf16> to vector<8x8xbf16>
    %cst_74 = arith.constant dense<0.000000e+00> : vector<8x8xf32>
    %170 = tpu.matmul %168, %169, %cst_74 {dimension_numbers = #tpu.dot_dimension_numbers<[1], [1], [0], [0], [0, 0, 1, 0], [], []>} : vector<8x8xbf16>, vector<8x8xbf16>, vector<8x8xf32> -> vector<8x8xf32>
    %cst_75 = arith.constant dense<0xFF800000> : vector<8xf32>
    %171 = vector.multi_reduction <maximumf>, %170, %cst_75 [1] : vector<8x8xf32> to vector<8xf32>
    %172 = vector.shape_cast %171 : vector<8xf32> to vector<8x1xf32>
    %173 = vector.broadcast %172 : vector<8x1xf32> to vector<8x8xf32>
    %174 = arith.subf %170, %173 : vector<8x8xf32>
    %175 = math.exp %174 : vector<8x8xf32>
    %cst_76 = arith.constant dense<0.000000e+00> : vector<8xf32>
    %176 = vector.multi_reduction <add>, %175, %cst_76 [1] : vector<8x8xf32> to vector<8xf32>
    %177 = vector.shape_cast %176 : vector<8xf32> to vector<8x1xf32>
    %178 = tpu.reciprocal %177 {approx = true} : vector<8x1xf32> -> vector<8x1xf32>
    %179 = vector.broadcast %178 : vector<8x1xf32> to vector<8x8xf32>
    %180 = arith.mulf %175, %179 : vector<8x8xf32>
    %181 = arith.truncf %180 : vector<8x8xf32> to vector<8x8xbf16>
    %182 = vector.extract_strided_slice %167 {offsets = [0, 0], sizes = [8, 8], strides = [1, 1]} : vector<8x32xbf16> to vector<8x8xbf16>
    %cst_77 = arith.constant dense<0.000000e+00> : vector<8x8xf32>
    %183 = tpu.matmul %181, %182, %cst_77 {dimension_numbers = #tpu.dot_dimension_numbers<[1], [0], [0], [1], [0, 0, 1, 1], [], []>} : vector<8x8xbf16>, vector<8x8xbf16>, vector<8x8xf32> -> vector<8x8xf32>
    %184 = arith.truncf %183 : vector<8x8xf32> to vector<8x8xbf16>
    %c0_78 = arith.constant 0 : index
    %c0_79 = arith.constant 0 : index
    %185 = vector.load %arg30[%c0_78, %c0_79] : memref<8x32xbf16, #tpu.memory_space<vmem>>, vector<8x8xbf16>
    tpu.vector_store %arg30[%c0_78, %c0_79], %184 {strides = array<i32>} : memref<8x32xbf16, #tpu.memory_space<vmem>>, vector<8x8xbf16>,
    %186 = vector.extract_strided_slice %165 {offsets = [0, 8], sizes = [8, 8], strides = [1, 1]} : vector<8x32xbf16> to vector<8x8xbf16>
    %187 = vector.extract_strided_slice %166 {offsets = [0, 8], sizes = [8, 8], strides = [1, 1]} : vector<8x32xbf16> to vector<8x8xbf16>
    %cst_80 = arith.constant dense<0.000000e+00> : vector<8x8xf32>
    %188 = tpu.matmul %186, %187, %cst_80 {dimension_numbers = #tpu.dot_dimension_numbers<[1], [1], [0], [0], [0, 0, 1, 0], [], []>} : vector<8x8xbf16>, vector<8x8xbf16>, vector<8x8xf32> -> vector<8x8xf32>
    %cst_81 = arith.constant dense<0xFF800000> : vector<8xf32>
    %189 = vector.multi_reduction <maximumf>, %188, %cst_81 [1] : vector<8x8xf32> to vector<8xf32>
    %190 = vector.shape_cast %189 : vector<8xf32> to vector<8x1xf32>
    %191 = vector.broadcast %190 : vector<8x1xf32> to vector<8x8xf32>
    %192 = arith.subf %188, %191 : vector<8x8xf32>
    %193 = math.exp %192 : vector<8x8xf32>
    %cst_82 = arith.constant dense<0.000000e+00> : vector<8xf32>
    %194 = vector.multi_reduction <add>, %193, %cst_82 [1] : vector<8x8xf32> to vector<8xf32>
    %195 = vector.shape_cast %194 : vector<8xf32> to vector<8x1xf32>
    %196 = tpu.reciprocal %195 {approx = true} : vector<8x1xf32> -> vector<8x1xf32>
    %197 = vector.broadcast %196 : vector<8x1xf32> to vector<8x8xf32>
    %198 = arith.mulf %193, %197 : vector<8x8xf32>
    %199 = arith.truncf %198 : vector<8x8xf32> to vector<8x8xbf16>
    %200 = vector.extract_strided_slice %167 {offsets = [0, 8], sizes = [8, 8], strides = [1, 1]} : vector<8x32xbf16> to vector<8x8xbf16>
    %cst_83 = arith.constant dense<0.000000e+00> : vector<8x8xf32>
    %201 = tpu.matmul %199, %200, %cst_83 {dimension_numbers = #tpu.dot_dimension_numbers<[1], [0], [0], [1], [0, 0, 1, 1], [], []>} : vector<8x8xbf16>, vector<8x8xbf16>, vector<8x8xf32> -> vector<8x8xf32>
    %202 = arith.truncf %201 : vector<8x8xf32> to vector<8x8xbf16>
    %c0_84 = arith.constant 0 : index
    %c8_85 = arith.constant 8 : index
    %203 = vector.load %arg30[%c0_84, %c8_85] : memref<8x32xbf16, #tpu.memory_space<vmem>>, vector<8x8xbf16>
    tpu.vector_store %arg30[%c0_84, %c8_85], %202 {strides = array<i32>} : memref<8x32xbf16, #tpu.memory_space<vmem>>, vector<8x8xbf16>,
    %204 = vector.extract_strided_slice %165 {offsets = [0, 16], sizes = [8, 8], strides = [1, 1]} : vector<8x32xbf16> to vector<8x8xbf16>
    %205 = vector.extract_strided_slice %166 {offsets = [0, 16], sizes = [8, 8], strides = [1, 1]} : vector<8x32xbf16> to vector<8x8xbf16>
    %cst_86 = arith.constant dense<0.000000e+00> : vector<8x8xf32>
    %206 = tpu.matmul %204, %205, %cst_86 {dimension_numbers = #tpu.dot_dimension_numbers<[1], [1], [0], [0], [0, 0, 1, 0], [], []>} : vector<8x8xbf16>, vector<8x8xbf16>, vector<8x8xf32> -> vector<8x8xf32>
    %cst_87 = arith.constant dense<0xFF800000> : vector<8xf32>
    %207 = vector.multi_reduction <maximumf>, %206, %cst_87 [1] : vector<8x8xf32> to vector<8xf32>
    %208 = vector.shape_cast %207 : vector<8xf32> to vector<8x1xf32>
    %209 = vector.broadcast %208 : vector<8x1xf32> to vector<8x8xf32>
    %210 = arith.subf %206, %209 : vector<8x8xf32>
    %211 = math.exp %210 : vector<8x8xf32>
    %cst_88 = arith.constant dense<0.000000e+00> : vector<8xf32>
    %212 = vector.multi_reduction <add>, %211, %cst_88 [1] : vector<8x8xf32> to vector<8xf32>
    %213 = vector.shape_cast %212 : vector<8xf32> to vector<8x1xf32>
    %214 = tpu.reciprocal %213 {approx = true} : vector<8x1xf32> -> vector<8x1xf32>
    %215 = vector.broadcast %214 : vector<8x1xf32> to vector<8x8xf32>
    %216 = arith.mulf %211, %215 : vector<8x8xf32>
    %217 = arith.truncf %216 : vector<8x8xf32> to vector<8x8xbf16>
    %218 = vector.extract_strided_slice %167 {offsets = [0, 16], sizes = [8, 8], strides = [1, 1]} : vector<8x32xbf16> to vector<8x8xbf16>
    %cst_89 = arith.constant dense<0.000000e+00> : vector<8x8xf32>
    %219 = tpu.matmul %217, %218, %cst_89 {dimension_numbers = #tpu.dot_dimension_numbers<[1], [0], [0], [1], [0, 0, 1, 1], [], []>} : vector<8x8xbf16>, vector<8x8xbf16>, vector<8x8xf32> -> vector<8x8xf32>
    %220 = arith.truncf %219 : vector<8x8xf32> to vector<8x8xbf16>
    %c0_90 = arith.constant 0 : index
    %c16_91 = arith.constant 16 : index
    %221 = vector.load %arg30[%c0_90, %c16_91] : memref<8x32xbf16, #tpu.memory_space<vmem>>, vector<8x8xbf16>
    tpu.vector_store %arg30[%c0_90, %c16_91], %220 {strides = array<i32>} : memref<8x32xbf16, #tpu.memory_space<vmem>>, vector<8x8xbf16>,
    %222 = vector.extract_strided_slice %165 {offsets = [0, 24], sizes = [8, 8], strides = [1, 1]} : vector<8x32xbf16> to vector<8x8xbf16>
    %223 = vector.extract_strided_slice %166 {offsets = [0, 24], sizes = [8, 8], strides = [1, 1]} : vector<8x32xbf16> to vector<8x8xbf16>
    %cst_92 = arith.constant dense<0.000000e+00> : vector<8x8xf32>
    %224 = tpu.matmul %222, %223, %cst_92 {dimension_numbers = #tpu.dot_dimension_numbers<[1], [1], [0], [0], [0, 0, 1, 0], [], []>} : vector<8x8xbf16>, vector<8x8xbf16>, vector<8x8xf32> -> vector<8x8xf32>
    %cst_93 = arith.constant dense<0xFF800000> : vector<8xf32>
    %225 = vector.multi_reduction <maximumf>, %224, %cst_93 [1] : vector<8x8xf32> to vector<8xf32>
    %226 = vector.shape_cast %225 : vector<8xf32> to vector<8x1xf32>
    %227 = vector.broadcast %226 : vector<8x1xf32> to vector<8x8xf32>
    %228 = arith.subf %224, %227 : vector<8x8xf32>
    %229 = math.exp %228 : vector<8x8xf32>
    %cst_94 = arith.constant dense<0.000000e+00> : vector<8xf32>
    %230 = vector.multi_reduction <add>, %229, %cst_94 [1] : vector<8x8xf32> to vector<8xf32>
    %231 = vector.shape_cast %230 : vector<8xf32> to vector<8x1xf32>
    %232 = tpu.reciprocal %231 {approx = true} : vector<8x1xf32> -> vector<8x1xf32>
    %233 = vector.broadcast %232 : vector<8x1xf32> to vector<8x8xf32>
    %234 = arith.mulf %229, %233 : vector<8x8xf32>
    %235 = arith.truncf %234 : vector<8x8xf32> to vector<8x8xbf16>
    %236 = vector.extract_strided_slice %167 {offsets = [0, 24], sizes = [8, 8], strides = [1, 1]} : vector<8x32xbf16> to vector<8x8xbf16>
    %cst_95 = arith.constant dense<0.000000e+00> : vector<8x8xf32>
    %237 = tpu.matmul %235, %236, %cst_95 {dimension_numbers = #tpu.dot_dimension_numbers<[1], [0], [0], [1], [0, 0, 1, 1], [], []>} : vector<8x8xbf16>, vector<8x8xbf16>, vector<8x8xf32> -> vector<8x8xf32>
    %238 = arith.truncf %237 : vector<8x8xf32> to vector<8x8xbf16>
    %c0_96 = arith.constant 0 : index
    %c24_97 = arith.constant 24 : index
    %239 = vector.load %arg30[%c0_96, %c24_97] : memref<8x32xbf16, #tpu.memory_space<vmem>>, vector<8x8xbf16>
    tpu.vector_store %arg30[%c0_96, %c24_97], %238 {strides = array<i32>} : memref<8x32xbf16, #tpu.memory_space<vmem>>, vector<8x8xbf16>,
    %c0_98 = arith.constant 0 : index
    %c0_99 = arith.constant 0 : index
    %240 = vector.load %arg30[%c0_98, %c0_99] : memref<8x32xbf16, #tpu.memory_space<vmem>>, vector<8x32xbf16>
    %c0_100 = arith.constant 0 : index
    %c0_101 = arith.constant 0 : index
    %241 = vector.load %arg17[%c0_100, %c0_101] : memref<32x32xbf16, #tpu.memory_space<vmem>>, vector<32x32xbf16>
    %cst_102 = arith.constant dense<0.000000e+00> : vector<8x32xf32>
    %242 = tpu.matmul %240, %241, %cst_102 {dimension_numbers = #tpu.dot_dimension_numbers<[1], [0], [0], [1], [0, 0, 1, 1], [], []>} : vector<8x32xbf16>, vector<32x32xbf16>, vector<8x32xf32> -> vector<8x32xf32>
    %243 = vector.shape_cast %164 : vector<32xf32> to vector<1x32xf32>
    %244 = vector.broadcast %243 : vector<1x32xf32> to vector<8x32xf32>
    %245 = arith.addf %242, %244 : vector<8x32xf32>
    %246 = arith.addf %136, %245 : vector<8x32xf32>
    %c0_103 = arith.constant 0 : index
    %c0_104 = arith.constant 0 : index
    %247 = vector.load %arg25[%c0_103, %c0_104] : memref<1x32xf32, #tpu.memory_space<vmem>>, vector<1x32xf32>
    %248 = vector.shape_cast %247 : vector<1x32xf32> to vector<32xf32>
    %c0_105 = arith.constant 0 : index
    %c0_106 = arith.constant 0 : index
    %249 = vector.load %arg26[%c0_105, %c0_106] : memref<1x32xf32, #tpu.memory_space<vmem>>, vector<1x32xf32>
    %250 = vector.shape_cast %249 : vector<1x32xf32> to vector<32xf32>
    %cst_107 = arith.constant dense<0.000000e+00> : vector<8xf32>
    %251 = vector.multi_reduction <add>, %246, %cst_107 [1] : vector<8x32xf32> to vector<8xf32>
    %252 = vector.shape_cast %251 : vector<8xf32> to vector<8x1xf32>
    %cst_108 = arith.constant 3.200000e+01 : f32
    %253 = vector.broadcast %cst_108 : f32 to vector<8x1xf32>
    %254 = arith.divf %252, %253 : vector<8x1xf32>
    %255 = vector.broadcast %254 : vector<8x1xf32> to vector<8x32xf32>
    %256 = arith.subf %246, %255 : vector<8x32xf32>
    %257 = arith.mulf %256, %256 : vector<8x32xf32>
    %cst_109 = arith.constant dense<0.000000e+00> : vector<8xf32>
    %258 = vector.multi_reduction <add>, %257, %cst_109 [1] : vector<8x32xf32> to vector<8xf32>
    %259 = vector.shape_cast %258 : vector<8xf32> to vector<8x1xf32>
    %cst_110 = arith.constant 3.200000e+01 : f32
    %260 = vector.broadcast %cst_110 : f32 to vector<8x1xf32>
    %261 = arith.divf %259, %260 : vector<8x1xf32>
    %cst_111 = arith.constant 9.99999974E-6 : f32
    %262 = vector.broadcast %cst_111 : f32 to vector<8x1xf32>
    %263 = arith.addf %261, %262 : vector<8x1xf32>
    %264 = math.rsqrt %263 : vector<8x1xf32>
    %265 = vector.broadcast %264 : vector<8x1xf32> to vector<8x32xf32>
    %266 = arith.mulf %256, %265 : vector<8x32xf32>
    %267 = vector.shape_cast %248 : vector<32xf32> to vector<1x32xf32>
    %268 = vector.broadcast %267 : vector<1x32xf32> to vector<8x32xf32>
    %269 = arith.mulf %266, %268 : vector<8x32xf32>
    %270 = vector.shape_cast %250 : vector<32xf32> to vector<1x32xf32>
    %271 = vector.broadcast %270 : vector<1x32xf32> to vector<8x32xf32>
    %272 = arith.addf %269, %271 : vector<8x32xf32>
    %273 = arith.truncf %272 : vector<8x32xf32> to vector<8x32xbf16>
    %c0_112 = arith.constant 0 : index
    %c0_113 = arith.constant 0 : index
    %274 = vector.load %arg19[%c0_112, %c0_113] : memref<32x64xbf16, #tpu.memory_space<vmem>>, vector<32x64xbf16>
    %cst_114 = arith.constant dense<0.000000e+00> : vector<8x64xf32>
    %275 = tpu.matmul %273, %274, %cst_114 {dimension_numbers = #tpu.dot_dimension_numbers<[1], [0], [0], [1], [0, 0, 1, 1], [], []>} : vector<8x32xbf16>, vector<32x64xbf16>, vector<8x64xf32> -> vector<8x64xf32>
    %c0_115 = arith.constant 0 : index
    %c0_116 = arith.constant 0 : index
    %276 = vector.load %arg20[%c0_115, %c0_116] : memref<1x64xf32, #tpu.memory_space<vmem>>, vector<1x64xf32>
    %277 = vector.shape_cast %276 : vector<1x64xf32> to vector<64xf32>
    %278 = vector.shape_cast %277 : vector<64xf32> to vector<1x64xf32>
    %279 = vector.broadcast %278 : vector<1x64xf32> to vector<8x64xf32>
    %280 = arith.addf %275, %279 : vector<8x64xf32>
    %cst_117 = arith.constant 0.000000e+00 : f32
    %281 = vector.broadcast %cst_117 : f32 to vector<8x64xf32>
    %282 = arith.maximumf %280, %281 : vector<8x64xf32>
    %283 = arith.truncf %282 : vector<8x64xf32> to vector<8x64xbf16>
    %c0_118 = arith.constant 0 : index
    %c0_119 = arith.constant 0 : index
    %284 = vector.load %arg21[%c0_118, %c0_119] : memref<64x32xbf16, #tpu.memory_space<vmem>>, vector<64x32xbf16>
    %cst_120 = arith.constant dense<0.000000e+00> : vector<8x32xf32>
    %285 = tpu.matmul %283, %284, %cst_120 {dimension_numbers = #tpu.dot_dimension_numbers<[1], [0], [0], [1], [0, 0, 1, 1], [], []>} : vector<8x64xbf16>, vector<64x32xbf16>, vector<8x32xf32> -> vector<8x32xf32>
    %c0_121 = arith.constant 0 : index
    %c0_122 = arith.constant 0 : index
    %286 = vector.load %arg22[%c0_121, %c0_122] : memref<1x32xf32, #tpu.memory_space<vmem>>, vector<1x32xf32>
    %287 = vector.shape_cast %286 : vector<1x32xf32> to vector<32xf32>
    %288 = vector.shape_cast %287 : vector<32xf32> to vector<1x32xf32>
    %289 = vector.broadcast %288 : vector<1x32xf32> to vector<8x32xf32>
    %290 = arith.addf %285, %289 : vector<8x32xf32>
    %291 = arith.addf %272, %290 : vector<8x32xf32>
    %c0_123 = arith.constant 0 : index
    %c0_124 = arith.constant 0 : index
    %292 = vector.load %arg27[%c0_123, %c0_124] : memref<1x32xf32, #tpu.memory_space<vmem>>, vector<1x32xf32>
    %293 = vector.shape_cast %292 : vector<1x32xf32> to vector<32xf32>
    %c0_125 = arith.constant 0 : index
    %c0_126 = arith.constant 0 : index
    %294 = vector.load %arg28[%c0_125, %c0_126] : memref<1x32xf32, #tpu.memory_space<vmem>>, vector<1x32xf32>
    %295 = vector.shape_cast %294 : vector<1x32xf32> to vector<32xf32>
    %cst_127 = arith.constant dense<0.000000e+00> : vector<8xf32>
    %296 = vector.multi_reduction <add>, %291, %cst_127 [1] : vector<8x32xf32> to vector<8xf32>
    %297 = vector.shape_cast %296 : vector<8xf32> to vector<8x1xf32>
    %cst_128 = arith.constant 3.200000e+01 : f32
    %298 = vector.broadcast %cst_128 : f32 to vector<8x1xf32>
    %299 = arith.divf %297, %298 : vector<8x1xf32>
    %300 = vector.broadcast %299 : vector<8x1xf32> to vector<8x32xf32>
    %301 = arith.subf %291, %300 : vector<8x32xf32>
    %302 = arith.mulf %301, %301 : vector<8x32xf32>
    %cst_129 = arith.constant dense<0.000000e+00> : vector<8xf32>
    %303 = vector.multi_reduction <add>, %302, %cst_129 [1] : vector<8x32xf32> to vector<8xf32>
    %304 = vector.shape_cast %303 : vector<8xf32> to vector<8x1xf32>
    %cst_130 = arith.constant 3.200000e+01 : f32
    %305 = vector.broadcast %cst_130 : f32 to vector<8x1xf32>
    %306 = arith.divf %304, %305 : vector<8x1xf32>
    %cst_131 = arith.constant 9.99999974E-6 : f32
    %307 = vector.broadcast %cst_131 : f32 to vector<8x1xf32>
    %308 = arith.addf %306, %307 : vector<8x1xf32>
    %309 = math.rsqrt %308 : vector<8x1xf32>
    %310 = vector.broadcast %309 : vector<8x1xf32> to vector<8x32xf32>
    %311 = arith.mulf %301, %310 : vector<8x32xf32>
    %312 = vector.shape_cast %293 : vector<32xf32> to vector<1x32xf32>
    %313 = vector.broadcast %312 : vector<1x32xf32> to vector<8x32xf32>
    %314 = arith.mulf %311, %313 : vector<8x32xf32>
    %315 = vector.shape_cast %295 : vector<32xf32> to vector<1x32xf32>
    %316 = vector.broadcast %315 : vector<1x32xf32> to vector<8x32xf32>
    %317 = arith.addf %314, %316 : vector<8x32xf32>
    %c0_132 = arith.constant 0 : index
    %c0_133 = arith.constant 0 : index
    %c0_134 = arith.constant 0 : index
    %318 = vector.load %arg29[%c0_132, %c0_133, %c0_134] : memref<1x8x32xf32, #tpu.memory_space<vmem>>, vector<1x8x32xf32>
    %319 = vector.shape_cast %318 : vector<1x8x32xf32> to vector<8x32xf32>
    %320 = vector.shape_cast %317 : vector<8x32xf32> to vector<1x8x32xf32>
    tpu.vector_store %arg29[%c0_132, %c0_133, %c0_134], %320 {strides = array<i32>} : memref<1x8x32xf32, #tpu.memory_space<vmem>>, vector<1x8x32xf32>,
    return
  }
  func.func @transform_0(%arg0: i32) -> (i32, i32, i32) {
    %c0_i32 = arith.constant 0 : i32
    %c0_i32_0 = arith.constant 0 : i32
    %c0_i32_1 = arith.constant 0 : i32
    return %arg0, %c0_i32, %c0_i32_0 : i32, i32, i32
  }
  func.func @transform_1(%arg0: i32) -> (i32, i32, i32) {
    %c0_i32 = arith.constant 0 : i32
    %c0_i32_0 = arith.constant 0 : i32
    %c0_i32_1 = arith.constant 0 : i32
    return %arg0, %c0_i32, %c0_i32_0 : i32, i32, i32
  }
  func.func @transform_2(%arg0: i32) -> (i32, i32, i32) {
    %c0_i32 = arith.constant 0 : i32
    %c0_i32_0 = arith.constant 0 : i32
    %c0_i32_1 = arith.constant 0 : i32
    return %arg0, %c0_i32, %c0_i32_0 : i32, i32, i32
  }
  func.func @transform_3(%arg0: i32) -> (i32, i32, i32) {
    %c0_i32 = arith.constant 0 : i32
    %c0_i32_0 = arith.constant 0 : i32
    %c0_i32_1 = arith.constant 0 : i32
    return %arg0, %c0_i32, %c0_i32_0 : i32, i32, i32
  }
  func.func @transform_4(%arg0: i32) -> (i32, i32) {
    %c0_i32 = arith.constant 0 : i32
    %c0_i32_0 = arith.constant 0 : i32
    %c0_i32_1 = arith.constant 0 : i32
    return %c0_i32, %c0_i32_0 : i32, i32
  }
  func.func @transform_5(%arg0: i32) -> (i32, i32) {
    %c0_i32 = arith.constant 0 : i32
    %c0_i32_0 = arith.constant 0 : i32
    %c0_i32_1 = arith.constant 0 : i32
    return %c0_i32, %c0_i32_0 : i32, i32
  }
  func.func @transform_6(%arg0: i32) -> (i32, i32) {
    %c0_i32 = arith.constant 0 : i32
    %c0_i32_0 = arith.constant 0 : i32
    %c0_i32_1 = arith.constant 0 : i32
    return %c0_i32, %c0_i32_0 : i32, i32
  }
  func.func @transform_7(%arg0: i32) -> (i32, i32) {
    %c0_i32 = arith.constant 0 : i32
    %c0_i32_0 = arith.constant 0 : i32
    %c0_i32_1 = arith.constant 0 : i32
    return %c0_i32, %c0_i32_0 : i32, i32
  }
  func.func @transform_8(%arg0: i32) -> (i32, i32) {
    %c0_i32 = arith.constant 0 : i32
    %c0_i32_0 = arith.constant 0 : i32
    %c0_i32_1 = arith.constant 0 : i32
    return %c0_i32, %c0_i32_0 : i32, i32
  }
  func.func @transform_9(%arg0: i32) -> (i32, i32) {
    %c0_i32 = arith.constant 0 : i32
    %c0_i32_0 = arith.constant 0 : i32
    %c0_i32_1 = arith.constant 0 : i32
    return %c0_i32, %c0_i32_0 : i32, i32
  }
  func.func @transform_10(%arg0: i32) -> (i32, i32) {
    %c0_i32 = arith.constant 0 : i32
    %c0_i32_0 = arith.constant 0 : i32
    %c0_i32_1 = arith.constant 0 : i32
    return %c0_i32, %c0_i32_0 : i32, i32
  }
  func.func @transform_11(%arg0: i32) -> (i32, i32) {
    %c0_i32 = arith.constant 0 : i32
    %c0_i32_0 = arith.constant 0 : i32
    %c0_i32_1 = arith.constant 0 : i32
    return %c0_i32, %c0_i32_0 : i32, i32
  }
  func.func @transform_12(%arg0: i32) -> (i32, i32) {
    %c0_i32 = arith.constant 0 : i32
    %c0_i32_0 = arith.constant 0 : i32
    %c0_i32_1 = arith.constant 0 : i32
    return %c0_i32, %c0_i32_0 : i32, i32
  }
  func.func @transform_13(%arg0: i32) -> (i32, i32) {
    %c0_i32 = arith.constant 0 : i32
    %c0_i32_0 = arith.constant 0 : i32
    %c0_i32_1 = arith.constant 0 : i32
    return %c0_i32, %c0_i32_0 : i32, i32
  }
  func.func @transform_14(%arg0: i32) -> (i32, i32) {
    %c0_i32 = arith.constant 0 : i32
    %c0_i32_0 = arith.constant 0 : i32
    %c0_i32_1 = arith.constant 0 : i32
    return %c0_i32, %c0_i32_0 : i32, i32
  }
  func.func @transform_15(%arg0: i32) -> (i32, i32) {
    %c0_i32 = arith.constant 0 : i32
    %c0_i32_0 = arith.constant 0 : i32
    %c0_i32_1 = arith.constant 0 : i32
    return %c0_i32, %c0_i32_0 : i32, i32
  }
  func.func @transform_16(%arg0: i32) -> (i32, i32) {
    %c0_i32 = arith.constant 0 : i32
    %c0_i32_0 = arith.constant 0 : i32
    %c0_i32_1 = arith.constant 0 : i32
    return %c0_i32, %c0_i32_0 : i32, i32
  }
  func.func @transform_17(%arg0: i32) -> (i32, i32) {
    %c0_i32 = arith.constant 0 : i32
    %c0_i32_0 = arith.constant 0 : i32
    %c0_i32_1 = arith.constant 0 : i32
    return %c0_i32, %c0_i32_0 : i32, i32
  }
  func.func @transform_18(%arg0: i32) -> (i32, i32) {
    %c0_i32 = arith.constant 0 : i32
    %c0_i32_0 = arith.constant 0 : i32
    %c0_i32_1 = arith.constant 0 : i32
    return %c0_i32, %c0_i32_0 : i32, i32
  }
  func.func @transform_19(%arg0: i32) -> (i32, i32) {
    %c0_i32 = arith.constant 0 : i32
    %c0_i32_0 = arith.constant 0 : i32
    %c0_i32_1 = arith.constant 0 : i32
    return %c0_i32, %c0_i32_0 : i32, i32
  }
  func.func @transform_20(%arg0: i32) -> (i32, i32) {
    %c0_i32 = arith.constant 0 : i32
    %c0_i32_0 = arith.constant 0 : i32
    %c0_i32_1 = arith.constant 0 : i32
    return %c0_i32, %c0_i32_0 : i32, i32
  }
  func.func @transform_21(%arg0: i32) -> (i32, i32) {
    %c0_i32 = arith.constant 0 : i32
    %c0_i32_0 = arith.constant 0 : i32
    %c0_i32_1 = arith.constant 0 : i32
    return %c0_i32, %c0_i32_0 : i32, i32
  }
  func.func @transform_22(%arg0: i32) -> (i32, i32) {
    %c0_i32 = arith.constant 0 : i32
    %c0_i32_0 = arith.constant 0 : i32
    %c0_i32_1 = arith.constant 0 : i32
    return %c0_i32, %c0_i32_0 : i32, i32
  }
  func.func @transform_23(%arg0: i32) -> (i32, i32) {
    %c0_i32 = arith.constant 0 : i32
    %c0_i32_0 = arith.constant 0 : i32
    %c0_i32_1 = arith.constant 0 : i32
    return %c0_i32, %c0_i32_0 : i32, i32
  }
  func.func @transform_24(%arg0: i32) -> (i32, i32) {
    %c0_i32 = arith.constant 0 : i32
    %c0_i32_0 = arith.constant 0 : i32
    %c0_i32_1 = arith.constant 0 : i32
    return %c0_i32, %c0_i32_0 : i32, i32
  }
  func.func @transform_25(%arg0: i32) -> (i32, i32) {
    %c0_i32 = arith.constant 0 : i32
    %c0_i32_0 = arith.constant 0 : i32
    %c0_i32_1 = arith.constant 0 : i32
    return %c0_i32, %c0_i32_0 : i32, i32
  }
  func.func @transform_26(%arg0: i32) -> (i32, i32) {
    %c0_i32 = arith.constant 0 : i32
    %c0_i32_0 = arith.constant 0 : i32
    %c0_i32_1 = arith.constant 0 : i32
    return %c0_i32, %c0_i32_0 : i32, i32
  }
  func.func @transform_27(%arg0: i32) -> (i32, i32) {
    %c0_i32 = arith.constant 0 : i32
    %c0_i32_0 = arith.constant 0 : i32
    %c0_i32_1 = arith.constant 0 : i32
    return %c0_i32, %c0_i32_0 : i32, i32
  }
  func.func @transform_28(%arg0: i32) -> (i32, i32, i32) {
    %c0_i32 = arith.constant 0 : i32
    %c0_i32_0 = arith.constant 0 : i32
    %c0_i32_1 = arith.constant 0 : i32
    return %arg0, %c0_i32, %c0_i32_0 : i32, i32, i32
  }
}

module attributes {stable_mosaic.version = 11 : i64} {
  func.func @kernel(%arg0: i32, %arg1: memref<1x8x32xf32, #tpu.memory_space<vmem>>, %arg2: memref<1x8x32xf32, #tpu.memory_space<vmem>>, %arg3: memref<1x8x32xf32, #tpu.memory_space<vmem>>, %arg4: memref<1x8x32xf32, #tpu.memory_space<vmem>>, %arg5: memref<32x64xbf16, #tpu.memory_space<vmem>>, %arg6: memref<1x64xf32, #tpu.memory_space<vmem>>, %arg7: memref<32x32xbf16, #tpu.memory_space<vmem>>, %arg8: memref<1x32xf32, #tpu.memory_space<vmem>>, %arg9: memref<32x32xbf16, #tpu.memory_space<vmem>>, %arg10: memref<1x32xf32, #tpu.memory_space<vmem>>, %arg11: memref<32x32xbf16, #tpu.memory_space<vmem>>, %arg12: memref<1x32xf32, #tpu.memory_space<vmem>>, %arg13: memref<32x32xbf16, #tpu.memory_space<vmem>>, %arg14: memref<1x32xf32, #tpu.memory_space<vmem>>, %arg15: memref<32x32xbf16, #tpu.memory_space<vmem>>, %arg16: memref<1x32xf32, #tpu.memory_space<vmem>>, %arg17: memref<32x32xbf16, #tpu.memory_space<vmem>>, %arg18: memref<1x32xf32, #tpu.memory_space<vmem>>, %arg19: memref<32x64xbf16, #tpu.memory_space<vmem>>, %arg20: memref<1x64xf32, #tpu.memory_space<vmem>>, %arg21: memref<64x32xbf16, #tpu.memory_space<vmem>>, %arg22: memref<1x32xf32, #tpu.memory_space<vmem>>, %arg23: memref<1x32xf32, #tpu.memory_space<vmem>>, %arg24: memref<1x32xf32, #tpu.memory_space<vmem>>, %arg25: memref<1x32xf32, #tpu.memory_space<vmem>>, %arg26: memref<1x32xf32, #tpu.memory_space<vmem>>, %arg27: memref<1x32xf32, #tpu.memory_space<vmem>>, %arg28: memref<1x32xf32, #tpu.memory_space<vmem>>, %arg29: memref<1x8x32xf32, #tpu.memory_space<vmem>>, %arg30: memref<8x32xbf16, #tpu.memory_space<vmem>>) attributes {dimension_semantics = [#tpu.dimension_semantics<parallel>], iteration_bounds = array<i64: 2>, scalar_prefetch = 0 : i64, scratch_operands = 1 : i64, tpu.core_type = #tpu.core_type<tc>, window_params = [{transform_indices = @transform_0, window_bounds = array<i64: 1, 8, 32>}, {transform_indices = @transform_1, window_bounds = array<i64: 1, 8, 32>}, {transform_indices = @transform_2, window_bounds = array<i64: 1, 8, 32>}, {transform_indices = @transform_3, window_bounds = array<i64: 1, 8, 32>}, {pipeline_mode = #tpu.pipeline_mode<synchronous>, transform_indices = @transform_4, window_bounds = array<i64: 32, 64>}, {pipeline_mode = #tpu.pipeline_mode<synchronous>, transform_indices = @transform_5, window_bounds = array<i64: 1, 64>}, {pipeline_mode = #tpu.pipeline_mode<synchronous>, transform_indices = @transform_6, window_bounds = array<i64: 32, 32>}, {pipeline_mode = #tpu.pipeline_mode<synchronous>, transform_indices = @transform_7, window_bounds = array<i64: 1, 32>}, {pipeline_mode = #tpu.pipeline_mode<synchronous>, transform_indices = @transform_8, window_bounds = array<i64: 32, 32>}, {pipeline_mode = #tpu.pipeline_mode<synchronous>, transform_indices = @transform_9, window_bounds = array<i64: 1, 32>}, {pipeline_mode = #tpu.pipeline_mode<synchronous>, transform_indices = @transform_10, window_bounds = array<i64: 32, 32>}, {pipeline_mode = #tpu.pipeline_mode<synchronous>, transform_indices = @transform_11, window_bounds = array<i64: 1, 32>}, {pipeline_mode = #tpu.pipeline_mode<synchronous>, transform_indices = @transform_12, window_bounds = array<i64: 32, 32>}, {pipeline_mode = #tpu.pipeline_mode<synchronous>, transform_indices = @transform_13, window_bounds = array<i64: 1, 32>}, {pipeline_mode = #tpu.pipeline_mode<synchronous>, transform_indices = @transform_14, window_bounds = array<i64: 32, 32>}, {pipeline_mode = #tpu.pipeline_mode<synchronous>, transform_indices = @transform_15, window_bounds = array<i64: 1, 32>}, {pipeline_mode = #tpu.pipeline_mode<synchronous>, transform_indices = @transform_16, window_bounds = array<i64: 32, 32>}, {pipeline_mode = #tpu.pipeline_mode<synchronous>, transform_indices = @transform_17, window_bounds = array<i64: 1, 32>}, {pipeline_mode = #tpu.pipeline_mode<synchronous>, transform_indices = @transform_18, window_bounds = array<i64: 32, 64>}, {pipeline_mode = #tpu.pipeline_mode<synchronous>, transform_indices = @transform_19, window_bounds = array<i64: 1, 64>}, {pipeline_mode = #tpu.pipeline_mode<synchronous>, transform_indices = @transform_20, window_bounds = array<i64: 64, 32>}, {pipeline_mode = #tpu.pipeline_mode<synchronous>, transform_indices = @transform_21, window_bounds = array<i64: 1, 32>}, {pipeline_mode = #tpu.pipeline_mode<synchronous>, transform_indices = @transform_22, window_bounds = array<i64: 1, 32>}, {pipeline_mode = #tpu.pipeline_mode<synchronous>, transform_indices = @transform_23, window_bounds = array<i64: 1, 32>}, {pipeline_mode = #tpu.pipeline_mode<synchronous>, transform_indices = @transform_24, window_bounds = array<i64: 1, 32>}, {pipeline_mode = #tpu.pipeline_mode<synchronous>, transform_indices = @transform_25, window_bounds = array<i64: 1, 32>}, {pipeline_mode = #tpu.pipeline_mode<synchronous>, transform_indices = @transform_26, window_bounds = array<i64: 1, 32>}, {pipeline_mode = #tpu.pipeline_mode<synchronous>, transform_indices = @transform_27, window_bounds = array<i64: 1, 32>}, {transform_indices = @transform_28, window_bounds = array<i64: 1, 8, 32>}]} {
    %c0 = arith.constant 0 : index
    %c0_0 = arith.constant 0 : index
    %c0_1 = arith.constant 0 : index
    %0 = vector.load %arg1[%c0, %c0_0, %c0_1] : memref<1x8x32xf32, #tpu.memory_space<vmem>>, vector<1x8x32xf32>
    %1 = vector.shape_cast %0 : vector<1x8x32xf32> to vector<8x32xf32>
    %c0_2 = arith.constant 0 : index
    %c0_3 = arith.constant 0 : index
    %c0_4 = arith.constant 0 : index
    %2 = vector.load %arg2[%c0_2, %c0_3, %c0_4] : memref<1x8x32xf32, #tpu.memory_space<vmem>>, vector<1x8x32xf32>
    %3 = vector.shape_cast %2 : vector<1x8x32xf32> to vector<8x32xf32>
    %c0_5 = arith.constant 0 : index
    %c0_6 = arith.constant 0 : index
    %c0_7 = arith.constant 0 : index
    %4 = vector.load %arg3[%c0_5, %c0_6, %c0_7] : memref<1x8x32xf32, #tpu.memory_space<vmem>>, vector<1x8x32xf32>
    %5 = vector.shape_cast %4 : vector<1x8x32xf32> to vector<8x32xf32>
    %c0_8 = arith.constant 0 : index
    %c0_9 = arith.constant 0 : index
    %c0_10 = arith.constant 0 : index
    %6 = vector.load %arg4[%c0_8, %c0_9, %c0_10] : memref<1x8x32xf32, #tpu.memory_space<vmem>>, vector<1x8x32xf32>
    %7 = vector.shape_cast %6 : vector<1x8x32xf32> to vector<8x32xf32>
    %8 = arith.addf %1, %5 : vector<8x32xf32>
    %9 = arith.truncf %8 : vector<8x32xf32> to vector<8x32xbf16>
    %c0_11 = arith.constant 0 : index
    %c0_12 = arith.constant 0 : index
    %10 = vector.load %arg5[%c0_11, %c0_12] : memref<32x64xbf16, #tpu.memory_space<vmem>>, vector<32x64xbf16>
    %cst = arith.constant dense<0.000000e+00> : vector<8x64xf32>
    %11 = tpu.matmul %9, %10, %cst {dimension_numbers = #tpu.dot_dimension_numbers<[1], [0], [0], [1], [0, 0, 1, 1], [], []>} : vector<8x32xbf16>, vector<32x64xbf16>, vector<8x64xf32> -> vector<8x64xf32>
    %c0_13 = arith.constant 0 : index
    %c0_14 = arith.constant 0 : index
    %12 = vector.load %arg6[%c0_13, %c0_14] : memref<1x64xf32, #tpu.memory_space<vmem>>, vector<1x64xf32>
    %13 = vector.shape_cast %12 : vector<1x64xf32> to vector<64xf32>
    %14 = vector.shape_cast %13 : vector<64xf32> to vector<1x64xf32>
    %15 = vector.broadcast %14 : vector<1x64xf32> to vector<8x64xf32>
    %16 = arith.addf %11, %15 : vector<8x64xf32>
    %17 = arith.truncf %1 : vector<8x32xf32> to vector<8x32xbf16>
    %c0_15 = arith.constant 0 : index
    %c0_16 = arith.constant 0 : index
    %18 = vector.load %arg7[%c0_15, %c0_16] : memref<32x32xbf16, #tpu.memory_space<vmem>>, vector<32x32xbf16>
    %cst_17 = arith.constant dense<0.000000e+00> : vector<8x32xf32>
    %19 = tpu.matmul %17, %18, %cst_17 {dimension_numbers = #tpu.dot_dimension_numbers<[1], [0], [0], [1], [0, 0, 1, 1], [], []>} : vector<8x32xbf16>, vector<32x32xbf16>, vector<8x32xf32> -> vector<8x32xf32>
    %c0_18 = arith.constant 0 : index
    %c0_19 = arith.constant 0 : index
    %20 = vector.load %arg8[%c0_18, %c0_19] : memref<1x32xf32, #tpu.memory_space<vmem>>, vector<1x32xf32>
    %21 = vector.shape_cast %20 : vector<1x32xf32> to vector<32xf32>
    %22 = vector.shape_cast %21 : vector<32xf32> to vector<1x32xf32>
    %23 = vector.broadcast %22 : vector<1x32xf32> to vector<8x32xf32>
    %24 = arith.addf %19, %23 : vector<8x32xf32>
    %25 = vector.extract_strided_slice %16 {offsets = [0, 0], sizes = [8, 32], strides = [1, 1]} : vector<8x64xf32> to vector<8x32xf32>
    %26 = vector.extract_strided_slice %16 {offsets = [0, 32], sizes = [8, 32], strides = [1, 1]} : vector<8x64xf32> to vector<8x32xf32>
    %c0_20 = arith.constant 0 : index
    %c0_21 = arith.constant 0 : index
    %27 = vector.load %arg10[%c0_20, %c0_21] : memref<1x32xf32, #tpu.memory_space<vmem>>, vector<1x32xf32>
    %28 = vector.shape_cast %27 : vector<1x32xf32> to vector<32xf32>
    %29 = arith.truncf %25 : vector<8x32xf32> to vector<8x32xbf16>
    %30 = arith.truncf %26 : vector<8x32xf32> to vector<8x32xbf16>
    %31 = arith.truncf %24 : vector<8x32xf32> to vector<8x32xbf16>
    %32 = vector.extract_strided_slice %29 {offsets = [0, 0], sizes = [8, 8], strides = [1, 1]} : vector<8x32xbf16> to vector<8x8xbf16>
    %33 = vector.extract_strided_slice %30 {offsets = [0, 0], sizes = [8, 8], strides = [1, 1]} : vector<8x32xbf16> to vector<8x8xbf16>
    %cst_22 = arith.constant dense<0.000000e+00> : vector<8x8xf32>
    %34 = tpu.matmul %32, %33, %cst_22 {dimension_numbers = #tpu.dot_dimension_numbers<[1], [1], [0], [0], [0, 0, 1, 0], [], []>} : vector<8x8xbf16>, vector<8x8xbf16>, vector<8x8xf32> -> vector<8x8xf32>
    %cst_23 = arith.constant dense<0xFF800000> : vector<8xf32>
    %35 = vector.multi_reduction <maximumf>, %34, %cst_23 [1] : vector<8x8xf32> to vector<8xf32>
    %36 = vector.shape_cast %35 : vector<8xf32> to vector<8x1xf32>
    %37 = vector.broadcast %36 : vector<8x1xf32> to vector<8x8xf32>
    %38 = arith.subf %34, %37 : vector<8x8xf32>
    %39 = math.exp %38 : vector<8x8xf32>
    %cst_24 = arith.constant dense<0.000000e+00> : vector<8xf32>
    %40 = vector.multi_reduction <add>, %39, %cst_24 [1] : vector<8x8xf32> to vector<8xf32>
    %41 = vector.shape_cast %40 : vector<8xf32> to vector<8x1xf32>
    %42 = tpu.reciprocal %41 {approx = true} : vector<8x1xf32> -> vector<8x1xf32>
    %43 = vector.broadcast %42 : vector<8x1xf32> to vector<8x8xf32>
    %44 = arith.mulf %39, %43 : vector<8x8xf32>
    %45 = arith.truncf %44 : vector<8x8xf32> to vector<8x8xbf16>
    %46 = vector.extract_strided_slice %31 {offsets = [0, 0], sizes = [8, 8], strides = [1, 1]} : vector<8x32xbf16> to vector<8x8xbf16>
    %cst_25 = arith.constant dense<0.000000e+00> : vector<8x8xf32>
    %47 = tpu.matmul %45, %46, %cst_25 {dimension_numbers = #tpu.dot_dimension_numbers<[1], [0], [0], [1], [0, 0, 1, 1], [], []>} : vector<8x8xbf16>, vector<8x8xbf16>, vector<8x8xf32> -> vector<8x8xf32>
    %48 = arith.truncf %47 : vector<8x8xf32> to vector<8x8xbf16>
    %c0_26 = arith.constant 0 : index
    %c0_27 = arith.constant 0 : index
    %49 = vector.load %arg30[%c0_26, %c0_27] : memref<8x32xbf16, #tpu.memory_space<vmem>>, vector<8x8xbf16>
    tpu.vector_store %arg30[%c0_26, %c0_27], %48 {strides = array<i32>} : memref<8x32xbf16, #tpu.memory_space<vmem>>, vector<8x8xbf16>,
    %50 = vector.extract_strided_slice %29 {offsets = [0, 8], sizes = [8, 8], strides = [1, 1]} : vector<8x32xbf16> to vector<8x8xbf16>
    %51 = vector.extract_strided_slice %30 {offsets = [0, 8], sizes = [8, 8], strides = [1, 1]} : vector<8x32xbf16> to vector<8x8xbf16>
    %cst_28 = arith.constant dense<0.000000e+00> : vector<8x8xf32>
    %52 = tpu.matmul %50, %51, %cst_28 {dimension_numbers = #tpu.dot_dimension_numbers<[1], [1], [0], [0], [0, 0, 1, 0], [], []>} : vector<8x8xbf16>, vector<8x8xbf16>, vector<8x8xf32> -> vector<8x8xf32>
    %cst_29 = arith.constant dense<0xFF800000> : vector<8xf32>
    %53 = vector.multi_reduction <maximumf>, %52, %cst_29 [1] : vector<8x8xf32> to vector<8xf32>
    %54 = vector.shape_cast %53 : vector<8xf32> to vector<8x1xf32>
    %55 = vector.broadcast %54 : vector<8x1xf32> to vector<8x8xf32>
    %56 = arith.subf %52, %55 : vector<8x8xf32>
    %57 = math.exp %56 : vector<8x8xf32>
    %cst_30 = arith.constant dense<0.000000e+00> : vector<8xf32>
    %58 = vector.multi_reduction <add>, %57, %cst_30 [1] : vector<8x8xf32> to vector<8xf32>
    %59 = vector.shape_cast %58 : vector<8xf32> to vector<8x1xf32>
    %60 = tpu.reciprocal %59 {approx = true} : vector<8x1xf32> -> vector<8x1xf32>
    %61 = vector.broadcast %60 : vector<8x1xf32> to vector<8x8xf32>
    %62 = arith.mulf %57, %61 : vector<8x8xf32>
    %63 = arith.truncf %62 : vector<8x8xf32> to vector<8x8xbf16>
    %64 = vector.extract_strided_slice %31 {offsets = [0, 8], sizes = [8, 8], strides = [1, 1]} : vector<8x32xbf16> to vector<8x8xbf16>
    %cst_31 = arith.constant dense<0.000000e+00> : vector<8x8xf32>
    %65 = tpu.matmul %63, %64, %cst_31 {dimension_numbers = #tpu.dot_dimension_numbers<[1], [0], [0], [1], [0, 0, 1, 1], [], []>} : vector<8x8xbf16>, vector<8x8xbf16>, vector<8x8xf32> -> vector<8x8xf32>
    %66 = arith.truncf %65 : vector<8x8xf32> to vector<8x8xbf16>
    %c0_32 = arith.constant 0 : index
    %c8 = arith.constant 8 : index
    %67 = vector.load %arg30[%c0_32, %c8] : memref<8x32xbf16, #tpu.memory_space<vmem>>, vector<8x8xbf16>
    tpu.vector_store %arg30[%c0_32, %c8], %66 {strides = array<i32>} : memref<8x32xbf16, #tpu.memory_space<vmem>>, vector<8x8xbf16>,
    %68 = vector.extract_strided_slice %29 {offsets = [0, 16], sizes = [8, 8], strides = [1, 1]} : vector<8x32xbf16> to vector<8x8xbf16>
    %69 = vector.extract_strided_slice %30 {offsets = [0, 16], sizes = [8, 8], strides = [1, 1]} : vector<8x32xbf16> to vector<8x8xbf16>
    %cst_33 = arith.constant dense<0.000000e+00> : vector<8x8xf32>
    %70 = tpu.matmul %68, %69, %cst_33 {dimension_numbers = #tpu.dot_dimension_numbers<[1], [1], [0], [0], [0, 0, 1, 0], [], []>} : vector<8x8xbf16>, vector<8x8xbf16>, vector<8x8xf32> -> vector<8x8xf32>
    %cst_34 = arith.constant dense<0xFF800000> : vector<8xf32>
    %71 = vector.multi_reduction <maximumf>, %70, %cst_34 [1] : vector<8x8xf32> to vector<8xf32>
    %72 = vector.shape_cast %71 : vector<8xf32> to vector<8x1xf32>
    %73 = vector.broadcast %72 : vector<8x1xf32> to vector<8x8xf32>
    %74 = arith.subf %70, %73 : vector<8x8xf32>
    %75 = math.exp %74 : vector<8x8xf32>
    %cst_35 = arith.constant dense<0.000000e+00> : vector<8xf32>
    %76 = vector.multi_reduction <add>, %75, %cst_35 [1] : vector<8x8xf32> to vector<8xf32>
    %77 = vector.shape_cast %76 : vector<8xf32> to vector<8x1xf32>
    %78 = tpu.reciprocal %77 {approx = true} : vector<8x1xf32> -> vector<8x1xf32>
    %79 = vector.broadcast %78 : vector<8x1xf32> to vector<8x8xf32>
    %80 = arith.mulf %75, %79 : vector<8x8xf32>
    %81 = arith.truncf %80 : vector<8x8xf32> to vector<8x8xbf16>
    %82 = vector.extract_strided_slice %31 {offsets = [0, 16], sizes = [8, 8], strides = [1, 1]} : vector<8x32xbf16> to vector<8x8xbf16>
    %cst_36 = arith.constant dense<0.000000e+00> : vector<8x8xf32>
    %83 = tpu.matmul %81, %82, %cst_36 {dimension_numbers = #tpu.dot_dimension_numbers<[1], [0], [0], [1], [0, 0, 1, 1], [], []>} : vector<8x8xbf16>, vector<8x8xbf16>, vector<8x8xf32> -> vector<8x8xf32>
    %84 = arith.truncf %83 : vector<8x8xf32> to vector<8x8xbf16>
    %c0_37 = arith.constant 0 : index
    %c16 = arith.constant 16 : index
    %85 = vector.load %arg30[%c0_37, %c16] : memref<8x32xbf16, #tpu.memory_space<vmem>>, vector<8x8xbf16>
    tpu.vector_store %arg30[%c0_37, %c16], %84 {strides = array<i32>} : memref<8x32xbf16, #tpu.memory_space<vmem>>, vector<8x8xbf16>,
    %86 = vector.extract_strided_slice %29 {offsets = [0, 24], sizes = [8, 8], strides = [1, 1]} : vector<8x32xbf16> to vector<8x8xbf16>
    %87 = vector.extract_strided_slice %30 {offsets = [0, 24], sizes = [8, 8], strides = [1, 1]} : vector<8x32xbf16> to vector<8x8xbf16>
    %cst_38 = arith.constant dense<0.000000e+00> : vector<8x8xf32>
    %88 = tpu.matmul %86, %87, %cst_38 {dimension_numbers = #tpu.dot_dimension_numbers<[1], [1], [0], [0], [0, 0, 1, 0], [], []>} : vector<8x8xbf16>, vector<8x8xbf16>, vector<8x8xf32> -> vector<8x8xf32>
    %cst_39 = arith.constant dense<0xFF800000> : vector<8xf32>
    %89 = vector.multi_reduction <maximumf>, %88, %cst_39 [1] : vector<8x8xf32> to vector<8xf32>
    %90 = vector.shape_cast %89 : vector<8xf32> to vector<8x1xf32>
    %91 = vector.broadcast %90 : vector<8x1xf32> to vector<8x8xf32>
    %92 = arith.subf %88, %91 : vector<8x8xf32>
    %93 = math.exp %92 : vector<8x8xf32>
    %cst_40 = arith.constant dense<0.000000e+00> : vector<8xf32>
    %94 = vector.multi_reduction <add>, %93, %cst_40 [1] : vector<8x8xf32> to vector<8xf32>
    %95 = vector.shape_cast %94 : vector<8xf32> to vector<8x1xf32>
    %96 = tpu.reciprocal %95 {approx = true} : vector<8x1xf32> -> vector<8x1xf32>
    %97 = vector.broadcast %96 : vector<8x1xf32> to vector<8x8xf32>
    %98 = arith.mulf %93, %97 : vector<8x8xf32>
    %99 = arith.truncf %98 : vector<8x8xf32> to vector<8x8xbf16>
    %100 = vector.extract_strided_slice %31 {offsets = [0, 24], sizes = [8, 8], strides = [1, 1]} : vector<8x32xbf16> to vector<8x8xbf16>
    %cst_41 = arith.constant dense<0.000000e+00> : vector<8x8xf32>
    %101 = tpu.matmul %99, %100, %cst_41 {dimension_numbers = #tpu.dot_dimension_numbers<[1], [0], [0], [1], [0, 0, 1, 1], [], []>} : vector<8x8xbf16>, vector<8x8xbf16>, vector<8x8xf32> -> vector<8x8xf32>
    %102 = arith.truncf %101 : vector<8x8xf32> to vector<8x8xbf16>
    %c0_42 = arith.constant 0 : index
    %c24 = arith.constant 24 : index
    %103 = vector.load %arg30[%c0_42, %c24] : memref<8x32xbf16, #tpu.memory_space<vmem>>, vector<8x8xbf16>
    tpu.vector_store %arg30[%c0_42, %c24], %102 {strides = array<i32>} : memref<8x32xbf16, #tpu.memory_space<vmem>>, vector<8x8xbf16>,
    %c0_43 = arith.constant 0 : index
    %c0_44 = arith.constant 0 : index
    %104 = vector.load %arg30[%c0_43, %c0_44] : memref<8x32xbf16, #tpu.memory_space<vmem>>, vector<8x32xbf16>
    %c0_45 = arith.constant 0 : index
    %c0_46 = arith.constant 0 : index
    %105 = vector.load %arg9[%c0_45, %c0_46] : memref<32x32xbf16, #tpu.memory_space<vmem>>, vector<32x32xbf16>
    %cst_47 = arith.constant dense<0.000000e+00> : vector<8x32xf32>
    %106 = tpu.matmul %104, %105, %cst_47 {dimension_numbers = #tpu.dot_dimension_numbers<[1], [0], [0], [1], [0, 0, 1, 1], [], []>} : vector<8x32xbf16>, vector<32x32xbf16>, vector<8x32xf32> -> vector<8x32xf32>
    %107 = vector.shape_cast %28 : vector<32xf32> to vector<1x32xf32>
    %108 = vector.broadcast %107 : vector<1x32xf32> to vector<8x32xf32>
    %109 = arith.addf %106, %108 : vector<8x32xf32>
    %110 = arith.addf %1, %109 : vector<8x32xf32>
    %c0_48 = arith.constant 0 : index
    %c0_49 = arith.constant 0 : index
    %111 = vector.load %arg23[%c0_48, %c0_49] : memref<1x32xf32, #tpu.memory_space<vmem>>, vector<1x32xf32>
    %112 = vector.shape_cast %111 : vector<1x32xf32> to vector<32xf32>
    %c0_50 = arith.constant 0 : index
    %c0_51 = arith.constant 0 : index
    %113 = vector.load %arg24[%c0_50, %c0_51] : memref<1x32xf32, #tpu.memory_space<vmem>>, vector<1x32xf32>
    %114 = vector.shape_cast %113 : vector<1x32xf32> to vector<32xf32>
    %cst_52 = arith.constant dense<0.000000e+00> : vector<8xf32>
    %115 = vector.multi_reduction <add>, %110, %cst_52 [1] : vector<8x32xf32> to vector<8xf32>
    %116 = vector.shape_cast %115 : vector<8xf32> to vector<8x1xf32>
    %cst_53 = arith.constant 3.200000e+01 : f32
    %117 = vector.broadcast %cst_53 : f32 to vector<8x1xf32>
    %118 = arith.divf %116, %117 : vector<8x1xf32>
    %119 = vector.broadcast %118 : vector<8x1xf32> to vector<8x32xf32>
    %120 = arith.subf %110, %119 : vector<8x32xf32>
    %121 = arith.mulf %120, %120 : vector<8x32xf32>
    %cst_54 = arith.constant dense<0.000000e+00> : vector<8xf32>
    %122 = vector.multi_reduction <add>, %121, %cst_54 [1] : vector<8x32xf32> to vector<8xf32>
    %123 = vector.shape_cast %122 : vector<8xf32> to vector<8x1xf32>
    %cst_55 = arith.constant 3.200000e+01 : f32
    %124 = vector.broadcast %cst_55 : f32 to vector<8x1xf32>
    %125 = arith.divf %123, %124 : vector<8x1xf32>
    %cst_56 = arith.constant 9.99999974E-6 : f32
    %126 = vector.broadcast %cst_56 : f32 to vector<8x1xf32>
    %127 = arith.addf %125, %126 : vector<8x1xf32>
    %128 = math.rsqrt %127 : vector<8x1xf32>
    %129 = vector.broadcast %128 : vector<8x1xf32> to vector<8x32xf32>
    %130 = arith.mulf %120, %129 : vector<8x32xf32>
    %131 = vector.shape_cast %112 : vector<32xf32> to vector<1x32xf32>
    %132 = vector.broadcast %131 : vector<1x32xf32> to vector<8x32xf32>
    %133 = arith.mulf %130, %132 : vector<8x32xf32>
    %134 = vector.shape_cast %114 : vector<32xf32> to vector<1x32xf32>
    %135 = vector.broadcast %134 : vector<1x32xf32> to vector<8x32xf32>
    %136 = arith.addf %133, %135 : vector<8x32xf32>
    %137 = arith.addf %136, %5 : vector<8x32xf32>
    %138 = arith.truncf %137 : vector<8x32xf32> to vector<8x32xbf16>
    %139 = arith.addf %3, %7 : vector<8x32xf32>
    %140 = arith.truncf %139 : vector<8x32xf32> to vector<8x32xbf16>
    %141 = arith.truncf %3 : vector<8x32xf32> to vector<8x32xbf16>
    %c0_57 = arith.constant 0 : index
    %c0_58 = arith.constant 0 : index
    %142 = vector.load %arg11[%c0_57, %c0_58] : memref<32x32xbf16, #tpu.memory_space<vmem>>, vector<32x32xbf16>
    %cst_59 = arith.constant dense<0.000000e+00> : vector<8x32xf32>
    %143 = tpu.matmul %138, %142, %cst_59 {dimension_numbers = #tpu.dot_dimension_numbers<[1], [0], [0], [1], [0, 0, 1, 1], [], []>} : vector<8x32xbf16>, vector<32x32xbf16>, vector<8x32xf32> -> vector<8x32xf32>
    %c0_60 = arith.constant 0 : index
    %c0_61 = arith.constant 0 : index
    %144 = vector.load %arg12[%c0_60, %c0_61] : memref<1x32xf32, #tpu.memory_space<vmem>>, vector<1x32xf32>
    %145 = vector.shape_cast %144 : vector<1x32xf32> to vector<32xf32>
    %146 = vector.shape_cast %145 : vector<32xf32> to vector<1x32xf32>
    %147 = vector.broadcast %146 : vector<1x32xf32> to vector<8x32xf32>
    %148 = arith.addf %143, %147 : vector<8x32xf32>
    %c0_62 = arith.constant 0 : index
    %c0_63 = arith.constant 0 : index
    %149 = vector.load %arg13[%c0_62, %c0_63] : memref<32x32xbf16, #tpu.memory_space<vmem>>, vector<32x32xbf16>
    %cst_64 = arith.constant dense<0.000000e+00> : vector<8x32xf32>
    %150 = tpu.matmul %140, %149, %cst_64 {dimension_numbers = #tpu.dot_dimension_numbers<[1], [0], [0], [1], [0, 0, 1, 1], [], []>} : vector<8x32xbf16>, vector<32x32xbf16>, vector<8x32xf32> -> vector<8x32xf32>
    %c0_65 = arith.constant 0 : index
    %c0_66 = arith.constant 0 : index
    %151 = vector.load %arg14[%c0_65, %c0_66] : memref<1x32xf32, #tpu.memory_space<vmem>>, vector<1x32xf32>
    %152 = vector.shape_cast %151 : vector<1x32xf32> to vector<32xf32>
    %153 = vector.shape_cast %152 : vector<32xf32> to vector<1x32xf32>
    %154 = vector.broadcast %153 : vector<1x32xf32> to vector<8x32xf32>
    %155 = arith.addf %150, %154 : vector<8x32xf32>
    %c0_67 = arith.constant 0 : index
    %c0_68 = arith.constant 0 : index
    %156 = vector.load %arg15[%c0_67, %c0_68] : memref<32x32xbf16, #tpu.memory_space<vmem>>, vector<32x32xbf16>
    %cst_69 = arith.constant dense<0.000000e+00> : vector<8x32xf32>
    %157 = tpu.matmul %141, %156, %cst_69 {dimension_numbers = #tpu.dot_dimension_numbers<[1], [0], [0], [1], [0, 0, 1, 1], [], []>} : vector<8x32xbf16>, vector<32x32xbf16>, vector<8x32xf32> -> vector<8x32xf32>
    %c0_70 = arith.constant 0 : index
    %c0_71 = arith.constant 0 : index
    %158 = vector.load %arg16[%c0_70, %c0_71] : memref<1x32xf32, #tpu.memory_space<vmem>>, vector<1x32xf32>
    %159 = vector.shape_cast %158 : vector<1x32xf32> to vector<32xf32>
    %160 = vector.shape_cast %159 : vector<32xf32> to vector<1x32xf32>
    %161 = vector.broadcast %160 : vector<1x32xf32> to vector<8x32xf32>
    %162 = arith.addf %157, %161 : vector<8x32xf32>
    %c0_72 = arith.constant 0 : index
    %c0_73 = arith.constant 0 : index
    %163 = vector.load %arg18[%c0_72, %c0_73] : memref<1x32xf32, #tpu.memory_space<vmem>>, vector<1x32xf32>
    %164 = vector.shape_cast %163 : vector<1x32xf32> to vector<32xf32>
    %165 = arith.truncf %148 : vector<8x32xf32> to vector<8x32xbf16>
    %166 = arith.truncf %155 : vector<8x32xf32> to vector<8x32xbf16>
    %167 = arith.truncf %162 : vector<8x32xf32> to vector<8x32xbf16>
    %168 = vector.extract_strided_slice %165 {offsets = [0, 0], sizes = [8, 8], strides = [1, 1]} : vector<8x32xbf16> to vector<8x8xbf16>
    %169 = vector.extract_strided_slice %166 {offsets = [0, 0], sizes = [8, 8], strides = [1, 1]} : vector<8x32xbf16> to vector<8x8xbf16>
    %cst_74 = arith.constant dense<0.000000e+00> : vector<8x8xf32>
    %170 = tpu.matmul %168, %169, %cst_74 {dimension_numbers = #tpu.dot_dimension_numbers<[1], [1], [0], [0], [0, 0, 1, 0], [], []>} : vector<8x8xbf16>, vector<8x8xbf16>, vector<8x8xf32> -> vector<8x8xf32>
    %cst_75 = arith.constant dense<0xFF800000> : vector<8xf32>
    %171 = vector.multi_reduction <maximumf>, %170, %cst_75 [1] : vector<8x8xf32> to vector<8xf32>
    %172 = vector.shape_cast %171 : vector<8xf32> to vector<8x1xf32>
    %173 = vector.broadcast %172 : vector<8x1xf32> to vector<8x8xf32>
    %174 = arith.subf %170, %173 : vector<8x8xf32>
    %175 = math.exp %174 : vector<8x8xf32>
    %cst_76 = arith.constant dense<0.000000e+00> : vector<8xf32>
    %176 = vector.multi_reduction <add>, %175, %cst_76 [1] : vector<8x8xf32> to vector<8xf32>
    %177 = vector.shape_cast %176 : vector<8xf32> to vector<8x1xf32>
    %178 = tpu.reciprocal %177 {approx = true} : vector<8x1xf32> -> vector<8x1xf32>
    %179 = vector.broadcast %178 : vector<8x1xf32> to vector<8x8xf32>
    %180 = arith.mulf %175, %179 : vector<8x8xf32>
    %181 = arith.truncf %180 : vector<8x8xf32> to vector<8x8xbf16>
    %182 = vector.extract_strided_slice %167 {offsets = [0, 0], sizes = [8, 8], strides = [1, 1]} : vector<8x32xbf16> to vector<8x8xbf16>
    %cst_77 = arith.constant dense<0.000000e+00> : vector<8x8xf32>
    %183 = tpu.matmul %181, %182, %cst_77 {dimension_numbers = #tpu.dot_dimension_numbers<[1], [0], [0], [1], [0, 0, 1, 1], [], []>} : vector<8x8xbf16>, vector<8x8xbf16>, vector<8x8xf32> -> vector<8x8xf32>
    %184 = arith.truncf %183 : vector<8x8xf32> to vector<8x8xbf16>
    %c0_78 = arith.constant 0 : index
    %c0_79 = arith.constant 0 : index
    %185 = vector.load %arg30[%c0_78, %c0_79] : memref<8x32xbf16, #tpu.memory_space<vmem>>, vector<8x8xbf16>
    tpu.vector_store %arg30[%c0_78, %c0_79], %184 {strides = array<i32>} : memref<8x32xbf16, #tpu.memory_space<vmem>>, vector<8x8xbf16>,
    %186 = vector.extract_strided_slice %165 {offsets = [0, 8], sizes = [8, 8], strides = [1, 1]} : vector<8x32xbf16> to vector<8x8xbf16>
    %187 = vector.extract_strided_slice %166 {offsets = [0, 8], sizes = [8, 8], strides = [1, 1]} : vector<8x32xbf16> to vector<8x8xbf16>
    %cst_80 = arith.constant dense<0.000000e+00> : vector<8x8xf32>
    %188 = tpu.matmul %186, %187, %cst_80 {dimension_numbers = #tpu.dot_dimension_numbers<[1], [1], [0], [0], [0, 0, 1, 0], [], []>} : vector<8x8xbf16>, vector<8x8xbf16>, vector<8x8xf32> -> vector<8x8xf32>
    %cst_81 = arith.constant dense<0xFF800000> : vector<8xf32>
    %189 = vector.multi_reduction <maximumf>, %188, %cst_81 [1] : vector<8x8xf32> to vector<8xf32>
    %190 = vector.shape_cast %189 : vector<8xf32> to vector<8x1xf32>
    %191 = vector.broadcast %190 : vector<8x1xf32> to vector<8x8xf32>
    %192 = arith.subf %188, %191 : vector<8x8xf32>
    %193 = math.exp %192 : vector<8x8xf32>
    %cst_82 = arith.constant dense<0.000000e+00> : vector<8xf32>
    %194 = vector.multi_reduction <add>, %193, %cst_82 [1] : vector<8x8xf32> to vector<8xf32>
    %195 = vector.shape_cast %194 : vector<8xf32> to vector<8x1xf32>
    %196 = tpu.reciprocal %195 {approx = true} : vector<8x1xf32> -> vector<8x1xf32>
    %197 = vector.broadcast %196 : vector<8x1xf32> to vector<8x8xf32>
    %198 = arith.mulf %193, %197 : vector<8x8xf32>
    %199 = arith.truncf %198 : vector<8x8xf32> to vector<8x8xbf16>
    %200 = vector.extract_strided_slice %167 {offsets = [0, 8], sizes = [8, 8], strides = [1, 1]} : vector<8x32xbf16> to vector<8x8xbf16>
    %cst_83 = arith.constant dense<0.000000e+00> : vector<8x8xf32>
    %201 = tpu.matmul %199, %200, %cst_83 {dimension_numbers = #tpu.dot_dimension_numbers<[1], [0], [0], [1], [0, 0, 1, 1], [], []>} : vector<8x8xbf16>, vector<8x8xbf16>, vector<8x8xf32> -> vector<8x8xf32>
    %202 = arith.truncf %201 : vector<8x8xf32> to vector<8x8xbf16>
    %c0_84 = arith.constant 0 : index
    %c8_85 = arith.constant 8 : index
    %203 = vector.load %arg30[%c0_84, %c8_85] : memref<8x32xbf16, #tpu.memory_space<vmem>>, vector<8x8xbf16>
    tpu.vector_store %arg30[%c0_84, %c8_85], %202 {strides = array<i32>} : memref<8x32xbf16, #tpu.memory_space<vmem>>, vector<8x8xbf16>,
    %204 = vector.extract_strided_slice %165 {offsets = [0, 16], sizes = [8, 8], strides = [1, 1]} : vector<8x32xbf16> to vector<8x8xbf16>
    %205 = vector.extract_strided_slice %166 {offsets = [0, 16], sizes = [8, 8], strides = [1, 1]} : vector<8x32xbf16> to vector<8x8xbf16>
    %cst_86 = arith.constant dense<0.000000e+00> : vector<8x8xf32>
    %206 = tpu.matmul %204, %205, %cst_86 {dimension_numbers = #tpu.dot_dimension_numbers<[1], [1], [0], [0], [0, 0, 1, 0], [], []>} : vector<8x8xbf16>, vector<8x8xbf16>, vector<8x8xf32> -> vector<8x8xf32>
    %cst_87 = arith.constant dense<0xFF800000> : vector<8xf32>
    %207 = vector.multi_reduction <maximumf>, %206, %cst_87 [1] : vector<8x8xf32> to vector<8xf32>
    %208 = vector.shape_cast %207 : vector<8xf32> to vector<8x1xf32>
    %209 = vector.broadcast %208 : vector<8x1xf32> to vector<8x8xf32>
    %210 = arith.subf %206, %209 : vector<8x8xf32>
    %211 = math.exp %210 : vector<8x8xf32>
    %cst_88 = arith.constant dense<0.000000e+00> : vector<8xf32>
    %212 = vector.multi_reduction <add>, %211, %cst_88 [1] : vector<8x8xf32> to vector<8xf32>
    %213 = vector.shape_cast %212 : vector<8xf32> to vector<8x1xf32>
    %214 = tpu.reciprocal %213 {approx = true} : vector<8x1xf32> -> vector<8x1xf32>
    %215 = vector.broadcast %214 : vector<8x1xf32> to vector<8x8xf32>
    %216 = arith.mulf %211, %215 : vector<8x8xf32>
    %217 = arith.truncf %216 : vector<8x8xf32> to vector<8x8xbf16>
    %218 = vector.extract_strided_slice %167 {offsets = [0, 16], sizes = [8, 8], strides = [1, 1]} : vector<8x32xbf16> to vector<8x8xbf16>
    %cst_89 = arith.constant dense<0.000000e+00> : vector<8x8xf32>
    %219 = tpu.matmul %217, %218, %cst_89 {dimension_numbers = #tpu.dot_dimension_numbers<[1], [0], [0], [1], [0, 0, 1, 1], [], []>} : vector<8x8xbf16>, vector<8x8xbf16>, vector<8x8xf32> -> vector<8x8xf32>
    %220 = arith.truncf %219 : vector<8x8xf32> to vector<8x8xbf16>
    %c0_90 = arith.constant 0 : index
    %c16_91 = arith.constant 16 : index
    %221 = vector.load %arg30[%c0_90, %c16_91] : memref<8x32xbf16, #tpu.memory_space<vmem>>, vector<8x8xbf16>
    tpu.vector_store %arg30[%c0_90, %c16_91], %220 {strides = array<i32>} : memref<8x32xbf16, #tpu.memory_space<vmem>>, vector<8x8xbf16>,
    %222 = vector.extract_strided_slice %165 {offsets = [0, 24], sizes = [8, 8], strides = [1, 1]} : vector<8x32xbf16> to vector<8x8xbf16>
    %223 = vector.extract_strided_slice %166 {offsets = [0, 24], sizes = [8, 8], strides = [1, 1]} : vector<8x32xbf16> to vector<8x8xbf16>
    %cst_92 = arith.constant dense<0.000000e+00> : vector<8x8xf32>
    %224 = tpu.matmul %222, %223, %cst_92 {dimension_numbers = #tpu.dot_dimension_numbers<[1], [1], [0], [0], [0, 0, 1, 0], [], []>} : vector<8x8xbf16>, vector<8x8xbf16>, vector<8x8xf32> -> vector<8x8xf32>
    %cst_93 = arith.constant dense<0xFF800000> : vector<8xf32>
    %225 = vector.multi_reduction <maximumf>, %224, %cst_93 [1] : vector<8x8xf32> to vector<8xf32>
    %226 = vector.shape_cast %225 : vector<8xf32> to vector<8x1xf32>
    %227 = vector.broadcast %226 : vector<8x1xf32> to vector<8x8xf32>
    %228 = arith.subf %224, %227 : vector<8x8xf32>
    %229 = math.exp %228 : vector<8x8xf32>
    %cst_94 = arith.constant dense<0.000000e+00> : vector<8xf32>
    %230 = vector.multi_reduction <add>, %229, %cst_94 [1] : vector<8x8xf32> to vector<8xf32>
    %231 = vector.shape_cast %230 : vector<8xf32> to vector<8x1xf32>
    %232 = tpu.reciprocal %231 {approx = true} : vector<8x1xf32> -> vector<8x1xf32>
    %233 = vector.broadcast %232 : vector<8x1xf32> to vector<8x8xf32>
    %234 = arith.mulf %229, %233 : vector<8x8xf32>
    %235 = arith.truncf %234 : vector<8x8xf32> to vector<8x8xbf16>
    %236 = vector.extract_strided_slice %167 {offsets = [0, 24], sizes = [8, 8], strides = [1, 1]} : vector<8x32xbf16> to vector<8x8xbf16>
    %cst_95 = arith.constant dense<0.000000e+00> : vector<8x8xf32>
    %237 = tpu.matmul %235, %236, %cst_95 {dimension_numbers = #tpu.dot_dimension_numbers<[1], [0], [0], [1], [0, 0, 1, 1], [], []>} : vector<8x8xbf16>, vector<8x8xbf16>, vector<8x8xf32> -> vector<8x8xf32>
    %238 = arith.truncf %237 : vector<8x8xf32> to vector<8x8xbf16>
    %c0_96 = arith.constant 0 : index
    %c24_97 = arith.constant 24 : index
    %239 = vector.load %arg30[%c0_96, %c24_97] : memref<8x32xbf16, #tpu.memory_space<vmem>>, vector<8x8xbf16>
    tpu.vector_store %arg30[%c0_96, %c24_97], %238 {strides = array<i32>} : memref<8x32xbf16, #tpu.memory_space<vmem>>, vector<8x8xbf16>,
    %c0_98 = arith.constant 0 : index
    %c0_99 = arith.constant 0 : index
    %240 = vector.load %arg30[%c0_98, %c0_99] : memref<8x32xbf16, #tpu.memory_space<vmem>>, vector<8x32xbf16>
    %c0_100 = arith.constant 0 : index
    %c0_101 = arith.constant 0 : index
    %241 = vector.load %arg17[%c0_100, %c0_101] : memref<32x32xbf16, #tpu.memory_space<vmem>>, vector<32x32xbf16>
    %cst_102 = arith.constant dense<0.000000e+00> : vector<8x32xf32>
    %242 = tpu.matmul %240, %241, %cst_102 {dimension_numbers = #tpu.dot_dimension_numbers<[1], [0], [0], [1], [0, 0, 1, 1], [], []>} : vector<8x32xbf16>, vector<32x32xbf16>, vector<8x32xf32> -> vector<8x32xf32>
    %243 = vector.shape_cast %164 : vector<32xf32> to vector<1x32xf32>
    %244 = vector.broadcast %243 : vector<1x32xf32> to vector<8x32xf32>
    %245 = arith.addf %242, %244 : vector<8x32xf32>
    %246 = arith.addf %136, %245 : vector<8x32xf32>
    %c0_103 = arith.constant 0 : index
    %c0_104 = arith.constant 0 : index
    %247 = vector.load %arg25[%c0_103, %c0_104] : memref<1x32xf32, #tpu.memory_space<vmem>>, vector<1x32xf32>
    %248 = vector.shape_cast %247 : vector<1x32xf32> to vector<32xf32>
    %c0_105 = arith.constant 0 : index
    %c0_106 = arith.constant 0 : index
    %249 = vector.load %arg26[%c0_105, %c0_106] : memref<1x32xf32, #tpu.memory_space<vmem>>, vector<1x32xf32>
    %250 = vector.shape_cast %249 : vector<1x32xf32> to vector<32xf32>
    %cst_107 = arith.constant dense<0.000000e+00> : vector<8xf32>
    %251 = vector.multi_reduction <add>, %246, %cst_107 [1] : vector<8x32xf32> to vector<8xf32>
    %252 = vector.shape_cast %251 : vector<8xf32> to vector<8x1xf32>
    %cst_108 = arith.constant 3.200000e+01 : f32
    %253 = vector.broadcast %cst_108 : f32 to vector<8x1xf32>
    %254 = arith.divf %252, %253 : vector<8x1xf32>
    %255 = vector.broadcast %254 : vector<8x1xf32> to vector<8x32xf32>
    %256 = arith.subf %246, %255 : vector<8x32xf32>
    %257 = arith.mulf %256, %256 : vector<8x32xf32>
    %cst_109 = arith.constant dense<0.000000e+00> : vector<8xf32>
    %258 = vector.multi_reduction <add>, %257, %cst_109 [1] : vector<8x32xf32> to vector<8xf32>
    %259 = vector.shape_cast %258 : vector<8xf32> to vector<8x1xf32>
    %cst_110 = arith.constant 3.200000e+01 : f32
    %260 = vector.broadcast %cst_110 : f32 to vector<8x1xf32>
    %261 = arith.divf %259, %260 : vector<8x1xf32>
    %cst_111 = arith.constant 9.99999974E-6 : f32
    %262 = vector.broadcast %cst_111 : f32 to vector<8x1xf32>
    %263 = arith.addf %261, %262 : vector<8x1xf32>
    %264 = math.rsqrt %263 : vector<8x1xf32>
    %265 = vector.broadcast %264 : vector<8x1xf32> to vector<8x32xf32>
    %266 = arith.mulf %256, %265 : vector<8x32xf32>
    %267 = vector.shape_cast %248 : vector<32xf32> to vector<1x32xf32>
    %268 = vector.broadcast %267 : vector<1x32xf32> to vector<8x32xf32>
    %269 = arith.mulf %266, %268 : vector<8x32xf32>
    %270 = vector.shape_cast %250 : vector<32xf32> to vector<1x32xf32>
    %271 = vector.broadcast %270 : vector<1x32xf32> to vector<8x32xf32>
    %272 = arith.addf %269, %271 : vector<8x32xf32>
    %273 = arith.truncf %272 : vector<8x32xf32> to vector<8x32xbf16>
    %c0_112 = arith.constant 0 : index
    %c0_113 = arith.constant 0 : index
    %274 = vector.load %arg19[%c0_112, %c0_113] : memref<32x64xbf16, #tpu.memory_space<vmem>>, vector<32x64xbf16>
    %cst_114 = arith.constant dense<0.000000e+00> : vector<8x64xf32>
    %275 = tpu.matmul %273, %274, %cst_114 {dimension_numbers = #tpu.dot_dimension_numbers<[1], [0], [0], [1], [0, 0, 1, 1], [], []>} : vector<8x32xbf16>, vector<32x64xbf16>, vector<8x64xf32> -> vector<8x64xf32>
    %c0_115 = arith.constant 0 : index
    %c0_116 = arith.constant 0 : index
    %276 = vector.load %arg20[%c0_115, %c0_116] : memref<1x64xf32, #tpu.memory_space<vmem>>, vector<1x64xf32>
    %277 = vector.shape_cast %276 : vector<1x64xf32> to vector<64xf32>
    %278 = vector.shape_cast %277 : vector<64xf32> to vector<1x64xf32>
    %279 = vector.broadcast %278 : vector<1x64xf32> to vector<8x64xf32>
    %280 = arith.addf %275, %279 : vector<8x64xf32>
    %cst_117 = arith.constant 0.000000e+00 : f32
    %281 = vector.broadcast %cst_117 : f32 to vector<8x64xf32>
    %282 = arith.maximumf %280, %281 : vector<8x64xf32>
    %283 = arith.truncf %282 : vector<8x64xf32> to vector<8x64xbf16>
    %c0_118 = arith.constant 0 : index
    %c0_119 = arith.constant 0 : index
    %284 = vector.load %arg21[%c0_118, %c0_119] : memref<64x32xbf16, #tpu.memory_space<vmem>>, vector<64x32xbf16>
    %cst_120 = arith.constant dense<0.000000e+00> : vector<8x32xf32>
    %285 = tpu.matmul %283, %284, %cst_120 {dimension_numbers = #tpu.dot_dimension_numbers<[1], [0], [0], [1], [0, 0, 1, 1], [], []>} : vector<8x64xbf16>, vector<64x32xbf16>, vector<8x32xf32> -> vector<8x32xf32>
    %c0_121 = arith.constant 0 : index
    %c0_122 = arith.constant 0 : index
    %286 = vector.load %arg22[%c0_121, %c0_122] : memref<1x32xf32, #tpu.memory_space<vmem>>, vector<1x32xf32>
    %287 = vector.shape_cast %286 : vector<1x32xf32> to vector<32xf32>
    %288 = vector.shape_cast %287 : vector<32xf32> to vector<1x32xf32>
    %289 = vector.broadcast %288 : vector<1x32xf32> to vector<8x32xf32>
    %290 = arith.addf %285, %289 : vector<8x32xf32>
    %291 = arith.addf %272, %290 : vector<8x32xf32>
    %c0_123 = arith.constant 0 : index
    %c0_124 = arith.constant 0 : index
    %292 = vector.load %arg27[%c0_123, %c0_124] : memref<1x32xf32, #tpu.memory_space<vmem>>, vector<1x32xf32>
    %293 = vector.shape_cast %292 : vector<1x32xf32> to vector<32xf32>
    %c0_125 = arith.constant 0 : index
    %c0_126 = arith.constant 0 : index
    %294 = vector.load %arg28[%c0_125, %c0_126] : memref<1x32xf32, #tpu.memory_space<vmem>>, vector<1x32xf32>
    %295 = vector.shape_cast %294 : vector<1x32xf32> to vector<32xf32>
    %cst_127 = arith.constant dense<0.000000e+00> : vector<8xf32>
    %296 = vector.multi_reduction <add>, %291, %cst_127 [1] : vector<8x32xf32> to vector<8xf32>
    %297 = vector.shape_cast %296 : vector<8xf32> to vector<8x1xf32>
    %cst_128 = arith.constant 3.200000e+01 : f32
    %298 = vector.broadcast %cst_128 : f32 to vector<8x1xf32>
    %299 = arith.divf %297, %298 : vector<8x1xf32>
    %300 = vector.broadcast %299 : vector<8x1xf32> to vector<8x32xf32>
    %301 = arith.subf %291, %300 : vector<8x32xf32>
    %302 = arith.mulf %301, %301 : vector<8x32xf32>
    %cst_129 = arith.constant dense<0.000000e+00> : vector<8xf32>
    %303 = vector.multi_reduction <add>, %302, %cst_129 [1] : vector<8x32xf32> to vector<8xf32>
    %304 = vector.shape_cast %303 : vector<8xf32> to vector<8x1xf32>
    %cst_130 = arith.constant 3.200000e+01 : f32
    %305 = vector.broadcast %cst_130 : f32 to vector<8x1xf32>
    %306 = arith.divf %304, %305 : vector<8x1xf32>
    %cst_131 = arith.constant 9.99999974E-6 : f32
    %307 = vector.broadcast %cst_131 : f32 to vector<8x1xf32>
    %308 = arith.addf %306, %307 : vector<8x1xf32>
    %309 = math.rsqrt %308 : vector<8x1xf32>
    %310 = vector.broadcast %309 : vector<8x1xf32> to vector<8x32xf32>
    %311 = arith.mulf %301, %310 : vector<8x32xf32>
    %312 = vector.shape_cast %293 : vector<32xf32> to vector<1x32xf32>
    %313 = vector.broadcast %312 : vector<1x32xf32> to vector<8x32xf32>
    %314 = arith.mulf %311, %313 : vector<8x32xf32>
    %315 = vector.shape_cast %295 : vector<32xf32> to vector<1x32xf32>
    %316 = vector.broadcast %315 : vector<1x32xf32> to vector<8x32xf32>
    %317 = arith.addf %314, %316 : vector<8x32xf32>
    %c0_132 = arith.constant 0 : index
    %c0_133 = arith.constant 0 : index
    %c0_134 = arith.constant 0 : index
    %318 = vector.load %arg29[%c0_132, %c0_133, %c0_134] : memref<1x8x32xf32, #tpu.memory_space<vmem>>, vector<1x8x32xf32>
    %319 = vector.shape_cast %318 : vector<1x8x32xf32> to vector<8x32xf32>
    %320 = vector.shape_cast %317 : vector<8x32xf32> to vector<1x8x32xf32>
    tpu.vector_store %arg29[%c0_132, %c0_133, %c0_134], %320 {strides = array<i32>} : memref<1x8x32xf32, #tpu.memory_space<vmem>>, vector<1x8x32xf32>,
    return
  }
  func.func @transform_0(%arg0: i32) -> (i32, i32, i32) {
    %c0_i32 = arith.constant 0 : i32
    %c0_i32_0 = arith.constant 0 : i32
    %c0_i32_1 = arith.constant 0 : i32
    return %arg0, %c0_i32, %c0_i32_0 : i32, i32, i32
  }
  func.func @transform_1(%arg0: i32) -> (i32, i32, i32) {
    %c0_i32 = arith.constant 0 : i32
    %c0_i32_0 = arith.constant 0 : i32
    %c0_i32_1 = arith.constant 0 : i32
    return %arg0, %c0_i32, %c0_i32_0 : i32, i32, i32
  }
  func.func @transform_2(%arg0: i32) -> (i32, i32, i32) {
    %c0_i32 = arith.constant 0 : i32
    %c0_i32_0 = arith.constant 0 : i32
    %c0_i32_1 = arith.constant 0 : i32
    return %arg0, %c0_i32, %c0_i32_0 : i32, i32, i32
  }
  func.func @transform_3(%arg0: i32) -> (i32, i32, i32) {
    %c0_i32 = arith.constant 0 : i32
    %c0_i32_0 = arith.constant 0 : i32
    %c0_i32_1 = arith.constant 0 : i32
    return %arg0, %c0_i32, %c0_i32_0 : i32, i32, i32
  }
  func.func @transform_4(%arg0: i32) -> (i32, i32) {
    %c0_i32 = arith.constant 0 : i32
    %c0_i32_0 = arith.constant 0 : i32
    %c0_i32_1 = arith.constant 0 : i32
    return %c0_i32, %c0_i32_0 : i32, i32
  }
  func.func @transform_5(%arg0: i32) -> (i32, i32) {
    %c0_i32 = arith.constant 0 : i32
    %c0_i32_0 = arith.constant 0 : i32
    %c0_i32_1 = arith.constant 0 : i32
    return %c0_i32, %c0_i32_0 : i32, i32
  }
  func.func @transform_6(%arg0: i32) -> (i32, i32) {
    %c0_i32 = arith.constant 0 : i32
    %c0_i32_0 = arith.constant 0 : i32
    %c0_i32_1 = arith.constant 0 : i32
    return %c0_i32, %c0_i32_0 : i32, i32
  }
  func.func @transform_7(%arg0: i32) -> (i32, i32) {
    %c0_i32 = arith.constant 0 : i32
    %c0_i32_0 = arith.constant 0 : i32
    %c0_i32_1 = arith.constant 0 : i32
    return %c0_i32, %c0_i32_0 : i32, i32
  }
  func.func @transform_8(%arg0: i32) -> (i32, i32) {
    %c0_i32 = arith.constant 0 : i32
    %c0_i32_0 = arith.constant 0 : i32
    %c0_i32_1 = arith.constant 0 : i32
    return %c0_i32, %c0_i32_0 : i32, i32
  }
  func.func @transform_9(%arg0: i32) -> (i32, i32) {
    %c0_i32 = arith.constant 0 : i32
    %c0_i32_0 = arith.constant 0 : i32
    %c0_i32_1 = arith.constant 0 : i32
    return %c0_i32, %c0_i32_0 : i32, i32
  }
  func.func @transform_10(%arg0: i32) -> (i32, i32) {
    %c0_i32 = arith.constant 0 : i32
    %c0_i32_0 = arith.constant 0 : i32
    %c0_i32_1 = arith.constant 0 : i32
    return %c0_i32, %c0_i32_0 : i32, i32
  }
  func.func @transform_11(%arg0: i32) -> (i32, i32) {
    %c0_i32 = arith.constant 0 : i32
    %c0_i32_0 = arith.constant 0 : i32
    %c0_i32_1 = arith.constant 0 : i32
    return %c0_i32, %c0_i32_0 : i32, i32
  }
  func.func @transform_12(%arg0: i32) -> (i32, i32) {
    %c0_i32 = arith.constant 0 : i32
    %c0_i32_0 = arith.constant 0 : i32
    %c0_i32_1 = arith.constant 0 : i32
    return %c0_i32, %c0_i32_0 : i32, i32
  }
  func.func @transform_13(%arg0: i32) -> (i32, i32) {
    %c0_i32 = arith.constant 0 : i32
    %c0_i32_0 = arith.constant 0 : i32
    %c0_i32_1 = arith.constant 0 : i32
    return %c0_i32, %c0_i32_0 : i32, i32
  }
  func.func @transform_14(%arg0: i32) -> (i32, i32) {
    %c0_i32 = arith.constant 0 : i32
    %c0_i32_0 = arith.constant 0 : i32
    %c0_i32_1 = arith.constant 0 : i32
    return %c0_i32, %c0_i32_0 : i32, i32
  }
  func.func @transform_15(%arg0: i32) -> (i32, i32) {
    %c0_i32 = arith.constant 0 : i32
    %c0_i32_0 = arith.constant 0 : i32
    %c0_i32_1 = arith.constant 0 : i32
    return %c0_i32, %c0_i32_0 : i32, i32
  }
  func.func @transform_16(%arg0: i32) -> (i32, i32) {
    %c0_i32 = arith.constant 0 : i32
    %c0_i32_0 = arith.constant 0 : i32
    %c0_i32_1 = arith.constant 0 : i32
    return %c0_i32, %c0_i32_0 : i32, i32
  }
  func.func @transform_17(%arg0: i32) -> (i32, i32) {
    %c0_i32 = arith.constant 0 : i32
    %c0_i32_0 = arith.constant 0 : i32
    %c0_i32_1 = arith.constant 0 : i32
    return %c0_i32, %c0_i32_0 : i32, i32
  }
  func.func @transform_18(%arg0: i32) -> (i32, i32) {
    %c0_i32 = arith.constant 0 : i32
    %c0_i32_0 = arith.constant 0 : i32
    %c0_i32_1 = arith.constant 0 : i32
    return %c0_i32, %c0_i32_0 : i32, i32
  }
  func.func @transform_19(%arg0: i32) -> (i32, i32) {
    %c0_i32 = arith.constant 0 : i32
    %c0_i32_0 = arith.constant 0 : i32
    %c0_i32_1 = arith.constant 0 : i32
    return %c0_i32, %c0_i32_0 : i32, i32
  }
  func.func @transform_20(%arg0: i32) -> (i32, i32) {
    %c0_i32 = arith.constant 0 : i32
    %c0_i32_0 = arith.constant 0 : i32
    %c0_i32_1 = arith.constant 0 : i32
    return %c0_i32, %c0_i32_0 : i32, i32
  }
  func.func @transform_21(%arg0: i32) -> (i32, i32) {
    %c0_i32 = arith.constant 0 : i32
    %c0_i32_0 = arith.constant 0 : i32
    %c0_i32_1 = arith.constant 0 : i32
    return %c0_i32, %c0_i32_0 : i32, i32
  }
  func.func @transform_22(%arg0: i32) -> (i32, i32) {
    %c0_i32 = arith.constant 0 : i32
    %c0_i32_0 = arith.constant 0 : i32
    %c0_i32_1 = arith.constant 0 : i32
    return %c0_i32, %c0_i32_0 : i32, i32
  }
  func.func @transform_23(%arg0: i32) -> (i32, i32) {
    %c0_i32 = arith.constant 0 : i32
    %c0_i32_0 = arith.constant 0 : i32
    %c0_i32_1 = arith.constant 0 : i32
    return %c0_i32, %c0_i32_0 : i32, i32
  }
  func.func @transform_24(%arg0: i32) -> (i32, i32) {
    %c0_i32 = arith.constant 0 : i32
    %c0_i32_0 = arith.constant 0 : i32
    %c0_i32_1 = arith.constant 0 : i32
    return %c0_i32, %c0_i32_0 : i32, i32
  }
  func.func @transform_25(%arg0: i32) -> (i32, i32) {
    %c0_i32 = arith.constant 0 : i32
    %c0_i32_0 = arith.constant 0 : i32
    %c0_i32_1 = arith.constant 0 : i32
    return %c0_i32, %c0_i32_0 : i32, i32
  }
  func.func @transform_26(%arg0: i32) -> (i32, i32) {
    %c0_i32 = arith.constant 0 : i32
    %c0_i32_0 = arith.constant 0 : i32
    %c0_i32_1 = arith.constant 0 : i32
    return %c0_i32, %c0_i32_0 : i32, i32
  }
  func.func @transform_27(%arg0: i32) -> (i32, i32) {
    %c0_i32 = arith.constant 0 : i32
    %c0_i32_0 = arith.constant 0 : i32
    %c0_i32_1 = arith.constant 0 : i32
    return %c0_i32, %c0_i32_0 : i32, i32
  }
  func.func @transform_28(%arg0: i32) -> (i32, i32, i32) {
    %c0_i32 = arith.constant 0 : i32
    %c0_i32_0 = arith.constant 0 : i32
    %c0_i32_1 = arith.constant 0 : i32
    return %arg0, %c0_i32, %c0_i32_0 : i32, i32, i32
  }
}

</mosaic_0001>

<llo_original>
// kernel: tpu_custom_call.1
$region0: #{tpu_custom_call.1}
  #allocation0 [shape = 'u32[]', space=smem, size = 0x4, offset = 0x4, fixed_abs, tag = 'smem constant byte address 0x4 - core index']
  #allocation1 [shape = 'u32[144,128]{1,0:T(1,128)}', space=vmem, size = 0x12000, scoped, tag = 'internal scratch']
  #allocation2 [shape = 'bf16[8,32]{1,0:T(8,128)(2,1)}', space=vmem, size = 0x800, scoped, tag = 'scratch operand']
  %s0 = inlined_call_operand.hbm [shape: f32[2,8,32], index: 0, kind: input, shape index: {}]
  %s1 = inlined_call_operand.hbm [shape: f32[2,8,32], index: 1, kind: input, shape index: {}]
  %s2 = inlined_call_operand.hbm [shape: f32[2,8,32], index: 2, kind: input, shape index: {}]
  %s3 = inlined_call_operand.hbm [shape: f32[2,8,32], index: 3, kind: input, shape index: {}]
  %s4 = inlined_call_operand.hbm [shape: bf16[32,64], index: 4, kind: input, shape index: {}]
  %s5 = inlined_call_operand.hbm [shape: f32[1,64], index: 5, kind: input, shape index: {}]
  %s6 = inlined_call_operand.hbm [shape: bf16[32,32], index: 6, kind: input, shape index: {}]
  %s7 = inlined_call_operand.hbm [shape: f32[1,32], index: 7, kind: input, shape index: {}]
  %s8 = inlined_call_operand.hbm [shape: bf16[32,32], index: 8, kind: input, shape index: {}]
  %s9 = inlined_call_operand.hbm [shape: f32[1,32], index: 9, kind: input, shape index: {}]
  %s10 = inlined_call_operand.hbm [shape: bf16[32,32], index: 10, kind: input, shape index: {}]
  %s11 = inlined_call_operand.hbm [shape: f32[1,32], index: 11, kind: input, shape index: {}]
  %s12 = inlined_call_operand.hbm [shape: bf16[32,32], index: 12, kind: input, shape index: {}]
  %s13 = inlined_call_operand.hbm [shape: f32[1,32], index: 13, kind: input, shape index: {}]
  %s14 = inlined_call_operand.hbm [shape: bf16[32,32], index: 14, kind: input, shape index: {}]
  %s15 = inlined_call_operand.hbm [shape: f32[1,32], index: 15, kind: input, shape index: {}]
  %s16 = inlined_call_operand.hbm [shape: bf16[32,32], index: 16, kind: input, shape index: {}]
  %s17 = inlined_call_operand.hbm [shape: f32[1,32], index: 17, kind: input, shape index: {}]
  %s18 = inlined_call_operand.hbm [shape: bf16[32,64], index: 18, kind: input, shape index: {}]
  %s19 = inlined_call_operand.hbm [shape: f32[1,64], index: 19, kind: input, shape index: {}]
  %s20 = inlined_call_operand.hbm [shape: bf16[64,32], index: 20, kind: input, shape index: {}]
  %s21 = inlined_call_operand.hbm [shape: f32[1,32], index: 21, kind: input, shape index: {}]
  %s22 = inlined_call_operand.hbm [shape: f32[1,32], index: 22, kind: input, shape index: {}]
  %s23 = inlined_call_operand.hbm [shape: f32[1,32], index: 23, kind: input, shape index: {}]
  %s24 = inlined_call_operand.hbm [shape: f32[1,32], index: 24, kind: input, shape index: {}]
  %s25 = inlined_call_operand.hbm [shape: f32[1,32], index: 25, kind: input, shape index: {}]
  %s26 = inlined_call_operand.hbm [shape: f32[1,32], index: 26, kind: input, shape index: {}]
  %s27 = inlined_call_operand.hbm [shape: f32[1,32], index: 27, kind: input, shape index: {}]
  %s28 = inlined_call_operand.hbm [shape: f32[2,8,32], index: 28, kind: output, shape index: {}]
  %s29 = sld [smem:[#allocation0]]
  $region257: #{tpu_custom_call.1} parent=0
    _
  %s31 = ssub.s32 1, %s29
  %s32 = scalar_select 0, %s31, %s29
  $region1: #{tpu_custom_call.1} parent=0
    #allocation3 [shape = 'u8[8192]{0}', space=vmem, size = 0x2000, scoped, tag = 'input window, operand 0']
    #allocation4 [shape = 's32[2]{0}', space=sflag, size = 0x8, scoped, tag = 'scoped memory for tpu_custom_call.1']
    #allocation5 [shape = 's32[2]{0}', space=sflag, size = 0x8, scoped, tag = 'scoped memory for tpu_custom_call.1']
    #allocation6 [shape = 'u8[8192]{0}', space=vmem, size = 0x2000, scoped, tag = 'input window, operand 1']
    #allocation7 [shape = 's32[2]{0}', space=sflag, size = 0x8, scoped, tag = 'scoped memory for tpu_custom_call.1']
    #allocation8 [shape = 'u8[8192]{0}', space=vmem, size = 0x2000, scoped, tag = 'input window, operand 2']
    #allocation9 [shape = 'u8[8192]{0}', space=vmem, size = 0x2000, scoped, tag = 'input window, operand 3']
    #allocation10 [shape = 's32[2]{0}', space=sflag, size = 0x8, scoped, tag = 'scoped memory for tpu_custom_call.1']
    #allocation11 [shape = 'u8[8192]{0}', space=vmem, size = 0x2000, scoped, tag = 'input window, operand 4, single buffered']
    #allocation12 [shape = 'u8[512]{0}', space=vmem, size = 0x400, scoped, tag = 'input window, operand 5, single buffered']
    #allocation13 [shape = 's32[1]{0}', space=sflag, size = 0x4, scoped, tag = 'scoped memory for tpu_custom_call.1']
    #allocation14 [shape = 'u8[8192]{0}', space=vmem, size = 0x2000, scoped, tag = 'input window, operand 6, single buffered']
    #allocation15 [shape = 'u8[512]{0}', space=vmem, size = 0x400, scoped, tag = 'input window, operand 7, single buffered']
    #allocation16 [shape = 's32[1]{0}', space=sflag, size = 0x4, scoped, tag = 'scoped memory for tpu_custom_call.1']
    #allocation17 [shape = 'u8[8192]{0}', space=vmem, size = 0x2000, scoped, tag = 'input window, operand 8, single buffered']
    #allocation18 [shape = 'u8[512]{0}', space=vmem, size = 0x400, scoped, tag = 'input window, operand 9, single buffered']
    #allocation19 [shape = 's32[1]{0}', space=sflag, size = 0x4, scoped, tag = 'scoped memory for tpu_custom_call.1']
    #allocation20 [shape = 'u8[8192]{0}', space=vmem, size = 0x2000, scoped, tag = 'input window, operand 10, single buffered']
    #allocation21 [shape = 'u8[512]{0}', space=vmem, size = 0x400, scoped, tag = 'input window, operand 11, single buffered']
    #allocation22 [shape = 's32[1]{0}', space=sflag, size = 0x4, scoped, tag = 'scoped memory for tpu_custom_call.1']
    #allocation23 [shape = 'u8[8192]{0}', space=vmem, size = 0x2000, scoped, tag = 'input window, operand 12, single buffered']
    #allocation24 [shape = 'u8[512]{0}', space=vmem, size = 0x400, scoped, tag = 'input window, operand 13, single buffered']
    #allocation25 [shape = 's32[1]{0}', space=sflag, size = 0x4, scoped, tag = 'scoped memory for tpu_custom_call.1']
    #allocation26 [shape = 'u8[8192]{0}', space=vmem, size = 0x2000, scoped, tag = 'input window, operand 14, single buffered']
    #allocation27 [shape = 'u8[512]{0}', space=vmem, size = 0x400, scoped, tag = 'input window, operand 15, single buffered']
    #allocation28 [shape = 's32[1]{0}', space=sflag, size = 0x4, scoped, tag = 'scoped memory for tpu_custom_call.1']
    #allocation29 [shape = 'u8[8192]{0}', space=vmem, size = 0x2000, scoped, tag = 'input window, operand 16, single buffered']
    #allocation30 [shape = 'u8[512]{0}', space=vmem, size = 0x400, scoped, tag = 'input window, operand 17, single buffered']
    #allocation31 [shape = 's32[1]{0}', space=sflag, size = 0x4, scoped, tag = 'scoped memory for tpu_custom_call.1']
    #allocation32 [shape = 'u8[8192]{0}', space=vmem, size = 0x2000, scoped, tag = 'input window, operand 18, single buffered']
    #allocation33 [shape = 'u8[512]{0}', space=vmem, size = 0x400, scoped, tag = 'input window, operand 19, single buffered']
    #allocation34 [shape = 's32[1]{0}', space=sflag, size = 0x4, scoped, tag = 'scoped memory for tpu_custom_call.1']
    #allocation35 [shape = 'u8[16384]{0}', space=vmem, size = 0x4000, scoped, tag = 'input window, operand 20, single buffered']
    #allocation36 [shape = 'u8[512]{0}', space=vmem, size = 0x400, scoped, tag = 'input window, operand 21, single buffered']
    #allocation37 [shape = 's32[1]{0}', space=sflag, size = 0x4, scoped, tag = 'scoped memory for tpu_custom_call.1']
    #allocation38 [shape = 'u8[512]{0}', space=vmem, size = 0x400, scoped, tag = 'input window, operand 22, single buffered']
    #allocation39 [shape = 'u8[512]{0}', space=vmem, size = 0x400, scoped, tag = 'input window, operand 23, single buffered']
    #allocation40 [shape = 's32[1]{0}', space=sflag, size = 0x4, scoped, tag = 'scoped memory for tpu_custom_call.1']
    #allocation41 [shape = 'u8[512]{0}', space=vmem, size = 0x400, scoped, tag = 'input window, operand 24, single buffered']
    #allocation42 [shape = 'u8[512]{0}', space=vmem, size = 0x400, scoped, tag = 'input window, operand 25, single buffered']
    #allocation43 [shape = 's32[1]{0}', space=sflag, size = 0x4, scoped, tag = 'scoped memory for tpu_custom_call.1']
    #allocation44 [shape = 'u8[512]{0}', space=vmem, size = 0x400, scoped, tag = 'input window, operand 26, single buffered']
    #allocation45 [shape = 'u8[512]{0}', space=vmem, size = 0x400, scoped, tag = 'input window, operand 27, single buffered']
    #allocation46 [shape = 's32[1]{0}', space=sflag, size = 0x4, scoped, tag = 'scoped memory for tpu_custom_call.1']
    #allocation47 [shape = 'u8[8192]{0}', space=vmem, size = 0x2000, scoped, tag = 'output window, operand 0']
    %33 = vsyncpa [#allocation4], 0
    %s34 = scalar_lea.sflag [#allocation4], 1
    %35 = vsyncpa %s34, 0
    %36 = vsyncpa [#allocation7], 0
    %s37 = scalar_lea.sflag [#allocation7], 1
    %38 = vsyncpa %s37, 0
    %39 = vsyncpa [#allocation10], 0
    %s40 = scalar_lea.sflag [#allocation10], 1
    %41 = vsyncpa %s40, 0
    %42 = vsyncpa [#allocation13], 0
    %43 = vsyncpa [#allocation16], 0
    %44 = vsyncpa [#allocation19], 0
    %45 = vsyncpa [#allocation22], 0
    %46 = vsyncpa [#allocation25], 0
    %47 = vsyncpa [#allocation28], 0
    %48 = vsyncpa [#allocation31], 0
    %49 = vsyncpa [#allocation34], 0
    %50 = vsyncpa [#allocation37], 0
    %51 = vsyncpa [#allocation40], 0
    %52 = vsyncpa [#allocation43], 0
    %53 = vsyncpa [#allocation46], 0
    %54 = vsyncpa [#allocation5], 0
    %s55 = scalar_lea.sflag [#allocation5], 1
    %56 = vsyncpa %s55, 0
    loop: start=0, step=1, limit=4
    $region2: #{tpu_custom_call.1} parent=1 // loop_pre_header
      _
    $region3: #{tpu_custom_call.1} parent=1 // loop_header
      %s58 = sphi 0, %s62
      %p59 = scmp.ge.s32.totalorder %s58, 4
      %s68 = sphi 0, %s70
      %s71 = sphi 0, %s68
      %s72 = sphi 0, %s71
      %s88 = sphi 0, %s72
      %s94 = sphi 0, %s96
      %s97 = sphi 0, %s94
      %s98 = sphi 0, %s97
      %s114 = sphi 0, %s98
      %s120 = sphi 0, %s122
      %s123 = sphi 0, %s120
      %s124 = sphi 0, %s123
      %s140 = sphi 0, %s124
      %s146 = sphi 0, %s148
      %s149 = sphi 0, %s146
      %s150 = sphi 0, %s149
      %s166 = sphi 0, %s150
      %s170 = sphi 0, %s170
      %s172 = sphi 0, %s170
      %s173 = sphi 0, %s172
      %s187 = sphi 0, %s173
      %s191 = sphi 0, %s191
      %s193 = sphi 0, %s191
      %s194 = sphi 0, %s193
      %s208 = sphi 0, %s194
      %s212 = sphi 0, %s212
      %s214 = sphi 0, %s212
      %s215 = sphi 0, %s214
      %s229 = sphi 0, %s215
      %s233 = sphi 0, %s233
      %s235 = sphi 0, %s233
      %s236 = sphi 0, %s235
      %s250 = sphi 0, %s236
      %s254 = sphi 0, %s254
      %s256 = sphi 0, %s254
      %s257 = sphi 0, %s256
      %s271 = sphi 0, %s257
      %s275 = sphi 0, %s275
      %s277 = sphi 0, %s275
      %s278 = sphi 0, %s277
      %s292 = sphi 0, %s278
      %s296 = sphi 0, %s296
      %s298 = sphi 0, %s296
      %s299 = sphi 0, %s298
      %s313 = sphi 0, %s299
      %s317 = sphi 0, %s317
      %s319 = sphi 0, %s317
      %s320 = sphi 0, %s319
      %s334 = sphi 0, %s320
      %s338 = sphi 0, %s338
      %s340 = sphi 0, %s338
      %s341 = sphi 0, %s340
      %s355 = sphi 0, %s341
      %s359 = sphi 0, %s359
      %s361 = sphi 0, %s359
      %s362 = sphi 0, %s361
      %s376 = sphi 0, %s362
      %s380 = sphi 0, %s380
      %s382 = sphi 0, %s380
      %s383 = sphi 0, %s382
      %s397 = sphi 0, %s383
      %s401 = sphi 0, %s401
      %s403 = sphi 0, %s401
      %s404 = sphi 0, %s403
      %s418 = sphi 0, %s404
      %s422 = sphi 0, %s422
      %s424 = sphi 0, %s422
      %s425 = sphi 0, %s424
      %s439 = sphi 0, %s425
      %s443 = sphi 0, %s443
      %s445 = sphi 0, %s443
      %s446 = sphi 0, %s445
      %s460 = sphi 0, %s446
      %s464 = sphi 0, %s464
      %s466 = sphi 0, %s464
      %s467 = sphi 0, %s466
      %s481 = sphi 0, %s467
      %s485 = sphi 0, %s485
      %s487 = sphi 0, %s485
      %s488 = sphi 0, %s487
      %s502 = sphi 0, %s488
      %s506 = sphi 0, %s506
      %s508 = sphi 0, %s506
      %s509 = sphi 0, %s508
      %s523 = sphi 0, %s509
      %s527 = sphi 0, %s527
      %s529 = sphi 0, %s527
      %s530 = sphi 0, %s529
      %s544 = sphi 0, %s530
      %s548 = sphi 0, %s548
      %s550 = sphi 0, %s548
      %s551 = sphi 0, %s550
      %s565 = sphi 0, %s551
      %s569 = sphi 0, %s569
      %s571 = sphi 0, %s569
      %s572 = sphi 0, %s571
      %s586 = sphi 0, %s572
      %s590 = sphi 0, %s590
      %s592 = sphi 0, %s590
      %s593 = sphi 0, %s592
      %s607 = sphi 0, %s593
      %s611 = sphi 0, %s611
      %s613 = sphi 0, %s611
      %s614 = sphi 0, %s613
      %s628 = sphi 0, %s614
      %s632 = sphi 0, %s632
      %s634 = sphi 0, %s632
      %s635 = sphi 0, %s634
      %s649 = sphi 0, %s635
      %s653 = sphi 0, %s653
      %s655 = sphi 0, %s653
      %s656 = sphi 0, %s655
      %s670 = sphi 0, %s656
      %s676 = sphi 0, %s678
      %s679 = sphi 0, %s676
      %s680 = sphi 0, %s679
      %s696 = sphi 0, %s680
    $region4: #{tpu_custom_call.1} parent=1 // loop_header_branch
      %61 = sbr.rel (%p59) target = $region8
    $region5: #{tpu_custom_call.1} parent=1 // loop_body
      %s63 = ssub.s32 %s58, 1
      %s64 = ssub.s32 %s58, 2
      %s65 = sadd.s32 %s58, 1
      %s66 = ssub.s32 %s58, %s65
      %p67 = scmp.eq.s32.totalorder %s66, 0
      %s69 = sadd.s32 %s68, 1
      %s70 = scalar_select %p67, %s68, %s69
      %p73 = pneg %p67
      %p74 = scmp.eq.s32.totalorder %s58, 1
      %p75 = por %p73, %p74
      %p76 = scmp.ne.s32.totalorder %s68, %s71
      %p77 = scmp.eq.s32.totalorder %s58, 0
      %p78 = por %p76, %p77
      %p79 = scmp.ne.s32.totalorder %s68, %s71
      %p80 = scmp.eq.s32.totalorder %s63, 1
      %p81 = por %p79, %p80
      %p82 = scmp.ne.s32.totalorder %s71, %s72
      %p83 = scmp.eq.s32.totalorder %s63, 0
      %p84 = por %p82, %p83
      %p85 = scmp.ne.s32.totalorder %s71, %s72
      %p86 = scmp.eq.s32.totalorder %s64, 1
      %p87 = por %p85, %p86
      %p89 = scmp.ne.s32.totalorder %s72, %s88
      %p90 = scmp.eq.s32.totalorder %s64, 0
      %p91 = por %p89, %p90
      %s92 = ssub.s32 %s58, %s65
      %p93 = scmp.eq.s32.totalorder %s92, 0
      %s95 = sadd.s32 %s94, 1
      %s96 = scalar_select %p93, %s94, %s95
      %p99 = pneg %p93
      %p100 = scmp.eq.s32.totalorder %s58, 1
      %p101 = por %p99, %p100
      %p102 = scmp.ne.s32.totalorder %s94, %s97
      %p103 = scmp.eq.s32.totalorder %s58, 0
      %p104 = por %p102, %p103
      %p105 = scmp.ne.s32.totalorder %s94, %s97
      %p106 = scmp.eq.s32.totalorder %s63, 1
      %p107 = por %p105, %p106
      %p108 = scmp.ne.s32.totalorder %s97, %s98
      %p109 = scmp.eq.s32.totalorder %s63, 0
      %p110 = por %p108, %p109
      %p111 = scmp.ne.s32.totalorder %s97, %s98
      %p112 = scmp.eq.s32.totalorder %s64, 1
      %p113 = por %p111, %p112
      %p115 = scmp.ne.s32.totalorder %s98, %s114
      %p116 = scmp.eq.s32.totalorder %s64, 0
      %p117 = por %p115, %p116
      %s118 = ssub.s32 %s58, %s65
      %p119 = scmp.eq.s32.totalorder %s118, 0
      %s121 = sadd.s32 %s120, 1
      %s122 = scalar_select %p119, %s120, %s121
      %p125 = pneg %p119
      %p126 = scmp.eq.s32.totalorder %s58, 1
      %p127 = por %p125, %p126
      %p128 = scmp.ne.s32.totalorder %s120, %s123
      %p129 = scmp.eq.s32.totalorder %s58, 0
      %p130 = por %p128, %p129
      %p131 = scmp.ne.s32.totalorder %s120, %s123
      %p132 = scmp.eq.s32.totalorder %s63, 1
      %p133 = por %p131, %p132
      %p134 = scmp.ne.s32.totalorder %s123, %s124
      %p135 = scmp.eq.s32.totalorder %s63, 0
      %p136 = por %p134, %p135
      %p137 = scmp.ne.s32.totalorder %s123, %s124
      %p138 = scmp.eq.s32.totalorder %s64, 1
      %p139 = por %p137, %p138
      %p141 = scmp.ne.s32.totalorder %s124, %s140
      %p142 = scmp.eq.s32.totalorder %s64, 0
      %p143 = por %p141, %p142
      %s144 = ssub.s32 %s58, %s65
      %p145 = scmp.eq.s32.totalorder %s144, 0
      %s147 = sadd.s32 %s146, 1
      %s148 = scalar_select %p145, %s146, %s147
      %p151 = pneg %p145
      %p152 = scmp.eq.s32.totalorder %s58, 1
      %p153 = por %p151, %p152
      %p154 = scmp.ne.s32.totalorder %s146, %s149
      %p155 = scmp.eq.s32.totalorder %s58, 0
      %p156 = por %p154, %p155
      %p157 = scmp.ne.s32.totalorder %s146, %s149
      %p158 = scmp.eq.s32.totalorder %s63, 1
      %p159 = por %p157, %p158
      %p160 = scmp.ne.s32.totalorder %s149, %s150
      %p161 = scmp.eq.s32.totalorder %s63, 0
      %p162 = por %p160, %p161
      %p163 = scmp.ne.s32.totalorder %s149, %s150
      %p164 = scmp.eq.s32.totalorder %s64, 1
      %p165 = por %p163, %p164
      %p167 = scmp.ne.s32.totalorder %s150, %s166
      %p168 = scmp.eq.s32.totalorder %s64, 0
      %p169 = por %p167, %p168
      %s171 = sadd.s32 %s170, 1
      %p174 = scmp.eq.s32.totalorder %s58, 1
      %p175 = scmp.ne.s32.totalorder %s170, %s172
      %p176 = scmp.eq.s32.totalorder %s58, 0
      %p177 = por %p175, %p176
      %p178 = scmp.ne.s32.totalorder %s170, %s172
      %p179 = scmp.eq.s32.totalorder %s63, 1
      %p180 = por %p178, %p179
      %p181 = scmp.ne.s32.totalorder %s172, %s173
      %p182 = scmp.eq.s32.totalorder %s63, 0
      %p183 = por %p181, %p182
      %p184 = scmp.ne.s32.totalorder %s172, %s173
      %p185 = scmp.eq.s32.totalorder %s64, 1
      %p186 = por %p184, %p185
      %p188 = scmp.ne.s32.totalorder %s173, %s187
      %p189 = scmp.eq.s32.totalorder %s64, 0
      %p190 = por %p188, %p189
      %s192 = sadd.s32 %s191, 1
      %p195 = scmp.eq.s32.totalorder %s58, 1
      %p196 = scmp.ne.s32.totalorder %s191, %s193
      %p197 = scmp.eq.s32.totalorder %s58, 0
      %p198 = por %p196, %p197
      %p199 = scmp.ne.s32.totalorder %s191, %s193
      %p200 = scmp.eq.s32.totalorder %s63, 1
      %p201 = por %p199, %p200
      %p202 = scmp.ne.s32.totalorder %s193, %s194
      %p203 = scmp.eq.s32.totalorder %s63, 0
      %p204 = por %p202, %p203
      %p205 = scmp.ne.s32.totalorder %s193, %s194
      %p206 = scmp.eq.s32.totalorder %s64, 1
      %p207 = por %p205, %p206
      %p209 = scmp.ne.s32.totalorder %s194, %s208
      %p210 = scmp.eq.s32.totalorder %s64, 0
      %p211 = por %p209, %p210
      %s213 = sadd.s32 %s212, 1
      %p216 = scmp.eq.s32.totalorder %s58, 1
      %p217 = scmp.ne.s32.totalorder %s212, %s214
      %p218 = scmp.eq.s32.totalorder %s58, 0
      %p219 = por %p217, %p218
      %p220 = scmp.ne.s32.totalorder %s212, %s214
      %p221 = scmp.eq.s32.totalorder %s63, 1
      %p222 = por %p220, %p221
      %p223 = scmp.ne.s32.totalorder %s214, %s215
      %p224 = scmp.eq.s32.totalorder %s63, 0
      %p225 = por %p223, %p224
      %p226 = scmp.ne.s32.totalorder %s214, %s215
      %p227 = scmp.eq.s32.totalorder %s64, 1
      %p228 = por %p226, %p227
      %p230 = scmp.ne.s32.totalorder %s215, %s229
      %p231 = scmp.eq.s32.totalorder %s64, 0
      %p232 = por %p230, %p231
      %s234 = sadd.s32 %s233, 1
      %p237 = scmp.eq.s32.totalorder %s58, 1
      %p238 = scmp.ne.s32.totalorder %s233, %s235
      %p239 = scmp.eq.s32.totalorder %s58, 0
      %p240 = por %p238, %p239
      %p241 = scmp.ne.s32.totalorder %s233, %s235
      %p242 = scmp.eq.s32.totalorder %s63, 1
      %p243 = por %p241, %p242
      %p244 = scmp.ne.s32.totalorder %s235, %s236
      %p245 = scmp.eq.s32.totalorder %s63, 0
      %p246 = por %p244, %p245
      %p247 = scmp.ne.s32.totalorder %s235, %s236
      %p248 = scmp.eq.s32.totalorder %s64, 1
      %p249 = por %p247, %p248
      %p251 = scmp.ne.s32.totalorder %s236, %s250
      %p252 = scmp.eq.s32.totalorder %s64, 0
      %p253 = por %p251, %p252
      %s255 = sadd.s32 %s254, 1
      %p258 = scmp.eq.s32.totalorder %s58, 1
      %p259 = scmp.ne.s32.totalorder %s254, %s256
      %p260 = scmp.eq.s32.totalorder %s58, 0
      %p261 = por %p259, %p260
      %p262 = scmp.ne.s32.totalorder %s254, %s256
      %p263 = scmp.eq.s32.totalorder %s63, 1
      %p264 = por %p262, %p263
      %p265 = scmp.ne.s32.totalorder %s256, %s257
      %p266 = scmp.eq.s32.totalorder %s63, 0
      %p267 = por %p265, %p266
      %p268 = scmp.ne.s32.totalorder %s256, %s257
      %p269 = scmp.eq.s32.totalorder %s64, 1
      %p270 = por %p268, %p269
      %p272 = scmp.ne.s32.totalorder %s257, %s271
      %p273 = scmp.eq.s32.totalorder %s64, 0
      %p274 = por %p272, %p273
      %s276 = sadd.s32 %s275, 1
      %p279 = scmp.eq.s32.totalorder %s58, 1
      %p280 = scmp.ne.s32.totalorder %s275, %s277
      %p281 = scmp.eq.s32.totalorder %s58, 0
      %p282 = por %p280, %p281
      %p283 = scmp.ne.s32.totalorder %s275, %s277
      %p284 = scmp.eq.s32.totalorder %s63, 1
      %p285 = por %p283, %p284
      %p286 = scmp.ne.s32.totalorder %s277, %s278
      %p287 = scmp.eq.s32.totalorder %s63, 0
      %p288 = por %p286, %p287
      %p289 = scmp.ne.s32.totalorder %s277, %s278
      %p290 = scmp.eq.s32.totalorder %s64, 1
      %p291 = por %p289, %p290
      %p293 = scmp.ne.s32.totalorder %s278, %s292
      %p294 = scmp.eq.s32.totalorder %s64, 0
      %p295 = por %p293, %p294
      %s297 = sadd.s32 %s296, 1
      %p300 = scmp.eq.s32.totalorder %s58, 1
      %p301 = scmp.ne.s32.totalorder %s296, %s298
      %p302 = scmp.eq.s32.totalorder %s58, 0
      %p303 = por %p301, %p302
      %p304 = scmp.ne.s32.totalorder %s296, %s298
      %p305 = scmp.eq.s32.totalorder %s63, 1
      %p306 = por %p304, %p305
      %p307 = scmp.ne.s32.totalorder %s298, %s299
      %p308 = scmp.eq.s32.totalorder %s63, 0
      %p309 = por %p307, %p308
      %p310 = scmp.ne.s32.totalorder %s298, %s299
      %p311 = scmp.eq.s32.totalorder %s64, 1
      %p312 = por %p310, %p311
      %p314 = scmp.ne.s32.totalorder %s299, %s313
      %p315 = scmp.eq.s32.totalorder %s64, 0
      %p316 = por %p314, %p315
      %s318 = sadd.s32 %s317, 1
      %p321 = scmp.eq.s32.totalorder %s58, 1
      %p322 = scmp.ne.s32.totalorder %s317, %s319
      %p323 = scmp.eq.s32.totalorder %s58, 0
      %p324 = por %p322, %p323
      %p325 = scmp.ne.s32.totalorder %s317, %s319
      %p326 = scmp.eq.s32.totalorder %s63, 1
      %p327 = por %p325, %p326
      %p328 = scmp.ne.s32.totalorder %s319, %s320
      %p329 = scmp.eq.s32.totalorder %s63, 0
      %p330 = por %p328, %p329
      %p331 = scmp.ne.s32.totalorder %s319, %s320
      %p332 = scmp.eq.s32.totalorder %s64, 1
      %p333 = por %p331, %p332
      %p335 = scmp.ne.s32.totalorder %s320, %s334
      %p336 = scmp.eq.s32.totalorder %s64, 0
      %p337 = por %p335, %p336
      %s339 = sadd.s32 %s338, 1
      %p342 = scmp.eq.s32.totalorder %s58, 1
      %p343 = scmp.ne.s32.totalorder %s338, %s340
      %p344 = scmp.eq.s32.totalorder %s58, 0
      %p345 = por %p343, %p344
      %p346 = scmp.ne.s32.totalorder %s338, %s340
      %p347 = scmp.eq.s32.totalorder %s63, 1
      %p348 = por %p346, %p347
      %p349 = scmp.ne.s32.totalorder %s340, %s341
      %p350 = scmp.eq.s32.totalorder %s63, 0
      %p351 = por %p349, %p350
      %p352 = scmp.ne.s32.totalorder %s340, %s341
      %p353 = scmp.eq.s32.totalorder %s64, 1
      %p354 = por %p352, %p353
      %p356 = scmp.ne.s32.totalorder %s341, %s355
      %p357 = scmp.eq.s32.totalorder %s64, 0
      %p358 = por %p356, %p357
      %s360 = sadd.s32 %s359, 1
      %p363 = scmp.eq.s32.totalorder %s58, 1
      %p364 = scmp.ne.s32.totalorder %s359, %s361
      %p365 = scmp.eq.s32.totalorder %s58, 0
      %p366 = por %p364, %p365
      %p367 = scmp.ne.s32.totalorder %s359, %s361
      %p368 = scmp.eq.s32.totalorder %s63, 1
      %p369 = por %p367, %p368
      %p370 = scmp.ne.s32.totalorder %s361, %s362
      %p371 = scmp.eq.s32.totalorder %s63, 0
      %p372 = por %p370, %p371
      %p373 = scmp.ne.s32.totalorder %s361, %s362
      %p374 = scmp.eq.s32.totalorder %s64, 1
      %p375 = por %p373, %p374
      %p377 = scmp.ne.s32.totalorder %s362, %s376
      %p378 = scmp.eq.s32.totalorder %s64, 0
      %p379 = por %p377, %p378
      %s381 = sadd.s32 %s380, 1
      %p384 = scmp.eq.s32.totalorder %s58, 1
      %p385 = scmp.ne.s32.totalorder %s380, %s382
      %p386 = scmp.eq.s32.totalorder %s58, 0
      %p387 = por %p385, %p386
      %p388 = scmp.ne.s32.totalorder %s380, %s382
      %p389 = scmp.eq.s32.totalorder %s63, 1
      %p390 = por %p388, %p389
      %p391 = scmp.ne.s32.totalorder %s382, %s383
      %p392 = scmp.eq.s32.totalorder %s63, 0
      %p393 = por %p391, %p392
      %p394 = scmp.ne.s32.totalorder %s382, %s383
      %p395 = scmp.eq.s32.totalorder %s64, 1
      %p396 = por %p394, %p395
      %p398 = scmp.ne.s32.totalorder %s383, %s397
      %p399 = scmp.eq.s32.totalorder %s64, 0
      %p400 = por %p398, %p399
      %s402 = sadd.s32 %s401, 1
      %p405 = scmp.eq.s32.totalorder %s58, 1
      %p406 = scmp.ne.s32.totalorder %s401, %s403
      %p407 = scmp.eq.s32.totalorder %s58, 0
      %p408 = por %p406, %p407
      %p409 = scmp.ne.s32.totalorder %s401, %s403
      %p410 = scmp.eq.s32.totalorder %s63, 1
      %p411 = por %p409, %p410
      %p412 = scmp.ne.s32.totalorder %s403, %s404
      %p413 = scmp.eq.s32.totalorder %s63, 0
      %p414 = por %p412, %p413
      %p415 = scmp.ne.s32.totalorder %s403, %s404
      %p416 = scmp.eq.s32.totalorder %s64, 1
      %p417 = por %p415, %p416
      %p419 = scmp.ne.s32.totalorder %s404, %s418
      %p420 = scmp.eq.s32.totalorder %s64, 0
      %p421 = por %p419, %p420
      %s423 = sadd.s32 %s422, 1
      %p426 = scmp.eq.s32.totalorder %s58, 1
      %p427 = scmp.ne.s32.totalorder %s422, %s424
      %p428 = scmp.eq.s32.totalorder %s58, 0
      %p429 = por %p427, %p428
      %p430 = scmp.ne.s32.totalorder %s422, %s424
      %p431 = scmp.eq.s32.totalorder %s63, 1
      %p432 = por %p430, %p431
      %p433 = scmp.ne.s32.totalorder %s424, %s425
      %p434 = scmp.eq.s32.totalorder %s63, 0
      %p435 = por %p433, %p434
      %p436 = scmp.ne.s32.totalorder %s424, %s425
      %p437 = scmp.eq.s32.totalorder %s64, 1
      %p438 = por %p436, %p437
      %p440 = scmp.ne.s32.totalorder %s425, %s439
      %p441 = scmp.eq.s32.totalorder %s64, 0
      %p442 = por %p440, %p441
      %s444 = sadd.s32 %s443, 1
      %p447 = scmp.eq.s32.totalorder %s58, 1
      %p448 = scmp.ne.s32.totalorder %s443, %s445
      %p449 = scmp.eq.s32.totalorder %s58, 0
      %p450 = por %p448, %p449
      %p451 = scmp.ne.s32.totalorder %s443, %s445
      %p452 = scmp.eq.s32.totalorder %s63, 1
      %p453 = por %p451, %p452
      %p454 = scmp.ne.s32.totalorder %s445, %s446
      %p455 = scmp.eq.s32.totalorder %s63, 0
      %p456 = por %p454, %p455
      %p457 = scmp.ne.s32.totalorder %s445, %s446
      %p458 = scmp.eq.s32.totalorder %s64, 1
      %p459 = por %p457, %p458
      %p461 = scmp.ne.s32.totalorder %s446, %s460
      %p462 = scmp.eq.s32.totalorder %s64, 0
      %p463 = por %p461, %p462
      %s465 = sadd.s32 %s464, 1
      %p468 = scmp.eq.s32.totalorder %s58, 1
      %p469 = scmp.ne.s32.totalorder %s464, %s466
      %p470 = scmp.eq.s32.totalorder %s58, 0
      %p471 = por %p469, %p470
      %p472 = scmp.ne.s32.totalorder %s464, %s466
      %p473 = scmp.eq.s32.totalorder %s63, 1
      %p474 = por %p472, %p473
      %p475 = scmp.ne.s32.totalorder %s466, %s467
      %p476 = scmp.eq.s32.totalorder %s63, 0
      %p477 = por %p475, %p476
      %p478 = scmp.ne.s32.totalorder %s466, %s467
      %p479 = scmp.eq.s32.totalorder %s64, 1
      %p480 = por %p478, %p479
      %p482 = scmp.ne.s32.totalorder %s467, %s481
      %p483 = scmp.eq.s32.totalorder %s64, 0
      %p484 = por %p482, %p483
      %s486 = sadd.s32 %s485, 1
      %p489 = scmp.eq.s32.totalorder %s58, 1
      %p490 = scmp.ne.s32.totalorder %s485, %s487
      %p491 = scmp.eq.s32.totalorder %s58, 0
      %p492 = por %p490, %p491
      %p493 = scmp.ne.s32.totalorder %s485, %s487
      %p494 = scmp.eq.s32.totalorder %s63, 1
      %p495 = por %p493, %p494
      %p496 = scmp.ne.s32.totalorder %s487, %s488
      %p497 = scmp.eq.s32.totalorder %s63, 0
      %p498 = por %p496, %p497
      %p499 = scmp.ne.s32.totalorder %s487, %s488
      %p500 = scmp.eq.s32.totalorder %s64, 1
      %p501 = por %p499, %p500
      %p503 = scmp.ne.s32.totalorder %s488, %s502
      %p504 = scmp.eq.s32.totalorder %s64, 0
      %p505 = por %p503, %p504
      %s507 = sadd.s32 %s506, 1
      %p510 = scmp.eq.s32.totalorder %s58, 1
      %p511 = scmp.ne.s32.totalorder %s506, %s508
      %p512 = scmp.eq.s32.totalorder %s58, 0
      %p513 = por %p511, %p512
      %p514 = scmp.ne.s32.totalorder %s506, %s508
      %p515 = scmp.eq.s32.totalorder %s63, 1
      %p516 = por %p514, %p515
      %p517 = scmp.ne.s32.totalorder %s508, %s509
      %p518 = scmp.eq.s32.totalorder %s63, 0
      %p519 = por %p517, %p518
      %p520 = scmp.ne.s32.totalorder %s508, %s509
      %p521 = scmp.eq.s32.totalorder %s64, 1
      %p522 = por %p520, %p521
      %p524 = scmp.ne.s32.totalorder %s509, %s523
      %p525 = scmp.eq.s32.totalorder %s64, 0
      %p526 = por %p524, %p525
      %s528 = sadd.s32 %s527, 1
      %p531 = scmp.eq.s32.totalorder %s58, 1
      %p532 = scmp.ne.s32.totalorder %s527, %s529
      %p533 = scmp.eq.s32.totalorder %s58, 0
      %p534 = por %p532, %p533
      %p535 = scmp.ne.s32.totalorder %s527, %s529
      %p536 = scmp.eq.s32.totalorder %s63, 1
      %p537 = por %p535, %p536
      %p538 = scmp.ne.s32.totalorder %s529, %s530
      %p539 = scmp.eq.s32.totalorder %s63, 0
      %p540 = por %p538, %p539
      %p541 = scmp.ne.s32.totalorder %s529, %s530
      %p542 = scmp.eq.s32.totalorder %s64, 1
      %p543 = por %p541, %p542
      %p545 = scmp.ne.s32.totalorder %s530, %s544
      %p546 = scmp.eq.s32.totalorder %s64, 0
      %p547 = por %p545, %p546
      %s549 = sadd.s32 %s548, 1
      %p552 = scmp.eq.s32.totalorder %s58, 1
      %p553 = scmp.ne.s32.totalorder %s548, %s550
      %p554 = scmp.eq.s32.totalorder %s58, 0
      %p555 = por %p553, %p554
      %p556 = scmp.ne.s32.totalorder %s548, %s550
      %p557 = scmp.eq.s32.totalorder %s63, 1
      %p558 = por %p556, %p557
      %p559 = scmp.ne.s32.totalorder %s550, %s551
      %p560 = scmp.eq.s32.totalorder %s63, 0
      %p561 = por %p559, %p560
      %p562 = scmp.ne.s32.totalorder %s550, %s551
      %p563 = scmp.eq.s32.totalorder %s64, 1
      %p564 = por %p562, %p563
      %p566 = scmp.ne.s32.totalorder %s551, %s565
      %p567 = scmp.eq.s32.totalorder %s64, 0
      %p568 = por %p566, %p567
      %s570 = sadd.s32 %s569, 1
      %p573 = scmp.eq.s32.totalorder %s58, 1
      %p574 = scmp.ne.s32.totalorder %s569, %s571
      %p575 = scmp.eq.s32.totalorder %s58, 0
      %p576 = por %p574, %p575
      %p577 = scmp.ne.s32.totalorder %s569, %s571
      %p578 = scmp.eq.s32.totalorder %s63, 1
      %p579 = por %p577, %p578
      %p580 = scmp.ne.s32.totalorder %s571, %s572
      %p581 = scmp.eq.s32.totalorder %s63, 0
      %p582 = por %p580, %p581
      %p583 = scmp.ne.s32.totalorder %s571, %s572
      %p584 = scmp.eq.s32.totalorder %s64, 1
      %p585 = por %p583, %p584
      %p587 = scmp.ne.s32.totalorder %s572, %s586
      %p588 = scmp.eq.s32.totalorder %s64, 0
      %p589 = por %p587, %p588
      %s591 = sadd.s32 %s590, 1
      %p594 = scmp.eq.s32.totalorder %s58, 1
      %p595 = scmp.ne.s32.totalorder %s590, %s592
      %p596 = scmp.eq.s32.totalorder %s58, 0
      %p597 = por %p595, %p596
      %p598 = scmp.ne.s32.totalorder %s590, %s592
      %p599 = scmp.eq.s32.totalorder %s63, 1
      %p600 = por %p598, %p599
      %p601 = scmp.ne.s32.totalorder %s592, %s593
      %p602 = scmp.eq.s32.totalorder %s63, 0
      %p603 = por %p601, %p602
      %p604 = scmp.ne.s32.totalorder %s592, %s593
      %p605 = scmp.eq.s32.totalorder %s64, 1
      %p606 = por %p604, %p605
      %p608 = scmp.ne.s32.totalorder %s593, %s607
      %p609 = scmp.eq.s32.totalorder %s64, 0
      %p610 = por %p608, %p609
      %s612 = sadd.s32 %s611, 1
      %p615 = scmp.eq.s32.totalorder %s58, 1
      %p616 = scmp.ne.s32.totalorder %s611, %s613
      %p617 = scmp.eq.s32.totalorder %s58, 0
      %p618 = por %p616, %p617
      %p619 = scmp.ne.s32.totalorder %s611, %s613
      %p620 = scmp.eq.s32.totalorder %s63, 1
      %p621 = por %p619, %p620
      %p622 = scmp.ne.s32.totalorder %s613, %s614
      %p623 = scmp.eq.s32.totalorder %s63, 0
      %p624 = por %p622, %p623
      %p625 = scmp.ne.s32.totalorder %s613, %s614
      %p626 = scmp.eq.s32.totalorder %s64, 1
      %p627 = por %p625, %p626
      %p629 = scmp.ne.s32.totalorder %s614, %s628
      %p630 = scmp.eq.s32.totalorder %s64, 0
      %p631 = por %p629, %p630
      %s633 = sadd.s32 %s632, 1
      %p636 = scmp.eq.s32.totalorder %s58, 1
      %p637 = scmp.ne.s32.totalorder %s632, %s634
      %p638 = scmp.eq.s32.totalorder %s58, 0
      %p639 = por %p637, %p638
      %p640 = scmp.ne.s32.totalorder %s632, %s634
      %p641 = scmp.eq.s32.totalorder %s63, 1
      %p642 = por %p640, %p641
      %p643 = scmp.ne.s32.totalorder %s634, %s635
      %p644 = scmp.eq.s32.totalorder %s63, 0
      %p645 = por %p643, %p644
      %p646 = scmp.ne.s32.totalorder %s634, %s635
      %p647 = scmp.eq.s32.totalorder %s64, 1
      %p648 = por %p646, %p647
      %p650 = scmp.ne.s32.totalorder %s635, %s649
      %p651 = scmp.eq.s32.totalorder %s64, 0
      %p652 = por %p650, %p651
      %s654 = sadd.s32 %s653, 1
      %p657 = scmp.eq.s32.totalorder %s58, 1
      %p658 = scmp.ne.s32.totalorder %s653, %s655
      %p659 = scmp.eq.s32.totalorder %s58, 0
      %p660 = por %p658, %p659
      %p661 = scmp.ne.s32.totalorder %s653, %s655
      %p662 = scmp.eq.s32.totalorder %s63, 1
      %p663 = por %p661, %p662
      %p664 = scmp.ne.s32.totalorder %s655, %s656
      %p665 = scmp.eq.s32.totalorder %s63, 0
      %p666 = por %p664, %p665
      %p667 = scmp.ne.s32.totalorder %s655, %s656
      %p668 = scmp.eq.s32.totalorder %s64, 1
      %p669 = por %p667, %p668
      %p671 = scmp.ne.s32.totalorder %s656, %s670
      %p672 = scmp.eq.s32.totalorder %s64, 0
      %p673 = por %p671, %p672
      %s674 = ssub.s32 %s58, %s65
      %p675 = scmp.eq.s32.totalorder %s674, 0
      %s677 = sadd.s32 %s676, 1
      %s678 = scalar_select %p675, %s676, %s677
      %p681 = pneg %p675
      %p682 = scmp.eq.s32.totalorder %s58, 1
      %p683 = por %p681, %p682
      %p684 = scmp.ne.s32.totalorder %s676, %s679
      %p685 = scmp.eq.s32.totalorder %s58, 0
      %p686 = por %p684, %p685
      %p687 = scmp.ne.s32.totalorder %s676, %s679
      %p688 = scmp.eq.s32.totalorder %s63, 1
      %p689 = por %p687, %p688
      %p690 = scmp.ne.s32.totalorder %s679, %s680
      %p691 = scmp.eq.s32.totalorder %s63, 0
      %p692 = por %p690, %p691
      %p693 = scmp.ne.s32.totalorder %s679, %s680
      %p694 = scmp.eq.s32.totalorder %s64, 1
      %p695 = por %p693, %p694
      %p697 = scmp.ne.s32.totalorder %s680, %s696
      %p698 = scmp.eq.s32.totalorder %s64, 0
      %p699 = por %p697, %p698
      %p700 = scmp.le.s32.totalorder 1, %s58
      %p701 = scmp.lt.s32.totalorder %s58, 3
      %p702 = pnand %p700, %p701
      %p703 = pneg %p702
      // Predicated region
      $region9: #{tpu_custom_call.1} parent=5 // pred_check
        _
      $region10: #{tpu_custom_call.1} parent=5 // pred_check_branch
        %705 = sbr.rel (%p702) target = $region12
      $region11: #{tpu_custom_call.1} parent=5 // pred_region
        %s706 = ssub.s32 %s58, 1
        // Predicated region
        $region13: #{tpu_custom_call.1} parent=11 // pred_check
          %p707 = pneg %p183
        $region14: #{tpu_custom_call.1} parent=11 // pred_check_branch
          %709 = sbr.rel (%p707) target = $region16
        $region15: #{tpu_custom_call.1} parent=11 // pred_region
          %s711 = ssub.s32 256, 256
          %712 = vsyncadd [#allocation10], %s711
          %s713 = sshll.u32 [#allocation11], 4
          %s714 = int_to_ptr.vmem [resolvable:$true] %s713
          %719 = dma.hbm_to_vmem [thread:$0]  %s4, 256, %s714, [#allocation10], 64, 64, 4
        $region16: #{tpu_custom_call.1} parent=11 // pred_fallthru
          _
        // Predicated region
        $region17: #{tpu_custom_call.1} parent=11 // pred_check
          %p720 = pneg %p204
        $region18: #{tpu_custom_call.1} parent=11 // pred_check_branch
          %722 = sbr.rel (%p720) target = $region20
        $region19: #{tpu_custom_call.1} parent=11 // pred_region
          %s724 = ssub.s32 16, 16
          %725 = vsyncadd [#allocation13], %s724
          %s727 = sshll.u32 [#allocation12], 4
          %s728 = int_to_ptr.vmem [resolvable:$true] %s727
          %730 = dma.hbm_to_vmem [thread:$0]  %s5, 16, %s728, [#allocation13]
        $region20: #{tpu_custom_call.1} parent=11 // pred_fallthru
          _
        // Predicated region
        $region21: #{tpu_custom_call.1} parent=11 // pred_check
          %p731 = pneg %p225
        $region22: #{tpu_custom_call.1} parent=11 // pred_check_branch
          %733 = sbr.rel (%p731) target = $region24
        $region23: #{tpu_custom_call.1} parent=11 // pred_region
          %s735 = ssub.s32 256, 256
          %736 = vsyncadd [#allocation13], %s735
          %s737 = sshll.u32 [#allocation14], 4
          %s738 = int_to_ptr.vmem [resolvable:$true] %s737
          %743 = dma.hbm_to_vmem [thread:$0]  %s6, 256, %s738, [#allocation13], 64, 64, 4
        $region24: #{tpu_custom_call.1} parent=11 // pred_fallthru
          _
        // Predicated region
        $region25: #{tpu_custom_call.1} parent=11 // pred_check
          %p744 = pneg %p246
        $region26: #{tpu_custom_call.1} parent=11 // pred_check_branch
          %746 = sbr.rel (%p744) target = $region28
        $region27: #{tpu_custom_call.1} parent=11 // pred_region
          %s748 = ssub.s32 16, 16
          %749 = vsyncadd [#allocation16], %s748
          %s751 = sshll.u32 [#allocation15], 4
          %s752 = int_to_ptr.vmem [resolvable:$true] %s751
          %754 = dma.hbm_to_vmem [thread:$0]  %s7, 16, %s752, [#allocation16]
        $region28: #{tpu_custom_call.1} parent=11 // pred_fallthru
          _
        // Predicated region
        $region29: #{tpu_custom_call.1} parent=11 // pred_check
          %p755 = pneg %p267
        $region30: #{tpu_custom_call.1} parent=11 // pred_check_branch
          %757 = sbr.rel (%p755) target = $region32
        $region31: #{tpu_custom_call.1} parent=11 // pred_region
          %s759 = ssub.s32 256, 256
          %760 = vsyncadd [#allocation16], %s759
          %s761 = sshll.u32 [#allocation17], 4
          %s762 = int_to_ptr.vmem [resolvable:$true] %s761
          %767 = dma.hbm_to_vmem [thread:$0]  %s8, 256, %s762, [#allocation16], 64, 64, 4
        $region32: #{tpu_custom_call.1} parent=11 // pred_fallthru
          _
        // Predicated region
        $region33: #{tpu_custom_call.1} parent=11 // pred_check
          %p768 = pneg %p288
        $region34: #{tpu_custom_call.1} parent=11 // pred_check_branch
          %770 = sbr.rel (%p768) target = $region36
        $region35: #{tpu_custom_call.1} parent=11 // pred_region
          %s772 = ssub.s32 16, 16
          %773 = vsyncadd [#allocation19], %s772
          %s775 = sshll.u32 [#allocation18], 4
          %s776 = int_to_ptr.vmem [resolvable:$true] %s775
          %778 = dma.hbm_to_vmem [thread:$0]  %s9, 16, %s776, [#allocation19]
        $region36: #{tpu_custom_call.1} parent=11 // pred_fallthru
          _
        // Predicated region
        $region37: #{tpu_custom_call.1} parent=11 // pred_check
          %p779 = pneg %p309
        $region38: #{tpu_custom_call.1} parent=11 // pred_check_branch
          %781 = sbr.rel (%p779) target = $region40
        $region39: #{tpu_custom_call.1} parent=11 // pred_region
          %s783 = ssub.s32 256, 256
          %784 = vsyncadd [#allocation19], %s783
          %s785 = sshll.u32 [#allocation20], 4
          %s786 = int_to_ptr.vmem [resolvable:$true] %s785
          %791 = dma.hbm_to_vmem [thread:$0]  %s10, 256, %s786, [#allocation19], 64, 64, 4
        $region40: #{tpu_custom_call.1} parent=11 // pred_fallthru
          _
        // Predicated region
        $region41: #{tpu_custom_call.1} parent=11 // pred_check
          %p792 = pneg %p330
        $region42: #{tpu_custom_call.1} parent=11 // pred_check_branch
          %794 = sbr.rel (%p792) target = $region44
        $region43: #{tpu_custom_call.1} parent=11 // pred_region
          %s796 = ssub.s32 16, 16
          %797 = vsyncadd [#allocation22], %s796
          %s799 = sshll.u32 [#allocation21], 4
          %s800 = int_to_ptr.vmem [resolvable:$true] %s799
          %802 = dma.hbm_to_vmem [thread:$0]  %s11, 16, %s800, [#allocation22]
        $region44: #{tpu_custom_call.1} parent=11 // pred_fallthru
          _
        // Predicated region
        $region45: #{tpu_custom_call.1} parent=11 // pred_check
          %p803 = pneg %p351
        $region46: #{tpu_custom_call.1} parent=11 // pred_check_branch
          %805 = sbr.rel (%p803) target = $region48
        $region47: #{tpu_custom_call.1} parent=11 // pred_region
          %s807 = ssub.s32 256, 256
          %808 = vsyncadd [#allocation22], %s807
          %s809 = sshll.u32 [#allocation23], 4
          %s810 = int_to_ptr.vmem [resolvable:$true] %s809
          %815 = dma.hbm_to_vmem [thread:$0]  %s12, 256, %s810, [#allocation22], 64, 64, 4
        $region48: #{tpu_custom_call.1} parent=11 // pred_fallthru
          _
        // Predicated region
        $region49: #{tpu_custom_call.1} parent=11 // pred_check
          %p816 = pneg %p372
        $region50: #{tpu_custom_call.1} parent=11 // pred_check_branch
          %818 = sbr.rel (%p816) target = $region52
        $region51: #{tpu_custom_call.1} parent=11 // pred_region
          %s820 = ssub.s32 16, 16
          %821 = vsyncadd [#allocation25], %s820
          %s823 = sshll.u32 [#allocation24], 4
          %s824 = int_to_ptr.vmem [resolvable:$true] %s823
          %826 = dma.hbm_to_vmem [thread:$0]  %s13, 16, %s824, [#allocation25]
        $region52: #{tpu_custom_call.1} parent=11 // pred_fallthru
          _
        // Predicated region
        $region53: #{tpu_custom_call.1} parent=11 // pred_check
          %p827 = pneg %p393
        $region54: #{tpu_custom_call.1} parent=11 // pred_check_branch
          %829 = sbr.rel (%p827) target = $region56
        $region55: #{tpu_custom_call.1} parent=11 // pred_region
          %s831 = ssub.s32 256, 256
          %832 = vsyncadd [#allocation25], %s831
          %s833 = sshll.u32 [#allocation26], 4
          %s834 = int_to_ptr.vmem [resolvable:$true] %s833
          %839 = dma.hbm_to_vmem [thread:$0]  %s14, 256, %s834, [#allocation25], 64, 64, 4
        $region56: #{tpu_custom_call.1} parent=11 // pred_fallthru
          _
        // Predicated region
        $region57: #{tpu_custom_call.1} parent=11 // pred_check
          %p840 = pneg %p414
        $region58: #{tpu_custom_call.1} parent=11 // pred_check_branch
          %842 = sbr.rel (%p840) target = $region60
        $region59: #{tpu_custom_call.1} parent=11 // pred_region
          %s844 = ssub.s32 16, 16
          %845 = vsyncadd [#allocation28], %s844
          %s847 = sshll.u32 [#allocation27], 4
          %s848 = int_to_ptr.vmem [resolvable:$true] %s847
          %850 = dma.hbm_to_vmem [thread:$0]  %s15, 16, %s848, [#allocation28]
        $region60: #{tpu_custom_call.1} parent=11 // pred_fallthru
          _
        // Predicated region
        $region61: #{tpu_custom_call.1} parent=11 // pred_check
          %p851 = pneg %p435
        $region62: #{tpu_custom_call.1} parent=11 // pred_check_branch
          %853 = sbr.rel (%p851) target = $region64
        $region63: #{tpu_custom_call.1} parent=11 // pred_region
          %s855 = ssub.s32 256, 256
          %856 = vsyncadd [#allocation28], %s855
          %s857 = sshll.u32 [#allocation29], 4
          %s858 = int_to_ptr.vmem [resolvable:$true] %s857
          %863 = dma.hbm_to_vmem [thread:$0]  %s16, 256, %s858, [#allocation28], 64, 64, 4
        $region64: #{tpu_custom_call.1} parent=11 // pred_fallthru
          _
        // Predicated region
        $region65: #{tpu_custom_call.1} parent=11 // pred_check
          %p864 = pneg %p456
        $region66: #{tpu_custom_call.1} parent=11 // pred_check_branch
          %866 = sbr.rel (%p864) target = $region68
        $region67: #{tpu_custom_call.1} parent=11 // pred_region
          %s868 = ssub.s32 16, 16
          %869 = vsyncadd [#allocation31], %s868
          %s871 = sshll.u32 [#allocation30], 4
          %s872 = int_to_ptr.vmem [resolvable:$true] %s871
          %874 = dma.hbm_to_vmem [thread:$0]  %s17, 16, %s872, [#allocation31]
        $region68: #{tpu_custom_call.1} parent=11 // pred_fallthru
          _
        // Predicated region
        $region69: #{tpu_custom_call.1} parent=11 // pred_check
          %p875 = pneg %p477
        $region70: #{tpu_custom_call.1} parent=11 // pred_check_branch
          %877 = sbr.rel (%p875) target = $region72
        $region71: #{tpu_custom_call.1} parent=11 // pred_region
          %s879 = ssub.s32 256, 256
          %880 = vsyncadd [#allocation31], %s879
          %s881 = sshll.u32 [#allocation32], 4
          %s882 = int_to_ptr.vmem [resolvable:$true] %s881
          %887 = dma.hbm_to_vmem [thread:$0]  %s18, 256, %s882, [#allocation31], 64, 64, 4
        $region72: #{tpu_custom_call.1} parent=11 // pred_fallthru
          _
        // Predicated region
        $region73: #{tpu_custom_call.1} parent=11 // pred_check
          %p888 = pneg %p498
        $region74: #{tpu_custom_call.1} parent=11 // pred_check_branch
          %890 = sbr.rel (%p888) target = $region76
        $region75: #{tpu_custom_call.1} parent=11 // pred_region
          %s892 = ssub.s32 16, 16
          %893 = vsyncadd [#allocation34], %s892
          %s895 = sshll.u32 [#allocation33], 4
          %s896 = int_to_ptr.vmem [resolvable:$true] %s895
          %898 = dma.hbm_to_vmem [thread:$0]  %s19, 16, %s896, [#allocation34]
        $region76: #{tpu_custom_call.1} parent=11 // pred_fallthru
          _
        // Predicated region
        $region77: #{tpu_custom_call.1} parent=11 // pred_check
          %p899 = pneg %p519
        $region78: #{tpu_custom_call.1} parent=11 // pred_check_branch
          %901 = sbr.rel (%p899) target = $region80
        $region79: #{tpu_custom_call.1} parent=11 // pred_region
          %s903 = ssub.s32 512, 512
          %904 = vsyncadd [#allocation34], %s903
          %s905 = sshll.u32 [#allocation35], 4
          %s906 = int_to_ptr.vmem [resolvable:$true] %s905
          %911 = dma.hbm_to_vmem [thread:$0]  %s20, 512, %s906, [#allocation34], 64, 64, 4
        $region80: #{tpu_custom_call.1} parent=11 // pred_fallthru
          _
        // Predicated region
        $region81: #{tpu_custom_call.1} parent=11 // pred_check
          %p912 = pneg %p540
        $region82: #{tpu_custom_call.1} parent=11 // pred_check_branch
          %914 = sbr.rel (%p912) target = $region84
        $region83: #{tpu_custom_call.1} parent=11 // pred_region
          %s916 = ssub.s32 16, 16
          %917 = vsyncadd [#allocation37], %s916
          %s919 = sshll.u32 [#allocation36], 4
          %s920 = int_to_ptr.vmem [resolvable:$true] %s919
          %922 = dma.hbm_to_vmem [thread:$0]  %s21, 16, %s920, [#allocation37]
        $region84: #{tpu_custom_call.1} parent=11 // pred_fallthru
          _
        // Predicated region
        $region85: #{tpu_custom_call.1} parent=11 // pred_check
          %p923 = pneg %p561
        $region86: #{tpu_custom_call.1} parent=11 // pred_check_branch
          %925 = sbr.rel (%p923) target = $region88
        $region87: #{tpu_custom_call.1} parent=11 // pred_region
          %s927 = ssub.s32 16, 16
          %928 = vsyncadd [#allocation37], %s927
          %s930 = sshll.u32 [#allocation38], 4
          %s931 = int_to_ptr.vmem [resolvable:$true] %s930
          %933 = dma.hbm_to_vmem [thread:$0]  %s22, 16, %s931, [#allocation37]
        $region88: #{tpu_custom_call.1} parent=11 // pred_fallthru
          _
        // Predicated region
        $region89: #{tpu_custom_call.1} parent=11 // pred_check
          %p934 = pneg %p582
        $region90: #{tpu_custom_call.1} parent=11 // pred_check_branch
          %936 = sbr.rel (%p934) target = $region92
        $region91: #{tpu_custom_call.1} parent=11 // pred_region
          %s938 = ssub.s32 16, 16
          %939 = vsyncadd [#allocation40], %s938
          %s941 = sshll.u32 [#allocation39], 4
          %s942 = int_to_ptr.vmem [resolvable:$true] %s941
          %944 = dma.hbm_to_vmem [thread:$0]  %s23, 16, %s942, [#allocation40]
        $region92: #{tpu_custom_call.1} parent=11 // pred_fallthru
          _
        // Predicated region
        $region93: #{tpu_custom_call.1} parent=11 // pred_check
          %p945 = pneg %p603
        $region94: #{tpu_custom_call.1} parent=11 // pred_check_branch
          %947 = sbr.rel (%p945) target = $region96
        $region95: #{tpu_custom_call.1} parent=11 // pred_region
          %s949 = ssub.s32 16, 16
          %950 = vsyncadd [#allocation40], %s949
          %s952 = sshll.u32 [#allocation41], 4
          %s953 = int_to_ptr.vmem [resolvable:$true] %s952
          %955 = dma.hbm_to_vmem [thread:$0]  %s24, 16, %s953, [#allocation40]
        $region96: #{tpu_custom_call.1} parent=11 // pred_fallthru
          _
        // Predicated region
        $region97: #{tpu_custom_call.1} parent=11 // pred_check
          %p956 = pneg %p624
        $region98: #{tpu_custom_call.1} parent=11 // pred_check_branch
          %958 = sbr.rel (%p956) target = $region100
        $region99: #{tpu_custom_call.1} parent=11 // pred_region
          %s960 = ssub.s32 16, 16
          %961 = vsyncadd [#allocation43], %s960
          %s963 = sshll.u32 [#allocation42], 4
          %s964 = int_to_ptr.vmem [resolvable:$true] %s963
          %966 = dma.hbm_to_vmem [thread:$0]  %s25, 16, %s964, [#allocation43]
        $region100: #{tpu_custom_call.1} parent=11 // pred_fallthru
          _
        // Predicated region
        $region101: #{tpu_custom_call.1} parent=11 // pred_check
          %p967 = pneg %p645
        $region102: #{tpu_custom_call.1} parent=11 // pred_check_branch
          %969 = sbr.rel (%p967) target = $region104
        $region103: #{tpu_custom_call.1} parent=11 // pred_region
          %s971 = ssub.s32 16, 16
          %972 = vsyncadd [#allocation43], %s971
          %s974 = sshll.u32 [#allocation44], 4
          %s975 = int_to_ptr.vmem [resolvable:$true] %s974
          %977 = dma.hbm_to_vmem [thread:$0]  %s26, 16, %s975, [#allocation43]
        $region104: #{tpu_custom_call.1} parent=11 // pred_fallthru
          _
        // Predicated region
        $region105: #{tpu_custom_call.1} parent=11 // pred_check
          %p978 = pneg %p666
        $region106: #{tpu_custom_call.1} parent=11 // pred_check_branch
          %980 = sbr.rel (%p978) target = $region108
        $region107: #{tpu_custom_call.1} parent=11 // pred_region
          %s982 = ssub.s32 16, 16
          %983 = vsyncadd [#allocation46], %s982
          %s985 = sshll.u32 [#allocation45], 4
          %s986 = int_to_ptr.vmem [resolvable:$true] %s985
          %988 = dma.hbm_to_vmem [thread:$0]  %s27, 16, %s986, [#allocation46]
        $region108: #{tpu_custom_call.1} parent=11 // pred_fallthru
          _
      $region12: #{tpu_custom_call.1} parent=5 // pred_fallthru
        _
      %p989 = scmp.lt.s32.totalorder %s58, 2
      // Predicated region
      $region109: #{tpu_custom_call.1} parent=5 // pred_check
        %p990 = pneg %p989
      $region110: #{tpu_custom_call.1} parent=5 // pred_check_branch
        %992 = sbr.rel (%p990) target = $region112
      $region111: #{tpu_custom_call.1} parent=5 // pred_region
        // Predicated region
        $region113: #{tpu_custom_call.1} parent=111 // pred_check
          %p993 = pneg %p78
        $region114: #{tpu_custom_call.1} parent=111 // pred_check_branch
          %995 = sbr.rel (%p993) target = $region116
        $region115: #{tpu_custom_call.1} parent=111 // pred_region
          %s996 = sand.u32 %s68, 1
          %s997 = scalar_lea.sflag [#allocation4], %s996
          %s998 = sand.u32 %s68, 1
          %s999 = smul.addr %s998, 8
          %s1000 = scalar_lea.vmem [#allocation3], %s999
          %s1002 = ssub.s32 128, 128
          %1003 = vsyncadd %s997, %s1002
          %s1004 = smul.addr %s58, 128
          %s1005 = scalar_lea.hbm %s0, %s1004
          %s1007 = sshll.u32 %s1000, 4
          %s1008 = int_to_ptr.vmem [resolvable:$true] %s1007
          %1010 = dma.hbm_to_vmem [thread:$0]  %s1005, 128, %s1008, %s997
        $region116: #{tpu_custom_call.1} parent=111 // pred_fallthru
          _
        // Predicated region
        $region117: #{tpu_custom_call.1} parent=111 // pred_check
          %p1011 = pneg %p104
        $region118: #{tpu_custom_call.1} parent=111 // pred_check_branch
          %1013 = sbr.rel (%p1011) target = $region120
        $region119: #{tpu_custom_call.1} parent=111 // pred_region
          %s1014 = sand.u32 %s58, 1
          %s1015 = scalar_lea.sflag [#allocation7], %s1014
          %s1016 = sand.u32 %s94, 1
          %s1017 = smul.addr %s1016, 8
          %s1018 = scalar_lea.vmem [#allocation6], %s1017
          %s1020 = ssub.s32 128, 128
          %1021 = vsyncadd %s1015, %s1020
          %s1022 = smul.addr %s58, 128
          %s1023 = scalar_lea.hbm %s1, %s1022
          %s1025 = sshll.u32 %s1018, 4
          %s1026 = int_to_ptr.vmem [resolvable:$true] %s1025
          %1028 = dma.hbm_to_vmem [thread:$0]  %s1023, 128, %s1026, %s1015
        $region120: #{tpu_custom_call.1} parent=111 // pred_fallthru
          _
        // Predicated region
        $region121: #{tpu_custom_call.1} parent=111 // pred_check
          %p1029 = pneg %p130
        $region122: #{tpu_custom_call.1} parent=111 // pred_check_branch
          %1031 = sbr.rel (%p1029) target = $region124
        $region123: #{tpu_custom_call.1} parent=111 // pred_region
          %s1032 = sand.u32 %s58, 1
          %s1033 = scalar_lea.sflag [#allocation7], %s1032
          %s1034 = sand.u32 %s120, 1
          %s1035 = smul.addr %s1034, 8
          %s1036 = scalar_lea.vmem [#allocation8], %s1035
          %s1038 = ssub.s32 128, 128
          %1039 = vsyncadd %s1033, %s1038
          %s1040 = smul.addr %s58, 128
          %s1041 = scalar_lea.hbm %s2, %s1040
          %s1043 = sshll.u32 %s1036, 4
          %s1044 = int_to_ptr.vmem [resolvable:$true] %s1043
          %1046 = dma.hbm_to_vmem [thread:$0]  %s1041, 128, %s1044, %s1033
        $region124: #{tpu_custom_call.1} parent=111 // pred_fallthru
          _
        // Predicated region
        $region125: #{tpu_custom_call.1} parent=111 // pred_check
          %p1047 = pneg %p156
        $region126: #{tpu_custom_call.1} parent=111 // pred_check_branch
          %1049 = sbr.rel (%p1047) target = $region128
        $region127: #{tpu_custom_call.1} parent=111 // pred_region
          %s1050 = sand.u32 %s58, 1
          %s1051 = scalar_lea.sflag [#allocation10], %s1050
          %s1052 = sand.u32 %s146, 1
          %s1053 = smul.addr %s1052, 8
          %s1054 = scalar_lea.vmem [#allocation9], %s1053
          %s1056 = ssub.s32 128, 128
          %1057 = vsyncadd %s1051, %s1056
          %s1058 = smul.addr %s58, 128
          %s1059 = scalar_lea.hbm %s3, %s1058
          %s1061 = sshll.u32 %s1054, 4
          %s1062 = int_to_ptr.vmem [resolvable:$true] %s1061
          %1064 = dma.hbm_to_vmem [thread:$0]  %s1059, 128, %s1062, %s1051
        $region128: #{tpu_custom_call.1} parent=111 // pred_fallthru
          _
      $region112: #{tpu_custom_call.1} parent=5 // pred_fallthru
        _
      %p1065 = scmp.le.s32.totalorder 1, %s58
      %p1066 = scmp.lt.s32.totalorder %s58, 3
      %p1067 = pnand %p1065, %p1066
      %p1068 = pneg %p1067
      // Predicated region
      $region129: #{tpu_custom_call.1} parent=5 // pred_check
        _
      $region130: #{tpu_custom_call.1} parent=5 // pred_check_branch
        %1070 = sbr.rel (%p1067) target = $region132
      $region131: #{tpu_custom_call.1} parent=5 // pred_region
        %s1071 = ssub.s32 %s58, 1
        %s1072 = sand.u32 %s71, 1
        %s1073 = scalar_lea.sflag [#allocation4], %s1072
        %s1074 = sand.u32 %s71, 1
        %s1075 = smul.addr %s1074, 8
        %s1076 = scalar_lea.vmem [#allocation3], %s1075
        // Predicated region
        $region133: #{tpu_custom_call.1} parent=131 // pred_check
          %p1077 = pneg %p84
        $region134: #{tpu_custom_call.1} parent=131 // pred_check_branch
          %1079 = sbr.rel (%p1077) target = $region136
        $region135: #{tpu_custom_call.1} parent=131 // pred_region
          %1080 = dma.done %s1073, 128
        $region136: #{tpu_custom_call.1} parent=131 // pred_fallthru
          _
        %s1081 = sand.u32 %s63, 1
        %s1082 = scalar_lea.sflag [#allocation7], %s1081
        %s1083 = sand.u32 %s97, 1
        %s1084 = smul.addr %s1083, 8
        %s1085 = scalar_lea.vmem [#allocation6], %s1084
        // Predicated region
        $region137: #{tpu_custom_call.1} parent=131 // pred_check
          %p1086 = pneg %p110
        $region138: #{tpu_custom_call.1} parent=131 // pred_check_branch
          %1088 = sbr.rel (%p1086) target = $region140
        $region139: #{tpu_custom_call.1} parent=131 // pred_region
          %1089 = dma.done %s1082, 128
        $region140: #{tpu_custom_call.1} parent=131 // pred_fallthru
          _
        %s1090 = sand.u32 %s63, 1
        %s1091 = scalar_lea.sflag [#allocation7], %s1090
        %s1092 = sand.u32 %s123, 1
        %s1093 = smul.addr %s1092, 8
        %s1094 = scalar_lea.vmem [#allocation8], %s1093
        // Predicated region
        $region141: #{tpu_custom_call.1} parent=131 // pred_check
          %p1095 = pneg %p136
        $region142: #{tpu_custom_call.1} parent=131 // pred_check_branch
          %1097 = sbr.rel (%p1095) target = $region144
        $region143: #{tpu_custom_call.1} parent=131 // pred_region
          %1098 = dma.done %s1091, 128
        $region144: #{tpu_custom_call.1} parent=131 // pred_fallthru
          _
        %s1099 = sand.u32 %s63, 1
        %s1100 = scalar_lea.sflag [#allocation10], %s1099
        %s1101 = sand.u32 %s149, 1
        %s1102 = smul.addr %s1101, 8
        %s1103 = scalar_lea.vmem [#allocation9], %s1102
        // Predicated region
        $region145: #{tpu_custom_call.1} parent=131 // pred_check
          %p1104 = pneg %p162
        $region146: #{tpu_custom_call.1} parent=131 // pred_check_branch
          %1106 = sbr.rel (%p1104) target = $region148
        $region147: #{tpu_custom_call.1} parent=131 // pred_region
          %1107 = dma.done %s1100, 128
        $region148: #{tpu_custom_call.1} parent=131 // pred_fallthru
          _
        // Predicated region
        $region149: #{tpu_custom_call.1} parent=131 // pred_check
          %p1108 = pneg %p183
        $region150: #{tpu_custom_call.1} parent=131 // pred_check_branch
          %1110 = sbr.rel (%p1108) target = $region152
        $region151: #{tpu_custom_call.1} parent=131 // pred_region
          %1111 = dma.done [#allocation10], 256
        $region152: #{tpu_custom_call.1} parent=131 // pred_fallthru
          _
        // Predicated region
        $region153: #{tpu_custom_call.1} parent=131 // pred_check
          %p1112 = pneg %p204
        $region154: #{tpu_custom_call.1} parent=131 // pred_check_branch
          %1114 = sbr.rel (%p1112) target = $region156
        $region155: #{tpu_custom_call.1} parent=131 // pred_region
          %1115 = dma.done [#allocation13], 16
        $region156: #{tpu_custom_call.1} parent=131 // pred_fallthru
          _
        // Predicated region
        $region157: #{tpu_custom_call.1} parent=131 // pred_check
          %p1116 = pneg %p225
        $region158: #{tpu_custom_call.1} parent=131 // pred_check_branch
          %1118 = sbr.rel (%p1116) target = $region160
        $region159: #{tpu_custom_call.1} parent=131 // pred_region
          %1119 = dma.done [#allocation13], 256
        $region160: #{tpu_custom_call.1} parent=131 // pred_fallthru
          _
        // Predicated region
        $region161: #{tpu_custom_call.1} parent=131 // pred_check
          %p1120 = pneg %p246
        $region162: #{tpu_custom_call.1} parent=131 // pred_check_branch
          %1122 = sbr.rel (%p1120) target = $region164
        $region163: #{tpu_custom_call.1} parent=131 // pred_region
          %1123 = dma.done [#allocation16], 16
        $region164: #{tpu_custom_call.1} parent=131 // pred_fallthru
          _
        // Predicated region
        $region165: #{tpu_custom_call.1} parent=131 // pred_check
          %p1124 = pneg %p267
        $region166: #{tpu_custom_call.1} parent=131 // pred_check_branch
          %1126 = sbr.rel (%p1124) target = $region168
        $region167: #{tpu_custom_call.1} parent=131 // pred_region
          %1127 = dma.done [#allocation16], 256
        $region168: #{tpu_custom_call.1} parent=131 // pred_fallthru
          _
        // Predicated region
        $region169: #{tpu_custom_call.1} parent=131 // pred_check
          %p1128 = pneg %p288
        $region170: #{tpu_custom_call.1} parent=131 // pred_check_branch
          %1130 = sbr.rel (%p1128) target = $region172
        $region171: #{tpu_custom_call.1} parent=131 // pred_region
          %1131 = dma.done [#allocation19], 16
        $region172: #{tpu_custom_call.1} parent=131 // pred_fallthru
          _
        // Predicated region
        $region173: #{tpu_custom_call.1} parent=131 // pred_check
          %p1132 = pneg %p309
        $region174: #{tpu_custom_call.1} parent=131 // pred_check_branch
          %1134 = sbr.rel (%p1132) target = $region176
        $region175: #{tpu_custom_call.1} parent=131 // pred_region
          %1135 = dma.done [#allocation19], 256
        $region176: #{tpu_custom_call.1} parent=131 // pred_fallthru
          _
        // Predicated region
        $region177: #{tpu_custom_call.1} parent=131 // pred_check
          %p1136 = pneg %p330
        $region178: #{tpu_custom_call.1} parent=131 // pred_check_branch
          %1138 = sbr.rel (%p1136) target = $region180
        $region179: #{tpu_custom_call.1} parent=131 // pred_region
          %1139 = dma.done [#allocation22], 16
        $region180: #{tpu_custom_call.1} parent=131 // pred_fallthru
          _
        // Predicated region
        $region181: #{tpu_custom_call.1} parent=131 // pred_check
          %p1140 = pneg %p351
        $region182: #{tpu_custom_call.1} parent=131 // pred_check_branch
          %1142 = sbr.rel (%p1140) target = $region184
        $region183: #{tpu_custom_call.1} parent=131 // pred_region
          %1143 = dma.done [#allocation22], 256
        $region184: #{tpu_custom_call.1} parent=131 // pred_fallthru
          _
        // Predicated region
        $region185: #{tpu_custom_call.1} parent=131 // pred_check
          %p1144 = pneg %p372
        $region186: #{tpu_custom_call.1} parent=131 // pred_check_branch
          %1146 = sbr.rel (%p1144) target = $region188
        $region187: #{tpu_custom_call.1} parent=131 // pred_region
          %1147 = dma.done [#allocation25], 16
        $region188: #{tpu_custom_call.1} parent=131 // pred_fallthru
          _
        // Predicated region
        $region189: #{tpu_custom_call.1} parent=131 // pred_check
          %p1148 = pneg %p393
        $region190: #{tpu_custom_call.1} parent=131 // pred_check_branch
          %1150 = sbr.rel (%p1148) target = $region192
        $region191: #{tpu_custom_call.1} parent=131 // pred_region
          %1151 = dma.done [#allocation25], 256
        $region192: #{tpu_custom_call.1} parent=131 // pred_fallthru
          _
        // Predicated region
        $region193: #{tpu_custom_call.1} parent=131 // pred_check
          %p1152 = pneg %p414
        $region194: #{tpu_custom_call.1} parent=131 // pred_check_branch
          %1154 = sbr.rel (%p1152) target = $region196
        $region195: #{tpu_custom_call.1} parent=131 // pred_region
          %1155 = dma.done [#allocation28], 16
        $region196: #{tpu_custom_call.1} parent=131 // pred_fallthru
          _
        // Predicated region
        $region197: #{tpu_custom_call.1} parent=131 // pred_check
          %p1156 = pneg %p435
        $region198: #{tpu_custom_call.1} parent=131 // pred_check_branch
          %1158 = sbr.rel (%p1156) target = $region200
        $region199: #{tpu_custom_call.1} parent=131 // pred_region
          %1159 = dma.done [#allocation28], 256
        $region200: #{tpu_custom_call.1} parent=131 // pred_fallthru
          _
        // Predicated region
        $region201: #{tpu_custom_call.1} parent=131 // pred_check
          %p1160 = pneg %p456
        $region202: #{tpu_custom_call.1} parent=131 // pred_check_branch
          %1162 = sbr.rel (%p1160) target = $region204
        $region203: #{tpu_custom_call.1} parent=131 // pred_region
          %1163 = dma.done [#allocation31], 16
        $region204: #{tpu_custom_call.1} parent=131 // pred_fallthru
          _
        // Predicated region
        $region205: #{tpu_custom_call.1} parent=131 // pred_check
          %p1164 = pneg %p477
        $region206: #{tpu_custom_call.1} parent=131 // pred_check_branch
          %1166 = sbr.rel (%p1164) target = $region208
        $region207: #{tpu_custom_call.1} parent=131 // pred_region
          %1167 = dma.done [#allocation31], 256
        $region208: #{tpu_custom_call.1} parent=131 // pred_fallthru
          _
        // Predicated region
        $region209: #{tpu_custom_call.1} parent=131 // pred_check
          %p1168 = pneg %p498
        $region210: #{tpu_custom_call.1} parent=131 // pred_check_branch
          %1170 = sbr.rel (%p1168) target = $region212
        $region211: #{tpu_custom_call.1} parent=131 // pred_region
          %1171 = dma.done [#allocation34], 16
        $region212: #{tpu_custom_call.1} parent=131 // pred_fallthru
          _
        // Predicated region
        $region213: #{tpu_custom_call.1} parent=131 // pred_check
          %p1172 = pneg %p519
        $region214: #{tpu_custom_call.1} parent=131 // pred_check_branch
          %1174 = sbr.rel (%p1172) target = $region216
        $region215: #{tpu_custom_call.1} parent=131 // pred_region
          %1175 = dma.done [#allocation34], 512
        $region216: #{tpu_custom_call.1} parent=131 // pred_fallthru
          _
        // Predicated region
        $region217: #{tpu_custom_call.1} parent=131 // pred_check
          %p1176 = pneg %p540
        $region218: #{tpu_custom_call.1} parent=131 // pred_check_branch
          %1178 = sbr.rel (%p1176) target = $region220
        $region219: #{tpu_custom_call.1} parent=131 // pred_region
          %1179 = dma.done [#allocation37], 16
        $region220: #{tpu_custom_call.1} parent=131 // pred_fallthru
          _
        // Predicated region
        $region221: #{tpu_custom_call.1} parent=131 // pred_check
          %p1180 = pneg %p561
        $region222: #{tpu_custom_call.1} parent=131 // pred_check_branch
          %1182 = sbr.rel (%p1180) target = $region224
        $region223: #{tpu_custom_call.1} parent=131 // pred_region
          %1183 = dma.done [#allocation37], 16
        $region224: #{tpu_custom_call.1} parent=131 // pred_fallthru
          _
        // Predicated region
        $region225: #{tpu_custom_call.1} parent=131 // pred_check
          %p1184 = pneg %p582
        $region226: #{tpu_custom_call.1} parent=131 // pred_check_branch
          %1186 = sbr.rel (%p1184) target = $region228
        $region227: #{tpu_custom_call.1} parent=131 // pred_region
          %1187 = dma.done [#allocation40], 16
        $region228: #{tpu_custom_call.1} parent=131 // pred_fallthru
          _
        // Predicated region
        $region229: #{tpu_custom_call.1} parent=131 // pred_check
          %p1188 = pneg %p603
        $region230: #{tpu_custom_call.1} parent=131 // pred_check_branch
          %1190 = sbr.rel (%p1188) target = $region232
        $region231: #{tpu_custom_call.1} parent=131 // pred_region
          %1191 = dma.done [#allocation40], 16
        $region232: #{tpu_custom_call.1} parent=131 // pred_fallthru
          _
        // Predicated region
        $region233: #{tpu_custom_call.1} parent=131 // pred_check
          %p1192 = pneg %p624
        $region234: #{tpu_custom_call.1} parent=131 // pred_check_branch
          %1194 = sbr.rel (%p1192) target = $region236
        $region235: #{tpu_custom_call.1} parent=131 // pred_region
          %1195 = dma.done [#allocation43], 16
        $region236: #{tpu_custom_call.1} parent=131 // pred_fallthru
          _
        // Predicated region
        $region237: #{tpu_custom_call.1} parent=131 // pred_check
          %p1196 = pneg %p645
        $region238: #{tpu_custom_call.1} parent=131 // pred_check_branch
          %1198 = sbr.rel (%p1196) target = $region240
        $region239: #{tpu_custom_call.1} parent=131 // pred_region
          %1199 = dma.done [#allocation43], 16
        $region240: #{tpu_custom_call.1} parent=131 // pred_fallthru
          _
        // Predicated region
        $region241: #{tpu_custom_call.1} parent=131 // pred_check
          %p1200 = pneg %p666
        $region242: #{tpu_custom_call.1} parent=131 // pred_check_branch
          %1202 = sbr.rel (%p1200) target = $region244
        $region243: #{tpu_custom_call.1} parent=131 // pred_region
          %1203 = dma.done [#allocation46], 16
        $region244: #{tpu_custom_call.1} parent=131 // pred_fallthru
          _
        %s1204 = sand.u32 %s71, 1
        %s1205 = scalar_lea.sflag [#allocation4], %s1204
        %s1206 = sand.u32 %s71, 1
        %s1207 = smul.addr %s1206, 8
        %s1208 = scalar_lea.vmem [#allocation3], %s1207
        %p1209 = pneg %p84
        %p1210 = pneg %p81
        %s1211 = sand.u32 %s63, 1
        %s1212 = scalar_lea.sflag [#allocation7], %s1211
        %s1213 = sand.u32 %s97, 1
        %s1214 = smul.addr %s1213, 8
        %s1215 = scalar_lea.vmem [#allocation6], %s1214
        %p1216 = pneg %p110
        %p1217 = pneg %p107
        %s1218 = sand.u32 %s63, 1
        %s1219 = scalar_lea.sflag [#allocation7], %s1218
        %s1220 = sand.u32 %s123, 1
        %s1221 = smul.addr %s1220, 8
        %s1222 = scalar_lea.vmem [#allocation8], %s1221
        %p1223 = pneg %p136
        %p1224 = pneg %p133
        %s1225 = sand.u32 %s63, 1
        %s1226 = scalar_lea.sflag [#allocation10], %s1225
        %s1227 = sand.u32 %s149, 1
        %s1228 = smul.addr %s1227, 8
        %s1229 = scalar_lea.vmem [#allocation9], %s1228
        %p1230 = pneg %p162
        %p1231 = pneg %p159
        %p1232 = pneg %p183
        %p1233 = pneg %p180
        %p1234 = pneg %p204
        %p1235 = pneg %p201
        %p1236 = pneg %p225
        %p1237 = pneg %p222
        %p1238 = pneg %p246
        %p1239 = pneg %p243
        %p1240 = pneg %p267
        %p1241 = pneg %p264
        %p1242 = pneg %p288
        %p1243 = pneg %p285
        %p1244 = pneg %p309
        %p1245 = pneg %p306
        %p1246 = pneg %p330
        %p1247 = pneg %p327
        %p1248 = pneg %p351
        %p1249 = pneg %p348
        %p1250 = pneg %p372
        %p1251 = pneg %p369
        %p1252 = pneg %p393
        %p1253 = pneg %p390
        %p1254 = pneg %p414
        %p1255 = pneg %p411
        %p1256 = pneg %p435
        %p1257 = pneg %p432
        %p1258 = pneg %p456
        %p1259 = pneg %p453
        %p1260 = pneg %p477
        %p1261 = pneg %p474
        %p1262 = pneg %p498
        %p1263 = pneg %p495
        %p1264 = pneg %p519
        %p1265 = pneg %p516
        %p1266 = pneg %p540
        %p1267 = pneg %p537
        %p1268 = pneg %p561
        %p1269 = pneg %p558
        %p1270 = pneg %p582
        %p1271 = pneg %p579
        %p1272 = pneg %p603
        %p1273 = pneg %p600
        %p1274 = pneg %p624
        %p1275 = pneg %p621
        %p1276 = pneg %p645
        %p1277 = pneg %p642
        %p1278 = pneg %p666
        %p1279 = pneg %p663
        %p1280 = pneg %p692
        %p1281 = pneg %p689
        %s1282 = sand.u32 %s679, 1
        %s1283 = scalar_lea.sflag [#allocation5], %s1282
        %s1284 = sand.u32 %s679, 1
        %s1285 = smul.addr %s1284, 8
        %s1286 = scalar_lea.vmem [#allocation47], %s1285
        %v1288 = vld [vmem:[%s1076] sm:$0xff]
        %v1289 = vld [vmem:[%s1085] sm:$0xff]
        %v1290 = vld [vmem:[%s1094] sm:$0xff]
        %v1291 = vld [vmem:[%s1103] sm:$0xff]
        %v1292 = vadd.f32 %v1288, %v1290
        %v1293 = vpack.c.bf16 %v1292, %v1292
        %v1294 = vld [vmem:[#allocation11] sm:$0xf]
        %v1295 = vld [vmem:[#allocation11 + $0x4] sm:$0xf]
        %v1296 = vld [vmem:[#allocation11 + $0x8] sm:$0xf]
        %v1297 = vld [vmem:[#allocation11 + $0xc] sm:$0xf]
        %v1298 = vld [vmem:[#allocation12] sm:$0x1]
        %v1300 = vlaneseq
        %v1301 = vshrl.u32 %v1300, 7
        %v1302 = vsub.s32 0, %v1301
        %v1303 = vrot.slane %v1298, %v1302
        %v1309 = vunpack.c.l.b16 %v1294
        %v1310 = vunpack.c.l.b16 %v1295
        %v1311 = vunpack.c.l.b16 %v1296
        %v1312 = vunpack.c.l.b16 %v1297
        %v1313 = vpack.c.b16 %v1310, %v1309
        %v1314 = vpack.c.b16 %v1312, %v1311
        %vm1317 = vcmask 261120
        %v1319 = vsel %vm1317, %v1293, 0
        %1321 = vmatprep.subr.bf16.mxu0 0
        %1322 = vmatpush1.bf16.msra.mxu0 %v1313
        %1323 = vmatprep.subr.bf16.mxu0 0
        %1324 = vmatpush1.bf16.msra.mxu0 %v1314
        %1325 = vmatprep.subr.bf16.mxu0 0
        %1326 = vmatpush1.bf16.msra.mxu0 0
        %1327 = vmatprep.subr.bf16.mxu0 0
        %1328 = vmatpush1.bf16.msra.mxu0 0
        %1329 = vmatprep.subr.bf16.mxu0 0
        %1330 = vmatpush1.bf16.msra.mxu0 0
        %1331 = vmatprep.subr.bf16.mxu0 0
        %1332 = vmatpush1.bf16.msra.mxu0 0
        %1333 = vmatprep.subr.bf16.mxu0 0
        %1334 = vmatpush1.bf16.msra.mxu0 0
        %1335 = vmatprep.subr.bf16.mxu0 0
        %1336 = vmatpush1.bf16.msra.mxu0 0
        %1337 = vmatprep.subr.bf16.mxu0 0
        %1338 = vmatpush1.bf16.msra.mxu0 0
        %1339 = vmatprep.subr.bf16.mxu0 0
        %1340 = vmatpush1.bf16.msra.mxu0 0
        %1341 = vmatprep.subr.bf16.mxu0 0
        %1342 = vmatpush1.bf16.msra.mxu0 0
        %1343 = vmatprep.subr.bf16.mxu0 0
        %1344 = vmatpush1.bf16.msra.mxu0 0
        %1345 = vmatprep.subr.bf16.mxu0 0
        %1346 = vmatpush1.bf16.msra.mxu0 0
        %1347 = vmatprep.subr.bf16.mxu0 0
        %1348 = vmatpush1.bf16.msra.mxu0 0
        %1349 = vmatprep.subr.bf16.mxu0 0
        %1350 = vmatpush1.bf16.msra.mxu0 0
        %1351 = vmatprep.subr.bf16.mxu0 0
        %1352 = vmatpush1.bf16.msra.mxu0 0
        %1353 = vmatprep.mubr.bf16.mxu0 0
        %1354 = vmatmul.mubr.bf16.gmra.mrb[0].mxu0 %v1319
        %v1355 = vpop.f32.mrb[0].mxu0
        %v1356 = vadd.f32 %v1303, %v1355
        %v1357 = vpop.f32.mrb[0].mxu0
        %v1358 = vpop.f32.mrb[0].mxu0
        %v1359 = vpop.f32.mrb[0].mxu0
        %1360 = vdwg.mxu0
        %v1361 = vpack.c.bf16 %v1288, %v1288
        %v1362 = vld [vmem:[#allocation14] sm:$0xf]
        %v1363 = vld [vmem:[#allocation14 + $0x4] sm:$0xf]
        %v1364 = vld [vmem:[#allocation14 + $0x8] sm:$0xf]
        %v1365 = vld [vmem:[#allocation14 + $0xc] sm:$0xf]
        %v1366 = vld [vmem:[#allocation15] sm:$0x1]
        %v1368 = vlaneseq
        %v1369 = vshrl.u32 %v1368, 7
        %v1370 = vsub.s32 0, %v1369
        %v1371 = vrot.slane %v1366, %v1370
        %v1377 = vunpack.c.l.b16 %v1362
        %v1378 = vunpack.c.l.b16 %v1363
        %v1379 = vunpack.c.l.b16 %v1364
        %v1380 = vunpack.c.l.b16 %v1365
        %v1381 = vpack.c.b16 %v1378, %v1377
        %v1382 = vpack.c.b16 %v1380, %v1379
        %v1386 = vsel %vm1317, %v1361, 0
        %1388 = vmatprep.subr.bf16.mxu0 0
        %1389 = vmatpush1.bf16.msra.mxu0 %v1381
        %1390 = vmatprep.subr.bf16.mxu0 0
        %1391 = vmatpush1.bf16.msra.mxu0 %v1382
        %1392 = vmatprep.subr.bf16.mxu0 0
        %1393 = vmatpush1.bf16.msra.mxu0 0
        %1394 = vmatprep.subr.bf16.mxu0 0
        %1395 = vmatpush1.bf16.msra.mxu0 0
        %1396 = vmatprep.subr.bf16.mxu0 0
        %1397 = vmatpush1.bf16.msra.mxu0 0
        %1398 = vmatprep.subr.bf16.mxu0 0
        %1399 = vmatpush1.bf16.msra.mxu0 0
        %1400 = vmatprep.subr.bf16.mxu0 0
        %1401 = vmatpush1.bf16.msra.mxu0 0
        %1402 = vmatprep.subr.bf16.mxu0 0
        %1403 = vmatpush1.bf16.msra.mxu0 0
        %1404 = vmatprep.subr.bf16.mxu0 0
        %1405 = vmatpush1.bf16.msra.mxu0 0
        %1406 = vmatprep.subr.bf16.mxu0 0
        %1407 = vmatpush1.bf16.msra.mxu0 0
        %1408 = vmatprep.subr.bf16.mxu0 0
        %1409 = vmatpush1.bf16.msra.mxu0 0
        %1410 = vmatprep.subr.bf16.mxu0 0
        %1411 = vmatpush1.bf16.msra.mxu0 0
        %1412 = vmatprep.subr.bf16.mxu0 0
        %1413 = vmatpush1.bf16.msra.mxu0 0
        %1414 = vmatprep.subr.bf16.mxu0 0
        %1415 = vmatpush1.bf16.msra.mxu0 0
        %1416 = vmatprep.subr.bf16.mxu0 0
        %1417 = vmatpush1.bf16.msra.mxu0 0
        %1418 = vmatprep.subr.bf16.mxu0 0
        %1419 = vmatpush1.bf16.msra.mxu0 0
        %1420 = vmatprep.mubr.bf16.mxu0 0
        %1421 = vmatmul.mubr.bf16.gmra.mrb[0].mxu0 %v1386
        %v1422 = vpop.f32.mrb[0].mxu0
        %v1423 = vadd.f32 %v1371, %v1422
        %v1424 = vpop.f32.mrb[0].mxu0
        %v1425 = vpop.f32.mrb[0].mxu0
        %v1426 = vpop.f32.mrb[0].mxu0
        %1427 = vdwg.mxu0
        %v1428 = vld [vmem:[#allocation18] sm:$0x1]
        %v1429 = vpack.c.bf16 %v1356, %v1356
        %v1430 = vpack.c.bf16 %v1423, %v1423
        %1432 = vrot.lane.b32.xlu0 %v1429, 96
        %v1433 = vpop.permute.xlu0 %1432
        %vm1434 = vcmask 64512
        %v1436 = vsel %vm1434, %v1429, 0
        %v1439 = vsel %vm1434, %v1433, 0
        %1441 = vmatprep.subr.bf16.mxu0 0
        %1442 = vmatpush1.bf16.xpose.msra.mxu0 %v1439
        %1443 = vmatprep.subr.bf16.mxu0 0
        %1444 = vmatpush1.bf16.xpose.msra.mxu0 0
        %1445 = vmatprep.subr.bf16.mxu0 0
        %1446 = vmatpush1.bf16.xpose.msra.mxu0 0
        %1447 = vmatprep.subr.bf16.mxu0 0
        %1448 = vmatpush1.bf16.xpose.msra.mxu0 0
        %1449 = vmatprep.subr.bf16.mxu0 0
        %1450 = vmatpush1.bf16.xpose.msra.mxu0 0
        %1451 = vmatprep.subr.bf16.mxu0 0
        %1452 = vmatpush1.bf16.xpose.msra.mxu0 0
        %1453 = vmatprep.subr.bf16.mxu0 0
        %1454 = vmatpush1.bf16.xpose.msra.mxu0 0
        %1455 = vmatprep.subr.bf16.mxu0 0
        %1456 = vmatpush1.bf16.xpose.msra.mxu0 0
        %1457 = vmatprep.subr.bf16.mxu0 0
        %1458 = vmatpush1.bf16.xpose.msra.mxu0 0
        %1459 = vmatprep.subr.bf16.mxu0 0
        %1460 = vmatpush1.bf16.xpose.msra.mxu0 0
        %1461 = vmatprep.subr.bf16.mxu0 0
        %1462 = vmatpush1.bf16.xpose.msra.mxu0 0
        %1463 = vmatprep.subr.bf16.mxu0 0
        %1464 = vmatpush1.bf16.xpose.msra.mxu0 0
        %1465 = vmatprep.subr.bf16.mxu0 0
        %1466 = vmatpush1.bf16.xpose.msra.mxu0 0
        %1467 = vmatprep.subr.bf16.mxu0 0
        %1468 = vmatpush1.bf16.xpose.msra.mxu0 0
        %1469 = vmatprep.subr.bf16.mxu0 0
        %1470 = vmatpush1.bf16.xpose.msra.mxu0 0
        %1471 = vmatprep.subr.bf16.mxu0 0
        %1472 = vmatpush1.bf16.xpose.msra.mxu0 0
        %1473 = vmatprep.mubr.bf16.mxu0 0
        %1474 = vmatmul.mubr.bf16.gmra.mrb[0].mxu0 %v1436
        %v1475 = vpop.f32.mrb[0].mxu0
        %v1476 = vadd.f32 0.0, %v1475
        %v1477 = vpop.f32.mrb[0].mxu0
        %v1478 = vpop.f32.mrb[0].mxu0
        %v1479 = vpop.f32.mrb[0].mxu0
        %1480 = vdwg.mxu0
        %v1481 = vsel %vm1434, %v1476, -inf
        %1482 = vmax.xlane.f32.xlu0 %v1481
        %v1483 = vpop.xlane.xlu0 %1482
        %v1484 = vsub.f32 %v1476, %v1483
        %v1485 = vmul.f32 %v1484, 1.442695
        %v1486 = vpow.pop %v1485
        %v1487 = vsel %vm1434, %v1486, 0.0
        %1488 = vadd.xlane.f32.xlu0 %v1487
        %v1489 = vpop.xlane.xlu0 %1488
        %v1490 = vrcp.pop %v1489
        %v1491 = vmul.f32 %v1486, %v1490
        %v1492 = vpack.c.bf16 %v1491, %v1491
        %v1494 = vsel %vm1434, %v1492, 0
        %vm1496 = vcmask 1043456
        %v1498 = vsel %vm1496, %v1430, 0
        %1500 = vmatprep.subr.bf16.mxu0 0
        %1501 = vmatpush1.bf16.msra.mxu0 %v1498
        %1502 = vmatprep.subr.bf16.mxu0 0
        %1503 = vmatpush1.bf16.msra.mxu0 0
        %1504 = vmatprep.subr.bf16.mxu0 0
        %1505 = vmatpush1.bf16.msra.mxu0 0
        %1506 = vmatprep.subr.bf16.mxu0 0
        %1507 = vmatpush1.bf16.msra.mxu0 0
        %1508 = vmatprep.subr.bf16.mxu0 0
        %1509 = vmatpush1.bf16.msra.mxu0 0
        %1510 = vmatprep.subr.bf16.mxu0 0
        %1511 = vmatpush1.bf16.msra.mxu0 0
        %1512 = vmatprep.subr.bf16.mxu0 0
        %1513 = vmatpush1.bf16.msra.mxu0 0
        %1514 = vmatprep.subr.bf16.mxu0 0
        %1515 = vmatpush1.bf16.msra.mxu0 0
        %1516 = vmatprep.subr.bf16.mxu0 0
        %1517 = vmatpush1.bf16.msra.mxu0 0
        %1518 = vmatprep.subr.bf16.mxu0 0
        %1519 = vmatpush1.bf16.msra.mxu0 0
        %1520 = vmatprep.subr.bf16.mxu0 0
        %1521 = vmatpush1.bf16.msra.mxu0 0
        %1522 = vmatprep.subr.bf16.mxu0 0
        %1523 = vmatpush1.bf16.msra.mxu0 0
        %1524 = vmatprep.subr.bf16.mxu0 0
        %1525 = vmatpush1.bf16.msra.mxu0 0
        %1526 = vmatprep.subr.bf16.mxu0 0
        %1527 = vmatpush1.bf16.msra.mxu0 0
        %1528 = vmatprep.subr.bf16.mxu0 0
        %1529 = vmatpush1.bf16.msra.mxu0 0
        %1530 = vmatprep.subr.bf16.mxu0 0
        %1531 = vmatpush1.bf16.msra.mxu0 0
        %1532 = vmatprep.mubr.bf16.mxu0 0
        %1533 = vmatmul.mubr.bf16.gmra.mrb[0].mxu0 %v1494
        %v1534 = vpop.f32.mrb[0].mxu0
        %v1535 = vadd.f32 0.0, %v1534
        %v1536 = vpop.f32.mrb[0].mxu0
        %v1537 = vpop.f32.mrb[0].mxu0
        %v1538 = vpop.f32.mrb[0].mxu0
        %1539 = vdwg.mxu0
        %v1540 = vpack.c.bf16 %v1535, %v1535
        %vm1541 = vcmask 60416
        %1542 = vst.msk [vmem:[#allocation2] sm:$0xf] %vm1541, %v1540
        %1543 = vrot.lane.b32.xlu0 %v1429, 120
        %v1544 = vpop.permute.xlu0 %1543
        %1545 = vrot.lane.b32.xlu0 %v1429, 88
        %v1546 = vpop.permute.xlu0 %1545
        %v1548 = vsel %vm1434, %v1544, 0
        %v1551 = vsel %vm1434, %v1546, 0
        %1553 = vmatprep.subr.bf16.mxu0 0
        %1554 = vmatpush1.bf16.xpose.msra.mxu0 %v1551
        %1555 = vmatprep.subr.bf16.mxu0 0
        %1556 = vmatpush1.bf16.xpose.msra.mxu0 0
        %1557 = vmatprep.subr.bf16.mxu0 0
        %1558 = vmatpush1.bf16.xpose.msra.mxu0 0
        %1559 = vmatprep.subr.bf16.mxu0 0
        %1560 = vmatpush1.bf16.xpose.msra.mxu0 0
        %1561 = vmatprep.subr.bf16.mxu0 0
        %1562 = vmatpush1.bf16.xpose.msra.mxu0 0
        %1563 = vmatprep.subr.bf16.mxu0 0
        %1564 = vmatpush1.bf16.xpose.msra.mxu0 0
        %1565 = vmatprep.subr.bf16.mxu0 0
        %1566 = vmatpush1.bf16.xpose.msra.mxu0 0
        %1567 = vmatprep.subr.bf16.mxu0 0
        %1568 = vmatpush1.bf16.xpose.msra.mxu0 0
        %1569 = vmatprep.subr.bf16.mxu0 0
        %1570 = vmatpush1.bf16.xpose.msra.mxu0 0
        %1571 = vmatprep.subr.bf16.mxu0 0
        %1572 = vmatpush1.bf16.xpose.msra.mxu0 0
        %1573 = vmatprep.subr.bf16.mxu0 0
        %1574 = vmatpush1.bf16.xpose.msra.mxu0 0
        %1575 = vmatprep.subr.bf16.mxu0 0
        %1576 = vmatpush1.bf16.xpose.msra.mxu0 0
        %1577 = vmatprep.subr.bf16.mxu0 0
        %1578 = vmatpush1.bf16.xpose.msra.mxu0 0
        %1579 = vmatprep.subr.bf16.mxu0 0
        %1580 = vmatpush1.bf16.xpose.msra.mxu0 0
        %1581 = vmatprep.subr.bf16.mxu0 0
        %1582 = vmatpush1.bf16.xpose.msra.mxu0 0
        %1583 = vmatprep.subr.bf16.mxu0 0
        %1584 = vmatpush1.bf16.xpose.msra.mxu0 0
        %1585 = vmatprep.mubr.bf16.mxu0 0
        %1586 = vmatmul.mubr.bf16.gmra.mrb[0].mxu0 %v1548
        %v1587 = vpop.f32.mrb[0].mxu0
        %v1588 = vadd.f32 0.0, %v1587
        %v1589 = vpop.f32.mrb[0].mxu0
        %v1590 = vpop.f32.mrb[0].mxu0
        %v1591 = vpop.f32.mrb[0].mxu0
        %1592 = vdwg.mxu0
        %v1593 = vsel %vm1434, %v1588, -inf
        %1594 = vmax.xlane.f32.xlu0 %v1593
        %v1595 = vpop.xlane.xlu0 %1594
        %v1596 = vsub.f32 %v1588, %v1595
        %v1597 = vmul.f32 %v1596, 1.442695
        %v1598 = vpow.pop %v1597
        %v1599 = vsel %vm1434, %v1598, 0.0
        %1600 = vadd.xlane.f32.xlu0 %v1599
        %v1601 = vpop.xlane.xlu0 %1600
        %v1602 = vrcp.pop %v1601
        %v1603 = vmul.f32 %v1598, %v1602
        %v1604 = vpack.c.bf16 %v1603, %v1603
        %1606 = vrot.lane.b32.xlu0 %v1430, 120
        %v1607 = vpop.permute.xlu0 %1606
        %v1609 = vsel %vm1434, %v1604, 0
        %v1612 = vsel %vm1496, %v1607, 0
        %1614 = vmatprep.subr.bf16.mxu0 0
        %1615 = vmatpush1.bf16.msra.mxu0 %v1612
        %1616 = vmatprep.subr.bf16.mxu0 0
        %1617 = vmatpush1.bf16.msra.mxu0 0
        %1618 = vmatprep.subr.bf16.mxu0 0
        %1619 = vmatpush1.bf16.msra.mxu0 0
        %1620 = vmatprep.subr.bf16.mxu0 0
        %1621 = vmatpush1.bf16.msra.mxu0 0
        %1622 = vmatprep.subr.bf16.mxu0 0
        %1623 = vmatpush1.bf16.msra.mxu0 0
        %1624 = vmatprep.subr.bf16.mxu0 0
        %1625 = vmatpush1.bf16.msra.mxu0 0
        %1626 = vmatprep.subr.bf16.mxu0 0
        %1627 = vmatpush1.bf16.msra.mxu0 0
        %1628 = vmatprep.subr.bf16.mxu0 0
        %1629 = vmatpush1.bf16.msra.mxu0 0
        %1630 = vmatprep.subr.bf16.mxu0 0
        %1631 = vmatpush1.bf16.msra.mxu0 0
        %1632 = vmatprep.subr.bf16.mxu0 0
        %1633 = vmatpush1.bf16.msra.mxu0 0
        %1634 = vmatprep.subr.bf16.mxu0 0
        %1635 = vmatpush1.bf16.msra.mxu0 0
        %1636 = vmatprep.subr.bf16.mxu0 0
        %1637 = vmatpush1.bf16.msra.mxu0 0
        %1638 = vmatprep.subr.bf16.mxu0 0
        %1639 = vmatpush1.bf16.msra.mxu0 0
        %1640 = vmatprep.subr.bf16.mxu0 0
        %1641 = vmatpush1.bf16.msra.mxu0 0
        %1642 = vmatprep.subr.bf16.mxu0 0
        %1643 = vmatpush1.bf16.msra.mxu0 0
        %1644 = vmatprep.subr.bf16.mxu0 0
        %1645 = vmatpush1.bf16.msra.mxu0 0
        %1646 = vmatprep.mubr.bf16.mxu0 0
        %1647 = vmatmul.mubr.bf16.gmra.mrb[0].mxu0 %v1609
        %v1648 = vpop.f32.mrb[0].mxu0
        %v1649 = vadd.f32 0.0, %v1648
        %v1650 = vpop.f32.mrb[0].mxu0
        %v1651 = vpop.f32.mrb[0].mxu0
        %v1652 = vpop.f32.mrb[0].mxu0
        %1653 = vdwg.mxu0
        %v1654 = vpack.c.bf16 %v1649, %v1649
        %v1656 = vunpack.c.l.b16 %v1654
        %v1657 = vpack.c.b16 %v1656, %v1656
        %1658 = vrot.lane.b32.xlu0 %v1657, 8
        %v1659 = vpop.permute.xlu0 %1658
        %vm1661 = vcmask 126016
        %1662 = vst.msk [vmem:[#allocation2] sm:$0xf] %vm1661, %v1659
        %1663 = vrot.lane.b32.xlu0 %v1429, 112
        %v1664 = vpop.permute.xlu0 %1663
        %1665 = vrot.lane.b32.xlu0 %v1429, 80
        %v1666 = vpop.permute.xlu0 %1665
        %v1668 = vsel %vm1434, %v1664, 0
        %v1671 = vsel %vm1434, %v1666, 0
        %1673 = vmatprep.subr.bf16.mxu0 0
        %1674 = vmatpush1.bf16.xpose.msra.mxu0 %v1671
        %1675 = vmatprep.subr.bf16.mxu0 0
        %1676 = vmatpush1.bf16.xpose.msra.mxu0 0
        %1677 = vmatprep.subr.bf16.mxu0 0
        %1678 = vmatpush1.bf16.xpose.msra.mxu0 0
        %1679 = vmatprep.subr.bf16.mxu0 0
        %1680 = vmatpush1.bf16.xpose.msra.mxu0 0
        %1681 = vmatprep.subr.bf16.mxu0 0
        %1682 = vmatpush1.bf16.xpose.msra.mxu0 0
        %1683 = vmatprep.subr.bf16.mxu0 0
        %1684 = vmatpush1.bf16.xpose.msra.mxu0 0
        %1685 = vmatprep.subr.bf16.mxu0 0
        %1686 = vmatpush1.bf16.xpose.msra.mxu0 0
        %1687 = vmatprep.subr.bf16.mxu0 0
        %1688 = vmatpush1.bf16.xpose.msra.mxu0 0
        %1689 = vmatprep.subr.bf16.mxu0 0
        %1690 = vmatpush1.bf16.xpose.msra.mxu0 0
        %1691 = vmatprep.subr.bf16.mxu0 0
        %1692 = vmatpush1.bf16.xpose.msra.mxu0 0
        %1693 = vmatprep.subr.bf16.mxu0 0
        %1694 = vmatpush1.bf16.xpose.msra.mxu0 0
        %1695 = vmatprep.subr.bf16.mxu0 0
        %1696 = vmatpush1.bf16.xpose.msra.mxu0 0
        %1697 = vmatprep.subr.bf16.mxu0 0
        %1698 = vmatpush1.bf16.xpose.msra.mxu0 0
        %1699 = vmatprep.subr.bf16.mxu0 0
        %1700 = vmatpush1.bf16.xpose.msra.mxu0 0
        %1701 = vmatprep.subr.bf16.mxu0 0
        %1702 = vmatpush1.bf16.xpose.msra.mxu0 0
        %1703 = vmatprep.subr.bf16.mxu0 0
        %1704 = vmatpush1.bf16.xpose.msra.mxu0 0
        %1705 = vmatprep.mubr.bf16.mxu0 0
        %1706 = vmatmul.mubr.bf16.gmra.mrb[0].mxu0 %v1668
        %v1707 = vpop.f32.mrb[0].mxu0
        %v1708 = vadd.f32 0.0, %v1707
        %v1709 = vpop.f32.mrb[0].mxu0
        %v1710 = vpop.f32.mrb[0].mxu0
        %v1711 = vpop.f32.mrb[0].mxu0
        %1712 = vdwg.mxu0
        %v1713 = vsel %vm1434, %v1708, -inf
        %1714 = vmax.xlane.f32.xlu0 %v1713
        %v1715 = vpop.xlane.xlu0 %1714
        %v1716 = vsub.f32 %v1708, %v1715
        %v1717 = vmul.f32 %v1716, 1.442695
        %v1718 = vpow.pop %v1717
        %v1719 = vsel %vm1434, %v1718, 0.0
        %1720 = vadd.xlane.f32.xlu0 %v1719
        %v1721 = vpop.xlane.xlu0 %1720
        %v1722 = vrcp.pop %v1721
        %v1723 = vmul.f32 %v1718, %v1722
        %v1724 = vpack.c.bf16 %v1723, %v1723
        %1725 = vrot.lane.b32.xlu0 %v1430, 112
        %v1726 = vpop.permute.xlu0 %1725
        %v1728 = vsel %vm1434, %v1724, 0
        %v1731 = vsel %vm1496, %v1726, 0
        %1733 = vmatprep.subr.bf16.mxu0 0
        %1734 = vmatpush1.bf16.msra.mxu0 %v1731
        %1735 = vmatprep.subr.bf16.mxu0 0
        %1736 = vmatpush1.bf16.msra.mxu0 0
        %1737 = vmatprep.subr.bf16.mxu0 0
        %1738 = vmatpush1.bf16.msra.mxu0 0
        %1739 = vmatprep.subr.bf16.mxu0 0
        %1740 = vmatpush1.bf16.msra.mxu0 0
        %1741 = vmatprep.subr.bf16.mxu0 0
        %1742 = vmatpush1.bf16.msra.mxu0 0
        %1743 = vmatprep.subr.bf16.mxu0 0
        %1744 = vmatpush1.bf16.msra.mxu0 0
        %1745 = vmatprep.subr.bf16.mxu0 0
        %1746 = vmatpush1.bf16.msra.mxu0 0
        %1747 = vmatprep.subr.bf16.mxu0 0
        %1748 = vmatpush1.bf16.msra.mxu0 0
        %1749 = vmatprep.subr.bf16.mxu0 0
        %1750 = vmatpush1.bf16.msra.mxu0 0
        %1751 = vmatprep.subr.bf16.mxu0 0
        %1752 = vmatpush1.bf16.msra.mxu0 0
        %1753 = vmatprep.subr.bf16.mxu0 0
        %1754 = vmatpush1.bf16.msra.mxu0 0
        %1755 = vmatprep.subr.bf16.mxu0 0
        %1756 = vmatpush1.bf16.msra.mxu0 0
        %1757 = vmatprep.subr.bf16.mxu0 0
        %1758 = vmatpush1.bf16.msra.mxu0 0
        %1759 = vmatprep.subr.bf16.mxu0 0
        %1760 = vmatpush1.bf16.msra.mxu0 0
        %1761 = vmatprep.subr.bf16.mxu0 0
        %1762 = vmatpush1.bf16.msra.mxu0 0
        %1763 = vmatprep.subr.bf16.mxu0 0
        %1764 = vmatpush1.bf16.msra.mxu0 0
        %1765 = vmatprep.mubr.bf16.mxu0 0
        %1766 = vmatmul.mubr.bf16.gmra.mrb[0].mxu0 %v1728
        %v1767 = vpop.f32.mrb[0].mxu0
        %v1768 = vadd.f32 0.0, %v1767
        %v1769 = vpop.f32.mrb[0].mxu0
        %v1770 = vpop.f32.mrb[0].mxu0
        %v1771 = vpop.f32.mrb[0].mxu0
        %1772 = vdwg.mxu0
        %v1773 = vpack.c.bf16 %v1768, %v1768
        %v1775 = vunpack.c.l.b16 %v1773
        %v1776 = vpack.c.b16 %v1775, %v1775
        %1777 = vrot.lane.b32.xlu0 %v1776, 16
        %v1778 = vpop.permute.xlu0 %1777
        %vm1780 = vcmask 191616
        %1781 = vst.msk [vmem:[#allocation2] sm:$0xf] %vm1780, %v1778
        %1782 = vrot.lane.b32.xlu0 %v1429, 104
        %v1783 = vpop.permute.xlu0 %1782
        %1784 = vrot.lane.b32.xlu0 %v1429, 72
        %v1785 = vpop.permute.xlu0 %1784
        %v1787 = vsel %vm1434, %v1783, 0
        %v1790 = vsel %vm1434, %v1785, 0
        %1792 = vmatprep.subr.bf16.mxu0 0
        %1793 = vmatpush1.bf16.xpose.msra.mxu0 %v1790
        %1794 = vmatprep.subr.bf16.mxu0 0
        %1795 = vmatpush1.bf16.xpose.msra.mxu0 0
        %1796 = vmatprep.subr.bf16.mxu0 0
        %1797 = vmatpush1.bf16.xpose.msra.mxu0 0
        %1798 = vmatprep.subr.bf16.mxu0 0
        %1799 = vmatpush1.bf16.xpose.msra.mxu0 0
        %1800 = vmatprep.subr.bf16.mxu0 0
        %1801 = vmatpush1.bf16.xpose.msra.mxu0 0
        %1802 = vmatprep.subr.bf16.mxu0 0
        %1803 = vmatpush1.bf16.xpose.msra.mxu0 0
        %1804 = vmatprep.subr.bf16.mxu0 0
        %1805 = vmatpush1.bf16.xpose.msra.mxu0 0
        %1806 = vmatprep.subr.bf16.mxu0 0
        %1807 = vmatpush1.bf16.xpose.msra.mxu0 0
        %1808 = vmatprep.subr.bf16.mxu0 0
        %1809 = vmatpush1.bf16.xpose.msra.mxu0 0
        %1810 = vmatprep.subr.bf16.mxu0 0
        %1811 = vmatpush1.bf16.xpose.msra.mxu0 0
        %1812 = vmatprep.subr.bf16.mxu0 0
        %1813 = vmatpush1.bf16.xpose.msra.mxu0 0
        %1814 = vmatprep.subr.bf16.mxu0 0
        %1815 = vmatpush1.bf16.xpose.msra.mxu0 0
        %1816 = vmatprep.subr.bf16.mxu0 0
        %1817 = vmatpush1.bf16.xpose.msra.mxu0 0
        %1818 = vmatprep.subr.bf16.mxu0 0
        %1819 = vmatpush1.bf16.xpose.msra.mxu0 0
        %1820 = vmatprep.subr.bf16.mxu0 0
        %1821 = vmatpush1.bf16.xpose.msra.mxu0 0
        %1822 = vmatprep.subr.bf16.mxu0 0
        %1823 = vmatpush1.bf16.xpose.msra.mxu0 0
        %1824 = vmatprep.mubr.bf16.mxu0 0
        %1825 = vmatmul.mubr.bf16.gmra.mrb[0].mxu0 %v1787
        %v1826 = vpop.f32.mrb[0].mxu0
        %v1827 = vadd.f32 0.0, %v1826
        %v1828 = vpop.f32.mrb[0].mxu0
        %v1829 = vpop.f32.mrb[0].mxu0
        %v1830 = vpop.f32.mrb[0].mxu0
        %1831 = vdwg.mxu0
        %v1832 = vsel %vm1434, %v1827, -inf
        %1833 = vmax.xlane.f32.xlu0 %v1832
        %v1834 = vpop.xlane.xlu0 %1833
        %v1835 = vsub.f32 %v1827, %v1834
        %v1836 = vmul.f32 %v1835, 1.442695
        %v1837 = vpow.pop %v1836
        %v1838 = vsel %vm1434, %v1837, 0.0
        %1839 = vadd.xlane.f32.xlu0 %v1838
        %v1840 = vpop.xlane.xlu0 %1839
        %v1841 = vrcp.pop %v1840
        %v1842 = vmul.f32 %v1837, %v1841
        %v1843 = vpack.c.bf16 %v1842, %v1842
        %1844 = vrot.lane.b32.xlu0 %v1430, 104
        %v1845 = vpop.permute.xlu0 %1844
        %v1847 = vsel %vm1434, %v1843, 0
        %v1850 = vsel %vm1496, %v1845, 0
        %1852 = vmatprep.subr.bf16.mxu0 0
        %1853 = vmatpush1.bf16.msra.mxu0 %v1850
        %1854 = vmatprep.subr.bf16.mxu0 0
        %1855 = vmatpush1.bf16.msra.mxu0 0
        %1856 = vmatprep.subr.bf16.mxu0 0
        %1857 = vmatpush1.bf16.msra.mxu0 0
        %1858 = vmatprep.subr.bf16.mxu0 0
        %1859 = vmatpush1.bf16.msra.mxu0 0
        %1860 = vmatprep.subr.bf16.mxu0 0
        %1861 = vmatpush1.bf16.msra.mxu0 0
        %1862 = vmatprep.subr.bf16.mxu0 0
        %1863 = vmatpush1.bf16.msra.mxu0 0
        %1864 = vmatprep.subr.bf16.mxu0 0
        %1865 = vmatpush1.bf16.msra.mxu0 0
        %1866 = vmatprep.subr.bf16.mxu0 0
        %1867 = vmatpush1.bf16.msra.mxu0 0
        %1868 = vmatprep.subr.bf16.mxu0 0
        %1869 = vmatpush1.bf16.msra.mxu0 0
        %1870 = vmatprep.subr.bf16.mxu0 0
        %1871 = vmatpush1.bf16.msra.mxu0 0
        %1872 = vmatprep.subr.bf16.mxu0 0
        %1873 = vmatpush1.bf16.msra.mxu0 0
        %1874 = vmatprep.subr.bf16.mxu0 0
        %1875 = vmatpush1.bf16.msra.mxu0 0
        %1876 = vmatprep.subr.bf16.mxu0 0
        %1877 = vmatpush1.bf16.msra.mxu0 0
        %1878 = vmatprep.subr.bf16.mxu0 0
        %1879 = vmatpush1.bf16.msra.mxu0 0
        %1880 = vmatprep.subr.bf16.mxu0 0
        %1881 = vmatpush1.bf16.msra.mxu0 0
        %1882 = vmatprep.subr.bf16.mxu0 0
        %1883 = vmatpush1.bf16.msra.mxu0 0
        %1884 = vmatprep.mubr.bf16.mxu0 0
        %1885 = vmatmul.mubr.bf16.gmra.mrb[0].mxu0 %v1847
        %v1886 = vpop.f32.mrb[0].mxu0
        %v1887 = vadd.f32 0.0, %v1886
        %v1888 = vpop.f32.mrb[0].mxu0
        %v1889 = vpop.f32.mrb[0].mxu0
        %v1890 = vpop.f32.mrb[0].mxu0
        %1891 = vdwg.mxu0
        %v1892 = vpack.c.bf16 %v1887, %v1887
        %v1894 = vunpack.c.l.b16 %v1892
        %v1895 = vpack.c.b16 %v1894, %v1894
        %1896 = vrot.lane.b32.xlu0 %v1895, 24
        %v1897 = vpop.permute.xlu0 %1896
        %vm1899 = vcmask 257216
        %1900 = vst.msk [vmem:[#allocation2] sm:$0xf] %vm1899, %v1897
        %v1901 = vld [vmem:[#allocation2] sm:$0xf]
        %v1902 = vld [vmem:[#allocation17] sm:$0xf]
        %v1903 = vld [vmem:[#allocation17 + $0x4] sm:$0xf]
        %v1904 = vld [vmem:[#allocation17 + $0x8] sm:$0xf]
        %v1905 = vld [vmem:[#allocation17 + $0xc] sm:$0xf]
        %v1907 = vlaneseq
        %v1908 = vshrl.u32 %v1907, 7
        %v1909 = vsub.s32 0, %v1908
        %v1910 = vrot.slane %v1428, %v1909
        %v1916 = vunpack.c.l.b16 %v1902
        %v1917 = vunpack.c.l.b16 %v1903
        %v1918 = vunpack.c.l.b16 %v1904
        %v1919 = vunpack.c.l.b16 %v1905
        %v1920 = vpack.c.b16 %v1917, %v1916
        %v1921 = vpack.c.b16 %v1919, %v1918
        %v1925 = vsel %vm1317, %v1901, 0
        %1927 = vmatprep.subr.bf16.mxu0 0
        %1928 = vmatpush1.bf16.msra.mxu0 %v1920
        %1929 = vmatprep.subr.bf16.mxu0 0
        %1930 = vmatpush1.bf16.msra.mxu0 %v1921
        %1931 = vmatprep.subr.bf16.mxu0 0
        %1932 = vmatpush1.bf16.msra.mxu0 0
        %1933 = vmatprep.subr.bf16.mxu0 0
        %1934 = vmatpush1.bf16.msra.mxu0 0
        %1935 = vmatprep.subr.bf16.mxu0 0
        %1936 = vmatpush1.bf16.msra.mxu0 0
        %1937 = vmatprep.subr.bf16.mxu0 0
        %1938 = vmatpush1.bf16.msra.mxu0 0
        %1939 = vmatprep.subr.bf16.mxu0 0
        %1940 = vmatpush1.bf16.msra.mxu0 0
        %1941 = vmatprep.subr.bf16.mxu0 0
        %1942 = vmatpush1.bf16.msra.mxu0 0
        %1943 = vmatprep.subr.bf16.mxu0 0
        %1944 = vmatpush1.bf16.msra.mxu0 0
        %1945 = vmatprep.subr.bf16.mxu0 0
        %1946 = vmatpush1.bf16.msra.mxu0 0
        %1947 = vmatprep.subr.bf16.mxu0 0
        %1948 = vmatpush1.bf16.msra.mxu0 0
        %1949 = vmatprep.subr.bf16.mxu0 0
        %1950 = vmatpush1.bf16.msra.mxu0 0
        %1951 = vmatprep.subr.bf16.mxu0 0
        %1952 = vmatpush1.bf16.msra.mxu0 0
        %1953 = vmatprep.subr.bf16.mxu0 0
        %1954 = vmatpush1.bf16.msra.mxu0 0
        %1955 = vmatprep.subr.bf16.mxu0 0
        %1956 = vmatpush1.bf16.msra.mxu0 0
        %1957 = vmatprep.subr.bf16.mxu0 0
        %1958 = vmatpush1.bf16.msra.mxu0 0
        %1959 = vmatprep.mubr.bf16.mxu0 0
        %1960 = vmatmul.mubr.bf16.gmra.mrb[0].mxu0 %v1925
        %v1961 = vpop.f32.mrb[0].mxu0
        %v1962 = vadd.f32 %v1910, %v1961
        %v1963 = vpop.f32.mrb[0].mxu0
        %v1964 = vpop.f32.mrb[0].mxu0
        %v1965 = vpop.f32.mrb[0].mxu0
        %1966 = vdwg.mxu0
        %v1967 = vadd.f32 %v1288, %v1962
        %v1968 = vld [vmem:[#allocation38] sm:$0x1]
        %v1969 = vld [vmem:[#allocation39] sm:$0x1]
        %v1970 = vsel %vm1317, %v1967, 0.0
        %1971 = vadd.xlane.f32.xlu0 %v1970
        %v1972 = vpop.xlane.xlu0 %1971
        %v1973 = vrcp.pop 32.0
        %v1974 = vmul.f32 %v1972, %v1973
        %v1975 = vsub.f32 %v1967, %v1974
        %v1976 = vmul.f32 %v1975, %v1975
        %v1977 = vsel %vm1317, %v1976, 0.0
        %1978 = vadd.xlane.f32.xlu0 %v1977
        %v1979 = vpop.xlane.xlu0 %1978
        %v1980 = vmul.f32 %v1979, %v1973
        %v1981 = vadd.f32 %v1980, 1e-05
        %v1982 = vrsqrt.pop %v1981
        %v1983 = vmul.f32 %v1975, %v1982
        %v1985 = vlaneseq
        %v1986 = vshrl.u32 %v1985, 7
        %v1987 = vsub.s32 0, %v1986
        %v1988 = vrot.slane %v1968, %v1987
        %v1990 = vmul.f32 %v1983, %v1988
        %v1992 = vlaneseq
        %v1993 = vshrl.u32 %v1992, 7
        %v1994 = vsub.s32 0, %v1993
        %v1995 = vrot.slane %v1969, %v1994
        %v1997 = vadd.f32 %v1990, %v1995
        %v1998 = vadd.f32 %v1997, %v1290
        %v1999 = vpack.c.bf16 %v1998, %v1998
        %v2000 = vadd.f32 %v1289, %v1291
        %v2001 = vpack.c.bf16 %v2000, %v2000
        %v2002 = vpack.c.bf16 %v1289, %v1289
        %v2003 = vld [vmem:[#allocation20] sm:$0xf]
        %v2004 = vld [vmem:[#allocation20 + $0x4] sm:$0xf]
        %v2005 = vld [vmem:[#allocation20 + $0x8] sm:$0xf]
        %v2006 = vld [vmem:[#allocation20 + $0xc] sm:$0xf]
        %v2007 = vld [vmem:[#allocation21] sm:$0x1]
        %v2009 = vlaneseq
        %v2010 = vshrl.u32 %v2009, 7
        %v2011 = vsub.s32 0, %v2010
        %v2012 = vrot.slane %v2007, %v2011
        %v2018 = vunpack.c.l.b16 %v2003
        %v2019 = vunpack.c.l.b16 %v2004
        %v2020 = vunpack.c.l.b16 %v2005
        %v2021 = vunpack.c.l.b16 %v2006
        %v2022 = vpack.c.b16 %v2019, %v2018
        %v2023 = vpack.c.b16 %v2021, %v2020
        %v2027 = vsel %vm1317, %v1999, 0
        %2029 = vmatprep.subr.bf16.mxu0 0
        %2030 = vmatpush1.bf16.msra.mxu0 %v2022
        %2031 = vmatprep.subr.bf16.mxu0 0
        %2032 = vmatpush1.bf16.msra.mxu0 %v2023
        %2033 = vmatprep.subr.bf16.mxu0 0
        %2034 = vmatpush1.bf16.msra.mxu0 0
        %2035 = vmatprep.subr.bf16.mxu0 0
        %2036 = vmatpush1.bf16.msra.mxu0 0
        %2037 = vmatprep.subr.bf16.mxu0 0
        %2038 = vmatpush1.bf16.msra.mxu0 0
        %2039 = vmatprep.subr.bf16.mxu0 0
        %2040 = vmatpush1.bf16.msra.mxu0 0
        %2041 = vmatprep.subr.bf16.mxu0 0
        %2042 = vmatpush1.bf16.msra.mxu0 0
        %2043 = vmatprep.subr.bf16.mxu0 0
        %2044 = vmatpush1.bf16.msra.mxu0 0
        %2045 = vmatprep.subr.bf16.mxu0 0
        %2046 = vmatpush1.bf16.msra.mxu0 0
        %2047 = vmatprep.subr.bf16.mxu0 0
        %2048 = vmatpush1.bf16.msra.mxu0 0
        %2049 = vmatprep.subr.bf16.mxu0 0
        %2050 = vmatpush1.bf16.msra.mxu0 0
        %2051 = vmatprep.subr.bf16.mxu0 0
        %2052 = vmatpush1.bf16.msra.mxu0 0
        %2053 = vmatprep.subr.bf16.mxu0 0
        %2054 = vmatpush1.bf16.msra.mxu0 0
        %2055 = vmatprep.subr.bf16.mxu0 0
        %2056 = vmatpush1.bf16.msra.mxu0 0
        %2057 = vmatprep.subr.bf16.mxu0 0
        %2058 = vmatpush1.bf16.msra.mxu0 0
        %2059 = vmatprep.subr.bf16.mxu0 0
        %2060 = vmatpush1.bf16.msra.mxu0 0
        %2061 = vmatprep.mubr.bf16.mxu0 0
        %2062 = vmatmul.mubr.bf16.gmra.mrb[0].mxu0 %v2027
        %v2063 = vpop.f32.mrb[0].mxu0
        %v2064 = vadd.f32 %v2012, %v2063
        %v2065 = vpop.f32.mrb[0].mxu0
        %v2066 = vpop.f32.mrb[0].mxu0
        %v2067 = vpop.f32.mrb[0].mxu0
        %2068 = vdwg.mxu0
        %v2069 = vld [vmem:[#allocation23] sm:$0xf]
        %v2070 = vld [vmem:[#allocation23 + $0x4] sm:$0xf]
        %v2071 = vld [vmem:[#allocation23 + $0x8] sm:$0xf]
        %v2072 = vld [vmem:[#allocation23 + $0xc] sm:$0xf]
        %v2073 = vld [vmem:[#allocation24] sm:$0x1]
        %v2075 = vlaneseq
        %v2076 = vshrl.u32 %v2075, 7
        %v2077 = vsub.s32 0, %v2076
        %v2078 = vrot.slane %v2073, %v2077
        %v2084 = vunpack.c.l.b16 %v2069
        %v2085 = vunpack.c.l.b16 %v2070
        %v2086 = vunpack.c.l.b16 %v2071
        %v2087 = vunpack.c.l.b16 %v2072
        %v2088 = vpack.c.b16 %v2085, %v2084
        %v2089 = vpack.c.b16 %v2087, %v2086
        %v2093 = vsel %vm1317, %v2001, 0
        %2095 = vmatprep.subr.bf16.mxu0 0
        %2096 = vmatpush1.bf16.msra.mxu0 %v2088
        %2097 = vmatprep.subr.bf16.mxu0 0
        %2098 = vmatpush1.bf16.msra.mxu0 %v2089
        %2099 = vmatprep.subr.bf16.mxu0 0
        %2100 = vmatpush1.bf16.msra.mxu0 0
        %2101 = vmatprep.subr.bf16.mxu0 0
        %2102 = vmatpush1.bf16.msra.mxu0 0
        %2103 = vmatprep.subr.bf16.mxu0 0
        %2104 = vmatpush1.bf16.msra.mxu0 0
        %2105 = vmatprep.subr.bf16.mxu0 0
        %2106 = vmatpush1.bf16.msra.mxu0 0
        %2107 = vmatprep.subr.bf16.mxu0 0
        %2108 = vmatpush1.bf16.msra.mxu0 0
        %2109 = vmatprep.subr.bf16.mxu0 0
        %2110 = vmatpush1.bf16.msra.mxu0 0
        %2111 = vmatprep.subr.bf16.mxu0 0
        %2112 = vmatpush1.bf16.msra.mxu0 0
        %2113 = vmatprep.subr.bf16.mxu0 0
        %2114 = vmatpush1.bf16.msra.mxu0 0
        %2115 = vmatprep.subr.bf16.mxu0 0
        %2116 = vmatpush1.bf16.msra.mxu0 0
        %2117 = vmatprep.subr.bf16.mxu0 0
        %2118 = vmatpush1.bf16.msra.mxu0 0
        %2119 = vmatprep.subr.bf16.mxu0 0
        %2120 = vmatpush1.bf16.msra.mxu0 0
        %2121 = vmatprep.subr.bf16.mxu0 0
        %2122 = vmatpush1.bf16.msra.mxu0 0
        %2123 = vmatprep.subr.bf16.mxu0 0
        %2124 = vmatpush1.bf16.msra.mxu0 0
        %2125 = vmatprep.subr.bf16.mxu0 0
        %2126 = vmatpush1.bf16.msra.mxu0 0
        %2127 = vmatprep.mubr.bf16.mxu0 0
        %2128 = vmatmul.mubr.bf16.gmra.mrb[0].mxu0 %v2093
        %v2129 = vpop.f32.mrb[0].mxu0
        %v2130 = vadd.f32 %v2078, %v2129
        %v2131 = vpop.f32.mrb[0].mxu0
        %v2132 = vpop.f32.mrb[0].mxu0
        %v2133 = vpop.f32.mrb[0].mxu0
        %2134 = vdwg.mxu0
        %v2135 = vld [vmem:[#allocation26] sm:$0xf]
        %v2136 = vld [vmem:[#allocation26 + $0x4] sm:$0xf]
        %v2137 = vld [vmem:[#allocation26 + $0x8] sm:$0xf]
        %v2138 = vld [vmem:[#allocation26 + $0xc] sm:$0xf]
        %v2139 = vld [vmem:[#allocation27] sm:$0x1]
        %v2141 = vlaneseq
        %v2142 = vshrl.u32 %v2141, 7
        %v2143 = vsub.s32 0, %v2142
        %v2144 = vrot.slane %v2139, %v2143
        %v2150 = vunpack.c.l.b16 %v2135
        %v2151 = vunpack.c.l.b16 %v2136
        %v2152 = vunpack.c.l.b16 %v2137
        %v2153 = vunpack.c.l.b16 %v2138
        %v2154 = vpack.c.b16 %v2151, %v2150
        %v2155 = vpack.c.b16 %v2153, %v2152
        %v2159 = vsel %vm1317, %v2002, 0
        %2161 = vmatprep.subr.bf16.mxu0 0
        %2162 = vmatpush1.bf16.msra.mxu0 %v2154
        %2163 = vmatprep.subr.bf16.mxu0 0
        %2164 = vmatpush1.bf16.msra.mxu0 %v2155
        %2165 = vmatprep.subr.bf16.mxu0 0
        %2166 = vmatpush1.bf16.msra.mxu0 0
        %2167 = vmatprep.subr.bf16.mxu0 0
        %2168 = vmatpush1.bf16.msra.mxu0 0
        %2169 = vmatprep.subr.bf16.mxu0 0
        %2170 = vmatpush1.bf16.msra.mxu0 0
        %2171 = vmatprep.subr.bf16.mxu0 0
        %2172 = vmatpush1.bf16.msra.mxu0 0
        %2173 = vmatprep.subr.bf16.mxu0 0
        %2174 = vmatpush1.bf16.msra.mxu0 0
        %2175 = vmatprep.subr.bf16.mxu0 0
        %2176 = vmatpush1.bf16.msra.mxu0 0
        %2177 = vmatprep.subr.bf16.mxu0 0
        %2178 = vmatpush1.bf16.msra.mxu0 0
        %2179 = vmatprep.subr.bf16.mxu0 0
        %2180 = vmatpush1.bf16.msra.mxu0 0
        %2181 = vmatprep.subr.bf16.mxu0 0
        %2182 = vmatpush1.bf16.msra.mxu0 0
        %2183 = vmatprep.subr.bf16.mxu0 0
        %2184 = vmatpush1.bf16.msra.mxu0 0
        %2185 = vmatprep.subr.bf16.mxu0 0
        %2186 = vmatpush1.bf16.msra.mxu0 0
        %2187 = vmatprep.subr.bf16.mxu0 0
        %2188 = vmatpush1.bf16.msra.mxu0 0
        %2189 = vmatprep.subr.bf16.mxu0 0
        %2190 = vmatpush1.bf16.msra.mxu0 0
        %2191 = vmatprep.subr.bf16.mxu0 0
        %2192 = vmatpush1.bf16.msra.mxu0 0
        %2193 = vmatprep.mubr.bf16.mxu0 0
        %2194 = vmatmul.mubr.bf16.gmra.mrb[0].mxu0 %v2159
        %v2195 = vpop.f32.mrb[0].mxu0
        %v2196 = vadd.f32 %v2144, %v2195
        %v2197 = vpop.f32.mrb[0].mxu0
        %v2198 = vpop.f32.mrb[0].mxu0
        %v2199 = vpop.f32.mrb[0].mxu0
        %2200 = vdwg.mxu0
        %v2201 = vld [vmem:[#allocation30] sm:$0x1]
        %v2202 = vpack.c.bf16 %v2064, %v2064
        %v2203 = vpack.c.bf16 %v2130, %v2130
        %v2204 = vpack.c.bf16 %v2196, %v2196
        %v2206 = vsel %vm1434, %v2202, 0
        %v2209 = vsel %vm1434, %v2203, 0
        %2211 = vmatprep.subr.bf16.mxu0 0
        %2212 = vmatpush1.bf16.xpose.msra.mxu0 %v2209
        %2213 = vmatprep.subr.bf16.mxu0 0
        %2214 = vmatpush1.bf16.xpose.msra.mxu0 0
        %2215 = vmatprep.subr.bf16.mxu0 0
        %2216 = vmatpush1.bf16.xpose.msra.mxu0 0
        %2217 = vmatprep.subr.bf16.mxu0 0
        %2218 = vmatpush1.bf16.xpose.msra.mxu0 0
        %2219 = vmatprep.subr.bf16.mxu0 0
        %2220 = vmatpush1.bf16.xpose.msra.mxu0 0
        %2221 = vmatprep.subr.bf16.mxu0 0
        %2222 = vmatpush1.bf16.xpose.msra.mxu0 0
        %2223 = vmatprep.subr.bf16.mxu0 0
        %2224 = vmatpush1.bf16.xpose.msra.mxu0 0
        %2225 = vmatprep.subr.bf16.mxu0 0
        %2226 = vmatpush1.bf16.xpose.msra.mxu0 0
        %2227 = vmatprep.subr.bf16.mxu0 0
        %2228 = vmatpush1.bf16.xpose.msra.mxu0 0
        %2229 = vmatprep.subr.bf16.mxu0 0
        %2230 = vmatpush1.bf16.xpose.msra.mxu0 0
        %2231 = vmatprep.subr.bf16.mxu0 0
        %2232 = vmatpush1.bf16.xpose.msra.mxu0 0
        %2233 = vmatprep.subr.bf16.mxu0 0
        %2234 = vmatpush1.bf16.xpose.msra.mxu0 0
        %2235 = vmatprep.subr.bf16.mxu0 0
        %2236 = vmatpush1.bf16.xpose.msra.mxu0 0
        %2237 = vmatprep.subr.bf16.mxu0 0
        %2238 = vmatpush1.bf16.xpose.msra.mxu0 0
        %2239 = vmatprep.subr.bf16.mxu0 0
        %2240 = vmatpush1.bf16.xpose.msra.mxu0 0
        %2241 = vmatprep.subr.bf16.mxu0 0
        %2242 = vmatpush1.bf16.xpose.msra.mxu0 0
        %2243 = vmatprep.mubr.bf16.mxu0 0
        %2244 = vmatmul.mubr.bf16.gmra.mrb[0].mxu0 %v2206
        %v2245 = vpop.f32.mrb[0].mxu0
        %v2246 = vadd.f32 0.0, %v2245
        %v2247 = vpop.f32.mrb[0].mxu0
        %v2248 = vpop.f32.mrb[0].mxu0
        %v2249 = vpop.f32.mrb[0].mxu0
        %2250 = vdwg.mxu0
        %v2251 = vsel %vm1434, %v2246, -inf
        %2252 = vmax.xlane.f32.xlu0 %v2251
        %v2253 = vpop.xlane.xlu0 %2252
        %v2254 = vsub.f32 %v2246, %v2253
        %v2255 = vmul.f32 %v2254, 1.442695
        %v2256 = vpow.pop %v2255
        %v2257 = vsel %vm1434, %v2256, 0.0
        %2258 = vadd.xlane.f32.xlu0 %v2257
        %v2259 = vpop.xlane.xlu0 %2258
        %v2260 = vrcp.pop %v2259
        %v2261 = vmul.f32 %v2256, %v2260
        %v2262 = vpack.c.bf16 %v2261, %v2261
        %v2264 = vsel %vm1434, %v2262, 0
        %v2267 = vsel %vm1496, %v2204, 0
        %2269 = vmatprep.subr.bf16.mxu0 0
        %2270 = vmatpush1.bf16.msra.mxu0 %v2267
        %2271 = vmatprep.subr.bf16.mxu0 0
        %2272 = vmatpush1.bf16.msra.mxu0 0
        %2273 = vmatprep.subr.bf16.mxu0 0
        %2274 = vmatpush1.bf16.msra.mxu0 0
        %2275 = vmatprep.subr.bf16.mxu0 0
        %2276 = vmatpush1.bf16.msra.mxu0 0
        %2277 = vmatprep.subr.bf16.mxu0 0
        %2278 = vmatpush1.bf16.msra.mxu0 0
        %2279 = vmatprep.subr.bf16.mxu0 0
        %2280 = vmatpush1.bf16.msra.mxu0 0
        %2281 = vmatprep.subr.bf16.mxu0 0
        %2282 = vmatpush1.bf16.msra.mxu0 0
        %2283 = vmatprep.subr.bf16.mxu0 0
        %2284 = vmatpush1.bf16.msra.mxu0 0
        %2285 = vmatprep.subr.bf16.mxu0 0
        %2286 = vmatpush1.bf16.msra.mxu0 0
        %2287 = vmatprep.subr.bf16.mxu0 0
        %2288 = vmatpush1.bf16.msra.mxu0 0
        %2289 = vmatprep.subr.bf16.mxu0 0
        %2290 = vmatpush1.bf16.msra.mxu0 0
        %2291 = vmatprep.subr.bf16.mxu0 0
        %2292 = vmatpush1.bf16.msra.mxu0 0
        %2293 = vmatprep.subr.bf16.mxu0 0
        %2294 = vmatpush1.bf16.msra.mxu0 0
        %2295 = vmatprep.subr.bf16.mxu0 0
        %2296 = vmatpush1.bf16.msra.mxu0 0
        %2297 = vmatprep.subr.bf16.mxu0 0
        %2298 = vmatpush1.bf16.msra.mxu0 0
        %2299 = vmatprep.subr.bf16.mxu0 0
        %2300 = vmatpush1.bf16.msra.mxu0 0
        %2301 = vmatprep.mubr.bf16.mxu0 0
        %2302 = vmatmul.mubr.bf16.gmra.mrb[0].mxu0 %v2264
        %v2303 = vpop.f32.mrb[0].mxu0
        %v2304 = vadd.f32 0.0, %v2303
        %v2305 = vpop.f32.mrb[0].mxu0
        %v2306 = vpop.f32.mrb[0].mxu0
        %v2307 = vpop.f32.mrb[0].mxu0
        %2308 = vdwg.mxu0
        %v2309 = vpack.c.bf16 %v2304, %v2304
        %2310 = vst.msk [vmem:[#allocation2] sm:$0xf] %vm1541, %v2309
        %2312 = vrot.lane.b32.xlu0 %v2202, 120
        %v2313 = vpop.permute.xlu0 %2312
        %2315 = vrot.lane.b32.xlu0 %v2203, 120
        %v2316 = vpop.permute.xlu0 %2315
        %v2318 = vsel %vm1434, %v2313, 0
        %v2321 = vsel %vm1434, %v2316, 0
        %2323 = vmatprep.subr.bf16.mxu0 0
        %2324 = vmatpush1.bf16.xpose.msra.mxu0 %v2321
        %2325 = vmatprep.subr.bf16.mxu0 0
        %2326 = vmatpush1.bf16.xpose.msra.mxu0 0
        %2327 = vmatprep.subr.bf16.mxu0 0
        %2328 = vmatpush1.bf16.xpose.msra.mxu0 0
        %2329 = vmatprep.subr.bf16.mxu0 0
        %2330 = vmatpush1.bf16.xpose.msra.mxu0 0
        %2331 = vmatprep.subr.bf16.mxu0 0
        %2332 = vmatpush1.bf16.xpose.msra.mxu0 0
        %2333 = vmatprep.subr.bf16.mxu0 0
        %2334 = vmatpush1.bf16.xpose.msra.mxu0 0
        %2335 = vmatprep.subr.bf16.mxu0 0
        %2336 = vmatpush1.bf16.xpose.msra.mxu0 0
        %2337 = vmatprep.subr.bf16.mxu0 0
        %2338 = vmatpush1.bf16.xpose.msra.mxu0 0
        %2339 = vmatprep.subr.bf16.mxu0 0
        %2340 = vmatpush1.bf16.xpose.msra.mxu0 0
        %2341 = vmatprep.subr.bf16.mxu0 0
        %2342 = vmatpush1.bf16.xpose.msra.mxu0 0
        %2343 = vmatprep.subr.bf16.mxu0 0
        %2344 = vmatpush1.bf16.xpose.msra.mxu0 0
        %2345 = vmatprep.subr.bf16.mxu0 0
        %2346 = vmatpush1.bf16.xpose.msra.mxu0 0
        %2347 = vmatprep.subr.bf16.mxu0 0
        %2348 = vmatpush1.bf16.xpose.msra.mxu0 0
        %2349 = vmatprep.subr.bf16.mxu0 0
        %2350 = vmatpush1.bf16.xpose.msra.mxu0 0
        %2351 = vmatprep.subr.bf16.mxu0 0
        %2352 = vmatpush1.bf16.xpose.msra.mxu0 0
        %2353 = vmatprep.subr.bf16.mxu0 0
        %2354 = vmatpush1.bf16.xpose.msra.mxu0 0
        %2355 = vmatprep.mubr.bf16.mxu0 0
        %2356 = vmatmul.mubr.bf16.gmra.mrb[0].mxu0 %v2318
        %v2357 = vpop.f32.mrb[0].mxu0
        %v2358 = vadd.f32 0.0, %v2357
        %v2359 = vpop.f32.mrb[0].mxu0
        %v2360 = vpop.f32.mrb[0].mxu0
        %v2361 = vpop.f32.mrb[0].mxu0
        %2362 = vdwg.mxu0
        %v2363 = vsel %vm1434, %v2358, -inf
        %2364 = vmax.xlane.f32.xlu0 %v2363
        %v2365 = vpop.xlane.xlu0 %2364
        %v2366 = vsub.f32 %v2358, %v2365
        %v2367 = vmul.f32 %v2366, 1.442695
        %v2368 = vpow.pop %v2367
        %v2369 = vsel %vm1434, %v2368, 0.0
        %2370 = vadd.xlane.f32.xlu0 %v2369
        %v2371 = vpop.xlane.xlu0 %2370
        %v2372 = vrcp.pop %v2371
        %v2373 = vmul.f32 %v2368, %v2372
        %v2374 = vpack.c.bf16 %v2373, %v2373
        %2376 = vrot.lane.b32.xlu0 %v2204, 120
        %v2377 = vpop.permute.xlu0 %2376
        %v2379 = vsel %vm1434, %v2374, 0
        %v2382 = vsel %vm1496, %v2377, 0
        %2384 = vmatprep.subr.bf16.mxu0 0
        %2385 = vmatpush1.bf16.msra.mxu0 %v2382
        %2386 = vmatprep.subr.bf16.mxu0 0
        %2387 = vmatpush1.bf16.msra.mxu0 0
        %2388 = vmatprep.subr.bf16.mxu0 0
        %2389 = vmatpush1.bf16.msra.mxu0 0
        %2390 = vmatprep.subr.bf16.mxu0 0
        %2391 = vmatpush1.bf16.msra.mxu0 0
        %2392 = vmatprep.subr.bf16.mxu0 0
        %2393 = vmatpush1.bf16.msra.mxu0 0
        %2394 = vmatprep.subr.bf16.mxu0 0
        %2395 = vmatpush1.bf16.msra.mxu0 0
        %2396 = vmatprep.subr.bf16.mxu0 0
        %2397 = vmatpush1.bf16.msra.mxu0 0
        %2398 = vmatprep.subr.bf16.mxu0 0
        %2399 = vmatpush1.bf16.msra.mxu0 0
        %2400 = vmatprep.subr.bf16.mxu0 0
        %2401 = vmatpush1.bf16.msra.mxu0 0
        %2402 = vmatprep.subr.bf16.mxu0 0
        %2403 = vmatpush1.bf16.msra.mxu0 0
        %2404 = vmatprep.subr.bf16.mxu0 0
        %2405 = vmatpush1.bf16.msra.mxu0 0
        %2406 = vmatprep.subr.bf16.mxu0 0
        %2407 = vmatpush1.bf16.msra.mxu0 0
        %2408 = vmatprep.subr.bf16.mxu0 0
        %2409 = vmatpush1.bf16.msra.mxu0 0
        %2410 = vmatprep.subr.bf16.mxu0 0
        %2411 = vmatpush1.bf16.msra.mxu0 0
        %2412 = vmatprep.subr.bf16.mxu0 0
        %2413 = vmatpush1.bf16.msra.mxu0 0
        %2414 = vmatprep.subr.bf16.mxu0 0
        %2415 = vmatpush1.bf16.msra.mxu0 0
        %2416 = vmatprep.mubr.bf16.mxu0 0
        %2417 = vmatmul.mubr.bf16.gmra.mrb[0].mxu0 %v2379
        %v2418 = vpop.f32.mrb[0].mxu0
        %v2419 = vadd.f32 0.0, %v2418
        %v2420 = vpop.f32.mrb[0].mxu0
        %v2421 = vpop.f32.mrb[0].mxu0
        %v2422 = vpop.f32.mrb[0].mxu0
        %2423 = vdwg.mxu0
        %v2424 = vpack.c.bf16 %v2419, %v2419
        %v2426 = vunpack.c.l.b16 %v2424
        %v2427 = vpack.c.b16 %v2426, %v2426
        %2428 = vrot.lane.b32.xlu0 %v2427, 8
        %v2429 = vpop.permute.xlu0 %2428
        %2431 = vst.msk [vmem:[#allocation2] sm:$0xf] %vm1661, %v2429
        %2432 = vrot.lane.b32.xlu0 %v2202, 112
        %v2433 = vpop.permute.xlu0 %2432
        %2434 = vrot.lane.b32.xlu0 %v2203, 112
        %v2435 = vpop.permute.xlu0 %2434
        %v2437 = vsel %vm1434, %v2433, 0
        %v2440 = vsel %vm1434, %v2435, 0
        %2442 = vmatprep.subr.bf16.mxu0 0
        %2443 = vmatpush1.bf16.xpose.msra.mxu0 %v2440
        %2444 = vmatprep.subr.bf16.mxu0 0
        %2445 = vmatpush1.bf16.xpose.msra.mxu0 0
        %2446 = vmatprep.subr.bf16.mxu0 0
        %2447 = vmatpush1.bf16.xpose.msra.mxu0 0
        %2448 = vmatprep.subr.bf16.mxu0 0
        %2449 = vmatpush1.bf16.xpose.msra.mxu0 0
        %2450 = vmatprep.subr.bf16.mxu0 0
        %2451 = vmatpush1.bf16.xpose.msra.mxu0 0
        %2452 = vmatprep.subr.bf16.mxu0 0
        %2453 = vmatpush1.bf16.xpose.msra.mxu0 0
        %2454 = vmatprep.subr.bf16.mxu0 0
        %2455 = vmatpush1.bf16.xpose.msra.mxu0 0
        %2456 = vmatprep.subr.bf16.mxu0 0
        %2457 = vmatpush1.bf16.xpose.msra.mxu0 0
        %2458 = vmatprep.subr.bf16.mxu0 0
        %2459 = vmatpush1.bf16.xpose.msra.mxu0 0
        %2460 = vmatprep.subr.bf16.mxu0 0
        %2461 = vmatpush1.bf16.xpose.msra.mxu0 0
        %2462 = vmatprep.subr.bf16.mxu0 0
        %2463 = vmatpush1.bf16.xpose.msra.mxu0 0
        %2464 = vmatprep.subr.bf16.mxu0 0
        %2465 = vmatpush1.bf16.xpose.msra.mxu0 0
        %2466 = vmatprep.subr.bf16.mxu0 0
        %2467 = vmatpush1.bf16.xpose.msra.mxu0 0
        %2468 = vmatprep.subr.bf16.mxu0 0
        %2469 = vmatpush1.bf16.xpose.msra.mxu0 0
        %2470 = vmatprep.subr.bf16.mxu0 0
        %2471 = vmatpush1.bf16.xpose.msra.mxu0 0
        %2472 = vmatprep.subr.bf16.mxu0 0
        %2473 = vmatpush1.bf16.xpose.msra.mxu0 0
        %2474 = vmatprep.mubr.bf16.mxu0 0
        %2475 = vmatmul.mubr.bf16.gmra.mrb[0].mxu0 %v2437
        %v2476 = vpop.f32.mrb[0].mxu0
        %v2477 = vadd.f32 0.0, %v2476
        %v2478 = vpop.f32.mrb[0].mxu0
        %v2479 = vpop.f32.mrb[0].mxu0
        %v2480 = vpop.f32.mrb[0].mxu0
        %2481 = vdwg.mxu0
        %v2482 = vsel %vm1434, %v2477, -inf
        %2483 = vmax.xlane.f32.xlu0 %v2482
        %v2484 = vpop.xlane.xlu0 %2483
        %v2485 = vsub.f32 %v2477, %v2484
        %v2486 = vmul.f32 %v2485, 1.442695
        %v2487 = vpow.pop %v2486
        %v2488 = vsel %vm1434, %v2487, 0.0
        %2489 = vadd.xlane.f32.xlu0 %v2488
        %v2490 = vpop.xlane.xlu0 %2489
        %v2491 = vrcp.pop %v2490
        %v2492 = vmul.f32 %v2487, %v2491
        %v2493 = vpack.c.bf16 %v2492, %v2492
        %2494 = vrot.lane.b32.xlu0 %v2204, 112
        %v2495 = vpop.permute.xlu0 %2494
        %v2497 = vsel %vm1434, %v2493, 0
        %v2500 = vsel %vm1496, %v2495, 0
        %2502 = vmatprep.subr.bf16.mxu0 0
        %2503 = vmatpush1.bf16.msra.mxu0 %v2500
        %2504 = vmatprep.subr.bf16.mxu0 0
        %2505 = vmatpush1.bf16.msra.mxu0 0
        %2506 = vmatprep.subr.bf16.mxu0 0
        %2507 = vmatpush1.bf16.msra.mxu0 0
        %2508 = vmatprep.subr.bf16.mxu0 0
        %2509 = vmatpush1.bf16.msra.mxu0 0
        %2510 = vmatprep.subr.bf16.mxu0 0
        %2511 = vmatpush1.bf16.msra.mxu0 0
        %2512 = vmatprep.subr.bf16.mxu0 0
        %2513 = vmatpush1.bf16.msra.mxu0 0
        %2514 = vmatprep.subr.bf16.mxu0 0
        %2515 = vmatpush1.bf16.msra.mxu0 0
        %2516 = vmatprep.subr.bf16.mxu0 0
        %2517 = vmatpush1.bf16.msra.mxu0 0
        %2518 = vmatprep.subr.bf16.mxu0 0
        %2519 = vmatpush1.bf16.msra.mxu0 0
        %2520 = vmatprep.subr.bf16.mxu0 0
        %2521 = vmatpush1.bf16.msra.mxu0 0
        %2522 = vmatprep.subr.bf16.mxu0 0
        %2523 = vmatpush1.bf16.msra.mxu0 0
        %2524 = vmatprep.subr.bf16.mxu0 0
        %2525 = vmatpush1.bf16.msra.mxu0 0
        %2526 = vmatprep.subr.bf16.mxu0 0
        %2527 = vmatpush1.bf16.msra.mxu0 0
        %2528 = vmatprep.subr.bf16.mxu0 0
        %2529 = vmatpush1.bf16.msra.mxu0 0
        %2530 = vmatprep.subr.bf16.mxu0 0
        %2531 = vmatpush1.bf16.msra.mxu0 0
        %2532 = vmatprep.subr.bf16.mxu0 0
        %2533 = vmatpush1.bf16.msra.mxu0 0
        %2534 = vmatprep.mubr.bf16.mxu0 0
        %2535 = vmatmul.mubr.bf16.gmra.mrb[0].mxu0 %v2497
        %v2536 = vpop.f32.mrb[0].mxu0
        %v2537 = vadd.f32 0.0, %v2536
        %v2538 = vpop.f32.mrb[0].mxu0
        %v2539 = vpop.f32.mrb[0].mxu0
        %v2540 = vpop.f32.mrb[0].mxu0
        %2541 = vdwg.mxu0
        %v2542 = vpack.c.bf16 %v2537, %v2537
        %v2544 = vunpack.c.l.b16 %v2542
        %v2545 = vpack.c.b16 %v2544, %v2544
        %2546 = vrot.lane.b32.xlu0 %v2545, 16
        %v2547 = vpop.permute.xlu0 %2546
        %2549 = vst.msk [vmem:[#allocation2] sm:$0xf] %vm1780, %v2547
        %2550 = vrot.lane.b32.xlu0 %v2202, 104
        %v2551 = vpop.permute.xlu0 %2550
        %2552 = vrot.lane.b32.xlu0 %v2203, 104
        %v2553 = vpop.permute.xlu0 %2552
        %v2555 = vsel %vm1434, %v2551, 0
        %v2558 = vsel %vm1434, %v2553, 0
        %2560 = vmatprep.subr.bf16.mxu0 0
        %2561 = vmatpush1.bf16.xpose.msra.mxu0 %v2558
        %2562 = vmatprep.subr.bf16.mxu0 0
        %2563 = vmatpush1.bf16.xpose.msra.mxu0 0
        %2564 = vmatprep.subr.bf16.mxu0 0
        %2565 = vmatpush1.bf16.xpose.msra.mxu0 0
        %2566 = vmatprep.subr.bf16.mxu0 0
        %2567 = vmatpush1.bf16.xpose.msra.mxu0 0
        %2568 = vmatprep.subr.bf16.mxu0 0
        %2569 = vmatpush1.bf16.xpose.msra.mxu0 0
        %2570 = vmatprep.subr.bf16.mxu0 0
        %2571 = vmatpush1.bf16.xpose.msra.mxu0 0
        %2572 = vmatprep.subr.bf16.mxu0 0
        %2573 = vmatpush1.bf16.xpose.msra.mxu0 0
        %2574 = vmatprep.subr.bf16.mxu0 0
        %2575 = vmatpush1.bf16.xpose.msra.mxu0 0
        %2576 = vmatprep.subr.bf16.mxu0 0
        %2577 = vmatpush1.bf16.xpose.msra.mxu0 0
        %2578 = vmatprep.subr.bf16.mxu0 0
        %2579 = vmatpush1.bf16.xpose.msra.mxu0 0
        %2580 = vmatprep.subr.bf16.mxu0 0
        %2581 = vmatpush1.bf16.xpose.msra.mxu0 0
        %2582 = vmatprep.subr.bf16.mxu0 0
        %2583 = vmatpush1.bf16.xpose.msra.mxu0 0
        %2584 = vmatprep.subr.bf16.mxu0 0
        %2585 = vmatpush1.bf16.xpose.msra.mxu0 0
        %2586 = vmatprep.subr.bf16.mxu0 0
        %2587 = vmatpush1.bf16.xpose.msra.mxu0 0
        %2588 = vmatprep.subr.bf16.mxu0 0
        %2589 = vmatpush1.bf16.xpose.msra.mxu0 0
        %2590 = vmatprep.subr.bf16.mxu0 0
        %2591 = vmatpush1.bf16.xpose.msra.mxu0 0
        %2592 = vmatprep.mubr.bf16.mxu0 0
        %2593 = vmatmul.mubr.bf16.gmra.mrb[0].mxu0 %v2555
        %v2594 = vpop.f32.mrb[0].mxu0
        %v2595 = vadd.f32 0.0, %v2594
        %v2596 = vpop.f32.mrb[0].mxu0
        %v2597 = vpop.f32.mrb[0].mxu0
        %v2598 = vpop.f32.mrb[0].mxu0
        %2599 = vdwg.mxu0
        %v2600 = vsel %vm1434, %v2595, -inf
        %2601 = vmax.xlane.f32.xlu0 %v2600
        %v2602 = vpop.xlane.xlu0 %2601
        %v2603 = vsub.f32 %v2595, %v2602
        %v2604 = vmul.f32 %v2603, 1.442695
        %v2605 = vpow.pop %v2604
        %v2606 = vsel %vm1434, %v2605, 0.0
        %2607 = vadd.xlane.f32.xlu0 %v2606
        %v2608 = vpop.xlane.xlu0 %2607
        %v2609 = vrcp.pop %v2608
        %v2610 = vmul.f32 %v2605, %v2609
        %v2611 = vpack.c.bf16 %v2610, %v2610
        %2612 = vrot.lane.b32.xlu0 %v2204, 104
        %v2613 = vpop.permute.xlu0 %2612
        %v2615 = vsel %vm1434, %v2611, 0
        %v2618 = vsel %vm1496, %v2613, 0
        %2620 = vmatprep.subr.bf16.mxu0 0
        %2621 = vmatpush1.bf16.msra.mxu0 %v2618
        %2622 = vmatprep.subr.bf16.mxu0 0
        %2623 = vmatpush1.bf16.msra.mxu0 0
        %2624 = vmatprep.subr.bf16.mxu0 0
        %2625 = vmatpush1.bf16.msra.mxu0 0
        %2626 = vmatprep.subr.bf16.mxu0 0
        %2627 = vmatpush1.bf16.msra.mxu0 0
        %2628 = vmatprep.subr.bf16.mxu0 0
        %2629 = vmatpush1.bf16.msra.mxu0 0
        %2630 = vmatprep.subr.bf16.mxu0 0
        %2631 = vmatpush1.bf16.msra.mxu0 0
        %2632 = vmatprep.subr.bf16.mxu0 0
        %2633 = vmatpush1.bf16.msra.mxu0 0
        %2634 = vmatprep.subr.bf16.mxu0 0
        %2635 = vmatpush1.bf16.msra.mxu0 0
        %2636 = vmatprep.subr.bf16.mxu0 0
        %2637 = vmatpush1.bf16.msra.mxu0 0
        %2638 = vmatprep.subr.bf16.mxu0 0
        %2639 = vmatpush1.bf16.msra.mxu0 0
        %2640 = vmatprep.subr.bf16.mxu0 0
        %2641 = vmatpush1.bf16.msra.mxu0 0
        %2642 = vmatprep.subr.bf16.mxu0 0
        %2643 = vmatpush1.bf16.msra.mxu0 0
        %2644 = vmatprep.subr.bf16.mxu0 0
        %2645 = vmatpush1.bf16.msra.mxu0 0
        %2646 = vmatprep.subr.bf16.mxu0 0
        %2647 = vmatpush1.bf16.msra.mxu0 0
        %2648 = vmatprep.subr.bf16.mxu0 0
        %2649 = vmatpush1.bf16.msra.mxu0 0
        %2650 = vmatprep.subr.bf16.mxu0 0
        %2651 = vmatpush1.bf16.msra.mxu0 0
        %2652 = vmatprep.mubr.bf16.mxu0 0
        %2653 = vmatmul.mubr.bf16.gmra.mrb[0].mxu0 %v2615
        %v2654 = vpop.f32.mrb[0].mxu0
        %v2655 = vadd.f32 0.0, %v2654
        %v2656 = vpop.f32.mrb[0].mxu0
        %v2657 = vpop.f32.mrb[0].mxu0
        %v2658 = vpop.f32.mrb[0].mxu0
        %2659 = vdwg.mxu0
        %v2660 = vpack.c.bf16 %v2655, %v2655
        %v2662 = vunpack.c.l.b16 %v2660
        %v2663 = vpack.c.b16 %v2662, %v2662
        %2664 = vrot.lane.b32.xlu0 %v2663, 24
        %v2665 = vpop.permute.xlu0 %2664
        %2667 = vst.msk [vmem:[#allocation2] sm:$0xf] %vm1899, %v2665
        %v2668 = vld [vmem:[#allocation2] sm:$0xf]
        %v2669 = vld [vmem:[#allocation29] sm:$0xf]
        %v2670 = vld [vmem:[#allocation29 + $0x4] sm:$0xf]
        %v2671 = vld [vmem:[#allocation29 + $0x8] sm:$0xf]
        %v2672 = vld [vmem:[#allocation29 + $0xc] sm:$0xf]
        %v2674 = vlaneseq
        %v2675 = vshrl.u32 %v2674, 7
        %v2676 = vsub.s32 0, %v2675
        %v2677 = vrot.slane %v2201, %v2676
        %v2683 = vunpack.c.l.b16 %v2669
        %v2684 = vunpack.c.l.b16 %v2670
        %v2685 = vunpack.c.l.b16 %v2671
        %v2686 = vunpack.c.l.b16 %v2672
        %v2687 = vpack.c.b16 %v2684, %v2683
        %v2688 = vpack.c.b16 %v2686, %v2685
        %v2692 = vsel %vm1317, %v2668, 0
        %2694 = vmatprep.subr.bf16.mxu0 0
        %2695 = vmatpush1.bf16.msra.mxu0 %v2687
        %2696 = vmatprep.subr.bf16.mxu0 0
        %2697 = vmatpush1.bf16.msra.mxu0 %v2688
        %2698 = vmatprep.subr.bf16.mxu0 0
        %2699 = vmatpush1.bf16.msra.mxu0 0
        %2700 = vmatprep.subr.bf16.mxu0 0
        %2701 = vmatpush1.bf16.msra.mxu0 0
        %2702 = vmatprep.subr.bf16.mxu0 0
        %2703 = vmatpush1.bf16.msra.mxu0 0
        %2704 = vmatprep.subr.bf16.mxu0 0
        %2705 = vmatpush1.bf16.msra.mxu0 0
        %2706 = vmatprep.subr.bf16.mxu0 0
        %2707 = vmatpush1.bf16.msra.mxu0 0
        %2708 = vmatprep.subr.bf16.mxu0 0
        %2709 = vmatpush1.bf16.msra.mxu0 0
        %2710 = vmatprep.subr.bf16.mxu0 0
        %2711 = vmatpush1.bf16.msra.mxu0 0
        %2712 = vmatprep.subr.bf16.mxu0 0
        %2713 = vmatpush1.bf16.msra.mxu0 0
        %2714 = vmatprep.subr.bf16.mxu0 0
        %2715 = vmatpush1.bf16.msra.mxu0 0
        %2716 = vmatprep.subr.bf16.mxu0 0
        %2717 = vmatpush1.bf16.msra.mxu0 0
        %2718 = vmatprep.subr.bf16.mxu0 0
        %2719 = vmatpush1.bf16.msra.mxu0 0
        %2720 = vmatprep.subr.bf16.mxu0 0
        %2721 = vmatpush1.bf16.msra.mxu0 0
        %2722 = vmatprep.subr.bf16.mxu0 0
        %2723 = vmatpush1.bf16.msra.mxu0 0
        %2724 = vmatprep.subr.bf16.mxu0 0
        %2725 = vmatpush1.bf16.msra.mxu0 0
        %2726 = vmatprep.mubr.bf16.mxu0 0
        %2727 = vmatmul.mubr.bf16.gmra.mrb[0].mxu0 %v2692
        %v2728 = vpop.f32.mrb[0].mxu0
        %v2729 = vadd.f32 %v2677, %v2728
        %v2730 = vpop.f32.mrb[0].mxu0
        %v2731 = vpop.f32.mrb[0].mxu0
        %v2732 = vpop.f32.mrb[0].mxu0
        %2733 = vdwg.mxu0
        %v2734 = vadd.f32 %v1997, %v2729
        %v2735 = vld [vmem:[#allocation41] sm:$0x1]
        %v2736 = vld [vmem:[#allocation42] sm:$0x1]
        %v2737 = vsel %vm1317, %v2734, 0.0
        %2738 = vadd.xlane.f32.xlu0 %v2737
        %v2739 = vpop.xlane.xlu0 %2738
        %v2740 = vmul.f32 %v2739, %v1973
        %v2741 = vsub.f32 %v2734, %v2740
        %v2742 = vmul.f32 %v2741, %v2741
        %v2743 = vsel %vm1317, %v2742, 0.0
        %2744 = vadd.xlane.f32.xlu0 %v2743
        %v2745 = vpop.xlane.xlu0 %2744
        %v2746 = vmul.f32 %v2745, %v1973
        %v2747 = vadd.f32 %v2746, 1e-05
        %v2748 = vrsqrt.pop %v2747
        %v2749 = vmul.f32 %v2741, %v2748
        %v2751 = vlaneseq
        %v2752 = vshrl.u32 %v2751, 7
        %v2753 = vsub.s32 0, %v2752
        %v2754 = vrot.slane %v2735, %v2753
        %v2756 = vmul.f32 %v2749, %v2754
        %v2758 = vlaneseq
        %v2759 = vshrl.u32 %v2758, 7
        %v2760 = vsub.s32 0, %v2759
        %v2761 = vrot.slane %v2736, %v2760
        %v2763 = vadd.f32 %v2756, %v2761
        %v2764 = vpack.c.bf16 %v2763, %v2763
        %v2765 = vld [vmem:[#allocation32] sm:$0xf]
        %v2766 = vld [vmem:[#allocation32 + $0x4] sm:$0xf]
        %v2767 = vld [vmem:[#allocation32 + $0x8] sm:$0xf]
        %v2768 = vld [vmem:[#allocation32 + $0xc] sm:$0xf]
        %v2769 = vld [vmem:[#allocation33] sm:$0x1]
        %v2771 = vlaneseq
        %v2772 = vshrl.u32 %v2771, 7
        %v2773 = vsub.s32 0, %v2772
        %v2774 = vrot.slane %v2769, %v2773
        %v2780 = vunpack.c.l.b16 %v2765
        %v2781 = vunpack.c.l.b16 %v2766
        %v2782 = vunpack.c.l.b16 %v2767
        %v2783 = vunpack.c.l.b16 %v2768
        %v2784 = vpack.c.b16 %v2781, %v2780
        %v2785 = vpack.c.b16 %v2783, %v2782
        %v2789 = vsel %vm1317, %v2764, 0
        %2791 = vmatprep.subr.bf16.mxu0 0
        %2792 = vmatpush1.bf16.msra.mxu0 %v2784
        %2793 = vmatprep.subr.bf16.mxu0 0
        %2794 = vmatpush1.bf16.msra.mxu0 %v2785
        %2795 = vmatprep.subr.bf16.mxu0 0
        %2796 = vmatpush1.bf16.msra.mxu0 0
        %2797 = vmatprep.subr.bf16.mxu0 0
        %2798 = vmatpush1.bf16.msra.mxu0 0
        %2799 = vmatprep.subr.bf16.mxu0 0
        %2800 = vmatpush1.bf16.msra.mxu0 0
        %2801 = vmatprep.subr.bf16.mxu0 0
        %2802 = vmatpush1.bf16.msra.mxu0 0
        %2803 = vmatprep.subr.bf16.mxu0 0
        %2804 = vmatpush1.bf16.msra.mxu0 0
        %2805 = vmatprep.subr.bf16.mxu0 0
        %2806 = vmatpush1.bf16.msra.mxu0 0
        %2807 = vmatprep.subr.bf16.mxu0 0
        %2808 = vmatpush1.bf16.msra.mxu0 0
        %2809 = vmatprep.subr.bf16.mxu0 0
        %2810 = vmatpush1.bf16.msra.mxu0 0
        %2811 = vmatprep.subr.bf16.mxu0 0
        %2812 = vmatpush1.bf16.msra.mxu0 0
        %2813 = vmatprep.subr.bf16.mxu0 0
        %2814 = vmatpush1.bf16.msra.mxu0 0
        %2815 = vmatprep.subr.bf16.mxu0 0
        %2816 = vmatpush1.bf16.msra.mxu0 0
        %2817 = vmatprep.subr.bf16.mxu0 0
        %2818 = vmatpush1.bf16.msra.mxu0 0
        %2819 = vmatprep.subr.bf16.mxu0 0
        %2820 = vmatpush1.bf16.msra.mxu0 0
        %2821 = vmatprep.subr.bf16.mxu0 0
        %2822 = vmatpush1.bf16.msra.mxu0 0
        %2823 = vmatprep.mubr.bf16.mxu0 0
        %2824 = vmatmul.mubr.bf16.gmra.mrb[0].mxu0 %v2789
        %v2825 = vpop.f32.mrb[0].mxu0
        %v2826 = vadd.f32 %v2774, %v2825
        %v2827 = vpop.f32.mrb[0].mxu0
        %v2828 = vpop.f32.mrb[0].mxu0
        %v2829 = vpop.f32.mrb[0].mxu0
        %2830 = vdwg.mxu0
        %v2831 = vmax.f32 %v2826, 0.0
        %v2832 = vpack.c.bf16 %v2831, %v2831
        %v2833 = vld [vmem:[#allocation35] sm:$0xf]
        %v2834 = vld [vmem:[#allocation35 + $0x4] sm:$0xf]
        %v2835 = vld [vmem:[#allocation35 + $0x8] sm:$0xf]
        %v2836 = vld [vmem:[#allocation35 + $0xc] sm:$0xf]
        %v2837 = vld [vmem:[#allocation35 + $0x10] sm:$0xf]
        %v2838 = vld [vmem:[#allocation35 + $0x14] sm:$0xf]
        %v2839 = vld [vmem:[#allocation35 + $0x18] sm:$0xf]
        %v2840 = vld [vmem:[#allocation35 + $0x1c] sm:$0xf]
        %v2841 = vld [vmem:[#allocation36] sm:$0x1]
        %v2843 = vlaneseq
        %v2844 = vshrl.u32 %v2843, 7
        %v2845 = vsub.s32 0, %v2844
        %v2846 = vrot.slane %v2841, %v2845
        %v2856 = vunpack.c.l.b16 %v2833
        %v2857 = vunpack.c.l.b16 %v2834
        %v2858 = vunpack.c.l.b16 %v2835
        %v2859 = vunpack.c.l.b16 %v2836
        %v2860 = vunpack.c.l.b16 %v2837
        %v2861 = vunpack.c.l.b16 %v2838
        %v2862 = vunpack.c.l.b16 %v2839
        %v2863 = vunpack.c.l.b16 %v2840
        %v2864 = vpack.c.b16 %v2857, %v2856
        %v2865 = vpack.c.b16 %v2859, %v2858
        %v2866 = vpack.c.b16 %v2861, %v2860
        %v2867 = vpack.c.b16 %v2863, %v2862
        %vm2872 = vcmask 523264
        %v2874 = vsel %vm2872, %v2832, 0
        %2876 = vmatprep.subr.bf16.mxu0 0
        %2877 = vmatpush1.bf16.msra.mxu0 %v2864
        %2878 = vmatprep.subr.bf16.mxu0 0
        %2879 = vmatpush1.bf16.msra.mxu0 %v2865
        %2880 = vmatprep.subr.bf16.mxu0 0
        %2881 = vmatpush1.bf16.msra.mxu0 %v2866
        %2882 = vmatprep.subr.bf16.mxu0 0
        %2883 = vmatpush1.bf16.msra.mxu0 %v2867
        %2884 = vmatprep.subr.bf16.mxu0 0
        %2885 = vmatpush1.bf16.msra.mxu0 0
        %2886 = vmatprep.subr.bf16.mxu0 0
        %2887 = vmatpush1.bf16.msra.mxu0 0
        %2888 = vmatprep.subr.bf16.mxu0 0
        %2889 = vmatpush1.bf16.msra.mxu0 0
        %2890 = vmatprep.subr.bf16.mxu0 0
        %2891 = vmatpush1.bf16.msra.mxu0 0
        %2892 = vmatprep.subr.bf16.mxu0 0
        %2893 = vmatpush1.bf16.msra.mxu0 0
        %2894 = vmatprep.subr.bf16.mxu0 0
        %2895 = vmatpush1.bf16.msra.mxu0 0
        %2896 = vmatprep.subr.bf16.mxu0 0
        %2897 = vmatpush1.bf16.msra.mxu0 0
        %2898 = vmatprep.subr.bf16.mxu0 0
        %2899 = vmatpush1.bf16.msra.mxu0 0
        %2900 = vmatprep.subr.bf16.mxu0 0
        %2901 = vmatpush1.bf16.msra.mxu0 0
        %2902 = vmatprep.subr.bf16.mxu0 0
        %2903 = vmatpush1.bf16.msra.mxu0 0
        %2904 = vmatprep.subr.bf16.mxu0 0
        %2905 = vmatpush1.bf16.msra.mxu0 0
        %2906 = vmatprep.subr.bf16.mxu0 0
        %2907 = vmatpush1.bf16.msra.mxu0 0
        %2908 = vmatprep.mubr.bf16.mxu0 0
        %2909 = vmatmul.mubr.bf16.gmra.mrb[0].mxu0 %v2874
        %v2910 = vpop.f32.mrb[0].mxu0
        %v2911 = vadd.f32 %v2846, %v2910
        %v2912 = vpop.f32.mrb[0].mxu0
        %v2913 = vpop.f32.mrb[0].mxu0
        %v2914 = vpop.f32.mrb[0].mxu0
        %2915 = vdwg.mxu0
        %v2916 = vadd.f32 %v2763, %v2911
        %v2917 = vld [vmem:[#allocation44] sm:$0x1]
        %v2918 = vld [vmem:[#allocation45] sm:$0x1]
        %v2919 = vsel %vm1317, %v2916, 0.0
        %2920 = vadd.xlane.f32.xlu0 %v2919
        %v2921 = vpop.xlane.xlu0 %2920
        %v2922 = vmul.f32 %v2921, %v1973
        %v2923 = vsub.f32 %v2916, %v2922
        %v2924 = vmul.f32 %v2923, %v2923
        %v2925 = vsel %vm1317, %v2924, 0.0
        %2926 = vadd.xlane.f32.xlu0 %v2925
        %v2927 = vpop.xlane.xlu0 %2926
        %v2928 = vmul.f32 %v2927, %v1973
        %v2929 = vadd.f32 %v2928, 1e-05
        %v2930 = vrsqrt.pop %v2929
        %v2931 = vmul.f32 %v2923, %v2930
        %v2933 = vlaneseq
        %v2934 = vshrl.u32 %v2933, 7
        %v2935 = vsub.s32 0, %v2934
        %v2936 = vrot.slane %v2917, %v2935
        %v2938 = vmul.f32 %v2931, %v2936
        %v2940 = vlaneseq
        %v2941 = vshrl.u32 %v2940, 7
        %v2942 = vsub.s32 0, %v2941
        %v2943 = vrot.slane %v2918, %v2942
        %v2945 = vadd.f32 %v2938, %v2943
        %2946 = vst.msk [vmem:[%s1286] sm:$0xff] %vm1317, %v2945
        %s2947 = sand.u32 %s679, 1
        %s2948 = scalar_lea.sflag [#allocation5], %s2947
        %s2949 = sand.u32 %s679, 1
        %s2950 = smul.addr %s2949, 8
        %s2951 = scalar_lea.vmem [#allocation47], %s2950
        // Predicated region
        $region245: #{tpu_custom_call.1} parent=131 // pred_check
          %p2952 = pneg %p689
        $region246: #{tpu_custom_call.1} parent=131 // pred_check_branch
          %2954 = sbr.rel (%p2952) target = $region248
        $region247: #{tpu_custom_call.1} parent=131 // pred_region
          %s2956 = ssub.s32 128, 128
          %2957 = vsyncadd %s2948, %s2956
          %s2958 = smul.addr %s63, 128
          %s2959 = scalar_lea.hbm %s28, %s2958
          %s2961 = sshll.u32 %s2951, 4
          %s2962 = int_to_ptr.vmem [resolvable:$true] %s2961
          %2964 = dma.vmem_to_hbm [thread:$0]  %s2962, 128, %s2959, %s2948
        $region248: #{tpu_custom_call.1} parent=131 // pred_fallthru
          _
      $region132: #{tpu_custom_call.1} parent=5 // pred_fallthru
        _
      %p2965 = scmp.le.s32.totalorder 2, %s58
      // Predicated region
      $region249: #{tpu_custom_call.1} parent=5 // pred_check
        %p2966 = pneg %p2965
      $region250: #{tpu_custom_call.1} parent=5 // pred_check_branch
        %2968 = sbr.rel (%p2966) target = $region252
      $region251: #{tpu_custom_call.1} parent=5 // pred_region
        %s2969 = ssub.s32 %s58, 2
        // Predicated region
        $region253: #{tpu_custom_call.1} parent=251 // pred_check
          %p2970 = pneg %p695
        $region254: #{tpu_custom_call.1} parent=251 // pred_check_branch
          %2972 = sbr.rel (%p2970) target = $region256
        $region255: #{tpu_custom_call.1} parent=251 // pred_region
          %s2973 = sand.u32 %s680, 1
          %s2974 = scalar_lea.sflag [#allocation5], %s2973
          %s2975 = sand.u32 %s680, 1
          %s2976 = smul.addr %s2975, 8
          %s2977 = scalar_lea.vmem [#allocation47], %s2976
          %2978 = dma.done %s2974, 128
        $region256: #{tpu_custom_call.1} parent=251 // pred_fallthru
          _
      $region252: #{tpu_custom_call.1} parent=5 // pred_fallthru
        _
    $region6: #{tpu_custom_call.1} parent=1 // loop_footer
      %s62 = sadd.s32 1, %s58
    $region7: #{tpu_custom_call.1} parent=1 // loop_footer_branch
      %57 = sbr.rel target = $region3
    $region8: #{tpu_custom_call.1} parent=1 // loop_exit
      _
    %2979 = vsyncpa [#allocation4], 1
    %s2980 = scalar_lea.sflag [#allocation4], 1
    %2981 = vsyncpa %s2980, 1
    %2982 = vsyncpa [#allocation7], 1
    %s2983 = scalar_lea.sflag [#allocation7], 1
    %2984 = vsyncpa %s2983, 1
    %2985 = vsyncpa [#allocation10], 1
    %s2986 = scalar_lea.sflag [#allocation10], 1
    %2987 = vsyncpa %s2986, 1
    %2988 = vsyncpa [#allocation13], 1
    %2989 = vsyncpa [#allocation16], 1
    %2990 = vsyncpa [#allocation19], 1
    %2991 = vsyncpa [#allocation22], 1
    %2992 = vsyncpa [#allocation25], 1
    %2993 = vsyncpa [#allocation28], 1
    %2994 = vsyncpa [#allocation31], 1
    %2995 = vsyncpa [#allocation34], 1
    %2996 = vsyncpa [#allocation37], 1
    %2997 = vsyncpa [#allocation40], 1
    %2998 = vsyncpa [#allocation43], 1
    %2999 = vsyncpa [#allocation46], 1
    %3000 = vsyncpa [#allocation5], 1
    %s3001 = scalar_lea.sflag [#allocation5], 1
    %3002 = vsyncpa %s3001, 1

// kernel: tpu_custom_call.1
$region0: #{tpu_custom_call.1}
  #allocation0 [shape = 'u32[]', space=smem, size = 0x4, offset = 0x4, fixed_abs, tag = 'smem constant byte address 0x4 - core index']
  #allocation1 [shape = 'u32[144,128]{1,0:T(1,128)}', space=vmem, size = 0x12000, scoped, tag = 'internal scratch']
  #allocation2 [shape = 'bf16[8,32]{1,0:T(8,128)(2,1)}', space=vmem, size = 0x800, scoped, tag = 'scratch operand']
  %s0 = inlined_call_operand.hbm [shape: f32[2,8,32], index: 0, kind: input, shape index: {}]
  %s1 = inlined_call_operand.hbm [shape: f32[2,8,32], index: 1, kind: input, shape index: {}]
  %s2 = inlined_call_operand.hbm [shape: f32[2,8,32], index: 2, kind: input, shape index: {}]
  %s3 = inlined_call_operand.hbm [shape: f32[2,8,32], index: 3, kind: input, shape index: {}]
  %s4 = inlined_call_operand.hbm [shape: bf16[32,64], index: 4, kind: input, shape index: {}]
  %s5 = inlined_call_operand.hbm [shape: f32[1,64], index: 5, kind: input, shape index: {}]
  %s6 = inlined_call_operand.hbm [shape: bf16[32,32], index: 6, kind: input, shape index: {}]
  %s7 = inlined_call_operand.hbm [shape: f32[1,32], index: 7, kind: input, shape index: {}]
  %s8 = inlined_call_operand.hbm [shape: bf16[32,32], index: 8, kind: input, shape index: {}]
  %s9 = inlined_call_operand.hbm [shape: f32[1,32], index: 9, kind: input, shape index: {}]
  %s10 = inlined_call_operand.hbm [shape: bf16[32,32], index: 10, kind: input, shape index: {}]
  %s11 = inlined_call_operand.hbm [shape: f32[1,32], index: 11, kind: input, shape index: {}]
  %s12 = inlined_call_operand.hbm [shape: bf16[32,32], index: 12, kind: input, shape index: {}]
  %s13 = inlined_call_operand.hbm [shape: f32[1,32], index: 13, kind: input, shape index: {}]
  %s14 = inlined_call_operand.hbm [shape: bf16[32,32], index: 14, kind: input, shape index: {}]
  %s15 = inlined_call_operand.hbm [shape: f32[1,32], index: 15, kind: input, shape index: {}]
  %s16 = inlined_call_operand.hbm [shape: bf16[32,32], index: 16, kind: input, shape index: {}]
  %s17 = inlined_call_operand.hbm [shape: f32[1,32], index: 17, kind: input, shape index: {}]
  %s18 = inlined_call_operand.hbm [shape: bf16[32,64], index: 18, kind: input, shape index: {}]
  %s19 = inlined_call_operand.hbm [shape: f32[1,64], index: 19, kind: input, shape index: {}]
  %s20 = inlined_call_operand.hbm [shape: bf16[64,32], index: 20, kind: input, shape index: {}]
  %s21 = inlined_call_operand.hbm [shape: f32[1,32], index: 21, kind: input, shape index: {}]
  %s22 = inlined_call_operand.hbm [shape: f32[1,32], index: 22, kind: input, shape index: {}]
  %s23 = inlined_call_operand.hbm [shape: f32[1,32], index: 23, kind: input, shape index: {}]
  %s24 = inlined_call_operand.hbm [shape: f32[1,32], index: 24, kind: input, shape index: {}]
  %s25 = inlined_call_operand.hbm [shape: f32[1,32], index: 25, kind: input, shape index: {}]
  %s26 = inlined_call_operand.hbm [shape: f32[1,32], index: 26, kind: input, shape index: {}]
  %s27 = inlined_call_operand.hbm [shape: f32[1,32], index: 27, kind: input, shape index: {}]
  %s28 = inlined_call_operand.hbm [shape: f32[2,8,32], index: 28, kind: output, shape index: {}]
  %s29 = sld [smem:[#allocation0]]
  $region257: #{tpu_custom_call.1} parent=0
    _
  %s31 = ssub.s32 1, %s29
  %s32 = scalar_select 0, %s31, %s29
  $region1: #{tpu_custom_call.1} parent=0
    #allocation3 [shape = 'u8[8192]{0}', space=vmem, size = 0x2000, scoped, tag = 'input window, operand 0']
    #allocation4 [shape = 's32[2]{0}', space=sflag, size = 0x8, scoped, tag = 'scoped memory for tpu_custom_call.1']
    #allocation5 [shape = 's32[2]{0}', space=sflag, size = 0x8, scoped, tag = 'scoped memory for tpu_custom_call.1']
    #allocation6 [shape = 'u8[8192]{0}', space=vmem, size = 0x2000, scoped, tag = 'input window, operand 1']
    #allocation7 [shape = 's32[2]{0}', space=sflag, size = 0x8, scoped, tag = 'scoped memory for tpu_custom_call.1']
    #allocation8 [shape = 'u8[8192]{0}', space=vmem, size = 0x2000, scoped, tag = 'input window, operand 2']
    #allocation9 [shape = 'u8[8192]{0}', space=vmem, size = 0x2000, scoped, tag = 'input window, operand 3']
    #allocation10 [shape = 's32[2]{0}', space=sflag, size = 0x8, scoped, tag = 'scoped memory for tpu_custom_call.1']
    #allocation11 [shape = 'u8[8192]{0}', space=vmem, size = 0x2000, scoped, tag = 'input window, operand 4, single buffered']
    #allocation12 [shape = 'u8[512]{0}', space=vmem, size = 0x400, scoped, tag = 'input window, operand 5, single buffered']
    #allocation13 [shape = 's32[1]{0}', space=sflag, size = 0x4, scoped, tag = 'scoped memory for tpu_custom_call.1']
    #allocation14 [shape = 'u8[8192]{0}', space=vmem, size = 0x2000, scoped, tag = 'input window, operand 6, single buffered']
    #allocation15 [shape = 'u8[512]{0}', space=vmem, size = 0x400, scoped, tag = 'input window, operand 7, single buffered']
    #allocation16 [shape = 's32[1]{0}', space=sflag, size = 0x4, scoped, tag = 'scoped memory for tpu_custom_call.1']
    #allocation17 [shape = 'u8[8192]{0}', space=vmem, size = 0x2000, scoped, tag = 'input window, operand 8, single buffered']
    #allocation18 [shape = 'u8[512]{0}', space=vmem, size = 0x400, scoped, tag = 'input window, operand 9, single buffered']
    #allocation19 [shape = 's32[1]{0}', space=sflag, size = 0x4, scoped, tag = 'scoped memory for tpu_custom_call.1']
    #allocation20 [shape = 'u8[8192]{0}', space=vmem, size = 0x2000, scoped, tag = 'input window, operand 10, single buffered']
    #allocation21 [shape = 'u8[512]{0}', space=vmem, size = 0x400, scoped, tag = 'input window, operand 11, single buffered']
    #allocation22 [shape = 's32[1]{0}', space=sflag, size = 0x4, scoped, tag = 'scoped memory for tpu_custom_call.1']
    #allocation23 [shape = 'u8[8192]{0}', space=vmem, size = 0x2000, scoped, tag = 'input window, operand 12, single buffered']
    #allocation24 [shape = 'u8[512]{0}', space=vmem, size = 0x400, scoped, tag = 'input window, operand 13, single buffered']
    #allocation25 [shape = 's32[1]{0}', space=sflag, size = 0x4, scoped, tag = 'scoped memory for tpu_custom_call.1']
    #allocation26 [shape = 'u8[8192]{0}', space=vmem, size = 0x2000, scoped, tag = 'input window, operand 14, single buffered']
    #allocation27 [shape = 'u8[512]{0}', space=vmem, size = 0x400, scoped, tag = 'input window, operand 15, single buffered']
    #allocation28 [shape = 's32[1]{0}', space=sflag, size = 0x4, scoped, tag = 'scoped memory for tpu_custom_call.1']
    #allocation29 [shape = 'u8[8192]{0}', space=vmem, size = 0x2000, scoped, tag = 'input window, operand 16, single buffered']
    #allocation30 [shape = 'u8[512]{0}', space=vmem, size = 0x400, scoped, tag = 'input window, operand 17, single buffered']
    #allocation31 [shape = 's32[1]{0}', space=sflag, size = 0x4, scoped, tag = 'scoped memory for tpu_custom_call.1']
    #allocation32 [shape = 'u8[8192]{0}', space=vmem, size = 0x2000, scoped, tag = 'input window, operand 18, single buffered']
    #allocation33 [shape = 'u8[512]{0}', space=vmem, size = 0x400, scoped, tag = 'input window, operand 19, single buffered']
    #allocation34 [shape = 's32[1]{0}', space=sflag, size = 0x4, scoped, tag = 'scoped memory for tpu_custom_call.1']
    #allocation35 [shape = 'u8[16384]{0}', space=vmem, size = 0x4000, scoped, tag = 'input window, operand 20, single buffered']
    #allocation36 [shape = 'u8[512]{0}', space=vmem, size = 0x400, scoped, tag = 'input window, operand 21, single buffered']
    #allocation37 [shape = 's32[1]{0}', space=sflag, size = 0x4, scoped, tag = 'scoped memory for tpu_custom_call.1']
    #allocation38 [shape = 'u8[512]{0}', space=vmem, size = 0x400, scoped, tag = 'input window, operand 22, single buffered']
    #allocation39 [shape = 'u8[512]{0}', space=vmem, size = 0x400, scoped, tag = 'input window, operand 23, single buffered']
    #allocation40 [shape = 's32[1]{0}', space=sflag, size = 0x4, scoped, tag = 'scoped memory for tpu_custom_call.1']
    #allocation41 [shape = 'u8[512]{0}', space=vmem, size = 0x400, scoped, tag = 'input window, operand 24, single buffered']
    #allocation42 [shape = 'u8[512]{0}', space=vmem, size = 0x400, scoped, tag = 'input window, operand 25, single buffered']
    #allocation43 [shape = 's32[1]{0}', space=sflag, size = 0x4, scoped, tag = 'scoped memory for tpu_custom_call.1']
    #allocation44 [shape = 'u8[512]{0}', space=vmem, size = 0x400, scoped, tag = 'input window, operand 26, single buffered']
    #allocation45 [shape = 'u8[512]{0}', space=vmem, size = 0x400, scoped, tag = 'input window, operand 27, single buffered']
    #allocation46 [shape = 's32[1]{0}', space=sflag, size = 0x4, scoped, tag = 'scoped memory for tpu_custom_call.1']
    #allocation47 [shape = 'u8[8192]{0}', space=vmem, size = 0x2000, scoped, tag = 'output window, operand 0']
    %33 = vsyncpa [#allocation4], 0
    %s34 = scalar_lea.sflag [#allocation4], 1
    %35 = vsyncpa %s34, 0
    %36 = vsyncpa [#allocation7], 0
    %s37 = scalar_lea.sflag [#allocation7], 1
    %38 = vsyncpa %s37, 0
    %39 = vsyncpa [#allocation10], 0
    %s40 = scalar_lea.sflag [#allocation10], 1
    %41 = vsyncpa %s40, 0
    %42 = vsyncpa [#allocation13], 0
    %43 = vsyncpa [#allocation16], 0
    %44 = vsyncpa [#allocation19], 0
    %45 = vsyncpa [#allocation22], 0
    %46 = vsyncpa [#allocation25], 0
    %47 = vsyncpa [#allocation28], 0
    %48 = vsyncpa [#allocation31], 0
    %49 = vsyncpa [#allocation34], 0
    %50 = vsyncpa [#allocation37], 0
    %51 = vsyncpa [#allocation40], 0
    %52 = vsyncpa [#allocation43], 0
    %53 = vsyncpa [#allocation46], 0
    %54 = vsyncpa [#allocation5], 0
    %s55 = scalar_lea.sflag [#allocation5], 1
    %56 = vsyncpa %s55, 0
    loop: start=0, step=1, limit=4
    $region2: #{tpu_custom_call.1} parent=1 // loop_pre_header
      _
    $region3: #{tpu_custom_call.1} parent=1 // loop_header
      %s58 = sphi 0, %s62
      %p59 = scmp.ge.s32.totalorder %s58, 4
      %s68 = sphi 0, %s70
      %s71 = sphi 0, %s68
      %s72 = sphi 0, %s71
      %s88 = sphi 0, %s72
      %s94 = sphi 0, %s96
      %s97 = sphi 0, %s94
      %s98 = sphi 0, %s97
      %s114 = sphi 0, %s98
      %s120 = sphi 0, %s122
      %s123 = sphi 0, %s120
      %s124 = sphi 0, %s123
      %s140 = sphi 0, %s124
      %s146 = sphi 0, %s148
      %s149 = sphi 0, %s146
      %s150 = sphi 0, %s149
      %s166 = sphi 0, %s150
      %s170 = sphi 0, %s170
      %s172 = sphi 0, %s170
      %s173 = sphi 0, %s172
      %s187 = sphi 0, %s173
      %s191 = sphi 0, %s191
      %s193 = sphi 0, %s191
      %s194 = sphi 0, %s193
      %s208 = sphi 0, %s194
      %s212 = sphi 0, %s212
      %s214 = sphi 0, %s212
      %s215 = sphi 0, %s214
      %s229 = sphi 0, %s215
      %s233 = sphi 0, %s233
      %s235 = sphi 0, %s233
      %s236 = sphi 0, %s235
      %s250 = sphi 0, %s236
      %s254 = sphi 0, %s254
      %s256 = sphi 0, %s254
      %s257 = sphi 0, %s256
      %s271 = sphi 0, %s257
      %s275 = sphi 0, %s275
      %s277 = sphi 0, %s275
      %s278 = sphi 0, %s277
      %s292 = sphi 0, %s278
      %s296 = sphi 0, %s296
      %s298 = sphi 0, %s296
      %s299 = sphi 0, %s298
      %s313 = sphi 0, %s299
      %s317 = sphi 0, %s317
      %s319 = sphi 0, %s317
      %s320 = sphi 0, %s319
      %s334 = sphi 0, %s320
      %s338 = sphi 0, %s338
      %s340 = sphi 0, %s338
      %s341 = sphi 0, %s340
      %s355 = sphi 0, %s341
      %s359 = sphi 0, %s359
      %s361 = sphi 0, %s359
      %s362 = sphi 0, %s361
      %s376 = sphi 0, %s362
      %s380 = sphi 0, %s380
      %s382 = sphi 0, %s380
      %s383 = sphi 0, %s382
      %s397 = sphi 0, %s383
      %s401 = sphi 0, %s401
      %s403 = sphi 0, %s401
      %s404 = sphi 0, %s403
      %s418 = sphi 0, %s404
      %s422 = sphi 0, %s422
      %s424 = sphi 0, %s422
      %s425 = sphi 0, %s424
      %s439 = sphi 0, %s425
      %s443 = sphi 0, %s443
      %s445 = sphi 0, %s443
      %s446 = sphi 0, %s445
      %s460 = sphi 0, %s446
      %s464 = sphi 0, %s464
      %s466 = sphi 0, %s464
      %s467 = sphi 0, %s466
      %s481 = sphi 0, %s467
      %s485 = sphi 0, %s485
      %s487 = sphi 0, %s485
      %s488 = sphi 0, %s487
      %s502 = sphi 0, %s488
      %s506 = sphi 0, %s506
      %s508 = sphi 0, %s506
      %s509 = sphi 0, %s508
      %s523 = sphi 0, %s509
      %s527 = sphi 0, %s527
      %s529 = sphi 0, %s527
      %s530 = sphi 0, %s529
      %s544 = sphi 0, %s530
      %s548 = sphi 0, %s548
      %s550 = sphi 0, %s548
      %s551 = sphi 0, %s550
      %s565 = sphi 0, %s551
      %s569 = sphi 0, %s569
      %s571 = sphi 0, %s569
      %s572 = sphi 0, %s571
      %s586 = sphi 0, %s572
      %s590 = sphi 0, %s590
      %s592 = sphi 0, %s590
      %s593 = sphi 0, %s592
      %s607 = sphi 0, %s593
      %s611 = sphi 0, %s611
      %s613 = sphi 0, %s611
      %s614 = sphi 0, %s613
      %s628 = sphi 0, %s614
      %s632 = sphi 0, %s632
      %s634 = sphi 0, %s632
      %s635 = sphi 0, %s634
      %s649 = sphi 0, %s635
      %s653 = sphi 0, %s653
      %s655 = sphi 0, %s653
      %s656 = sphi 0, %s655
      %s670 = sphi 0, %s656
      %s676 = sphi 0, %s678
      %s679 = sphi 0, %s676
      %s680 = sphi 0, %s679
      %s696 = sphi 0, %s680
    $region4: #{tpu_custom_call.1} parent=1 // loop_header_branch
      %61 = sbr.rel (%p59) target = $region8
    $region5: #{tpu_custom_call.1} parent=1 // loop_body
      %s63 = ssub.s32 %s58, 1
      %s64 = ssub.s32 %s58, 2
      %s65 = sadd.s32 %s58, 1
      %s66 = ssub.s32 %s58, %s65
      %p67 = scmp.eq.s32.totalorder %s66, 0
      %s69 = sadd.s32 %s68, 1
      %s70 = scalar_select %p67, %s68, %s69
      %p73 = pneg %p67
      %p74 = scmp.eq.s32.totalorder %s58, 1
      %p75 = por %p73, %p74
      %p76 = scmp.ne.s32.totalorder %s68, %s71
      %p77 = scmp.eq.s32.totalorder %s58, 0
      %p78 = por %p76, %p77
      %p79 = scmp.ne.s32.totalorder %s68, %s71
      %p80 = scmp.eq.s32.totalorder %s63, 1
      %p81 = por %p79, %p80
      %p82 = scmp.ne.s32.totalorder %s71, %s72
      %p83 = scmp.eq.s32.totalorder %s63, 0
      %p84 = por %p82, %p83
      %p85 = scmp.ne.s32.totalorder %s71, %s72
      %p86 = scmp.eq.s32.totalorder %s64, 1
      %p87 = por %p85, %p86
      %p89 = scmp.ne.s32.totalorder %s72, %s88
      %p90 = scmp.eq.s32.totalorder %s64, 0
      %p91 = por %p89, %p90
      %s92 = ssub.s32 %s58, %s65
      %p93 = scmp.eq.s32.totalorder %s92, 0
      %s95 = sadd.s32 %s94, 1
      %s96 = scalar_select %p93, %s94, %s95
      %p99 = pneg %p93
      %p100 = scmp.eq.s32.totalorder %s58, 1
      %p101 = por %p99, %p100
      %p102 = scmp.ne.s32.totalorder %s94, %s97
      %p103 = scmp.eq.s32.totalorder %s58, 0
      %p104 = por %p102, %p103
      %p105 = scmp.ne.s32.totalorder %s94, %s97
      %p106 = scmp.eq.s32.totalorder %s63, 1
      %p107 = por %p105, %p106
      %p108 = scmp.ne.s32.totalorder %s97, %s98
      %p109 = scmp.eq.s32.totalorder %s63, 0
      %p110 = por %p108, %p109
      %p111 = scmp.ne.s32.totalorder %s97, %s98
      %p112 = scmp.eq.s32.totalorder %s64, 1
      %p113 = por %p111, %p112
      %p115 = scmp.ne.s32.totalorder %s98, %s114
      %p116 = scmp.eq.s32.totalorder %s64, 0
      %p117 = por %p115, %p116
      %s118 = ssub.s32 %s58, %s65
      %p119 = scmp.eq.s32.totalorder %s118, 0
      %s121 = sadd.s32 %s120, 1
      %s122 = scalar_select %p119, %s120, %s121
      %p125 = pneg %p119
      %p126 = scmp.eq.s32.totalorder %s58, 1
      %p127 = por %p125, %p126
      %p128 = scmp.ne.s32.totalorder %s120, %s123
      %p129 = scmp.eq.s32.totalorder %s58, 0
      %p130 = por %p128, %p129
      %p131 = scmp.ne.s32.totalorder %s120, %s123
      %p132 = scmp.eq.s32.totalorder %s63, 1
      %p133 = por %p131, %p132
      %p134 = scmp.ne.s32.totalorder %s123, %s124
      %p135 = scmp.eq.s32.totalorder %s63, 0
      %p136 = por %p134, %p135
      %p137 = scmp.ne.s32.totalorder %s123, %s124
      %p138 = scmp.eq.s32.totalorder %s64, 1
      %p139 = por %p137, %p138
      %p141 = scmp.ne.s32.totalorder %s124, %s140
      %p142 = scmp.eq.s32.totalorder %s64, 0
      %p143 = por %p141, %p142
      %s144 = ssub.s32 %s58, %s65
      %p145 = scmp.eq.s32.totalorder %s144, 0
      %s147 = sadd.s32 %s146, 1
      %s148 = scalar_select %p145, %s146, %s147
      %p151 = pneg %p145
      %p152 = scmp.eq.s32.totalorder %s58, 1
      %p153 = por %p151, %p152
      %p154 = scmp.ne.s32.totalorder %s146, %s149
      %p155 = scmp.eq.s32.totalorder %s58, 0
      %p156 = por %p154, %p155
      %p157 = scmp.ne.s32.totalorder %s146, %s149
      %p158 = scmp.eq.s32.totalorder %s63, 1
      %p159 = por %p157, %p158
      %p160 = scmp.ne.s32.totalorder %s149, %s150
      %p161 = scmp.eq.s32.totalorder %s63, 0
      %p162 = por %p160, %p161
      %p163 = scmp.ne.s32.totalorder %s149, %s150
      %p164 = scmp.eq.s32.totalorder %s64, 1
      %p165 = por %p163, %p164
      %p167 = scmp.ne.s32.totalorder %s150, %s166
      %p168 = scmp.eq.s32.totalorder %s64, 0
      %p169 = por %p167, %p168
      %s171 = sadd.s32 %s170, 1
      %p174 = scmp.eq.s32.totalorder %s58, 1
      %p175 = scmp.ne.s32.totalorder %s170, %s172
      %p176 = scmp.eq.s32.totalorder %s58, 0
      %p177 = por %p175, %p176
      %p178 = scmp.ne.s32.totalorder %s170, %s172
      %p179 = scmp.eq.s32.totalorder %s63, 1
      %p180 = por %p178, %p179
      %p181 = scmp.ne.s32.totalorder %s172, %s173
      %p182 = scmp.eq.s32.totalorder %s63, 0
      %p183 = por %p181, %p182
      %p184 = scmp.ne.s32.totalorder %s172, %s173
      %p185 = scmp.eq.s32.totalorder %s64, 1
      %p186 = por %p184, %p185
      %p188 = scmp.ne.s32.totalorder %s173, %s187
      %p189 = scmp.eq.s32.totalorder %s64, 0
      %p190 = por %p188, %p189
      %s192 = sadd.s32 %s191, 1
      %p195 = scmp.eq.s32.totalorder %s58, 1
      %p196 = scmp.ne.s32.totalorder %s191, %s193
      %p197 = scmp.eq.s32.totalorder %s58, 0
      %p198 = por %p196, %p197
      %p199 = scmp.ne.s32.totalorder %s191, %s193
      %p200 = scmp.eq.s32.totalorder %s63, 1
      %p201 = por %p199, %p200
      %p202 = scmp.ne.s32.totalorder %s193, %s194
      %p203 = scmp.eq.s32.totalorder %s63, 0
      %p204 = por %p202, %p203
      %p205 = scmp.ne.s32.totalorder %s193, %s194
      %p206 = scmp.eq.s32.totalorder %s64, 1
      %p207 = por %p205, %p206
      %p209 = scmp.ne.s32.totalorder %s194, %s208
      %p210 = scmp.eq.s32.totalorder %s64, 0
      %p211 = por %p209, %p210
      %s213 = sadd.s32 %s212, 1
      %p216 = scmp.eq.s32.totalorder %s58, 1
      %p217 = scmp.ne.s32.totalorder %s212, %s214
      %p218 = scmp.eq.s32.totalorder %s58, 0
      %p219 = por %p217, %p218
      %p220 = scmp.ne.s32.totalorder %s212, %s214
      %p221 = scmp.eq.s32.totalorder %s63, 1
      %p222 = por %p220, %p221
      %p223 = scmp.ne.s32.totalorder %s214, %s215
      %p224 = scmp.eq.s32.totalorder %s63, 0
      %p225 = por %p223, %p224
      %p226 = scmp.ne.s32.totalorder %s214, %s215
      %p227 = scmp.eq.s32.totalorder %s64, 1
      %p228 = por %p226, %p227
      %p230 = scmp.ne.s32.totalorder %s215, %s229
      %p231 = scmp.eq.s32.totalorder %s64, 0
      %p232 = por %p230, %p231
      %s234 = sadd.s32 %s233, 1
      %p237 = scmp.eq.s32.totalorder %s58, 1
      %p238 = scmp.ne.s32.totalorder %s233, %s235
      %p239 = scmp.eq.s32.totalorder %s58, 0
      %p240 = por %p238, %p239
      %p241 = scmp.ne.s32.totalorder %s233, %s235
      %p242 = scmp.eq.s32.totalorder %s63, 1
      %p243 = por %p241, %p242
      %p244 = scmp.ne.s32.totalorder %s235, %s236
      %p245 = scmp.eq.s32.totalorder %s63, 0
      %p246 = por %p244, %p245
      %p247 = scmp.ne.s32.totalorder %s235, %s236
      %p248 = scmp.eq.s32.totalorder %s64, 1
      %p249 = por %p247, %p248
      %p251 = scmp.ne.s32.totalorder %s236, %s250
      %p252 = scmp.eq.s32.totalorder %s64, 0
      %p253 = por %p251, %p252
      %s255 = sadd.s32 %s254, 1
      %p258 = scmp.eq.s32.totalorder %s58, 1
      %p259 = scmp.ne.s32.totalorder %s254, %s256
      %p260 = scmp.eq.s32.totalorder %s58, 0
      %p261 = por %p259, %p260
      %p262 = scmp.ne.s32.totalorder %s254, %s256
      %p263 = scmp.eq.s32.totalorder %s63, 1
      %p264 = por %p262, %p263
      %p265 = scmp.ne.s32.totalorder %s256, %s257
      %p266 = scmp.eq.s32.totalorder %s63, 0
      %p267 = por %p265, %p266
      %p268 = scmp.ne.s32.totalorder %s256, %s257
      %p269 = scmp.eq.s32.totalorder %s64, 1
      %p270 = por %p268, %p269
      %p272 = scmp.ne.s32.totalorder %s257, %s271
      %p273 = scmp.eq.s32.totalorder %s64, 0
      %p274 = por %p272, %p273
      %s276 = sadd.s32 %s275, 1
      %p279 = scmp.eq.s32.totalorder %s58, 1
      %p280 = scmp.ne.s32.totalorder %s275, %s277
      %p281 = scmp.eq.s32.totalorder %s58, 0
      %p282 = por %p280, %p281
      %p283 = scmp.ne.s32.totalorder %s275, %s277
      %p284 = scmp.eq.s32.totalorder %s63, 1
      %p285 = por %p283, %p284
      %p286 = scmp.ne.s32.totalorder %s277, %s278
      %p287 = scmp.eq.s32.totalorder %s63, 0
      %p288 = por %p286, %p287
      %p289 = scmp.ne.s32.totalorder %s277, %s278
      %p290 = scmp.eq.s32.totalorder %s64, 1
      %p291 = por %p289, %p290
      %p293 = scmp.ne.s32.totalorder %s278, %s292
      %p294 = scmp.eq.s32.totalorder %s64, 0
      %p295 = por %p293, %p294
      %s297 = sadd.s32 %s296, 1
      %p300 = scmp.eq.s32.totalorder %s58, 1
      %p301 = scmp.ne.s32.totalorder %s296, %s298
      %p302 = scmp.eq.s32.totalorder %s58, 0
      %p303 = por %p301, %p302
      %p304 = scmp.ne.s32.totalorder %s296, %s298
      %p305 = scmp.eq.s32.totalorder %s63, 1
      %p306 = por %p304, %p305
      %p307 = scmp.ne.s32.totalorder %s298, %s299
      %p308 = scmp.eq.s32.totalorder %s63, 0
      %p309 = por %p307, %p308
      %p310 = scmp.ne.s32.totalorder %s298, %s299
      %p311 = scmp.eq.s32.totalorder %s64, 1
      %p312 = por %p310, %p311
      %p314 = scmp.ne.s32.totalorder %s299, %s313
      %p315 = scmp.eq.s32.totalorder %s64, 0
      %p316 = por %p314, %p315
      %s318 = sadd.s32 %s317, 1
      %p321 = scmp.eq.s32.totalorder %s58, 1
      %p322 = scmp.ne.s32.totalorder %s317, %s319
      %p323 = scmp.eq.s32.totalorder %s58, 0
      %p324 = por %p322, %p323
      %p325 = scmp.ne.s32.totalorder %s317, %s319
      %p326 = scmp.eq.s32.totalorder %s63, 1
      %p327 = por %p325, %p326
      %p328 = scmp.ne.s32.totalorder %s319, %s320
      %p329 = scmp.eq.s32.totalorder %s63, 0
      %p330 = por %p328, %p329
      %p331 = scmp.ne.s32.totalorder %s319, %s320
      %p332 = scmp.eq.s32.totalorder %s64, 1
      %p333 = por %p331, %p332
      %p335 = scmp.ne.s32.totalorder %s320, %s334
      %p336 = scmp.eq.s32.totalorder %s64, 0
      %p337 = por %p335, %p336
      %s339 = sadd.s32 %s338, 1
      %p342 = scmp.eq.s32.totalorder %s58, 1
      %p343 = scmp.ne.s32.totalorder %s338, %s340
      %p344 = scmp.eq.s32.totalorder %s58, 0
      %p345 = por %p343, %p344
      %p346 = scmp.ne.s32.totalorder %s338, %s340
      %p347 = scmp.eq.s32.totalorder %s63, 1
      %p348 = por %p346, %p347
      %p349 = scmp.ne.s32.totalorder %s340, %s341
      %p350 = scmp.eq.s32.totalorder %s63, 0
      %p351 = por %p349, %p350
      %p352 = scmp.ne.s32.totalorder %s340, %s341
      %p353 = scmp.eq.s32.totalorder %s64, 1
      %p354 = por %p352, %p353
      %p356 = scmp.ne.s32.totalorder %s341, %s355
      %p357 = scmp.eq.s32.totalorder %s64, 0
      %p358 = por %p356, %p357
      %s360 = sadd.s32 %s359, 1
      %p363 = scmp.eq.s32.totalorder %s58, 1
      %p364 = scmp.ne.s32.totalorder %s359, %s361
      %p365 = scmp.eq.s32.totalorder %s58, 0
      %p366 = por %p364, %p365
      %p367 = scmp.ne.s32.totalorder %s359, %s361
      %p368 = scmp.eq.s32.totalorder %s63, 1
      %p369 = por %p367, %p368
      %p370 = scmp.ne.s32.totalorder %s361, %s362
      %p371 = scmp.eq.s32.totalorder %s63, 0
      %p372 = por %p370, %p371
      %p373 = scmp.ne.s32.totalorder %s361, %s362
      %p374 = scmp.eq.s32.totalorder %s64, 1
      %p375 = por %p373, %p374
      %p377 = scmp.ne.s32.totalorder %s362, %s376
      %p378 = scmp.eq.s32.totalorder %s64, 0
      %p379 = por %p377, %p378
      %s381 = sadd.s32 %s380, 1
      %p384 = scmp.eq.s32.totalorder %s58, 1
      %p385 = scmp.ne.s32.totalorder %s380, %s382
      %p386 = scmp.eq.s32.totalorder %s58, 0
      %p387 = por %p385, %p386
      %p388 = scmp.ne.s32.totalorder %s380, %s382
      %p389 = scmp.eq.s32.totalorder %s63, 1
      %p390 = por %p388, %p389
      %p391 = scmp.ne.s32.totalorder %s382, %s383
      %p392 = scmp.eq.s32.totalorder %s63, 0
      %p393 = por %p391, %p392
      %p394 = scmp.ne.s32.totalorder %s382, %s383
      %p395 = scmp.eq.s32.totalorder %s64, 1
      %p396 = por %p394, %p395
      %p398 = scmp.ne.s32.totalorder %s383, %s397
      %p399 = scmp.eq.s32.totalorder %s64, 0
      %p400 = por %p398, %p399
      %s402 = sadd.s32 %s401, 1
      %p405 = scmp.eq.s32.totalorder %s58, 1
      %p406 = scmp.ne.s32.totalorder %s401, %s403
      %p407 = scmp.eq.s32.totalorder %s58, 0
      %p408 = por %p406, %p407
      %p409 = scmp.ne.s32.totalorder %s401, %s403
      %p410 = scmp.eq.s32.totalorder %s63, 1
      %p411 = por %p409, %p410
      %p412 = scmp.ne.s32.totalorder %s403, %s404
      %p413 = scmp.eq.s32.totalorder %s63, 0
      %p414 = por %p412, %p413
      %p415 = scmp.ne.s32.totalorder %s403, %s404
      %p416 = scmp.eq.s32.totalorder %s64, 1
      %p417 = por %p415, %p416
      %p419 = scmp.ne.s32.totalorder %s404, %s418
      %p420 = scmp.eq.s32.totalorder %s64, 0
      %p421 = por %p419, %p420
      %s423 = sadd.s32 %s422, 1
      %p426 = scmp.eq.s32.totalorder %s58, 1
      %p427 = scmp.ne.s32.totalorder %s422, %s424
      %p428 = scmp.eq.s32.totalorder %s58, 0
      %p429 = por %p427, %p428
      %p430 = scmp.ne.s32.totalorder %s422, %s424
      %p431 = scmp.eq.s32.totalorder %s63, 1
      %p432 = por %p430, %p431
      %p433 = scmp.ne.s32.totalorder %s424, %s425
      %p434 = scmp.eq.s32.totalorder %s63, 0
      %p435 = por %p433, %p434
      %p436 = scmp.ne.s32.totalorder %s424, %s425
      %p437 = scmp.eq.s32.totalorder %s64, 1
      %p438 = por %p436, %p437
      %p440 = scmp.ne.s32.totalorder %s425, %s439
      %p441 = scmp.eq.s32.totalorder %s64, 0
      %p442 = por %p440, %p441
      %s444 = sadd.s32 %s443, 1
      %p447 = scmp.eq.s32.totalorder %s58, 1
      %p448 = scmp.ne.s32.totalorder %s443, %s445
      %p449 = scmp.eq.s32.totalorder %s58, 0
      %p450 = por %p448, %p449
      %p451 = scmp.ne.s32.totalorder %s443, %s445
      %p452 = scmp.eq.s32.totalorder %s63, 1
      %p453 = por %p451, %p452
      %p454 = scmp.ne.s32.totalorder %s445, %s446
      %p455 = scmp.eq.s32.totalorder %s63, 0
      %p456 = por %p454, %p455
      %p457 = scmp.ne.s32.totalorder %s445, %s446
      %p458 = scmp.eq.s32.totalorder %s64, 1
      %p459 = por %p457, %p458
      %p461 = scmp.ne.s32.totalorder %s446, %s460
      %p462 = scmp.eq.s32.totalorder %s64, 0
      %p463 = por %p461, %p462
      %s465 = sadd.s32 %s464, 1
      %p468 = scmp.eq.s32.totalorder %s58, 1
      %p469 = scmp.ne.s32.totalorder %s464, %s466
      %p470 = scmp.eq.s32.totalorder %s58, 0
      %p471 = por %p469, %p470
      %p472 = scmp.ne.s32.totalorder %s464, %s466
      %p473 = scmp.eq.s32.totalorder %s63, 1
      %p474 = por %p472, %p473
      %p475 = scmp.ne.s32.totalorder %s466, %s467
      %p476 = scmp.eq.s32.totalorder %s63, 0
      %p477 = por %p475, %p476
      %p478 = scmp.ne.s32.totalorder %s466, %s467
      %p479 = scmp.eq.s32.totalorder %s64, 1
      %p480 = por %p478, %p479
      %p482 = scmp.ne.s32.totalorder %s467, %s481
      %p483 = scmp.eq.s32.totalorder %s64, 0
      %p484 = por %p482, %p483
      %s486 = sadd.s32 %s485, 1
      %p489 = scmp.eq.s32.totalorder %s58, 1
      %p490 = scmp.ne.s32.totalorder %s485, %s487
      %p491 = scmp.eq.s32.totalorder %s58, 0
      %p492 = por %p490, %p491
      %p493 = scmp.ne.s32.totalorder %s485, %s487
      %p494 = scmp.eq.s32.totalorder %s63, 1
      %p495 = por %p493, %p494
      %p496 = scmp.ne.s32.totalorder %s487, %s488
      %p497 = scmp.eq.s32.totalorder %s63, 0
      %p498 = por %p496, %p497
      %p499 = scmp.ne.s32.totalorder %s487, %s488
      %p500 = scmp.eq.s32.totalorder %s64, 1
      %p501 = por %p499, %p500
      %p503 = scmp.ne.s32.totalorder %s488, %s502
      %p504 = scmp.eq.s32.totalorder %s64, 0
      %p505 = por %p503, %p504
      %s507 = sadd.s32 %s506, 1
      %p510 = scmp.eq.s32.totalorder %s58, 1
      %p511 = scmp.ne.s32.totalorder %s506, %s508
      %p512 = scmp.eq.s32.totalorder %s58, 0
      %p513 = por %p511, %p512
      %p514 = scmp.ne.s32.totalorder %s506, %s508
      %p515 = scmp.eq.s32.totalorder %s63, 1
      %p516 = por %p514, %p515
      %p517 = scmp.ne.s32.totalorder %s508, %s509
      %p518 = scmp.eq.s32.totalorder %s63, 0
      %p519 = por %p517, %p518
      %p520 = scmp.ne.s32.totalorder %s508, %s509
      %p521 = scmp.eq.s32.totalorder %s64, 1
      %p522 = por %p520, %p521
      %p524 = scmp.ne.s32.totalorder %s509, %s523
      %p525 = scmp.eq.s32.totalorder %s64, 0
      %p526 = por %p524, %p525
      %s528 = sadd.s32 %s527, 1
      %p531 = scmp.eq.s32.totalorder %s58, 1
      %p532 = scmp.ne.s32.totalorder %s527, %s529
      %p533 = scmp.eq.s32.totalorder %s58, 0
      %p534 = por %p532, %p533
      %p535 = scmp.ne.s32.totalorder %s527, %s529
      %p536 = scmp.eq.s32.totalorder %s63, 1
      %p537 = por %p535, %p536
      %p538 = scmp.ne.s32.totalorder %s529, %s530
      %p539 = scmp.eq.s32.totalorder %s63, 0
      %p540 = por %p538, %p539
      %p541 = scmp.ne.s32.totalorder %s529, %s530
      %p542 = scmp.eq.s32.totalorder %s64, 1
      %p543 = por %p541, %p542
      %p545 = scmp.ne.s32.totalorder %s530, %s544
      %p546 = scmp.eq.s32.totalorder %s64, 0
      %p547 = por %p545, %p546
      %s549 = sadd.s32 %s548, 1
      %p552 = scmp.eq.s32.totalorder %s58, 1
      %p553 = scmp.ne.s32.totalorder %s548, %s550
      %p554 = scmp.eq.s32.totalorder %s58, 0
      %p555 = por %p553, %p554
      %p556 = scmp.ne.s32.totalorder %s548, %s550
      %p557 = scmp.eq.s32.totalorder %s63, 1
      %p558 = por %p556, %p557
      %p559 = scmp.ne.s32.totalorder %s550, %s551
      %p560 = scmp.eq.s32.totalorder %s63, 0
      %p561 = por %p559, %p560
      %p562 = scmp.ne.s32.totalorder %s550, %s551
      %p563 = scmp.eq.s32.totalorder %s64, 1
      %p564 = por %p562, %p563
      %p566 = scmp.ne.s32.totalorder %s551, %s565
      %p567 = scmp.eq.s32.totalorder %s64, 0
      %p568 = por %p566, %p567
      %s570 = sadd.s32 %s569, 1
      %p573 = scmp.eq.s32.totalorder %s58, 1
      %p574 = scmp.ne.s32.totalorder %s569, %s571
      %p575 = scmp.eq.s32.totalorder %s58, 0
      %p576 = por %p574, %p575
      %p577 = scmp.ne.s32.totalorder %s569, %s571
      %p578 = scmp.eq.s32.totalorder %s63, 1
      %p579 = por %p577, %p578
      %p580 = scmp.ne.s32.totalorder %s571, %s572
      %p581 = scmp.eq.s32.totalorder %s63, 0
      %p582 = por %p580, %p581
      %p583 = scmp.ne.s32.totalorder %s571, %s572
      %p584 = scmp.eq.s32.totalorder %s64, 1
      %p585 = por %p583, %p584
      %p587 = scmp.ne.s32.totalorder %s572, %s586
      %p588 = scmp.eq.s32.totalorder %s64, 0
      %p589 = por %p587, %p588
      %s591 = sadd.s32 %s590, 1
      %p594 = scmp.eq.s32.totalorder %s58, 1
      %p595 = scmp.ne.s32.totalorder %s590, %s592
      %p596 = scmp.eq.s32.totalorder %s58, 0
      %p597 = por %p595, %p596
      %p598 = scmp.ne.s32.totalorder %s590, %s592
      %p599 = scmp.eq.s32.totalorder %s63, 1
      %p600 = por %p598, %p599
      %p601 = scmp.ne.s32.totalorder %s592, %s593
      %p602 = scmp.eq.s32.totalorder %s63, 0
      %p603 = por %p601, %p602
      %p604 = scmp.ne.s32.totalorder %s592, %s593
      %p605 = scmp.eq.s32.totalorder %s64, 1
      %p606 = por %p604, %p605
      %p608 = scmp.ne.s32.totalorder %s593, %s607
      %p609 = scmp.eq.s32.totalorder %s64, 0
      %p610 = por %p608, %p609
      %s612 = sadd.s32 %s611, 1
      %p615 = scmp.eq.s32.totalorder %s58, 1
      %p616 = scmp.ne.s32.totalorder %s611, %s613
      %p617 = scmp.eq.s32.totalorder %s58, 0
      %p618 = por %p616, %p617
      %p619 = scmp.ne.s32.totalorder %s611, %s613
      %p620 = scmp.eq.s32.totalorder %s63, 1
      %p621 = por %p619, %p620
      %p622 = scmp.ne.s32.totalorder %s613, %s614
      %p623 = scmp.eq.s32.totalorder %s63, 0
      %p624 = por %p622, %p623
      %p625 = scmp.ne.s32.totalorder %s613, %s614
      %p626 = scmp.eq.s32.totalorder %s64, 1
      %p627 = por %p625, %p626
      %p629 = scmp.ne.s32.totalorder %s614, %s628
      %p630 = scmp.eq.s32.totalorder %s64, 0
      %p631 = por %p629, %p630
      %s633 = sadd.s32 %s632, 1
      %p636 = scmp.eq.s32.totalorder %s58, 1
      %p637 = scmp.ne.s32.totalorder %s632, %s634
      %p638 = scmp.eq.s32.totalorder %s58, 0
      %p639 = por %p637, %p638
      %p640 = scmp.ne.s32.totalorder %s632, %s634
      %p641 = scmp.eq.s32.totalorder %s63, 1
      %p642 = por %p640, %p641
      %p643 = scmp.ne.s32.totalorder %s634, %s635
      %p644 = scmp.eq.s32.totalorder %s63, 0
      %p645 = por %p643, %p644
      %p646 = scmp.ne.s32.totalorder %s634, %s635
      %p647 = scmp.eq.s32.totalorder %s64, 1
      %p648 = por %p646, %p647
      %p650 = scmp.ne.s32.totalorder %s635, %s649
      %p651 = scmp.eq.s32.totalorder %s64, 0
      %p652 = por %p650, %p651
      %s654 = sadd.s32 %s653, 1
      %p657 = scmp.eq.s32.totalorder %s58, 1
      %p658 = scmp.ne.s32.totalorder %s653, %s655
      %p659 = scmp.eq.s32.totalorder %s58, 0
      %p660 = por %p658, %p659
      %p661 = scmp.ne.s32.totalorder %s653, %s655
      %p662 = scmp.eq.s32.totalorder %s63, 1
      %p663 = por %p661, %p662
      %p664 = scmp.ne.s32.totalorder %s655, %s656
      %p665 = scmp.eq.s32.totalorder %s63, 0
      %p666 = por %p664, %p665
      %p667 = scmp.ne.s32.totalorder %s655, %s656
      %p668 = scmp.eq.s32.totalorder %s64, 1
      %p669 = por %p667, %p668
      %p671 = scmp.ne.s32.totalorder %s656, %s670
      %p672 = scmp.eq.s32.totalorder %s64, 0
      %p673 = por %p671, %p672
      %s674 = ssub.s32 %s58, %s65
      %p675 = scmp.eq.s32.totalorder %s674, 0
      %s677 = sadd.s32 %s676, 1
      %s678 = scalar_select %p675, %s676, %s677
      %p681 = pneg %p675
      %p682 = scmp.eq.s32.totalorder %s58, 1
      %p683 = por %p681, %p682
      %p684 = scmp.ne.s32.totalorder %s676, %s679
      %p685 = scmp.eq.s32.totalorder %s58, 0
      %p686 = por %p684, %p685
      %p687 = scmp.ne.s32.totalorder %s676, %s679
      %p688 = scmp.eq.s32.totalorder %s63, 1
      %p689 = por %p687, %p688
      %p690 = scmp.ne.s32.totalorder %s679, %s680
      %p691 = scmp.eq.s32.totalorder %s63, 0
      %p692 = por %p690, %p691
      %p693 = scmp.ne.s32.totalorder %s679, %s680
      %p694 = scmp.eq.s32.totalorder %s64, 1
      %p695 = por %p693, %p694
      %p697 = scmp.ne.s32.totalorder %s680, %s696
      %p698 = scmp.eq.s32.totalorder %s64, 0
      %p699 = por %p697, %p698
      %p700 = scmp.le.s32.totalorder 1, %s58
      %p701 = scmp.lt.s32.totalorder %s58, 3
      %p702 = pnand %p700, %p701
      %p703 = pneg %p702
      // Predicated region
      $region9: #{tpu_custom_call.1} parent=5 // pred_check
        _
      $region10: #{tpu_custom_call.1} parent=5 // pred_check_branch
        %705 = sbr.rel (%p702) target = $region12
      $region11: #{tpu_custom_call.1} parent=5 // pred_region
        %s706 = ssub.s32 %s58, 1
        // Predicated region
        $region13: #{tpu_custom_call.1} parent=11 // pred_check
          %p707 = pneg %p183
        $region14: #{tpu_custom_call.1} parent=11 // pred_check_branch
          %709 = sbr.rel (%p707) target = $region16
        $region15: #{tpu_custom_call.1} parent=11 // pred_region
          %s711 = ssub.s32 256, 256
          %712 = vsyncadd [#allocation10], %s711
          %s713 = sshll.u32 [#allocation11], 4
          %s714 = int_to_ptr.vmem [resolvable:$true] %s713
          %719 = dma.hbm_to_vmem [thread:$0]  %s4, 256, %s714, [#allocation10], 64, 64, 4
        $region16: #{tpu_custom_call.1} parent=11 // pred_fallthru
          _
        // Predicated region
        $region17: #{tpu_custom_call.1} parent=11 // pred_check
          %p720 = pneg %p204
        $region18: #{tpu_custom_call.1} parent=11 // pred_check_branch
          %722 = sbr.rel (%p720) target = $region20
        $region19: #{tpu_custom_call.1} parent=11 // pred_region
          %s724 = ssub.s32 16, 16
          %725 = vsyncadd [#allocation13], %s724
          %s727 = sshll.u32 [#allocation12], 4
          %s728 = int_to_ptr.vmem [resolvable:$true] %s727
          %730 = dma.hbm_to_vmem [thread:$0]  %s5, 16, %s728, [#allocation13]
        $region20: #{tpu_custom_call.1} parent=11 // pred_fallthru
          _
        // Predicated region
        $region21: #{tpu_custom_call.1} parent=11 // pred_check
          %p731 = pneg %p225
        $region22: #{tpu_custom_call.1} parent=11 // pred_check_branch
          %733 = sbr.rel (%p731) target = $region24
        $region23: #{tpu_custom_call.1} parent=11 // pred_region
          %s735 = ssub.s32 256, 256
          %736 = vsyncadd [#allocation13], %s735
          %s737 = sshll.u32 [#allocation14], 4
          %s738 = int_to_ptr.vmem [resolvable:$true] %s737
          %743 = dma.hbm_to_vmem [thread:$0]  %s6, 256, %s738, [#allocation13], 64, 64, 4
        $region24: #{tpu_custom_call.1} parent=11 // pred_fallthru
          _
        // Predicated region
        $region25: #{tpu_custom_call.1} parent=11 // pred_check
          %p744 = pneg %p246
        $region26: #{tpu_custom_call.1} parent=11 // pred_check_branch
          %746 = sbr.rel (%p744) target = $region28
        $region27: #{tpu_custom_call.1} parent=11 // pred_region
          %s748 = ssub.s32 16, 16
          %749 = vsyncadd [#allocation16], %s748
          %s751 = sshll.u32 [#allocation15], 4
          %s752 = int_to_ptr.vmem [resolvable:$true] %s751
          %754 = dma.hbm_to_vmem [thread:$0]  %s7, 16, %s752, [#allocation16]
        $region28: #{tpu_custom_call.1} parent=11 // pred_fallthru
          _
        // Predicated region
        $region29: #{tpu_custom_call.1} parent=11 // pred_check
          %p755 = pneg %p267
        $region30: #{tpu_custom_call.1} parent=11 // pred_check_branch
          %757 = sbr.rel (%p755) target = $region32
        $region31: #{tpu_custom_call.1} parent=11 // pred_region
          %s759 = ssub.s32 256, 256
          %760 = vsyncadd [#allocation16], %s759
          %s761 = sshll.u32 [#allocation17], 4
          %s762 = int_to_ptr.vmem [resolvable:$true] %s761
          %767 = dma.hbm_to_vmem [thread:$0]  %s8, 256, %s762, [#allocation16], 64, 64, 4
        $region32: #{tpu_custom_call.1} parent=11 // pred_fallthru
          _
        // Predicated region
        $region33: #{tpu_custom_call.1} parent=11 // pred_check
          %p768 = pneg %p288
        $region34: #{tpu_custom_call.1} parent=11 // pred_check_branch
          %770 = sbr.rel (%p768) target = $region36
        $region35: #{tpu_custom_call.1} parent=11 // pred_region
          %s772 = ssub.s32 16, 16
          %773 = vsyncadd [#allocation19], %s772
          %s775 = sshll.u32 [#allocation18], 4
          %s776 = int_to_ptr.vmem [resolvable:$true] %s775
          %778 = dma.hbm_to_vmem [thread:$0]  %s9, 16, %s776, [#allocation19]
        $region36: #{tpu_custom_call.1} parent=11 // pred_fallthru
          _
        // Predicated region
        $region37: #{tpu_custom_call.1} parent=11 // pred_check
          %p779 = pneg %p309
        $region38: #{tpu_custom_call.1} parent=11 // pred_check_branch
          %781 = sbr.rel (%p779) target = $region40
        $region39: #{tpu_custom_call.1} parent=11 // pred_region
          %s783 = ssub.s32 256, 256
          %784 = vsyncadd [#allocation19], %s783
          %s785 = sshll.u32 [#allocation20], 4
          %s786 = int_to_ptr.vmem [resolvable:$true] %s785
          %791 = dma.hbm_to_vmem [thread:$0]  %s10, 256, %s786, [#allocation19], 64, 64, 4
        $region40: #{tpu_custom_call.1} parent=11 // pred_fallthru
          _
        // Predicated region
        $region41: #{tpu_custom_call.1} parent=11 // pred_check
          %p792 = pneg %p330
        $region42: #{tpu_custom_call.1} parent=11 // pred_check_branch
          %794 = sbr.rel (%p792) target = $region44
        $region43: #{tpu_custom_call.1} parent=11 // pred_region
          %s796 = ssub.s32 16, 16
          %797 = vsyncadd [#allocation22], %s796
          %s799 = sshll.u32 [#allocation21], 4
          %s800 = int_to_ptr.vmem [resolvable:$true] %s799
          %802 = dma.hbm_to_vmem [thread:$0]  %s11, 16, %s800, [#allocation22]
        $region44: #{tpu_custom_call.1} parent=11 // pred_fallthru
          _
        // Predicated region
        $region45: #{tpu_custom_call.1} parent=11 // pred_check
          %p803 = pneg %p351
        $region46: #{tpu_custom_call.1} parent=11 // pred_check_branch
          %805 = sbr.rel (%p803) target = $region48
        $region47: #{tpu_custom_call.1} parent=11 // pred_region
          %s807 = ssub.s32 256, 256
          %808 = vsyncadd [#allocation22], %s807
          %s809 = sshll.u32 [#allocation23], 4
          %s810 = int_to_ptr.vmem [resolvable:$true] %s809
          %815 = dma.hbm_to_vmem [thread:$0]  %s12, 256, %s810, [#allocation22], 64, 64, 4
        $region48: #{tpu_custom_call.1} parent=11 // pred_fallthru
          _
        // Predicated region
        $region49: #{tpu_custom_call.1} parent=11 // pred_check
          %p816 = pneg %p372
        $region50: #{tpu_custom_call.1} parent=11 // pred_check_branch
          %818 = sbr.rel (%p816) target = $region52
        $region51: #{tpu_custom_call.1} parent=11 // pred_region
          %s820 = ssub.s32 16, 16
          %821 = vsyncadd [#allocation25], %s820
          %s823 = sshll.u32 [#allocation24], 4
          %s824 = int_to_ptr.vmem [resolvable:$true] %s823
          %826 = dma.hbm_to_vmem [thread:$0]  %s13, 16, %s824, [#allocation25]
        $region52: #{tpu_custom_call.1} parent=11 // pred_fallthru
          _
        // Predicated region
        $region53: #{tpu_custom_call.1} parent=11 // pred_check
          %p827 = pneg %p393
        $region54: #{tpu_custom_call.1} parent=11 // pred_check_branch
          %829 = sbr.rel (%p827) target = $region56
        $region55: #{tpu_custom_call.1} parent=11 // pred_region
          %s831 = ssub.s32 256, 256
          %832 = vsyncadd [#allocation25], %s831
          %s833 = sshll.u32 [#allocation26], 4
          %s834 = int_to_ptr.vmem [resolvable:$true] %s833
          %839 = dma.hbm_to_vmem [thread:$0]  %s14, 256, %s834, [#allocation25], 64, 64, 4
        $region56: #{tpu_custom_call.1} parent=11 // pred_fallthru
          _
        // Predicated region
        $region57: #{tpu_custom_call.1} parent=11 // pred_check
          %p840 = pneg %p414
        $region58: #{tpu_custom_call.1} parent=11 // pred_check_branch
          %842 = sbr.rel (%p840) target = $region60
        $region59: #{tpu_custom_call.1} parent=11 // pred_region
          %s844 = ssub.s32 16, 16
          %845 = vsyncadd [#allocation28], %s844
          %s847 = sshll.u32 [#allocation27], 4
          %s848 = int_to_ptr.vmem [resolvable:$true] %s847
          %850 = dma.hbm_to_vmem [thread:$0]  %s15, 16, %s848, [#allocation28]
        $region60: #{tpu_custom_call.1} parent=11 // pred_fallthru
          _
        // Predicated region
        $region61: #{tpu_custom_call.1} parent=11 // pred_check
          %p851 = pneg %p435
        $region62: #{tpu_custom_call.1} parent=11 // pred_check_branch
          %853 = sbr.rel (%p851) target = $region64
        $region63: #{tpu_custom_call.1} parent=11 // pred_region
          %s855 = ssub.s32 256, 256
          %856 = vsyncadd [#allocation28], %s855
          %s857 = sshll.u32 [#allocation29], 4
          %s858 = int_to_ptr.vmem [resolvable:$true] %s857
          %863 = dma.hbm_to_vmem [thread:$0]  %s16, 256, %s858, [#allocation28], 64, 64, 4
        $region64: #{tpu_custom_call.1} parent=11 // pred_fallthru
          _
        // Predicated region
        $region65: #{tpu_custom_call.1} parent=11 // pred_check
          %p864 = pneg %p456
        $region66: #{tpu_custom_call.1} parent=11 // pred_check_branch
          %866 = sbr.rel (%p864) target = $region68
        $region67: #{tpu_custom_call.1} parent=11 // pred_region
          %s868 = ssub.s32 16, 16
          %869 = vsyncadd [#allocation31], %s868
          %s871 = sshll.u32 [#allocation30], 4
          %s872 = int_to_ptr.vmem [resolvable:$true] %s871
          %874 = dma.hbm_to_vmem [thread:$0]  %s17, 16, %s872, [#allocation31]
        $region68: #{tpu_custom_call.1} parent=11 // pred_fallthru
          _
        // Predicated region
        $region69: #{tpu_custom_call.1} parent=11 // pred_check
          %p875 = pneg %p477
        $region70: #{tpu_custom_call.1} parent=11 // pred_check_branch
          %877 = sbr.rel (%p875) target = $region72
        $region71: #{tpu_custom_call.1} parent=11 // pred_region
          %s879 = ssub.s32 256, 256
          %880 = vsyncadd [#allocation31], %s879
          %s881 = sshll.u32 [#allocation32], 4
          %s882 = int_to_ptr.vmem [resolvable:$true] %s881
          %887 = dma.hbm_to_vmem [thread:$0]  %s18, 256, %s882, [#allocation31], 64, 64, 4
        $region72: #{tpu_custom_call.1} parent=11 // pred_fallthru
          _
        // Predicated region
        $region73: #{tpu_custom_call.1} parent=11 // pred_check
          %p888 = pneg %p498
        $region74: #{tpu_custom_call.1} parent=11 // pred_check_branch
          %890 = sbr.rel (%p888) target = $region76
        $region75: #{tpu_custom_call.1} parent=11 // pred_region
          %s892 = ssub.s32 16, 16
          %893 = vsyncadd [#allocation34], %s892
          %s895 = sshll.u32 [#allocation33], 4
          %s896 = int_to_ptr.vmem [resolvable:$true] %s895
          %898 = dma.hbm_to_vmem [thread:$0]  %s19, 16, %s896, [#allocation34]
        $region76: #{tpu_custom_call.1} parent=11 // pred_fallthru
          _
        // Predicated region
        $region77: #{tpu_custom_call.1} parent=11 // pred_check
          %p899 = pneg %p519
        $region78: #{tpu_custom_call.1} parent=11 // pred_check_branch
          %901 = sbr.rel (%p899) target = $region80
        $region79: #{tpu_custom_call.1} parent=11 // pred_region
          %s903 = ssub.s32 512, 512
          %904 = vsyncadd [#allocation34], %s903
          %s905 = sshll.u32 [#allocation35], 4
          %s906 = int_to_ptr.vmem [resolvable:$true] %s905
          %911 = dma.hbm_to_vmem [thread:$0]  %s20, 512, %s906, [#allocation34], 64, 64, 4
        $region80: #{tpu_custom_call.1} parent=11 // pred_fallthru
          _
        // Predicated region
        $region81: #{tpu_custom_call.1} parent=11 // pred_check
          %p912 = pneg %p540
        $region82: #{tpu_custom_call.1} parent=11 // pred_check_branch
          %914 = sbr.rel (%p912) target = $region84
        $region83: #{tpu_custom_call.1} parent=11 // pred_region
          %s916 = ssub.s32 16, 16
          %917 = vsyncadd [#allocation37], %s916
          %s919 = sshll.u32 [#allocation36], 4
          %s920 = int_to_ptr.vmem [resolvable:$true] %s919
          %922 = dma.hbm_to_vmem [thread:$0]  %s21, 16, %s920, [#allocation37]
        $region84: #{tpu_custom_call.1} parent=11 // pred_fallthru
          _
        // Predicated region
        $region85: #{tpu_custom_call.1} parent=11 // pred_check
          %p923 = pneg %p561
        $region86: #{tpu_custom_call.1} parent=11 // pred_check_branch
          %925 = sbr.rel (%p923) target = $region88
        $region87: #{tpu_custom_call.1} parent=11 // pred_region
          %s927 = ssub.s32 16, 16
          %928 = vsyncadd [#allocation37], %s927
          %s930 = sshll.u32 [#allocation38], 4
          %s931 = int_to_ptr.vmem [resolvable:$true] %s930
          %933 = dma.hbm_to_vmem [thread:$0]  %s22, 16, %s931, [#allocation37]
        $region88: #{tpu_custom_call.1} parent=11 // pred_fallthru
          _
        // Predicated region
        $region89: #{tpu_custom_call.1} parent=11 // pred_check
          %p934 = pneg %p582
        $region90: #{tpu_custom_call.1} parent=11 // pred_check_branch
          %936 = sbr.rel (%p934) target = $region92
        $region91: #{tpu_custom_call.1} parent=11 // pred_region
          %s938 = ssub.s32 16, 16
          %939 = vsyncadd [#allocation40], %s938
          %s941 = sshll.u32 [#allocation39], 4
          %s942 = int_to_ptr.vmem [resolvable:$true] %s941
          %944 = dma.hbm_to_vmem [thread:$0]  %s23, 16, %s942, [#allocation40]
        $region92: #{tpu_custom_call.1} parent=11 // pred_fallthru
          _
        // Predicated region
        $region93: #{tpu_custom_call.1} parent=11 // pred_check
          %p945 = pneg %p603
        $region94: #{tpu_custom_call.1} parent=11 // pred_check_branch
          %947 = sbr.rel (%p945) target = $region96
        $region95: #{tpu_custom_call.1} parent=11 // pred_region
          %s949 = ssub.s32 16, 16
          %950 = vsyncadd [#allocation40], %s949
          %s952 = sshll.u32 [#allocation41], 4
          %s953 = int_to_ptr.vmem [resolvable:$true] %s952
          %955 = dma.hbm_to_vmem [thread:$0]  %s24, 16, %s953, [#allocation40]
        $region96: #{tpu_custom_call.1} parent=11 // pred_fallthru
          _
        // Predicated region
        $region97: #{tpu_custom_call.1} parent=11 // pred_check
          %p956 = pneg %p624
        $region98: #{tpu_custom_call.1} parent=11 // pred_check_branch
          %958 = sbr.rel (%p956) target = $region100
        $region99: #{tpu_custom_call.1} parent=11 // pred_region
          %s960 = ssub.s32 16, 16
          %961 = vsyncadd [#allocation43], %s960
          %s963 = sshll.u32 [#allocation42], 4
          %s964 = int_to_ptr.vmem [resolvable:$true] %s963
          %966 = dma.hbm_to_vmem [thread:$0]  %s25, 16, %s964, [#allocation43]
        $region100: #{tpu_custom_call.1} parent=11 // pred_fallthru
          _
        // Predicated region
        $region101: #{tpu_custom_call.1} parent=11 // pred_check
          %p967 = pneg %p645
        $region102: #{tpu_custom_call.1} parent=11 // pred_check_branch
          %969 = sbr.rel (%p967) target = $region104
        $region103: #{tpu_custom_call.1} parent=11 // pred_region
          %s971 = ssub.s32 16, 16
          %972 = vsyncadd [#allocation43], %s971
          %s974 = sshll.u32 [#allocation44], 4
          %s975 = int_to_ptr.vmem [resolvable:$true] %s974
          %977 = dma.hbm_to_vmem [thread:$0]  %s26, 16, %s975, [#allocation43]
        $region104: #{tpu_custom_call.1} parent=11 // pred_fallthru
          _
        // Predicated region
        $region105: #{tpu_custom_call.1} parent=11 // pred_check
          %p978 = pneg %p666
        $region106: #{tpu_custom_call.1} parent=11 // pred_check_branch
          %980 = sbr.rel (%p978) target = $region108
        $region107: #{tpu_custom_call.1} parent=11 // pred_region
          %s982 = ssub.s32 16, 16
          %983 = vsyncadd [#allocation46], %s982
          %s985 = sshll.u32 [#allocation45], 4
          %s986 = int_to_ptr.vmem [resolvable:$true] %s985
          %988 = dma.hbm_to_vmem [thread:$0]  %s27, 16, %s986, [#allocation46]
        $region108: #{tpu_custom_call.1} parent=11 // pred_fallthru
          _
      $region12: #{tpu_custom_call.1} parent=5 // pred_fallthru
        _
      %p989 = scmp.lt.s32.totalorder %s58, 2
      // Predicated region
      $region109: #{tpu_custom_call.1} parent=5 // pred_check
        %p990 = pneg %p989
      $region110: #{tpu_custom_call.1} parent=5 // pred_check_branch
        %992 = sbr.rel (%p990) target = $region112
      $region111: #{tpu_custom_call.1} parent=5 // pred_region
        // Predicated region
        $region113: #{tpu_custom_call.1} parent=111 // pred_check
          %p993 = pneg %p78
        $region114: #{tpu_custom_call.1} parent=111 // pred_check_branch
          %995 = sbr.rel (%p993) target = $region116
        $region115: #{tpu_custom_call.1} parent=111 // pred_region
          %s996 = sand.u32 %s68, 1
          %s997 = scalar_lea.sflag [#allocation4], %s996
          %s998 = sand.u32 %s68, 1
          %s999 = smul.addr %s998, 8
          %s1000 = scalar_lea.vmem [#allocation3], %s999
          %s1002 = ssub.s32 128, 128
          %1003 = vsyncadd %s997, %s1002
          %s1004 = smul.addr %s58, 128
          %s1005 = scalar_lea.hbm %s0, %s1004
          %s1007 = sshll.u32 %s1000, 4
          %s1008 = int_to_ptr.vmem [resolvable:$true] %s1007
          %1010 = dma.hbm_to_vmem [thread:$0]  %s1005, 128, %s1008, %s997
        $region116: #{tpu_custom_call.1} parent=111 // pred_fallthru
          _
        // Predicated region
        $region117: #{tpu_custom_call.1} parent=111 // pred_check
          %p1011 = pneg %p104
        $region118: #{tpu_custom_call.1} parent=111 // pred_check_branch
          %1013 = sbr.rel (%p1011) target = $region120
        $region119: #{tpu_custom_call.1} parent=111 // pred_region
          %s1014 = sand.u32 %s58, 1
          %s1015 = scalar_lea.sflag [#allocation7], %s1014
          %s1016 = sand.u32 %s94, 1
          %s1017 = smul.addr %s1016, 8
          %s1018 = scalar_lea.vmem [#allocation6], %s1017
          %s1020 = ssub.s32 128, 128
          %1021 = vsyncadd %s1015, %s1020
          %s1022 = smul.addr %s58, 128
          %s1023 = scalar_lea.hbm %s1, %s1022
          %s1025 = sshll.u32 %s1018, 4
          %s1026 = int_to_ptr.vmem [resolvable:$true] %s1025
          %1028 = dma.hbm_to_vmem [thread:$0]  %s1023, 128, %s1026, %s1015
        $region120: #{tpu_custom_call.1} parent=111 // pred_fallthru
          _
        // Predicated region
        $region121: #{tpu_custom_call.1} parent=111 // pred_check
          %p1029 = pneg %p130
        $region122: #{tpu_custom_call.1} parent=111 // pred_check_branch
          %1031 = sbr.rel (%p1029) target = $region124
        $region123: #{tpu_custom_call.1} parent=111 // pred_region
          %s1032 = sand.u32 %s58, 1
          %s1033 = scalar_lea.sflag [#allocation7], %s1032
          %s1034 = sand.u32 %s120, 1
          %s1035 = smul.addr %s1034, 8
          %s1036 = scalar_lea.vmem [#allocation8], %s1035
          %s1038 = ssub.s32 128, 128
          %1039 = vsyncadd %s1033, %s1038
          %s1040 = smul.addr %s58, 128
          %s1041 = scalar_lea.hbm %s2, %s1040
          %s1043 = sshll.u32 %s1036, 4
          %s1044 = int_to_ptr.vmem [resolvable:$true] %s1043
          %1046 = dma.hbm_to_vmem [thread:$0]  %s1041, 128, %s1044, %s1033
        $region124: #{tpu_custom_call.1} parent=111 // pred_fallthru
          _
        // Predicated region
        $region125: #{tpu_custom_call.1} parent=111 // pred_check
          %p1047 = pneg %p156
        $region126: #{tpu_custom_call.1} parent=111 // pred_check_branch
          %1049 = sbr.rel (%p1047) target = $region128
        $region127: #{tpu_custom_call.1} parent=111 // pred_region
          %s1050 = sand.u32 %s58, 1
          %s1051 = scalar_lea.sflag [#allocation10], %s1050
          %s1052 = sand.u32 %s146, 1
          %s1053 = smul.addr %s1052, 8
          %s1054 = scalar_lea.vmem [#allocation9], %s1053
          %s1056 = ssub.s32 128, 128
          %1057 = vsyncadd %s1051, %s1056
          %s1058 = smul.addr %s58, 128
          %s1059 = scalar_lea.hbm %s3, %s1058
          %s1061 = sshll.u32 %s1054, 4
          %s1062 = int_to_ptr.vmem [resolvable:$true] %s1061
          %1064 = dma.hbm_to_vmem [thread:$0]  %s1059, 128, %s1062, %s1051
        $region128: #{tpu_custom_call.1} parent=111 // pred_fallthru
          _
      $region112: #{tpu_custom_call.1} parent=5 // pred_fallthru
        _
      %p1065 = scmp.le.s32.totalorder 1, %s58
      %p1066 = scmp.lt.s32.totalorder %s58, 3
      %p1067 = pnand %p1065, %p1066
      %p1068 = pneg %p1067
      // Predicated region
      $region129: #{tpu_custom_call.1} parent=5 // pred_check
        _
      $region130: #{tpu_custom_call.1} parent=5 // pred_check_branch
        %1070 = sbr.rel (%p1067) target = $region132
      $region131: #{tpu_custom_call.1} parent=5 // pred_region
        %s1071 = ssub.s32 %s58, 1
        %s1072 = sand.u32 %s71, 1
        %s1073 = scalar_lea.sflag [#allocation4], %s1072
        %s1074 = sand.u32 %s71, 1
        %s1075 = smul.addr %s1074, 8
        %s1076 = scalar_lea.vmem [#allocation3], %s1075
        // Predicated region
        $region133: #{tpu_custom_call.1} parent=131 // pred_check
          %p1077 = pneg %p84
        $region134: #{tpu_custom_call.1} parent=131 // pred_check_branch
          %1079 = sbr.rel (%p1077) target = $region136
        $region135: #{tpu_custom_call.1} parent=131 // pred_region
          %1080 = dma.done %s1073, 128
        $region136: #{tpu_custom_call.1} parent=131 // pred_fallthru
          _
        %s1081 = sand.u32 %s63, 1
        %s1082 = scalar_lea.sflag [#allocation7], %s1081
        %s1083 = sand.u32 %s97, 1
        %s1084 = smul.addr %s1083, 8
        %s1085 = scalar_lea.vmem [#allocation6], %s1084
        // Predicated region
        $region137: #{tpu_custom_call.1} parent=131 // pred_check
          %p1086 = pneg %p110
        $region138: #{tpu_custom_call.1} parent=131 // pred_check_branch
          %1088 = sbr.rel (%p1086) target = $region140
        $region139: #{tpu_custom_call.1} parent=131 // pred_region
          %1089 = dma.done %s1082, 128
        $region140: #{tpu_custom_call.1} parent=131 // pred_fallthru
          _
        %s1090 = sand.u32 %s63, 1
        %s1091 = scalar_lea.sflag [#allocation7], %s1090
        %s1092 = sand.u32 %s123, 1
        %s1093 = smul.addr %s1092, 8
        %s1094 = scalar_lea.vmem [#allocation8], %s1093
        // Predicated region
        $region141: #{tpu_custom_call.1} parent=131 // pred_check
          %p1095 = pneg %p136
        $region142: #{tpu_custom_call.1} parent=131 // pred_check_branch
          %1097 = sbr.rel (%p1095) target = $region144
        $region143: #{tpu_custom_call.1} parent=131 // pred_region
          %1098 = dma.done %s1091, 128
        $region144: #{tpu_custom_call.1} parent=131 // pred_fallthru
          _
        %s1099 = sand.u32 %s63, 1
        %s1100 = scalar_lea.sflag [#allocation10], %s1099
        %s1101 = sand.u32 %s149, 1
        %s1102 = smul.addr %s1101, 8
        %s1103 = scalar_lea.vmem [#allocation9], %s1102
        // Predicated region
        $region145: #{tpu_custom_call.1} parent=131 // pred_check
          %p1104 = pneg %p162
        $region146: #{tpu_custom_call.1} parent=131 // pred_check_branch
          %1106 = sbr.rel (%p1104) target = $region148
        $region147: #{tpu_custom_call.1} parent=131 // pred_region
          %1107 = dma.done %s1100, 128
        $region148: #{tpu_custom_call.1} parent=131 // pred_fallthru
          _
        // Predicated region
        $region149: #{tpu_custom_call.1} parent=131 // pred_check
          %p1108 = pneg %p183
        $region150: #{tpu_custom_call.1} parent=131 // pred_check_branch
          %1110 = sbr.rel (%p1108) target = $region152
        $region151: #{tpu_custom_call.1} parent=131 // pred_region
          %1111 = dma.done [#allocation10], 256
        $region152: #{tpu_custom_call.1} parent=131 // pred_fallthru
          _
        // Predicated region
        $region153: #{tpu_custom_call.1} parent=131 // pred_check
          %p1112 = pneg %p204
        $region154: #{tpu_custom_call.1} parent=131 // pred_check_branch
          %1114 = sbr.rel (%p1112) target = $region156
        $region155: #{tpu_custom_call.1} parent=131 // pred_region
          %1115 = dma.done [#allocation13], 16
        $region156: #{tpu_custom_call.1} parent=131 // pred_fallthru
          _
        // Predicated region
        $region157: #{tpu_custom_call.1} parent=131 // pred_check
          %p1116 = pneg %p225
        $region158: #{tpu_custom_call.1} parent=131 // pred_check_branch
          %1118 = sbr.rel (%p1116) target = $region160
        $region159: #{tpu_custom_call.1} parent=131 // pred_region
          %1119 = dma.done [#allocation13], 256
        $region160: #{tpu_custom_call.1} parent=131 // pred_fallthru
          _
        // Predicated region
        $region161: #{tpu_custom_call.1} parent=131 // pred_check
          %p1120 = pneg %p246
        $region162: #{tpu_custom_call.1} parent=131 // pred_check_branch
          %1122 = sbr.rel (%p1120) target = $region164
        $region163: #{tpu_custom_call.1} parent=131 // pred_region
          %1123 = dma.done [#allocation16], 16
        $region164: #{tpu_custom_call.1} parent=131 // pred_fallthru
          _
        // Predicated region
        $region165: #{tpu_custom_call.1} parent=131 // pred_check
          %p1124 = pneg %p267
        $region166: #{tpu_custom_call.1} parent=131 // pred_check_branch
          %1126 = sbr.rel (%p1124) target = $region168
        $region167: #{tpu_custom_call.1} parent=131 // pred_region
          %1127 = dma.done [#allocation16], 256
        $region168: #{tpu_custom_call.1} parent=131 // pred_fallthru
          _
        // Predicated region
        $region169: #{tpu_custom_call.1} parent=131 // pred_check
          %p1128 = pneg %p288
        $region170: #{tpu_custom_call.1} parent=131 // pred_check_branch
          %1130 = sbr.rel (%p1128) target = $region172
        $region171: #{tpu_custom_call.1} parent=131 // pred_region
          %1131 = dma.done [#allocation19], 16
        $region172: #{tpu_custom_call.1} parent=131 // pred_fallthru
          _
        // Predicated region
        $region173: #{tpu_custom_call.1} parent=131 // pred_check
          %p1132 = pneg %p309
        $region174: #{tpu_custom_call.1} parent=131 // pred_check_branch
          %1134 = sbr.rel (%p1132) target = $region176
        $region175: #{tpu_custom_call.1} parent=131 // pred_region
          %1135 = dma.done [#allocation19], 256
        $region176: #{tpu_custom_call.1} parent=131 // pred_fallthru
          _
        // Predicated region
        $region177: #{tpu_custom_call.1} parent=131 // pred_check
          %p1136 = pneg %p330
        $region178: #{tpu_custom_call.1} parent=131 // pred_check_branch
          %1138 = sbr.rel (%p1136) target = $region180
        $region179: #{tpu_custom_call.1} parent=131 // pred_region
          %1139 = dma.done [#allocation22], 16
        $region180: #{tpu_custom_call.1} parent=131 // pred_fallthru
          _
        // Predicated region
        $region181: #{tpu_custom_call.1} parent=131 // pred_check
          %p1140 = pneg %p351
        $region182: #{tpu_custom_call.1} parent=131 // pred_check_branch
          %1142 = sbr.rel (%p1140) target = $region184
        $region183: #{tpu_custom_call.1} parent=131 // pred_region
          %1143 = dma.done [#allocation22], 256
        $region184: #{tpu_custom_call.1} parent=131 // pred_fallthru
          _
        // Predicated region
        $region185: #{tpu_custom_call.1} parent=131 // pred_check
          %p1144 = pneg %p372
        $region186: #{tpu_custom_call.1} parent=131 // pred_check_branch
          %1146 = sbr.rel (%p1144) target = $region188
        $region187: #{tpu_custom_call.1} parent=131 // pred_region
          %1147 = dma.done [#allocation25], 16
        $region188: #{tpu_custom_call.1} parent=131 // pred_fallthru
          _
        // Predicated region
        $region189: #{tpu_custom_call.1} parent=131 // pred_check
          %p1148 = pneg %p393
        $region190: #{tpu_custom_call.1} parent=131 // pred_check_branch
          %1150 = sbr.rel (%p1148) target = $region192
        $region191: #{tpu_custom_call.1} parent=131 // pred_region
          %1151 = dma.done [#allocation25], 256
        $region192: #{tpu_custom_call.1} parent=131 // pred_fallthru
          _
        // Predicated region
        $region193: #{tpu_custom_call.1} parent=131 // pred_check
          %p1152 = pneg %p414
        $region194: #{tpu_custom_call.1} parent=131 // pred_check_branch
          %1154 = sbr.rel (%p1152) target = $region196
        $region195: #{tpu_custom_call.1} parent=131 // pred_region
          %1155 = dma.done [#allocation28], 16
        $region196: #{tpu_custom_call.1} parent=131 // pred_fallthru
          _
        // Predicated region
        $region197: #{tpu_custom_call.1} parent=131 // pred_check
          %p1156 = pneg %p435
        $region198: #{tpu_custom_call.1} parent=131 // pred_check_branch
          %1158 = sbr.rel (%p1156) target = $region200
        $region199: #{tpu_custom_call.1} parent=131 // pred_region
          %1159 = dma.done [#allocation28], 256
        $region200: #{tpu_custom_call.1} parent=131 // pred_fallthru
          _
        // Predicated region
        $region201: #{tpu_custom_call.1} parent=131 // pred_check
          %p1160 = pneg %p456
        $region202: #{tpu_custom_call.1} parent=131 // pred_check_branch
          %1162 = sbr.rel (%p1160) target = $region204
        $region203: #{tpu_custom_call.1} parent=131 // pred_region
          %1163 = dma.done [#allocation31], 16
        $region204: #{tpu_custom_call.1} parent=131 // pred_fallthru
          _
        // Predicated region
        $region205: #{tpu_custom_call.1} parent=131 // pred_check
          %p1164 = pneg %p477
        $region206: #{tpu_custom_call.1} parent=131 // pred_check_branch
          %1166 = sbr.rel (%p1164) target = $region208
        $region207: #{tpu_custom_call.1} parent=131 // pred_region
          %1167 = dma.done [#allocation31], 256
        $region208: #{tpu_custom_call.1} parent=131 // pred_fallthru
          _
        // Predicated region
        $region209: #{tpu_custom_call.1} parent=131 // pred_check
          %p1168 = pneg %p498
        $region210: #{tpu_custom_call.1} parent=131 // pred_check_branch
          %1170 = sbr.rel (%p1168) target = $region212
        $region211: #{tpu_custom_call.1} parent=131 // pred_region
          %1171 = dma.done [#allocation34], 16
        $region212: #{tpu_custom_call.1} parent=131 // pred_fallthru
          _
        // Predicated region
        $region213: #{tpu_custom_call.1} parent=131 // pred_check
          %p1172 = pneg %p519
        $region214: #{tpu_custom_call.1} parent=131 // pred_check_branch
          %1174 = sbr.rel (%p1172) target = $region216
        $region215: #{tpu_custom_call.1} parent=131 // pred_region
          %1175 = dma.done [#allocation34], 512
        $region216: #{tpu_custom_call.1} parent=131 // pred_fallthru
          _
        // Predicated region
        $region217: #{tpu_custom_call.1} parent=131 // pred_check
          %p1176 = pneg %p540
        $region218: #{tpu_custom_call.1} parent=131 // pred_check_branch
          %1178 = sbr.rel (%p1176) target = $region220
        $region219: #{tpu_custom_call.1} parent=131 // pred_region
          %1179 = dma.done [#allocation37], 16
        $region220: #{tpu_custom_call.1} parent=131 // pred_fallthru
          _
        // Predicated region
        $region221: #{tpu_custom_call.1} parent=131 // pred_check
          %p1180 = pneg %p561
        $region222: #{tpu_custom_call.1} parent=131 // pred_check_branch
          %1182 = sbr.rel (%p1180) target = $region224
        $region223: #{tpu_custom_call.1} parent=131 // pred_region
          %1183 = dma.done [#allocation37], 16
        $region224: #{tpu_custom_call.1} parent=131 // pred_fallthru
          _
        // Predicated region
        $region225: #{tpu_custom_call.1} parent=131 // pred_check
          %p1184 = pneg %p582
        $region226: #{tpu_custom_call.1} parent=131 // pred_check_branch
          %1186 = sbr.rel (%p1184) target = $region228
        $region227: #{tpu_custom_call.1} parent=131 // pred_region
          %1187 = dma.done [#allocation40], 16
        $region228: #{tpu_custom_call.1} parent=131 // pred_fallthru
          _
        // Predicated region
        $region229: #{tpu_custom_call.1} parent=131 // pred_check
          %p1188 = pneg %p603
        $region230: #{tpu_custom_call.1} parent=131 // pred_check_branch
          %1190 = sbr.rel (%p1188) target = $region232
        $region231: #{tpu_custom_call.1} parent=131 // pred_region
          %1191 = dma.done [#allocation40], 16
        $region232: #{tpu_custom_call.1} parent=131 // pred_fallthru
          _
        // Predicated region
        $region233: #{tpu_custom_call.1} parent=131 // pred_check
          %p1192 = pneg %p624
        $region234: #{tpu_custom_call.1} parent=131 // pred_check_branch
          %1194 = sbr.rel (%p1192) target = $region236
        $region235: #{tpu_custom_call.1} parent=131 // pred_region
          %1195 = dma.done [#allocation43], 16
        $region236: #{tpu_custom_call.1} parent=131 // pred_fallthru
          _
        // Predicated region
        $region237: #{tpu_custom_call.1} parent=131 // pred_check
          %p1196 = pneg %p645
        $region238: #{tpu_custom_call.1} parent=131 // pred_check_branch
          %1198 = sbr.rel (%p1196) target = $region240
        $region239: #{tpu_custom_call.1} parent=131 // pred_region
          %1199 = dma.done [#allocation43], 16
        $region240: #{tpu_custom_call.1} parent=131 // pred_fallthru
          _
        // Predicated region
        $region241: #{tpu_custom_call.1} parent=131 // pred_check
          %p1200 = pneg %p666
        $region242: #{tpu_custom_call.1} parent=131 // pred_check_branch
          %1202 = sbr.rel (%p1200) target = $region244
        $region243: #{tpu_custom_call.1} parent=131 // pred_region
          %1203 = dma.done [#allocation46], 16
        $region244: #{tpu_custom_call.1} parent=131 // pred_fallthru
          _
        %s1204 = sand.u32 %s71, 1
        %s1205 = scalar_lea.sflag [#allocation4], %s1204
        %s1206 = sand.u32 %s71, 1
        %s1207 = smul.addr %s1206, 8
        %s1208 = scalar_lea.vmem [#allocation3], %s1207
        %p1209 = pneg %p84
        %p1210 = pneg %p81
        %s1211 = sand.u32 %s63, 1
        %s1212 = scalar_lea.sflag [#allocation7], %s1211
        %s1213 = sand.u32 %s97, 1
        %s1214 = smul.addr %s1213, 8
        %s1215 = scalar_lea.vmem [#allocation6], %s1214
        %p1216 = pneg %p110
        %p1217 = pneg %p107
        %s1218 = sand.u32 %s63, 1
        %s1219 = scalar_lea.sflag [#allocation7], %s1218
        %s1220 = sand.u32 %s123, 1
        %s1221 = smul.addr %s1220, 8
        %s1222 = scalar_lea.vmem [#allocation8], %s1221
        %p1223 = pneg %p136
        %p1224 = pneg %p133
        %s1225 = sand.u32 %s63, 1
        %s1226 = scalar_lea.sflag [#allocation10], %s1225
        %s1227 = sand.u32 %s149, 1
        %s1228 = smul.addr %s1227, 8
        %s1229 = scalar_lea.vmem [#allocation9], %s1228
        %p1230 = pneg %p162
        %p1231 = pneg %p159
        %p1232 = pneg %p183
        %p1233 = pneg %p180
        %p1234 = pneg %p204
        %p1235 = pneg %p201
        %p1236 = pneg %p225
        %p1237 = pneg %p222
        %p1238 = pneg %p246
        %p1239 = pneg %p243
        %p1240 = pneg %p267
        %p1241 = pneg %p264
        %p1242 = pneg %p288
        %p1243 = pneg %p285
        %p1244 = pneg %p309
        %p1245 = pneg %p306
        %p1246 = pneg %p330
        %p1247 = pneg %p327
        %p1248 = pneg %p351
        %p1249 = pneg %p348
        %p1250 = pneg %p372
        %p1251 = pneg %p369
        %p1252 = pneg %p393
        %p1253 = pneg %p390
        %p1254 = pneg %p414
        %p1255 = pneg %p411
        %p1256 = pneg %p435
        %p1257 = pneg %p432
        %p1258 = pneg %p456
        %p1259 = pneg %p453
        %p1260 = pneg %p477
        %p1261 = pneg %p474
        %p1262 = pneg %p498
        %p1263 = pneg %p495
        %p1264 = pneg %p519
        %p1265 = pneg %p516
        %p1266 = pneg %p540
        %p1267 = pneg %p537
        %p1268 = pneg %p561
        %p1269 = pneg %p558
        %p1270 = pneg %p582
        %p1271 = pneg %p579
        %p1272 = pneg %p603
        %p1273 = pneg %p600
        %p1274 = pneg %p624
        %p1275 = pneg %p621
        %p1276 = pneg %p645
        %p1277 = pneg %p642
        %p1278 = pneg %p666
        %p1279 = pneg %p663
        %p1280 = pneg %p692
        %p1281 = pneg %p689
        %s1282 = sand.u32 %s679, 1
        %s1283 = scalar_lea.sflag [#allocation5], %s1282
        %s1284 = sand.u32 %s679, 1
        %s1285 = smul.addr %s1284, 8
        %s1286 = scalar_lea.vmem [#allocation47], %s1285
        %v1288 = vld [vmem:[%s1076] sm:$0xff]
        %v1289 = vld [vmem:[%s1085] sm:$0xff]
        %v1290 = vld [vmem:[%s1094] sm:$0xff]
        %v1291 = vld [vmem:[%s1103] sm:$0xff]
        %v1292 = vadd.f32 %v1288, %v1290
        %v1293 = vpack.c.bf16 %v1292, %v1292
        %v1294 = vld [vmem:[#allocation11] sm:$0xf]
        %v1295 = vld [vmem:[#allocation11 + $0x4] sm:$0xf]
        %v1296 = vld [vmem:[#allocation11 + $0x8] sm:$0xf]
        %v1297 = vld [vmem:[#allocation11 + $0xc] sm:$0xf]
        %v1298 = vld [vmem:[#allocation12] sm:$0x1]
        %v1300 = vlaneseq
        %v1301 = vshrl.u32 %v1300, 7
        %v1302 = vsub.s32 0, %v1301
        %v1303 = vrot.slane %v1298, %v1302
        %v1309 = vunpack.c.l.b16 %v1294
        %v1310 = vunpack.c.l.b16 %v1295
        %v1311 = vunpack.c.l.b16 %v1296
        %v1312 = vunpack.c.l.b16 %v1297
        %v1313 = vpack.c.b16 %v1310, %v1309
        %v1314 = vpack.c.b16 %v1312, %v1311
        %vm1317 = vcmask 261120
        %v1319 = vsel %vm1317, %v1293, 0
        %1321 = vmatprep.subr.bf16.mxu0 0
        %1322 = vmatpush1.bf16.msra.mxu0 %v1313
        %1323 = vmatprep.subr.bf16.mxu0 0
        %1324 = vmatpush1.bf16.msra.mxu0 %v1314
        %1325 = vmatprep.subr.bf16.mxu0 0
        %1326 = vmatpush1.bf16.msra.mxu0 0
        %1327 = vmatprep.subr.bf16.mxu0 0
        %1328 = vmatpush1.bf16.msra.mxu0 0
        %1329 = vmatprep.subr.bf16.mxu0 0
        %1330 = vmatpush1.bf16.msra.mxu0 0
        %1331 = vmatprep.subr.bf16.mxu0 0
        %1332 = vmatpush1.bf16.msra.mxu0 0
        %1333 = vmatprep.subr.bf16.mxu0 0
        %1334 = vmatpush1.bf16.msra.mxu0 0
        %1335 = vmatprep.subr.bf16.mxu0 0
        %1336 = vmatpush1.bf16.msra.mxu0 0
        %1337 = vmatprep.subr.bf16.mxu0 0
        %1338 = vmatpush1.bf16.msra.mxu0 0
        %1339 = vmatprep.subr.bf16.mxu0 0
        %1340 = vmatpush1.bf16.msra.mxu0 0
        %1341 = vmatprep.subr.bf16.mxu0 0
        %1342 = vmatpush1.bf16.msra.mxu0 0
        %1343 = vmatprep.subr.bf16.mxu0 0
        %1344 = vmatpush1.bf16.msra.mxu0 0
        %1345 = vmatprep.subr.bf16.mxu0 0
        %1346 = vmatpush1.bf16.msra.mxu0 0
        %1347 = vmatprep.subr.bf16.mxu0 0
        %1348 = vmatpush1.bf16.msra.mxu0 0
        %1349 = vmatprep.subr.bf16.mxu0 0
        %1350 = vmatpush1.bf16.msra.mxu0 0
        %1351 = vmatprep.subr.bf16.mxu0 0
        %1352 = vmatpush1.bf16.msra.mxu0 0
        %1353 = vmatprep.mubr.bf16.mxu0 0
        %1354 = vmatmul.mubr.bf16.gmra.mrb[0].mxu0 %v1319
        %v1355 = vpop.f32.mrb[0].mxu0
        %v1356 = vadd.f32 %v1303, %v1355
        %v1357 = vpop.f32.mrb[0].mxu0
        %v1358 = vpop.f32.mrb[0].mxu0
        %v1359 = vpop.f32.mrb[0].mxu0
        %1360 = vdwg.mxu0
        %v1361 = vpack.c.bf16 %v1288, %v1288
        %v1362 = vld [vmem:[#allocation14] sm:$0xf]
        %v1363 = vld [vmem:[#allocation14 + $0x4] sm:$0xf]
        %v1364 = vld [vmem:[#allocation14 + $0x8] sm:$0xf]
        %v1365 = vld [vmem:[#allocation14 + $0xc] sm:$0xf]
        %v1366 = vld [vmem:[#allocation15] sm:$0x1]
        %v1368 = vlaneseq
        %v1369 = vshrl.u32 %v1368, 7
        %v1370 = vsub.s32 0, %v1369
        %v1371 = vrot.slane %v1366, %v1370
        %v1377 = vunpack.c.l.b16 %v1362
        %v1378 = vunpack.c.l.b16 %v1363
        %v1379 = vunpack.c.l.b16 %v1364
        %v1380 = vunpack.c.l.b16 %v1365
        %v1381 = vpack.c.b16 %v1378, %v1377
        %v1382 = vpack.c.b16 %v1380, %v1379
        %v1386 = vsel %vm1317, %v1361, 0
        %1388 = vmatprep.subr.bf16.mxu0 0
        %1389 = vmatpush1.bf16.msra.mxu0 %v1381
        %1390 = vmatprep.subr.bf16.mxu0 0
        %1391 = vmatpush1.bf16.msra.mxu0 %v1382
        %1392 = vmatprep.subr.bf16.mxu0 0
        %1393 = vmatpush1.bf16.msra.mxu0 0
        %1394 = vmatprep.subr.bf16.mxu0 0
        %1395 = vmatpush1.bf16.msra.mxu0 0
        %1396 = vmatprep.subr.bf16.mxu0 0
        %1397 = vmatpush1.bf16.msra.mxu0 0
        %1398 = vmatprep.subr.bf16.mxu0 0
        %1399 = vmatpush1.bf16.msra.mxu0 0
        %1400 = vmatprep.subr.bf16.mxu0 0
        %1401 = vmatpush1.bf16.msra.mxu0 0
        %1402 = vmatprep.subr.bf16.mxu0 0
        %1403 = vmatpush1.bf16.msra.mxu0 0
        %1404 = vmatprep.subr.bf16.mxu0 0
        %1405 = vmatpush1.bf16.msra.mxu0 0
        %1406 = vmatprep.subr.bf16.mxu0 0
        %1407 = vmatpush1.bf16.msra.mxu0 0
        %1408 = vmatprep.subr.bf16.mxu0 0
        %1409 = vmatpush1.bf16.msra.mxu0 0
        %1410 = vmatprep.subr.bf16.mxu0 0
        %1411 = vmatpush1.bf16.msra.mxu0 0
        %1412 = vmatprep.subr.bf16.mxu0 0
        %1413 = vmatpush1.bf16.msra.mxu0 0
        %1414 = vmatprep.subr.bf16.mxu0 0
        %1415 = vmatpush1.bf16.msra.mxu0 0
        %1416 = vmatprep.subr.bf16.mxu0 0
        %1417 = vmatpush1.bf16.msra.mxu0 0
        %1418 = vmatprep.subr.bf16.mxu0 0
        %1419 = vmatpush1.bf16.msra.mxu0 0
        %1420 = vmatprep.mubr.bf16.mxu0 0
        %1421 = vmatmul.mubr.bf16.gmra.mrb[0].mxu0 %v1386
        %v1422 = vpop.f32.mrb[0].mxu0
        %v1423 = vadd.f32 %v1371, %v1422
        %v1424 = vpop.f32.mrb[0].mxu0
        %v1425 = vpop.f32.mrb[0].mxu0
        %v1426 = vpop.f32.mrb[0].mxu0
        %1427 = vdwg.mxu0
        %v1428 = vld [vmem:[#allocation18] sm:$0x1]
        %v1429 = vpack.c.bf16 %v1356, %v1356
        %v1430 = vpack.c.bf16 %v1423, %v1423
        %1432 = vrot.lane.b32.xlu0 %v1429, 96
        %v1433 = vpop.permute.xlu0 %1432
        %vm1434 = vcmask 64512
        %v1436 = vsel %vm1434, %v1429, 0
        %v1439 = vsel %vm1434, %v1433, 0
        %1441 = vmatprep.subr.bf16.mxu0 0
        %1442 = vmatpush1.bf16.xpose.msra.mxu0 %v1439
        %1443 = vmatprep.subr.bf16.mxu0 0
        %1444 = vmatpush1.bf16.xpose.msra.mxu0 0
        %1445 = vmatprep.subr.bf16.mxu0 0
        %1446 = vmatpush1.bf16.xpose.msra.mxu0 0
        %1447 = vmatprep.subr.bf16.mxu0 0
        %1448 = vmatpush1.bf16.xpose.msra.mxu0 0
        %1449 = vmatprep.subr.bf16.mxu0 0
        %1450 = vmatpush1.bf16.xpose.msra.mxu0 0
        %1451 = vmatprep.subr.bf16.mxu0 0
        %1452 = vmatpush1.bf16.xpose.msra.mxu0 0
        %1453 = vmatprep.subr.bf16.mxu0 0
        %1454 = vmatpush1.bf16.xpose.msra.mxu0 0
        %1455 = vmatprep.subr.bf16.mxu0 0
        %1456 = vmatpush1.bf16.xpose.msra.mxu0 0
        %1457 = vmatprep.subr.bf16.mxu0 0
        %1458 = vmatpush1.bf16.xpose.msra.mxu0 0
        %1459 = vmatprep.subr.bf16.mxu0 0
        %1460 = vmatpush1.bf16.xpose.msra.mxu0 0
        %1461 = vmatprep.subr.bf16.mxu0 0
        %1462 = vmatpush1.bf16.xpose.msra.mxu0 0
        %1463 = vmatprep.subr.bf16.mxu0 0
        %1464 = vmatpush1.bf16.xpose.msra.mxu0 0
        %1465 = vmatprep.subr.bf16.mxu0 0
        %1466 = vmatpush1.bf16.xpose.msra.mxu0 0
        %1467 = vmatprep.subr.bf16.mxu0 0
        %1468 = vmatpush1.bf16.xpose.msra.mxu0 0
        %1469 = vmatprep.subr.bf16.mxu0 0
        %1470 = vmatpush1.bf16.xpose.msra.mxu0 0
        %1471 = vmatprep.subr.bf16.mxu0 0
        %1472 = vmatpush1.bf16.xpose.msra.mxu0 0
        %1473 = vmatprep.mubr.bf16.mxu0 0
        %1474 = vmatmul.mubr.bf16.gmra.mrb[0].mxu0 %v1436
        %v1475 = vpop.f32.mrb[0].mxu0
        %v1476 = vadd.f32 0.0, %v1475
        %v1477 = vpop.f32.mrb[0].mxu0
        %v1478 = vpop.f32.mrb[0].mxu0
        %v1479 = vpop.f32.mrb[0].mxu0
        %1480 = vdwg.mxu0
        %v1481 = vsel %vm1434, %v1476, -inf
        %1482 = vmax.xlane.f32.xlu0 %v1481
        %v1483 = vpop.xlane.xlu0 %1482
        %v1484 = vsub.f32 %v1476, %v1483
        %v1485 = vmul.f32 %v1484, 1.442695
        %v1486 = vpow.pop %v1485
        %v1487 = vsel %vm1434, %v1486, 0.0
        %1488 = vadd.xlane.f32.xlu0 %v1487
        %v1489 = vpop.xlane.xlu0 %1488
        %v1490 = vrcp.pop %v1489
        %v1491 = vmul.f32 %v1486, %v1490
        %v1492 = vpack.c.bf16 %v1491, %v1491
        %v1494 = vsel %vm1434, %v1492, 0
        %vm1496 = vcmask 1043456
        %v1498 = vsel %vm1496, %v1430, 0
        %1500 = vmatprep.subr.bf16.mxu0 0
        %1501 = vmatpush1.bf16.msra.mxu0 %v1498
        %1502 = vmatprep.subr.bf16.mxu0 0
        %1503 = vmatpush1.bf16.msra.mxu0 0
        %1504 = vmatprep.subr.bf16.mxu0 0
        %1505 = vmatpush1.bf16.msra.mxu0 0
        %1506 = vmatprep.subr.bf16.mxu0 0
        %1507 = vmatpush1.bf16.msra.mxu0 0
        %1508 = vmatprep.subr.bf16.mxu0 0
        %1509 = vmatpush1.bf16.msra.mxu0 0
        %1510 = vmatprep.subr.bf16.mxu0 0
        %1511 = vmatpush1.bf16.msra.mxu0 0
        %1512 = vmatprep.subr.bf16.mxu0 0
        %1513 = vmatpush1.bf16.msra.mxu0 0
        %1514 = vmatprep.subr.bf16.mxu0 0
        %1515 = vmatpush1.bf16.msra.mxu0 0
        %1516 = vmatprep.subr.bf16.mxu0 0
        %1517 = vmatpush1.bf16.msra.mxu0 0
        %1518 = vmatprep.subr.bf16.mxu0 0
        %1519 = vmatpush1.bf16.msra.mxu0 0
        %1520 = vmatprep.subr.bf16.mxu0 0
        %1521 = vmatpush1.bf16.msra.mxu0 0
        %1522 = vmatprep.subr.bf16.mxu0 0
        %1523 = vmatpush1.bf16.msra.mxu0 0
        %1524 = vmatprep.subr.bf16.mxu0 0
        %1525 = vmatpush1.bf16.msra.mxu0 0
        %1526 = vmatprep.subr.bf16.mxu0 0
        %1527 = vmatpush1.bf16.msra.mxu0 0
        %1528 = vmatprep.subr.bf16.mxu0 0
        %1529 = vmatpush1.bf16.msra.mxu0 0
        %1530 = vmatprep.subr.bf16.mxu0 0
        %1531 = vmatpush1.bf16.msra.mxu0 0
        %1532 = vmatprep.mubr.bf16.mxu0 0
        %1533 = vmatmul.mubr.bf16.gmra.mrb[0].mxu0 %v1494
        %v1534 = vpop.f32.mrb[0].mxu0
        %v1535 = vadd.f32 0.0, %v1534
        %v1536 = vpop.f32.mrb[0].mxu0
        %v1537 = vpop.f32.mrb[0].mxu0
        %v1538 = vpop.f32.mrb[0].mxu0
        %1539 = vdwg.mxu0
        %v1540 = vpack.c.bf16 %v1535, %v1535
        %vm1541 = vcmask 60416
        %1542 = vst.msk [vmem:[#allocation2] sm:$0xf] %vm1541, %v1540
        %1543 = vrot.lane.b32.xlu0 %v1429, 120
        %v1544 = vpop.permute.xlu0 %1543
        %1545 = vrot.lane.b32.xlu0 %v1429, 88
        %v1546 = vpop.permute.xlu0 %1545
        %v1548 = vsel %vm1434, %v1544, 0
        %v1551 = vsel %vm1434, %v1546, 0
        %1553 = vmatprep.subr.bf16.mxu0 0
        %1554 = vmatpush1.bf16.xpose.msra.mxu0 %v1551
        %1555 = vmatprep.subr.bf16.mxu0 0
        %1556 = vmatpush1.bf16.xpose.msra.mxu0 0
        %1557 = vmatprep.subr.bf16.mxu0 0
        %1558 = vmatpush1.bf16.xpose.msra.mxu0 0
        %1559 = vmatprep.subr.bf16.mxu0 0
        %1560 = vmatpush1.bf16.xpose.msra.mxu0 0
        %1561 = vmatprep.subr.bf16.mxu0 0
        %1562 = vmatpush1.bf16.xpose.msra.mxu0 0
        %1563 = vmatprep.subr.bf16.mxu0 0
        %1564 = vmatpush1.bf16.xpose.msra.mxu0 0
        %1565 = vmatprep.subr.bf16.mxu0 0
        %1566 = vmatpush1.bf16.xpose.msra.mxu0 0
        %1567 = vmatprep.subr.bf16.mxu0 0
        %1568 = vmatpush1.bf16.xpose.msra.mxu0 0
        %1569 = vmatprep.subr.bf16.mxu0 0
        %1570 = vmatpush1.bf16.xpose.msra.mxu0 0
        %1571 = vmatprep.subr.bf16.mxu0 0
        %1572 = vmatpush1.bf16.xpose.msra.mxu0 0
        %1573 = vmatprep.subr.bf16.mxu0 0
        %1574 = vmatpush1.bf16.xpose.msra.mxu0 0
        %1575 = vmatprep.subr.bf16.mxu0 0
        %1576 = vmatpush1.bf16.xpose.msra.mxu0 0
        %1577 = vmatprep.subr.bf16.mxu0 0
        %1578 = vmatpush1.bf16.xpose.msra.mxu0 0
        %1579 = vmatprep.subr.bf16.mxu0 0
        %1580 = vmatpush1.bf16.xpose.msra.mxu0 0
        %1581 = vmatprep.subr.bf16.mxu0 0
        %1582 = vmatpush1.bf16.xpose.msra.mxu0 0
        %1583 = vmatprep.subr.bf16.mxu0 0
        %1584 = vmatpush1.bf16.xpose.msra.mxu0 0
        %1585 = vmatprep.mubr.bf16.mxu0 0
        %1586 = vmatmul.mubr.bf16.gmra.mrb[0].mxu0 %v1548
        %v1587 = vpop.f32.mrb[0].mxu0
        %v1588 = vadd.f32 0.0, %v1587
        %v1589 = vpop.f32.mrb[0].mxu0
        %v1590 = vpop.f32.mrb[0].mxu0
        %v1591 = vpop.f32.mrb[0].mxu0
        %1592 = vdwg.mxu0
        %v1593 = vsel %vm1434, %v1588, -inf
        %1594 = vmax.xlane.f32.xlu0 %v1593
        %v1595 = vpop.xlane.xlu0 %1594
        %v1596 = vsub.f32 %v1588, %v1595
        %v1597 = vmul.f32 %v1596, 1.442695
        %v1598 = vpow.pop %v1597
        %v1599 = vsel %vm1434, %v1598, 0.0
        %1600 = vadd.xlane.f32.xlu0 %v1599
        %v1601 = vpop.xlane.xlu0 %1600
        %v1602 = vrcp.pop %v1601
        %v1603 = vmul.f32 %v1598, %v1602
        %v1604 = vpack.c.bf16 %v1603, %v1603
        %1606 = vrot.lane.b32.xlu0 %v1430, 120
        %v1607 = vpop.permute.xlu0 %1606
        %v1609 = vsel %vm1434, %v1604, 0
        %v1612 = vsel %vm1496, %v1607, 0
        %1614 = vmatprep.subr.bf16.mxu0 0
        %1615 = vmatpush1.bf16.msra.mxu0 %v1612
        %1616 = vmatprep.subr.bf16.mxu0 0
        %1617 = vmatpush1.bf16.msra.mxu0 0
        %1618 = vmatprep.subr.bf16.mxu0 0
        %1619 = vmatpush1.bf16.msra.mxu0 0
        %1620 = vmatprep.subr.bf16.mxu0 0
        %1621 = vmatpush1.bf16.msra.mxu0 0
        %1622 = vmatprep.subr.bf16.mxu0 0
        %1623 = vmatpush1.bf16.msra.mxu0 0
        %1624 = vmatprep.subr.bf16.mxu0 0
        %1625 = vmatpush1.bf16.msra.mxu0 0
        %1626 = vmatprep.subr.bf16.mxu0 0
        %1627 = vmatpush1.bf16.msra.mxu0 0
        %1628 = vmatprep.subr.bf16.mxu0 0
        %1629 = vmatpush1.bf16.msra.mxu0 0
        %1630 = vmatprep.subr.bf16.mxu0 0
        %1631 = vmatpush1.bf16.msra.mxu0 0
        %1632 = vmatprep.subr.bf16.mxu0 0
        %1633 = vmatpush1.bf16.msra.mxu0 0
        %1634 = vmatprep.subr.bf16.mxu0 0
        %1635 = vmatpush1.bf16.msra.mxu0 0
        %1636 = vmatprep.subr.bf16.mxu0 0
        %1637 = vmatpush1.bf16.msra.mxu0 0
        %1638 = vmatprep.subr.bf16.mxu0 0
        %1639 = vmatpush1.bf16.msra.mxu0 0
        %1640 = vmatprep.subr.bf16.mxu0 0
        %1641 = vmatpush1.bf16.msra.mxu0 0
        %1642 = vmatprep.subr.bf16.mxu0 0
        %1643 = vmatpush1.bf16.msra.mxu0 0
        %1644 = vmatprep.subr.bf16.mxu0 0
        %1645 = vmatpush1.bf16.msra.mxu0 0
        %1646 = vmatprep.mubr.bf16.mxu0 0
        %1647 = vmatmul.mubr.bf16.gmra.mrb[0].mxu0 %v1609
        %v1648 = vpop.f32.mrb[0].mxu0
        %v1649 = vadd.f32 0.0, %v1648
        %v1650 = vpop.f32.mrb[0].mxu0
        %v1651 = vpop.f32.mrb[0].mxu0
        %v1652 = vpop.f32.mrb[0].mxu0
        %1653 = vdwg.mxu0
        %v1654 = vpack.c.bf16 %v1649, %v1649
        %v1656 = vunpack.c.l.b16 %v1654
        %v1657 = vpack.c.b16 %v1656, %v1656
        %1658 = vrot.lane.b32.xlu0 %v1657, 8
        %v1659 = vpop.permute.xlu0 %1658
        %vm1661 = vcmask 126016
        %1662 = vst.msk [vmem:[#allocation2] sm:$0xf] %vm1661, %v1659
        %1663 = vrot.lane.b32.xlu0 %v1429, 112
        %v1664 = vpop.permute.xlu0 %1663
        %1665 = vrot.lane.b32.xlu0 %v1429, 80
        %v1666 = vpop.permute.xlu0 %1665
        %v1668 = vsel %vm1434, %v1664, 0
        %v1671 = vsel %vm1434, %v1666, 0
        %1673 = vmatprep.subr.bf16.mxu0 0
        %1674 = vmatpush1.bf16.xpose.msra.mxu0 %v1671
        %1675 = vmatprep.subr.bf16.mxu0 0
        %1676 = vmatpush1.bf16.xpose.msra.mxu0 0
        %1677 = vmatprep.subr.bf16.mxu0 0
        %1678 = vmatpush1.bf16.xpose.msra.mxu0 0
        %1679 = vmatprep.subr.bf16.mxu0 0
        %1680 = vmatpush1.bf16.xpose.msra.mxu0 0
        %1681 = vmatprep.subr.bf16.mxu0 0
        %1682 = vmatpush1.bf16.xpose.msra.mxu0 0
        %1683 = vmatprep.subr.bf16.mxu0 0
        %1684 = vmatpush1.bf16.xpose.msra.mxu0 0
        %1685 = vmatprep.subr.bf16.mxu0 0
        %1686 = vmatpush1.bf16.xpose.msra.mxu0 0
        %1687 = vmatprep.subr.bf16.mxu0 0
        %1688 = vmatpush1.bf16.xpose.msra.mxu0 0
        %1689 = vmatprep.subr.bf16.mxu0 0
        %1690 = vmatpush1.bf16.xpose.msra.mxu0 0
        %1691 = vmatprep.subr.bf16.mxu0 0
        %1692 = vmatpush1.bf16.xpose.msra.mxu0 0
        %1693 = vmatprep.subr.bf16.mxu0 0
        %1694 = vmatpush1.bf16.xpose.msra.mxu0 0
        %1695 = vmatprep.subr.bf16.mxu0 0
        %1696 = vmatpush1.bf16.xpose.msra.mxu0 0
        %1697 = vmatprep.subr.bf16.mxu0 0
        %1698 = vmatpush1.bf16.xpose.msra.mxu0 0
        %1699 = vmatprep.subr.bf16.mxu0 0
        %1700 = vmatpush1.bf16.xpose.msra.mxu0 0
        %1701 = vmatprep.subr.bf16.mxu0 0
        %1702 = vmatpush1.bf16.xpose.msra.mxu0 0
        %1703 = vmatprep.subr.bf16.mxu0 0
        %1704 = vmatpush1.bf16.xpose.msra.mxu0 0
        %1705 = vmatprep.mubr.bf16.mxu0 0
        %1706 = vmatmul.mubr.bf16.gmra.mrb[0].mxu0 %v1668
        %v1707 = vpop.f32.mrb[0].mxu0
        %v1708 = vadd.f32 0.0, %v1707
        %v1709 = vpop.f32.mrb[0].mxu0
        %v1710 = vpop.f32.mrb[0].mxu0
        %v1711 = vpop.f32.mrb[0].mxu0
        %1712 = vdwg.mxu0
        %v1713 = vsel %vm1434, %v1708, -inf
        %1714 = vmax.xlane.f32.xlu0 %v1713
        %v1715 = vpop.xlane.xlu0 %1714
        %v1716 = vsub.f32 %v1708, %v1715
        %v1717 = vmul.f32 %v1716, 1.442695
        %v1718 = vpow.pop %v1717
        %v1719 = vsel %vm1434, %v1718, 0.0
        %1720 = vadd.xlane.f32.xlu0 %v1719
        %v1721 = vpop.xlane.xlu0 %1720
        %v1722 = vrcp.pop %v1721
        %v1723 = vmul.f32 %v1718, %v1722
        %v1724 = vpack.c.bf16 %v1723, %v1723
        %1725 = vrot.lane.b32.xlu0 %v1430, 112
        %v1726 = vpop.permute.xlu0 %1725
        %v1728 = vsel %vm1434, %v1724, 0
        %v1731 = vsel %vm1496, %v1726, 0
        %1733 = vmatprep.subr.bf16.mxu0 0
        %1734 = vmatpush1.bf16.msra.mxu0 %v1731
        %1735 = vmatprep.subr.bf16.mxu0 0
        %1736 = vmatpush1.bf16.msra.mxu0 0
        %1737 = vmatprep.subr.bf16.mxu0 0
        %1738 = vmatpush1.bf16.msra.mxu0 0
        %1739 = vmatprep.subr.bf16.mxu0 0
        %1740 = vmatpush1.bf16.msra.mxu0 0
        %1741 = vmatprep.subr.bf16.mxu0 0
        %1742 = vmatpush1.bf16.msra.mxu0 0
        %1743 = vmatprep.subr.bf16.mxu0 0
        %1744 = vmatpush1.bf16.msra.mxu0 0
        %1745 = vmatprep.subr.bf16.mxu0 0
        %1746 = vmatpush1.bf16.msra.mxu0 0
        %1747 = vmatprep.subr.bf16.mxu0 0
        %1748 = vmatpush1.bf16.msra.mxu0 0
        %1749 = vmatprep.subr.bf16.mxu0 0
        %1750 = vmatpush1.bf16.msra.mxu0 0
        %1751 = vmatprep.subr.bf16.mxu0 0
        %1752 = vmatpush1.bf16.msra.mxu0 0
        %1753 = vmatprep.subr.bf16.mxu0 0
        %1754 = vmatpush1.bf16.msra.mxu0 0
        %1755 = vmatprep.subr.bf16.mxu0 0
        %1756 = vmatpush1.bf16.msra.mxu0 0
        %1757 = vmatprep.subr.bf16.mxu0 0
        %1758 = vmatpush1.bf16.msra.mxu0 0
        %1759 = vmatprep.subr.bf16.mxu0 0
        %1760 = vmatpush1.bf16.msra.mxu0 0
        %1761 = vmatprep.subr.bf16.mxu0 0
        %1762 = vmatpush1.bf16.msra.mxu0 0
        %1763 = vmatprep.subr.bf16.mxu0 0
        %1764 = vmatpush1.bf16.msra.mxu0 0
        %1765 = vmatprep.mubr.bf16.mxu0 0
        %1766 = vmatmul.mubr.bf16.gmra.mrb[0].mxu0 %v1728
        %v1767 = vpop.f32.mrb[0].mxu0
        %v1768 = vadd.f32 0.0, %v1767
        %v1769 = vpop.f32.mrb[0].mxu0
        %v1770 = vpop.f32.mrb[0].mxu0
        %v1771 = vpop.f32.mrb[0].mxu0
        %1772 = vdwg.mxu0
        %v1773 = vpack.c.bf16 %v1768, %v1768
        %v1775 = vunpack.c.l.b16 %v1773
        %v1776 = vpack.c.b16 %v1775, %v1775
        %1777 = vrot.lane.b32.xlu0 %v1776, 16
        %v1778 = vpop.permute.xlu0 %1777
        %vm1780 = vcmask 191616
        %1781 = vst.msk [vmem:[#allocation2] sm:$0xf] %vm1780, %v1778
        %1782 = vrot.lane.b32.xlu0 %v1429, 104
        %v1783 = vpop.permute.xlu0 %1782
        %1784 = vrot.lane.b32.xlu0 %v1429, 72
        %v1785 = vpop.permute.xlu0 %1784
        %v1787 = vsel %vm1434, %v1783, 0
        %v1790 = vsel %vm1434, %v1785, 0
        %1792 = vmatprep.subr.bf16.mxu0 0
        %1793 = vmatpush1.bf16.xpose.msra.mxu0 %v1790
        %1794 = vmatprep.subr.bf16.mxu0 0
        %1795 = vmatpush1.bf16.xpose.msra.mxu0 0
        %1796 = vmatprep.subr.bf16.mxu0 0
        %1797 = vmatpush1.bf16.xpose.msra.mxu0 0
        %1798 = vmatprep.subr.bf16.mxu0 0
        %1799 = vmatpush1.bf16.xpose.msra.mxu0 0
        %1800 = vmatprep.subr.bf16.mxu0 0
        %1801 = vmatpush1.bf16.xpose.msra.mxu0 0
        %1802 = vmatprep.subr.bf16.mxu0 0
        %1803 = vmatpush1.bf16.xpose.msra.mxu0 0
        %1804 = vmatprep.subr.bf16.mxu0 0
        %1805 = vmatpush1.bf16.xpose.msra.mxu0 0
        %1806 = vmatprep.subr.bf16.mxu0 0
        %1807 = vmatpush1.bf16.xpose.msra.mxu0 0
        %1808 = vmatprep.subr.bf16.mxu0 0
        %1809 = vmatpush1.bf16.xpose.msra.mxu0 0
        %1810 = vmatprep.subr.bf16.mxu0 0
        %1811 = vmatpush1.bf16.xpose.msra.mxu0 0
        %1812 = vmatprep.subr.bf16.mxu0 0
        %1813 = vmatpush1.bf16.xpose.msra.mxu0 0
        %1814 = vmatprep.subr.bf16.mxu0 0
        %1815 = vmatpush1.bf16.xpose.msra.mxu0 0
        %1816 = vmatprep.subr.bf16.mxu0 0
        %1817 = vmatpush1.bf16.xpose.msra.mxu0 0
        %1818 = vmatprep.subr.bf16.mxu0 0
        %1819 = vmatpush1.bf16.xpose.msra.mxu0 0
        %1820 = vmatprep.subr.bf16.mxu0 0
        %1821 = vmatpush1.bf16.xpose.msra.mxu0 0
        %1822 = vmatprep.subr.bf16.mxu0 0
        %1823 = vmatpush1.bf16.xpose.msra.mxu0 0
        %1824 = vmatprep.mubr.bf16.mxu0 0
        %1825 = vmatmul.mubr.bf16.gmra.mrb[0].mxu0 %v1787
        %v1826 = vpop.f32.mrb[0].mxu0
        %v1827 = vadd.f32 0.0, %v1826
        %v1828 = vpop.f32.mrb[0].mxu0
        %v1829 = vpop.f32.mrb[0].mxu0
        %v1830 = vpop.f32.mrb[0].mxu0
        %1831 = vdwg.mxu0
        %v1832 = vsel %vm1434, %v1827, -inf
        %1833 = vmax.xlane.f32.xlu0 %v1832
        %v1834 = vpop.xlane.xlu0 %1833
        %v1835 = vsub.f32 %v1827, %v1834
        %v1836 = vmul.f32 %v1835, 1.442695
        %v1837 = vpow.pop %v1836
        %v1838 = vsel %vm1434, %v1837, 0.0
        %1839 = vadd.xlane.f32.xlu0 %v1838
        %v1840 = vpop.xlane.xlu0 %1839
        %v1841 = vrcp.pop %v1840
        %v1842 = vmul.f32 %v1837, %v1841
        %v1843 = vpack.c.bf16 %v1842, %v1842
        %1844 = vrot.lane.b32.xlu0 %v1430, 104
        %v1845 = vpop.permute.xlu0 %1844
        %v1847 = vsel %vm1434, %v1843, 0
        %v1850 = vsel %vm1496, %v1845, 0
        %1852 = vmatprep.subr.bf16.mxu0 0
        %1853 = vmatpush1.bf16.msra.mxu0 %v1850
        %1854 = vmatprep.subr.bf16.mxu0 0
        %1855 = vmatpush1.bf16.msra.mxu0 0
        %1856 = vmatprep.subr.bf16.mxu0 0
        %1857 = vmatpush1.bf16.msra.mxu0 0
        %1858 = vmatprep.subr.bf16.mxu0 0
        %1859 = vmatpush1.bf16.msra.mxu0 0
        %1860 = vmatprep.subr.bf16.mxu0 0
        %1861 = vmatpush1.bf16.msra.mxu0 0
        %1862 = vmatprep.subr.bf16.mxu0 0
        %1863 = vmatpush1.bf16.msra.mxu0 0
        %1864 = vmatprep.subr.bf16.mxu0 0
        %1865 = vmatpush1.bf16.msra.mxu0 0
        %1866 = vmatprep.subr.bf16.mxu0 0
        %1867 = vmatpush1.bf16.msra.mxu0 0
        %1868 = vmatprep.subr.bf16.mxu0 0
        %1869 = vmatpush1.bf16.msra.mxu0 0
        %1870 = vmatprep.subr.bf16.mxu0 0
        %1871 = vmatpush1.bf16.msra.mxu0 0
        %1872 = vmatprep.subr.bf16.mxu0 0
        %1873 = vmatpush1.bf16.msra.mxu0 0
        %1874 = vmatprep.subr.bf16.mxu0 0
        %1875 = vmatpush1.bf16.msra.mxu0 0
        %1876 = vmatprep.subr.bf16.mxu0 0
        %1877 = vmatpush1.bf16.msra.mxu0 0
        %1878 = vmatprep.subr.bf16.mxu0 0
        %1879 = vmatpush1.bf16.msra.mxu0 0
        %1880 = vmatprep.subr.bf16.mxu0 0
        %1881 = vmatpush1.bf16.msra.mxu0 0
        %1882 = vmatprep.subr.bf16.mxu0 0
        %1883 = vmatpush1.bf16.msra.mxu0 0
        %1884 = vmatprep.mubr.bf16.mxu0 0
        %1885 = vmatmul.mubr.bf16.gmra.mrb[0].mxu0 %v1847
        %v1886 = vpop.f32.mrb[0].mxu0
        %v1887 = vadd.f32 0.0, %v1886
        %v1888 = vpop.f32.mrb[0].mxu0
        %v1889 = vpop.f32.mrb[0].mxu0
        %v1890 = vpop.f32.mrb[0].mxu0
        %1891 = vdwg.mxu0
        %v1892 = vpack.c.bf16 %v1887, %v1887
        %v1894 = vunpack.c.l.b16 %v1892
        %v1895 = vpack.c.b16 %v1894, %v1894
        %1896 = vrot.lane.b32.xlu0 %v1895, 24
        %v1897 = vpop.permute.xlu0 %1896
        %vm1899 = vcmask 257216
        %1900 = vst.msk [vmem:[#allocation2] sm:$0xf] %vm1899, %v1897
        %v1901 = vld [vmem:[#allocation2] sm:$0xf]
        %v1902 = vld [vmem:[#allocation17] sm:$0xf]
        %v1903 = vld [vmem:[#allocation17 + $0x4] sm:$0xf]
        %v1904 = vld [vmem:[#allocation17 + $0x8] sm:$0xf]
        %v1905 = vld [vmem:[#allocation17 + $0xc] sm:$0xf]
        %v1907 = vlaneseq
        %v1908 = vshrl.u32 %v1907, 7
        %v1909 = vsub.s32 0, %v1908
        %v1910 = vrot.slane %v1428, %v1909
        %v1916 = vunpack.c.l.b16 %v1902
        %v1917 = vunpack.c.l.b16 %v1903
        %v1918 = vunpack.c.l.b16 %v1904
        %v1919 = vunpack.c.l.b16 %v1905
        %v1920 = vpack.c.b16 %v1917, %v1916
        %v1921 = vpack.c.b16 %v1919, %v1918
        %v1925 = vsel %vm1317, %v1901, 0
        %1927 = vmatprep.subr.bf16.mxu0 0
        %1928 = vmatpush1.bf16.msra.mxu0 %v1920
        %1929 = vmatprep.subr.bf16.mxu0 0
        %1930 = vmatpush1.bf16.msra.mxu0 %v1921
        %1931 = vmatprep.subr.bf16.mxu0 0
        %1932 = vmatpush1.bf16.msra.mxu0 0
        %1933 = vmatprep.subr.bf16.mxu0 0
        %1934 = vmatpush1.bf16.msra.mxu0 0
        %1935 = vmatprep.subr.bf16.mxu0 0
        %1936 = vmatpush1.bf16.msra.mxu0 0
        %1937 = vmatprep.subr.bf16.mxu0 0
        %1938 = vmatpush1.bf16.msra.mxu0 0
        %1939 = vmatprep.subr.bf16.mxu0 0
        %1940 = vmatpush1.bf16.msra.mxu0 0
        %1941 = vmatprep.subr.bf16.mxu0 0
        %1942 = vmatpush1.bf16.msra.mxu0 0
        %1943 = vmatprep.subr.bf16.mxu0 0
        %1944 = vmatpush1.bf16.msra.mxu0 0
        %1945 = vmatprep.subr.bf16.mxu0 0
        %1946 = vmatpush1.bf16.msra.mxu0 0
        %1947 = vmatprep.subr.bf16.mxu0 0
        %1948 = vmatpush1.bf16.msra.mxu0 0
        %1949 = vmatprep.subr.bf16.mxu0 0
        %1950 = vmatpush1.bf16.msra.mxu0 0
        %1951 = vmatprep.subr.bf16.mxu0 0
        %1952 = vmatpush1.bf16.msra.mxu0 0
        %1953 = vmatprep.subr.bf16.mxu0 0
        %1954 = vmatpush1.bf16.msra.mxu0 0
        %1955 = vmatprep.subr.bf16.mxu0 0
        %1956 = vmatpush1.bf16.msra.mxu0 0
        %1957 = vmatprep.subr.bf16.mxu0 0
        %1958 = vmatpush1.bf16.msra.mxu0 0
        %1959 = vmatprep.mubr.bf16.mxu0 0
        %1960 = vmatmul.mubr.bf16.gmra.mrb[0].mxu0 %v1925
        %v1961 = vpop.f32.mrb[0].mxu0
        %v1962 = vadd.f32 %v1910, %v1961
        %v1963 = vpop.f32.mrb[0].mxu0
        %v1964 = vpop.f32.mrb[0].mxu0
        %v1965 = vpop.f32.mrb[0].mxu0
        %1966 = vdwg.mxu0
        %v1967 = vadd.f32 %v1288, %v1962
        %v1968 = vld [vmem:[#allocation38] sm:$0x1]
        %v1969 = vld [vmem:[#allocation39] sm:$0x1]
        %v1970 = vsel %vm1317, %v1967, 0.0
        %1971 = vadd.xlane.f32.xlu0 %v1970
        %v1972 = vpop.xlane.xlu0 %1971
        %v1973 = vrcp.pop 32.0
        %v1974 = vmul.f32 %v1972, %v1973
        %v1975 = vsub.f32 %v1967, %v1974
        %v1976 = vmul.f32 %v1975, %v1975
        %v1977 = vsel %vm1317, %v1976, 0.0
        %1978 = vadd.xlane.f32.xlu0 %v1977
        %v1979 = vpop.xlane.xlu0 %1978
        %v1980 = vmul.f32 %v1979, %v1973
        %v1981 = vadd.f32 %v1980, 1e-05
        %v1982 = vrsqrt.pop %v1981
        %v1983 = vmul.f32 %v1975, %v1982
        %v1985 = vlaneseq
        %v1986 = vshrl.u32 %v1985, 7
        %v1987 = vsub.s32 0, %v1986
        %v1988 = vrot.slane %v1968, %v1987
        %v1990 = vmul.f32 %v1983, %v1988
        %v1992 = vlaneseq
        %v1993 = vshrl.u32 %v1992, 7
        %v1994 = vsub.s32 0, %v1993
        %v1995 = vrot.slane %v1969, %v1994
        %v1997 = vadd.f32 %v1990, %v1995
        %v1998 = vadd.f32 %v1997, %v1290
        %v1999 = vpack.c.bf16 %v1998, %v1998
        %v2000 = vadd.f32 %v1289, %v1291
        %v2001 = vpack.c.bf16 %v2000, %v2000
        %v2002 = vpack.c.bf16 %v1289, %v1289
        %v2003 = vld [vmem:[#allocation20] sm:$0xf]
        %v2004 = vld [vmem:[#allocation20 + $0x4] sm:$0xf]
        %v2005 = vld [vmem:[#allocation20 + $0x8] sm:$0xf]
        %v2006 = vld [vmem:[#allocation20 + $0xc] sm:$0xf]
        %v2007 = vld [vmem:[#allocation21] sm:$0x1]
        %v2009 = vlaneseq
        %v2010 = vshrl.u32 %v2009, 7
        %v2011 = vsub.s32 0, %v2010
        %v2012 = vrot.slane %v2007, %v2011
        %v2018 = vunpack.c.l.b16 %v2003
        %v2019 = vunpack.c.l.b16 %v2004
        %v2020 = vunpack.c.l.b16 %v2005
        %v2021 = vunpack.c.l.b16 %v2006
        %v2022 = vpack.c.b16 %v2019, %v2018
        %v2023 = vpack.c.b16 %v2021, %v2020
        %v2027 = vsel %vm1317, %v1999, 0
        %2029 = vmatprep.subr.bf16.mxu0 0
        %2030 = vmatpush1.bf16.msra.mxu0 %v2022
        %2031 = vmatprep.subr.bf16.mxu0 0
        %2032 = vmatpush1.bf16.msra.mxu0 %v2023
        %2033 = vmatprep.subr.bf16.mxu0 0
        %2034 = vmatpush1.bf16.msra.mxu0 0
        %2035 = vmatprep.subr.bf16.mxu0 0
        %2036 = vmatpush1.bf16.msra.mxu0 0
        %2037 = vmatprep.subr.bf16.mxu0 0
        %2038 = vmatpush1.bf16.msra.mxu0 0
        %2039 = vmatprep.subr.bf16.mxu0 0
        %2040 = vmatpush1.bf16.msra.mxu0 0
        %2041 = vmatprep.subr.bf16.mxu0 0
        %2042 = vmatpush1.bf16.msra.mxu0 0
        %2043 = vmatprep.subr.bf16.mxu0 0
        %2044 = vmatpush1.bf16.msra.mxu0 0
        %2045 = vmatprep.subr.bf16.mxu0 0
        %2046 = vmatpush1.bf16.msra.mxu0 0
        %2047 = vmatprep.subr.bf16.mxu0 0
        %2048 = vmatpush1.bf16.msra.mxu0 0
        %2049 = vmatprep.subr.bf16.mxu0 0
        %2050 = vmatpush1.bf16.msra.mxu0 0
        %2051 = vmatprep.subr.bf16.mxu0 0
        %2052 = vmatpush1.bf16.msra.mxu0 0
        %2053 = vmatprep.subr.bf16.mxu0 0
        %2054 = vmatpush1.bf16.msra.mxu0 0
        %2055 = vmatprep.subr.bf16.mxu0 0
        %2056 = vmatpush1.bf16.msra.mxu0 0
        %2057 = vmatprep.subr.bf16.mxu0 0
        %2058 = vmatpush1.bf16.msra.mxu0 0
        %2059 = vmatprep.subr.bf16.mxu0 0
        %2060 = vmatpush1.bf16.msra.mxu0 0
        %2061 = vmatprep.mubr.bf16.mxu0 0
        %2062 = vmatmul.mubr.bf16.gmra.mrb[0].mxu0 %v2027
        %v2063 = vpop.f32.mrb[0].mxu0
        %v2064 = vadd.f32 %v2012, %v2063
        %v2065 = vpop.f32.mrb[0].mxu0
        %v2066 = vpop.f32.mrb[0].mxu0
        %v2067 = vpop.f32.mrb[0].mxu0
        %2068 = vdwg.mxu0
        %v2069 = vld [vmem:[#allocation23] sm:$0xf]
        %v2070 = vld [vmem:[#allocation23 + $0x4] sm:$0xf]
        %v2071 = vld [vmem:[#allocation23 + $0x8] sm:$0xf]
        %v2072 = vld [vmem:[#allocation23 + $0xc] sm:$0xf]
        %v2073 = vld [vmem:[#allocation24] sm:$0x1]
        %v2075 = vlaneseq
        %v2076 = vshrl.u32 %v2075, 7
        %v2077 = vsub.s32 0, %v2076
        %v2078 = vrot.slane %v2073, %v2077
        %v2084 = vunpack.c.l.b16 %v2069
        %v2085 = vunpack.c.l.b16 %v2070
        %v2086 = vunpack.c.l.b16 %v2071
        %v2087 = vunpack.c.l.b16 %v2072
        %v2088 = vpack.c.b16 %v2085, %v2084
        %v2089 = vpack.c.b16 %v2087, %v2086
        %v2093 = vsel %vm1317, %v2001, 0
        %2095 = vmatprep.subr.bf16.mxu0 0
        %2096 = vmatpush1.bf16.msra.mxu0 %v2088
        %2097 = vmatprep.subr.bf16.mxu0 0
        %2098 = vmatpush1.bf16.msra.mxu0 %v2089
        %2099 = vmatprep.subr.bf16.mxu0 0
        %2100 = vmatpush1.bf16.msra.mxu0 0
        %2101 = vmatprep.subr.bf16.mxu0 0
        %2102 = vmatpush1.bf16.msra.mxu0 0
        %2103 = vmatprep.subr.bf16.mxu0 0
        %2104 = vmatpush1.bf16.msra.mxu0 0
        %2105 = vmatprep.subr.bf16.mxu0 0
        %2106 = vmatpush1.bf16.msra.mxu0 0
        %2107 = vmatprep.subr.bf16.mxu0 0
        %2108 = vmatpush1.bf16.msra.mxu0 0
        %2109 = vmatprep.subr.bf16.mxu0 0
        %2110 = vmatpush1.bf16.msra.mxu0 0
        %2111 = vmatprep.subr.bf16.mxu0 0
        %2112 = vmatpush1.bf16.msra.mxu0 0
        %2113 = vmatprep.subr.bf16.mxu0 0
        %2114 = vmatpush1.bf16.msra.mxu0 0
        %2115 = vmatprep.subr.bf16.mxu0 0
        %2116 = vmatpush1.bf16.msra.mxu0 0
        %2117 = vmatprep.subr.bf16.mxu0 0
        %2118 = vmatpush1.bf16.msra.mxu0 0
        %2119 = vmatprep.subr.bf16.mxu0 0
        %2120 = vmatpush1.bf16.msra.mxu0 0
        %2121 = vmatprep.subr.bf16.mxu0 0
        %2122 = vmatpush1.bf16.msra.mxu0 0
        %2123 = vmatprep.subr.bf16.mxu0 0
        %2124 = vmatpush1.bf16.msra.mxu0 0
        %2125 = vmatprep.subr.bf16.mxu0 0
        %2126 = vmatpush1.bf16.msra.mxu0 0
        %2127 = vmatprep.mubr.bf16.mxu0 0
        %2128 = vmatmul.mubr.bf16.gmra.mrb[0].mxu0 %v2093
        %v2129 = vpop.f32.mrb[0].mxu0
        %v2130 = vadd.f32 %v2078, %v2129
        %v2131 = vpop.f32.mrb[0].mxu0
        %v2132 = vpop.f32.mrb[0].mxu0
        %v2133 = vpop.f32.mrb[0].mxu0
        %2134 = vdwg.mxu0
        %v2135 = vld [vmem:[#allocation26] sm:$0xf]
        %v2136 = vld [vmem:[#allocation26 + $0x4] sm:$0xf]
        %v2137 = vld [vmem:[#allocation26 + $0x8] sm:$0xf]
        %v2138 = vld [vmem:[#allocation26 + $0xc] sm:$0xf]
        %v2139 = vld [vmem:[#allocation27] sm:$0x1]
        %v2141 = vlaneseq
        %v2142 = vshrl.u32 %v2141, 7
        %v2143 = vsub.s32 0, %v2142
        %v2144 = vrot.slane %v2139, %v2143
        %v2150 = vunpack.c.l.b16 %v2135
        %v2151 = vunpack.c.l.b16 %v2136
        %v2152 = vunpack.c.l.b16 %v2137
        %v2153 = vunpack.c.l.b16 %v2138
        %v2154 = vpack.c.b16 %v2151, %v2150
        %v2155 = vpack.c.b16 %v2153, %v2152
        %v2159 = vsel %vm1317, %v2002, 0
        %2161 = vmatprep.subr.bf16.mxu0 0
        %2162 = vmatpush1.bf16.msra.mxu0 %v2154
        %2163 = vmatprep.subr.bf16.mxu0 0
        %2164 = vmatpush1.bf16.msra.mxu0 %v2155
        %2165 = vmatprep.subr.bf16.mxu0 0
        %2166 = vmatpush1.bf16.msra.mxu0 0
        %2167 = vmatprep.subr.bf16.mxu0 0
        %2168 = vmatpush1.bf16.msra.mxu0 0
        %2169 = vmatprep.subr.bf16.mxu0 0
        %2170 = vmatpush1.bf16.msra.mxu0 0
        %2171 = vmatprep.subr.bf16.mxu0 0
        %2172 = vmatpush1.bf16.msra.mxu0 0
        %2173 = vmatprep.subr.bf16.mxu0 0
        %2174 = vmatpush1.bf16.msra.mxu0 0
        %2175 = vmatprep.subr.bf16.mxu0 0
        %2176 = vmatpush1.bf16.msra.mxu0 0
        %2177 = vmatprep.subr.bf16.mxu0 0
        %2178 = vmatpush1.bf16.msra.mxu0 0
        %2179 = vmatprep.subr.bf16.mxu0 0
        %2180 = vmatpush1.bf16.msra.mxu0 0
        %2181 = vmatprep.subr.bf16.mxu0 0
        %2182 = vmatpush1.bf16.msra.mxu0 0
        %2183 = vmatprep.subr.bf16.mxu0 0
        %2184 = vmatpush1.bf16.msra.mxu0 0
        %2185 = vmatprep.subr.bf16.mxu0 0
        %2186 = vmatpush1.bf16.msra.mxu0 0
        %2187 = vmatprep.subr.bf16.mxu0 0
        %2188 = vmatpush1.bf16.msra.mxu0 0
        %2189 = vmatprep.subr.bf16.mxu0 0
        %2190 = vmatpush1.bf16.msra.mxu0 0
        %2191 = vmatprep.subr.bf16.mxu0 0
        %2192 = vmatpush1.bf16.msra.mxu0 0
        %2193 = vmatprep.mubr.bf16.mxu0 0
        %2194 = vmatmul.mubr.bf16.gmra.mrb[0].mxu0 %v2159
        %v2195 = vpop.f32.mrb[0].mxu0
        %v2196 = vadd.f32 %v2144, %v2195
        %v2197 = vpop.f32.mrb[0].mxu0
        %v2198 = vpop.f32.mrb[0].mxu0
        %v2199 = vpop.f32.mrb[0].mxu0
        %2200 = vdwg.mxu0
        %v2201 = vld [vmem:[#allocation30] sm:$0x1]
        %v2202 = vpack.c.bf16 %v2064, %v2064
        %v2203 = vpack.c.bf16 %v2130, %v2130
        %v2204 = vpack.c.bf16 %v2196, %v2196
        %v2206 = vsel %vm1434, %v2202, 0
        %v2209 = vsel %vm1434, %v2203, 0
        %2211 = vmatprep.subr.bf16.mxu0 0
        %2212 = vmatpush1.bf16.xpose.msra.mxu0 %v2209
        %2213 = vmatprep.subr.bf16.mxu0 0
        %2214 = vmatpush1.bf16.xpose.msra.mxu0 0
        %2215 = vmatprep.subr.bf16.mxu0 0
        %2216 = vmatpush1.bf16.xpose.msra.mxu0 0
        %2217 = vmatprep.subr.bf16.mxu0 0
        %2218 = vmatpush1.bf16.xpose.msra.mxu0 0
        %2219 = vmatprep.subr.bf16.mxu0 0
        %2220 = vmatpush1.bf16.xpose.msra.mxu0 0
        %2221 = vmatprep.subr.bf16.mxu0 0
        %2222 = vmatpush1.bf16.xpose.msra.mxu0 0
        %2223 = vmatprep.subr.bf16.mxu0 0
        %2224 = vmatpush1.bf16.xpose.msra.mxu0 0
        %2225 = vmatprep.subr.bf16.mxu0 0
        %2226 = vmatpush1.bf16.xpose.msra.mxu0 0
        %2227 = vmatprep.subr.bf16.mxu0 0
        %2228 = vmatpush1.bf16.xpose.msra.mxu0 0
        %2229 = vmatprep.subr.bf16.mxu0 0
        %2230 = vmatpush1.bf16.xpose.msra.mxu0 0
        %2231 = vmatprep.subr.bf16.mxu0 0
        %2232 = vmatpush1.bf16.xpose.msra.mxu0 0
        %2233 = vmatprep.subr.bf16.mxu0 0
        %2234 = vmatpush1.bf16.xpose.msra.mxu0 0
        %2235 = vmatprep.subr.bf16.mxu0 0
        %2236 = vmatpush1.bf16.xpose.msra.mxu0 0
        %2237 = vmatprep.subr.bf16.mxu0 0
        %2238 = vmatpush1.bf16.xpose.msra.mxu0 0
        %2239 = vmatprep.subr.bf16.mxu0 0
        %2240 = vmatpush1.bf16.xpose.msra.mxu0 0
        %2241 = vmatprep.subr.bf16.mxu0 0
        %2242 = vmatpush1.bf16.xpose.msra.mxu0 0
        %2243 = vmatprep.mubr.bf16.mxu0 0
        %2244 = vmatmul.mubr.bf16.gmra.mrb[0].mxu0 %v2206
        %v2245 = vpop.f32.mrb[0].mxu0
        %v2246 = vadd.f32 0.0, %v2245
        %v2247 = vpop.f32.mrb[0].mxu0
        %v2248 = vpop.f32.mrb[0].mxu0
        %v2249 = vpop.f32.mrb[0].mxu0
        %2250 = vdwg.mxu0
        %v2251 = vsel %vm1434, %v2246, -inf
        %2252 = vmax.xlane.f32.xlu0 %v2251
        %v2253 = vpop.xlane.xlu0 %2252
        %v2254 = vsub.f32 %v2246, %v2253
        %v2255 = vmul.f32 %v2254, 1.442695
        %v2256 = vpow.pop %v2255
        %v2257 = vsel %vm1434, %v2256, 0.0
        %2258 = vadd.xlane.f32.xlu0 %v2257
        %v2259 = vpop.xlane.xlu0 %2258
        %v2260 = vrcp.pop %v2259
        %v2261 = vmul.f32 %v2256, %v2260
        %v2262 = vpack.c.bf16 %v2261, %v2261
        %v2264 = vsel %vm1434, %v2262, 0
        %v2267 = vsel %vm1496, %v2204, 0
        %2269 = vmatprep.subr.bf16.mxu0 0
        %2270 = vmatpush1.bf16.msra.mxu0 %v2267
        %2271 = vmatprep.subr.bf16.mxu0 0
        %2272 = vmatpush1.bf16.msra.mxu0 0
        %2273 = vmatprep.subr.bf16.mxu0 0
        %2274 = vmatpush1.bf16.msra.mxu0 0
        %2275 = vmatprep.subr.bf16.mxu0 0
        %2276 = vmatpush1.bf16.msra.mxu0 0
        %2277 = vmatprep.subr.bf16.mxu0 0
        %2278 = vmatpush1.bf16.msra.mxu0 0
        %2279 = vmatprep.subr.bf16.mxu0 0
        %2280 = vmatpush1.bf16.msra.mxu0 0
        %2281 = vmatprep.subr.bf16.mxu0 0
        %2282 = vmatpush1.bf16.msra.mxu0 0
        %2283 = vmatprep.subr.bf16.mxu0 0
        %2284 = vmatpush1.bf16.msra.mxu0 0
        %2285 = vmatprep.subr.bf16.mxu0 0
        %2286 = vmatpush1.bf16.msra.mxu0 0
        %2287 = vmatprep.subr.bf16.mxu0 0
        %2288 = vmatpush1.bf16.msra.mxu0 0
        %2289 = vmatprep.subr.bf16.mxu0 0
        %2290 = vmatpush1.bf16.msra.mxu0 0
        %2291 = vmatprep.subr.bf16.mxu0 0
        %2292 = vmatpush1.bf16.msra.mxu0 0
        %2293 = vmatprep.subr.bf16.mxu0 0
        %2294 = vmatpush1.bf16.msra.mxu0 0
        %2295 = vmatprep.subr.bf16.mxu0 0
        %2296 = vmatpush1.bf16.msra.mxu0 0
        %2297 = vmatprep.subr.bf16.mxu0 0
        %2298 = vmatpush1.bf16.msra.mxu0 0
        %2299 = vmatprep.subr.bf16.mxu0 0
        %2300 = vmatpush1.bf16.msra.mxu0 0
        %2301 = vmatprep.mubr.bf16.mxu0 0
        %2302 = vmatmul.mubr.bf16.gmra.mrb[0].mxu0 %v2264
        %v2303 = vpop.f32.mrb[0].mxu0
        %v2304 = vadd.f32 0.0, %v2303
        %v2305 = vpop.f32.mrb[0].mxu0
        %v2306 = vpop.f32.mrb[0].mxu0
        %v2307 = vpop.f32.mrb[0].mxu0
        %2308 = vdwg.mxu0
        %v2309 = vpack.c.bf16 %v2304, %v2304
        %2310 = vst.msk [vmem:[#allocation2] sm:$0xf] %vm1541, %v2309
        %2312 = vrot.lane.b32.xlu0 %v2202, 120
        %v2313 = vpop.permute.xlu0 %2312
        %2315 = vrot.lane.b32.xlu0 %v2203, 120
        %v2316 = vpop.permute.xlu0 %2315
        %v2318 = vsel %vm1434, %v2313, 0
        %v2321 = vsel %vm1434, %v2316, 0
        %2323 = vmatprep.subr.bf16.mxu0 0
        %2324 = vmatpush1.bf16.xpose.msra.mxu0 %v2321
        %2325 = vmatprep.subr.bf16.mxu0 0
        %2326 = vmatpush1.bf16.xpose.msra.mxu0 0
        %2327 = vmatprep.subr.bf16.mxu0 0
        %2328 = vmatpush1.bf16.xpose.msra.mxu0 0
        %2329 = vmatprep.subr.bf16.mxu0 0
        %2330 = vmatpush1.bf16.xpose.msra.mxu0 0
        %2331 = vmatprep.subr.bf16.mxu0 0
        %2332 = vmatpush1.bf16.xpose.msra.mxu0 0
        %2333 = vmatprep.subr.bf16.mxu0 0
        %2334 = vmatpush1.bf16.xpose.msra.mxu0 0
        %2335 = vmatprep.subr.bf16.mxu0 0
        %2336 = vmatpush1.bf16.xpose.msra.mxu0 0
        %2337 = vmatprep.subr.bf16.mxu0 0
        %2338 = vmatpush1.bf16.xpose.msra.mxu0 0
        %2339 = vmatprep.subr.bf16.mxu0 0
        %2340 = vmatpush1.bf16.xpose.msra.mxu0 0
        %2341 = vmatprep.subr.bf16.mxu0 0
        %2342 = vmatpush1.bf16.xpose.msra.mxu0 0
        %2343 = vmatprep.subr.bf16.mxu0 0
        %2344 = vmatpush1.bf16.xpose.msra.mxu0 0
        %2345 = vmatprep.subr.bf16.mxu0 0
        %2346 = vmatpush1.bf16.xpose.msra.mxu0 0
        %2347 = vmatprep.subr.bf16.mxu0 0
        %2348 = vmatpush1.bf16.xpose.msra.mxu0 0
        %2349 = vmatprep.subr.bf16.mxu0 0
        %2350 = vmatpush1.bf16.xpose.msra.mxu0 0
        %2351 = vmatprep.subr.bf16.mxu0 0
        %2352 = vmatpush1.bf16.xpose.msra.mxu0 0
        %2353 = vmatprep.subr.bf16.mxu0 0
        %2354 = vmatpush1.bf16.xpose.msra.mxu0 0
        %2355 = vmatprep.mubr.bf16.mxu0 0
        %2356 = vmatmul.mubr.bf16.gmra.mrb[0].mxu0 %v2318
        %v2357 = vpop.f32.mrb[0].mxu0
        %v2358 = vadd.f32 0.0, %v2357
        %v2359 = vpop.f32.mrb[0].mxu0
        %v2360 = vpop.f32.mrb[0].mxu0
        %v2361 = vpop.f32.mrb[0].mxu0
        %2362 = vdwg.mxu0
        %v2363 = vsel %vm1434, %v2358, -inf
        %2364 = vmax.xlane.f32.xlu0 %v2363
        %v2365 = vpop.xlane.xlu0 %2364
        %v2366 = vsub.f32 %v2358, %v2365
        %v2367 = vmul.f32 %v2366, 1.442695
        %v2368 = vpow.pop %v2367
        %v2369 = vsel %vm1434, %v2368, 0.0
        %2370 = vadd.xlane.f32.xlu0 %v2369
        %v2371 = vpop.xlane.xlu0 %2370
        %v2372 = vrcp.pop %v2371
        %v2373 = vmul.f32 %v2368, %v2372
        %v2374 = vpack.c.bf16 %v2373, %v2373
        %2376 = vrot.lane.b32.xlu0 %v2204, 120
        %v2377 = vpop.permute.xlu0 %2376
        %v2379 = vsel %vm1434, %v2374, 0
        %v2382 = vsel %vm1496, %v2377, 0
        %2384 = vmatprep.subr.bf16.mxu0 0
        %2385 = vmatpush1.bf16.msra.mxu0 %v2382
        %2386 = vmatprep.subr.bf16.mxu0 0
        %2387 = vmatpush1.bf16.msra.mxu0 0
        %2388 = vmatprep.subr.bf16.mxu0 0
        %2389 = vmatpush1.bf16.msra.mxu0 0
        %2390 = vmatprep.subr.bf16.mxu0 0
        %2391 = vmatpush1.bf16.msra.mxu0 0
        %2392 = vmatprep.subr.bf16.mxu0 0
        %2393 = vmatpush1.bf16.msra.mxu0 0
        %2394 = vmatprep.subr.bf16.mxu0 0
        %2395 = vmatpush1.bf16.msra.mxu0 0
        %2396 = vmatprep.subr.bf16.mxu0 0
        %2397 = vmatpush1.bf16.msra.mxu0 0
        %2398 = vmatprep.subr.bf16.mxu0 0
        %2399 = vmatpush1.bf16.msra.mxu0 0
        %2400 = vmatprep.subr.bf16.mxu0 0
        %2401 = vmatpush1.bf16.msra.mxu0 0
        %2402 = vmatprep.subr.bf16.mxu0 0
        %2403 = vmatpush1.bf16.msra.mxu0 0
        %2404 = vmatprep.subr.bf16.mxu0 0
        %2405 = vmatpush1.bf16.msra.mxu0 0
        %2406 = vmatprep.subr.bf16.mxu0 0
        %2407 = vmatpush1.bf16.msra.mxu0 0
        %2408 = vmatprep.subr.bf16.mxu0 0
        %2409 = vmatpush1.bf16.msra.mxu0 0
        %2410 = vmatprep.subr.bf16.mxu0 0
        %2411 = vmatpush1.bf16.msra.mxu0 0
        %2412 = vmatprep.subr.bf16.mxu0 0
        %2413 = vmatpush1.bf16.msra.mxu0 0
        %2414 = vmatprep.subr.bf16.mxu0 0
        %2415 = vmatpush1.bf16.msra.mxu0 0
        %2416 = vmatprep.mubr.bf16.mxu0 0
        %2417 = vmatmul.mubr.bf16.gmra.mrb[0].mxu0 %v2379
        %v2418 = vpop.f32.mrb[0].mxu0
        %v2419 = vadd.f32 0.0, %v2418
        %v2420 = vpop.f32.mrb[0].mxu0
        %v2421 = vpop.f32.mrb[0].mxu0
        %v2422 = vpop.f32.mrb[0].mxu0
        %2423 = vdwg.mxu0
        %v2424 = vpack.c.bf16 %v2419, %v2419
        %v2426 = vunpack.c.l.b16 %v2424
        %v2427 = vpack.c.b16 %v2426, %v2426
        %2428 = vrot.lane.b32.xlu0 %v2427, 8
        %v2429 = vpop.permute.xlu0 %2428
        %2431 = vst.msk [vmem:[#allocation2] sm:$0xf] %vm1661, %v2429
        %2432 = vrot.lane.b32.xlu0 %v2202, 112
        %v2433 = vpop.permute.xlu0 %2432
        %2434 = vrot.lane.b32.xlu0 %v2203, 112
        %v2435 = vpop.permute.xlu0 %2434
        %v2437 = vsel %vm1434, %v2433, 0
        %v2440 = vsel %vm1434, %v2435, 0
        %2442 = vmatprep.subr.bf16.mxu0 0
        %2443 = vmatpush1.bf16.xpose.msra.mxu0 %v2440
        %2444 = vmatprep.subr.bf16.mxu0 0
        %2445 = vmatpush1.bf16.xpose.msra.mxu0 0
        %2446 = vmatprep.subr.bf16.mxu0 0
        %2447 = vmatpush1.bf16.xpose.msra.mxu0 0
        %2448 = vmatprep.subr.bf16.mxu0 0
        %2449 = vmatpush1.bf16.xpose.msra.mxu0 0
        %2450 = vmatprep.subr.bf16.mxu0 0
        %2451 = vmatpush1.bf16.xpose.msra.mxu0 0
        %2452 = vmatprep.subr.bf16.mxu0 0
        %2453 = vmatpush1.bf16.xpose.msra.mxu0 0
        %2454 = vmatprep.subr.bf16.mxu0 0
        %2455 = vmatpush1.bf16.xpose.msra.mxu0 0
        %2456 = vmatprep.subr.bf16.mxu0 0
        %2457 = vmatpush1.bf16.xpose.msra.mxu0 0
        %2458 = vmatprep.subr.bf16.mxu0 0
        %2459 = vmatpush1.bf16.xpose.msra.mxu0 0
        %2460 = vmatprep.subr.bf16.mxu0 0
        %2461 = vmatpush1.bf16.xpose.msra.mxu0 0
        %2462 = vmatprep.subr.bf16.mxu0 0
        %2463 = vmatpush1.bf16.xpose.msra.mxu0 0
        %2464 = vmatprep.subr.bf16.mxu0 0
        %2465 = vmatpush1.bf16.xpose.msra.mxu0 0
        %2466 = vmatprep.subr.bf16.mxu0 0
        %2467 = vmatpush1.bf16.xpose.msra.mxu0 0
        %2468 = vmatprep.subr.bf16.mxu0 0
        %2469 = vmatpush1.bf16.xpose.msra.mxu0 0
        %2470 = vmatprep.subr.bf16.mxu0 0
        %2471 = vmatpush1.bf16.xpose.msra.mxu0 0
        %2472 = vmatprep.subr.bf16.mxu0 0
        %2473 = vmatpush1.bf16.xpose.msra.mxu0 0
        %2474 = vmatprep.mubr.bf16.mxu0 0
        %2475 = vmatmul.mubr.bf16.gmra.mrb[0].mxu0 %v2437
        %v2476 = vpop.f32.mrb[0].mxu0
        %v2477 = vadd.f32 0.0, %v2476
        %v2478 = vpop.f32.mrb[0].mxu0
        %v2479 = vpop.f32.mrb[0].mxu0
        %v2480 = vpop.f32.mrb[0].mxu0
        %2481 = vdwg.mxu0
        %v2482 = vsel %vm1434, %v2477, -inf
        %2483 = vmax.xlane.f32.xlu0 %v2482
        %v2484 = vpop.xlane.xlu0 %2483
        %v2485 = vsub.f32 %v2477, %v2484
        %v2486 = vmul.f32 %v2485, 1.442695
        %v2487 = vpow.pop %v2486
        %v2488 = vsel %vm1434, %v2487, 0.0
        %2489 = vadd.xlane.f32.xlu0 %v2488
        %v2490 = vpop.xlane.xlu0 %2489
        %v2491 = vrcp.pop %v2490
        %v2492 = vmul.f32 %v2487, %v2491
        %v2493 = vpack.c.bf16 %v2492, %v2492
        %2494 = vrot.lane.b32.xlu0 %v2204, 112
        %v2495 = vpop.permute.xlu0 %2494
        %v2497 = vsel %vm1434, %v2493, 0
        %v2500 = vsel %vm1496, %v2495, 0
        %2502 = vmatprep.subr.bf16.mxu0 0
        %2503 = vmatpush1.bf16.msra.mxu0 %v2500
        %2504 = vmatprep.subr.bf16.mxu0 0
        %2505 = vmatpush1.bf16.msra.mxu0 0
        %2506 = vmatprep.subr.bf16.mxu0 0
        %2507 = vmatpush1.bf16.msra.mxu0 0
        %2508 = vmatprep.subr.bf16.mxu0 0
        %2509 = vmatpush1.bf16.msra.mxu0 0
        %2510 = vmatprep.subr.bf16.mxu0 0
        %2511 = vmatpush1.bf16.msra.mxu0 0
        %2512 = vmatprep.subr.bf16.mxu0 0
        %2513 = vmatpush1.bf16.msra.mxu0 0
        %2514 = vmatprep.subr.bf16.mxu0 0
        %2515 = vmatpush1.bf16.msra.mxu0 0
        %2516 = vmatprep.subr.bf16.mxu0 0
        %2517 = vmatpush1.bf16.msra.mxu0 0
        %2518 = vmatprep.subr.bf16.mxu0 0
        %2519 = vmatpush1.bf16.msra.mxu0 0
        %2520 = vmatprep.subr.bf16.mxu0 0
        %2521 = vmatpush1.bf16.msra.mxu0 0
        %2522 = vmatprep.subr.bf16.mxu0 0
        %2523 = vmatpush1.bf16.msra.mxu0 0
        %2524 = vmatprep.subr.bf16.mxu0 0
        %2525 = vmatpush1.bf16.msra.mxu0 0
        %2526 = vmatprep.subr.bf16.mxu0 0
        %2527 = vmatpush1.bf16.msra.mxu0 0
        %2528 = vmatprep.subr.bf16.mxu0 0
        %2529 = vmatpush1.bf16.msra.mxu0 0
        %2530 = vmatprep.subr.bf16.mxu0 0
        %2531 = vmatpush1.bf16.msra.mxu0 0
        %2532 = vmatprep.subr.bf16.mxu0 0
        %2533 = vmatpush1.bf16.msra.mxu0 0
        %2534 = vmatprep.mubr.bf16.mxu0 0
        %2535 = vmatmul.mubr.bf16.gmra.mrb[0].mxu0 %v2497
        %v2536 = vpop.f32.mrb[0].mxu0
        %v2537 = vadd.f32 0.0, %v2536
        %v2538 = vpop.f32.mrb[0].mxu0
        %v2539 = vpop.f32.mrb[0].mxu0
        %v2540 = vpop.f32.mrb[0].mxu0
        %2541 = vdwg.mxu0
        %v2542 = vpack.c.bf16 %v2537, %v2537
        %v2544 = vunpack.c.l.b16 %v2542
        %v2545 = vpack.c.b16 %v2544, %v2544
        %2546 = vrot.lane.b32.xlu0 %v2545, 16
        %v2547 = vpop.permute.xlu0 %2546
        %2549 = vst.msk [vmem:[#allocation2] sm:$0xf] %vm1780, %v2547
        %2550 = vrot.lane.b32.xlu0 %v2202, 104
        %v2551 = vpop.permute.xlu0 %2550
        %2552 = vrot.lane.b32.xlu0 %v2203, 104
        %v2553 = vpop.permute.xlu0 %2552
        %v2555 = vsel %vm1434, %v2551, 0
        %v2558 = vsel %vm1434, %v2553, 0
        %2560 = vmatprep.subr.bf16.mxu0 0
        %2561 = vmatpush1.bf16.xpose.msra.mxu0 %v2558
        %2562 = vmatprep.subr.bf16.mxu0 0
        %2563 = vmatpush1.bf16.xpose.msra.mxu0 0
        %2564 = vmatprep.subr.bf16.mxu0 0
        %2565 = vmatpush1.bf16.xpose.msra.mxu0 0
        %2566 = vmatprep.subr.bf16.mxu0 0
        %2567 = vmatpush1.bf16.xpose.msra.mxu0 0
        %2568 = vmatprep.subr.bf16.mxu0 0
        %2569 = vmatpush1.bf16.xpose.msra.mxu0 0
        %2570 = vmatprep.subr.bf16.mxu0 0
        %2571 = vmatpush1.bf16.xpose.msra.mxu0 0
        %2572 = vmatprep.subr.bf16.mxu0 0
        %2573 = vmatpush1.bf16.xpose.msra.mxu0 0
        %2574 = vmatprep.subr.bf16.mxu0 0
        %2575 = vmatpush1.bf16.xpose.msra.mxu0 0
        %2576 = vmatprep.subr.bf16.mxu0 0
        %2577 = vmatpush1.bf16.xpose.msra.mxu0 0
        %2578 = vmatprep.subr.bf16.mxu0 0
        %2579 = vmatpush1.bf16.xpose.msra.mxu0 0
        %2580 = vmatprep.subr.bf16.mxu0 0
        %2581 = vmatpush1.bf16.xpose.msra.mxu0 0
        %2582 = vmatprep.subr.bf16.mxu0 0
        %2583 = vmatpush1.bf16.xpose.msra.mxu0 0
        %2584 = vmatprep.subr.bf16.mxu0 0
        %2585 = vmatpush1.bf16.xpose.msra.mxu0 0
        %2586 = vmatprep.subr.bf16.mxu0 0
        %2587 = vmatpush1.bf16.xpose.msra.mxu0 0
        %2588 = vmatprep.subr.bf16.mxu0 0
        %2589 = vmatpush1.bf16.xpose.msra.mxu0 0
        %2590 = vmatprep.subr.bf16.mxu0 0
        %2591 = vmatpush1.bf16.xpose.msra.mxu0 0
        %2592 = vmatprep.mubr.bf16.mxu0 0
        %2593 = vmatmul.mubr.bf16.gmra.mrb[0].mxu0 %v2555
        %v2594 = vpop.f32.mrb[0].mxu0
        %v2595 = vadd.f32 0.0, %v2594
        %v2596 = vpop.f32.mrb[0].mxu0
        %v2597 = vpop.f32.mrb[0].mxu0
        %v2598 = vpop.f32.mrb[0].mxu0
        %2599 = vdwg.mxu0
        %v2600 = vsel %vm1434, %v2595, -inf
        %2601 = vmax.xlane.f32.xlu0 %v2600
        %v2602 = vpop.xlane.xlu0 %2601
        %v2603 = vsub.f32 %v2595, %v2602
        %v2604 = vmul.f32 %v2603, 1.442695
        %v2605 = vpow.pop %v2604
        %v2606 = vsel %vm1434, %v2605, 0.0
        %2607 = vadd.xlane.f32.xlu0 %v2606
        %v2608 = vpop.xlane.xlu0 %2607
        %v2609 = vrcp.pop %v2608
        %v2610 = vmul.f32 %v2605, %v2609
        %v2611 = vpack.c.bf16 %v2610, %v2610
        %2612 = vrot.lane.b32.xlu0 %v2204, 104
        %v2613 = vpop.permute.xlu0 %2612
        %v2615 = vsel %vm1434, %v2611, 0
        %v2618 = vsel %vm1496, %v2613, 0
        %2620 = vmatprep.subr.bf16.mxu0 0
        %2621 = vmatpush1.bf16.msra.mxu0 %v2618
        %2622 = vmatprep.subr.bf16.mxu0 0
        %2623 = vmatpush1.bf16.msra.mxu0 0
        %2624 = vmatprep.subr.bf16.mxu0 0
        %2625 = vmatpush1.bf16.msra.mxu0 0
        %2626 = vmatprep.subr.bf16.mxu0 0
        %2627 = vmatpush1.bf16.msra.mxu0 0
        %2628 = vmatprep.subr.bf16.mxu0 0
        %2629 = vmatpush1.bf16.msra.mxu0 0
        %2630 = vmatprep.subr.bf16.mxu0 0
        %2631 = vmatpush1.bf16.msra.mxu0 0
        %2632 = vmatprep.subr.bf16.mxu0 0
        %2633 = vmatpush1.bf16.msra.mxu0 0
        %2634 = vmatprep.subr.bf16.mxu0 0
        %2635 = vmatpush1.bf16.msra.mxu0 0
        %2636 = vmatprep.subr.bf16.mxu0 0
        %2637 = vmatpush1.bf16.msra.mxu0 0
        %2638 = vmatprep.subr.bf16.mxu0 0
        %2639 = vmatpush1.bf16.msra.mxu0 0
        %2640 = vmatprep.subr.bf16.mxu0 0
        %2641 = vmatpush1.bf16.msra.mxu0 0
        %2642 = vmatprep.subr.bf16.mxu0 0
        %2643 = vmatpush1.bf16.msra.mxu0 0
        %2644 = vmatprep.subr.bf16.mxu0 0
        %2645 = vmatpush1.bf16.msra.mxu0 0
        %2646 = vmatprep.subr.bf16.mxu0 0
        %2647 = vmatpush1.bf16.msra.mxu0 0
        %2648 = vmatprep.subr.bf16.mxu0 0
        %2649 = vmatpush1.bf16.msra.mxu0 0
        %2650 = vmatprep.subr.bf16.mxu0 0
        %2651 = vmatpush1.bf16.msra.mxu0 0
        %2652 = vmatprep.mubr.bf16.mxu0 0
        %2653 = vmatmul.mubr.bf16.gmra.mrb[0].mxu0 %v2615
        %v2654 = vpop.f32.mrb[0].mxu0
        %v2655 = vadd.f32 0.0, %v2654
        %v2656 = vpop.f32.mrb[0].mxu0
        %v2657 = vpop.f32.mrb[0].mxu0
        %v2658 = vpop.f32.mrb[0].mxu0
        %2659 = vdwg.mxu0
        %v2660 = vpack.c.bf16 %v2655, %v2655
        %v2662 = vunpack.c.l.b16 %v2660
        %v2663 = vpack.c.b16 %v2662, %v2662
        %2664 = vrot.lane.b32.xlu0 %v2663, 24
        %v2665 = vpop.permute.xlu0 %2664
        %2667 = vst.msk [vmem:[#allocation2] sm:$0xf] %vm1899, %v2665
        %v2668 = vld [vmem:[#allocation2] sm:$0xf]
        %v2669 = vld [vmem:[#allocation29] sm:$0xf]
        %v2670 = vld [vmem:[#allocation29 + $0x4] sm:$0xf]
        %v2671 = vld [vmem:[#allocation29 + $0x8] sm:$0xf]
        %v2672 = vld [vmem:[#allocation29 + $0xc] sm:$0xf]
        %v2674 = vlaneseq
        %v2675 = vshrl.u32 %v2674, 7
        %v2676 = vsub.s32 0, %v2675
        %v2677 = vrot.slane %v2201, %v2676
        %v2683 = vunpack.c.l.b16 %v2669
        %v2684 = vunpack.c.l.b16 %v2670
        %v2685 = vunpack.c.l.b16 %v2671
        %v2686 = vunpack.c.l.b16 %v2672
        %v2687 = vpack.c.b16 %v2684, %v2683
        %v2688 = vpack.c.b16 %v2686, %v2685
        %v2692 = vsel %vm1317, %v2668, 0
        %2694 = vmatprep.subr.bf16.mxu0 0
        %2695 = vmatpush1.bf16.msra.mxu0 %v2687
        %2696 = vmatprep.subr.bf16.mxu0 0
        %2697 = vmatpush1.bf16.msra.mxu0 %v2688
        %2698 = vmatprep.subr.bf16.mxu0 0
        %2699 = vmatpush1.bf16.msra.mxu0 0
        %2700 = vmatprep.subr.bf16.mxu0 0
        %2701 = vmatpush1.bf16.msra.mxu0 0
        %2702 = vmatprep.subr.bf16.mxu0 0
        %2703 = vmatpush1.bf16.msra.mxu0 0
        %2704 = vmatprep.subr.bf16.mxu0 0
        %2705 = vmatpush1.bf16.msra.mxu0 0
        %2706 = vmatprep.subr.bf16.mxu0 0
        %2707 = vmatpush1.bf16.msra.mxu0 0
        %2708 = vmatprep.subr.bf16.mxu0 0
        %2709 = vmatpush1.bf16.msra.mxu0 0
        %2710 = vmatprep.subr.bf16.mxu0 0
        %2711 = vmatpush1.bf16.msra.mxu0 0
        %2712 = vmatprep.subr.bf16.mxu0 0
        %2713 = vmatpush1.bf16.msra.mxu0 0
        %2714 = vmatprep.subr.bf16.mxu0 0
        %2715 = vmatpush1.bf16.msra.mxu0 0
        %2716 = vmatprep.subr.bf16.mxu0 0
        %2717 = vmatpush1.bf16.msra.mxu0 0
        %2718 = vmatprep.subr.bf16.mxu0 0
        %2719 = vmatpush1.bf16.msra.mxu0 0
        %2720 = vmatprep.subr.bf16.mxu0 0
        %2721 = vmatpush1.bf16.msra.mxu0 0
        %2722 = vmatprep.subr.bf16.mxu0 0
        %2723 = vmatpush1.bf16.msra.mxu0 0
        %2724 = vmatprep.subr.bf16.mxu0 0
        %2725 = vmatpush1.bf16.msra.mxu0 0
        %2726 = vmatprep.mubr.bf16.mxu0 0
        %2727 = vmatmul.mubr.bf16.gmra.mrb[0].mxu0 %v2692
        %v2728 = vpop.f32.mrb[0].mxu0
        %v2729 = vadd.f32 %v2677, %v2728
        %v2730 = vpop.f32.mrb[0].mxu0
        %v2731 = vpop.f32.mrb[0].mxu0
        %v2732 = vpop.f32.mrb[0].mxu0
        %2733 = vdwg.mxu0
        %v2734 = vadd.f32 %v1997, %v2729
        %v2735 = vld [vmem:[#allocation41] sm:$0x1]
        %v2736 = vld [vmem:[#allocation42] sm:$0x1]
        %v2737 = vsel %vm1317, %v2734, 0.0
        %2738 = vadd.xlane.f32.xlu0 %v2737
        %v2739 = vpop.xlane.xlu0 %2738
        %v2740 = vmul.f32 %v2739, %v1973
        %v2741 = vsub.f32 %v2734, %v2740
        %v2742 = vmul.f32 %v2741, %v2741
        %v2743 = vsel %vm1317, %v2742, 0.0
        %2744 = vadd.xlane.f32.xlu0 %v2743
        %v2745 = vpop.xlane.xlu0 %2744
        %v2746 = vmul.f32 %v2745, %v1973
        %v2747 = vadd.f32 %v2746, 1e-05
        %v2748 = vrsqrt.pop %v2747
        %v2749 = vmul.f32 %v2741, %v2748
        %v2751 = vlaneseq
        %v2752 = vshrl.u32 %v2751, 7
        %v2753 = vsub.s32 0, %v2752
        %v2754 = vrot.slane %v2735, %v2753
        %v2756 = vmul.f32 %v2749, %v2754
        %v2758 = vlaneseq
        %v2759 = vshrl.u32 %v2758, 7
        %v2760 = vsub.s32 0, %v2759
        %v2761 = vrot.slane %v2736, %v2760
        %v2763 = vadd.f32 %v2756, %v2761
        %v2764 = vpack.c.bf16 %v2763, %v2763
        %v2765 = vld [vmem:[#allocation32] sm:$0xf]
        %v2766 = vld [vmem:[#allocation32 + $0x4] sm:$0xf]
        %v2767 = vld [vmem:[#allocation32 + $0x8] sm:$0xf]
        %v2768 = vld [vmem:[#allocation32 + $0xc] sm:$0xf]
        %v2769 = vld [vmem:[#allocation33] sm:$0x1]
        %v2771 = vlaneseq
        %v2772 = vshrl.u32 %v2771, 7
        %v2773 = vsub.s32 0, %v2772
        %v2774 = vrot.slane %v2769, %v2773
        %v2780 = vunpack.c.l.b16 %v2765
        %v2781 = vunpack.c.l.b16 %v2766
        %v2782 = vunpack.c.l.b16 %v2767
        %v2783 = vunpack.c.l.b16 %v2768
        %v2784 = vpack.c.b16 %v2781, %v2780
        %v2785 = vpack.c.b16 %v2783, %v2782
        %v2789 = vsel %vm1317, %v2764, 0
        %2791 = vmatprep.subr.bf16.mxu0 0
        %2792 = vmatpush1.bf16.msra.mxu0 %v2784
        %2793 = vmatprep.subr.bf16.mxu0 0
        %2794 = vmatpush1.bf16.msra.mxu0 %v2785
        %2795 = vmatprep.subr.bf16.mxu0 0
        %2796 = vmatpush1.bf16.msra.mxu0 0
        %2797 = vmatprep.subr.bf16.mxu0 0
        %2798 = vmatpush1.bf16.msra.mxu0 0
        %2799 = vmatprep.subr.bf16.mxu0 0
        %2800 = vmatpush1.bf16.msra.mxu0 0
        %2801 = vmatprep.subr.bf16.mxu0 0
        %2802 = vmatpush1.bf16.msra.mxu0 0
        %2803 = vmatprep.subr.bf16.mxu0 0
        %2804 = vmatpush1.bf16.msra.mxu0 0
        %2805 = vmatprep.subr.bf16.mxu0 0
        %2806 = vmatpush1.bf16.msra.mxu0 0
        %2807 = vmatprep.subr.bf16.mxu0 0
        %2808 = vmatpush1.bf16.msra.mxu0 0
        %2809 = vmatprep.subr.bf16.mxu0 0
        %2810 = vmatpush1.bf16.msra.mxu0 0
        %2811 = vmatprep.subr.bf16.mxu0 0
        %2812 = vmatpush1.bf16.msra.mxu0 0
        %2813 = vmatprep.subr.bf16.mxu0 0
        %2814 = vmatpush1.bf16.msra.mxu0 0
        %2815 = vmatprep.subr.bf16.mxu0 0
        %2816 = vmatpush1.bf16.msra.mxu0 0
        %2817 = vmatprep.subr.bf16.mxu0 0
        %2818 = vmatpush1.bf16.msra.mxu0 0
        %2819 = vmatprep.subr.bf16.mxu0 0
        %2820 = vmatpush1.bf16.msra.mxu0 0
        %2821 = vmatprep.subr.bf16.mxu0 0
        %2822 = vmatpush1.bf16.msra.mxu0 0
        %2823 = vmatprep.mubr.bf16.mxu0 0
        %2824 = vmatmul.mubr.bf16.gmra.mrb[0].mxu0 %v2789
        %v2825 = vpop.f32.mrb[0].mxu0
        %v2826 = vadd.f32 %v2774, %v2825
        %v2827 = vpop.f32.mrb[0].mxu0
        %v2828 = vpop.f32.mrb[0].mxu0
        %v2829 = vpop.f32.mrb[0].mxu0
        %2830 = vdwg.mxu0
        %v2831 = vmax.f32 %v2826, 0.0
        %v2832 = vpack.c.bf16 %v2831, %v2831
        %v2833 = vld [vmem:[#allocation35] sm:$0xf]
        %v2834 = vld [vmem:[#allocation35 + $0x4] sm:$0xf]
        %v2835 = vld [vmem:[#allocation35 + $0x8] sm:$0xf]
        %v2836 = vld [vmem:[#allocation35 + $0xc] sm:$0xf]
        %v2837 = vld [vmem:[#allocation35 + $0x10] sm:$0xf]
        %v2838 = vld [vmem:[#allocation35 + $0x14] sm:$0xf]
        %v2839 = vld [vmem:[#allocation35 + $0x18] sm:$0xf]
        %v2840 = vld [vmem:[#allocation35 + $0x1c] sm:$0xf]
        %v2841 = vld [vmem:[#allocation36] sm:$0x1]
        %v2843 = vlaneseq
        %v2844 = vshrl.u32 %v2843, 7
        %v2845 = vsub.s32 0, %v2844
        %v2846 = vrot.slane %v2841, %v2845
        %v2856 = vunpack.c.l.b16 %v2833
        %v2857 = vunpack.c.l.b16 %v2834
        %v2858 = vunpack.c.l.b16 %v2835
        %v2859 = vunpack.c.l.b16 %v2836
        %v2860 = vunpack.c.l.b16 %v2837
        %v2861 = vunpack.c.l.b16 %v2838
        %v2862 = vunpack.c.l.b16 %v2839
        %v2863 = vunpack.c.l.b16 %v2840
        %v2864 = vpack.c.b16 %v2857, %v2856
        %v2865 = vpack.c.b16 %v2859, %v2858
        %v2866 = vpack.c.b16 %v2861, %v2860
        %v2867 = vpack.c.b16 %v2863, %v2862
        %vm2872 = vcmask 523264
        %v2874 = vsel %vm2872, %v2832, 0
        %2876 = vmatprep.subr.bf16.mxu0 0
        %2877 = vmatpush1.bf16.msra.mxu0 %v2864
        %2878 = vmatprep.subr.bf16.mxu0 0
        %2879 = vmatpush1.bf16.msra.mxu0 %v2865
        %2880 = vmatprep.subr.bf16.mxu0 0
        %2881 = vmatpush1.bf16.msra.mxu0 %v2866
        %2882 = vmatprep.subr.bf16.mxu0 0
        %2883 = vmatpush1.bf16.msra.mxu0 %v2867
        %2884 = vmatprep.subr.bf16.mxu0 0
        %2885 = vmatpush1.bf16.msra.mxu0 0
        %2886 = vmatprep.subr.bf16.mxu0 0
        %2887 = vmatpush1.bf16.msra.mxu0 0
        %2888 = vmatprep.subr.bf16.mxu0 0
        %2889 = vmatpush1.bf16.msra.mxu0 0
        %2890 = vmatprep.subr.bf16.mxu0 0
        %2891 = vmatpush1.bf16.msra.mxu0 0
        %2892 = vmatprep.subr.bf16.mxu0 0
        %2893 = vmatpush1.bf16.msra.mxu0 0
        %2894 = vmatprep.subr.bf16.mxu0 0
        %2895 = vmatpush1.bf16.msra.mxu0 0
        %2896 = vmatprep.subr.bf16.mxu0 0
        %2897 = vmatpush1.bf16.msra.mxu0 0
        %2898 = vmatprep.subr.bf16.mxu0 0
        %2899 = vmatpush1.bf16.msra.mxu0 0
        %2900 = vmatprep.subr.bf16.mxu0 0
        %2901 = vmatpush1.bf16.msra.mxu0 0
        %2902 = vmatprep.subr.bf16.mxu0 0
        %2903 = vmatpush1.bf16.msra.mxu0 0
        %2904 = vmatprep.subr.bf16.mxu0 0
        %2905 = vmatpush1.bf16.msra.mxu0 0
        %2906 = vmatprep.subr.bf16.mxu0 0
        %2907 = vmatpush1.bf16.msra.mxu0 0
        %2908 = vmatprep.mubr.bf16.mxu0 0
        %2909 = vmatmul.mubr.bf16.gmra.mrb[0].mxu0 %v2874
        %v2910 = vpop.f32.mrb[0].mxu0
        %v2911 = vadd.f32 %v2846, %v2910
        %v2912 = vpop.f32.mrb[0].mxu0
        %v2913 = vpop.f32.mrb[0].mxu0
        %v2914 = vpop.f32.mrb[0].mxu0
        %2915 = vdwg.mxu0
        %v2916 = vadd.f32 %v2763, %v2911
        %v2917 = vld [vmem:[#allocation44] sm:$0x1]
        %v2918 = vld [vmem:[#allocation45] sm:$0x1]
        %v2919 = vsel %vm1317, %v2916, 0.0
        %2920 = vadd.xlane.f32.xlu0 %v2919
        %v2921 = vpop.xlane.xlu0 %2920
        %v2922 = vmul.f32 %v2921, %v1973
        %v2923 = vsub.f32 %v2916, %v2922
        %v2924 = vmul.f32 %v2923, %v2923
        %v2925 = vsel %vm1317, %v2924, 0.0
        %2926 = vadd.xlane.f32.xlu0 %v2925
        %v2927 = vpop.xlane.xlu0 %2926
        %v2928 = vmul.f32 %v2927, %v1973
        %v2929 = vadd.f32 %v2928, 1e-05
        %v2930 = vrsqrt.pop %v2929
        %v2931 = vmul.f32 %v2923, %v2930
        %v2933 = vlaneseq
        %v2934 = vshrl.u32 %v2933, 7
        %v2935 = vsub.s32 0, %v2934
        %v2936 = vrot.slane %v2917, %v2935
        %v2938 = vmul.f32 %v2931, %v2936
        %v2940 = vlaneseq
        %v2941 = vshrl.u32 %v2940, 7
        %v2942 = vsub.s32 0, %v2941
        %v2943 = vrot.slane %v2918, %v2942
        %v2945 = vadd.f32 %v2938, %v2943
        %2946 = vst.msk [vmem:[%s1286] sm:$0xff] %vm1317, %v2945
        %s2947 = sand.u32 %s679, 1
        %s2948 = scalar_lea.sflag [#allocation5], %s2947
        %s2949 = sand.u32 %s679, 1
        %s2950 = smul.addr %s2949, 8
        %s2951 = scalar_lea.vmem [#allocation47], %s2950
        // Predicated region
        $region245: #{tpu_custom_call.1} parent=131 // pred_check
          %p2952 = pneg %p689
        $region246: #{tpu_custom_call.1} parent=131 // pred_check_branch
          %2954 = sbr.rel (%p2952) target = $region248
        $region247: #{tpu_custom_call.1} parent=131 // pred_region
          %s2956 = ssub.s32 128, 128
          %2957 = vsyncadd %s2948, %s2956
          %s2958 = smul.addr %s63, 128
          %s2959 = scalar_lea.hbm %s28, %s2958
          %s2961 = sshll.u32 %s2951, 4
          %s2962 = int_to_ptr.vmem [resolvable:$true] %s2961
          %2964 = dma.vmem_to_hbm [thread:$0]  %s2962, 128, %s2959, %s2948
        $region248: #{tpu_custom_call.1} parent=131 // pred_fallthru
          _
      $region132: #{tpu_custom_call.1} parent=5 // pred_fallthru
        _
      %p2965 = scmp.le.s32.totalorder 2, %s58
      // Predicated region
      $region249: #{tpu_custom_call.1} parent=5 // pred_check
        %p2966 = pneg %p2965
      $region250: #{tpu_custom_call.1} parent=5 // pred_check_branch
        %2968 = sbr.rel (%p2966) target = $region252
      $region251: #{tpu_custom_call.1} parent=5 // pred_region
        %s2969 = ssub.s32 %s58, 2
        // Predicated region
        $region253: #{tpu_custom_call.1} parent=251 // pred_check
          %p2970 = pneg %p695
        $region254: #{tpu_custom_call.1} parent=251 // pred_check_branch
          %2972 = sbr.rel (%p2970) target = $region256
        $region255: #{tpu_custom_call.1} parent=251 // pred_region
          %s2973 = sand.u32 %s680, 1
          %s2974 = scalar_lea.sflag [#allocation5], %s2973
          %s2975 = sand.u32 %s680, 1
          %s2976 = smul.addr %s2975, 8
          %s2977 = scalar_lea.vmem [#allocation47], %s2976
          %2978 = dma.done %s2974, 128
        $region256: #{tpu_custom_call.1} parent=251 // pred_fallthru
          _
      $region252: #{tpu_custom_call.1} parent=5 // pred_fallthru
        _
    $region6: #{tpu_custom_call.1} parent=1 // loop_footer
      %s62 = sadd.s32 1, %s58
    $region7: #{tpu_custom_call.1} parent=1 // loop_footer_branch
      %57 = sbr.rel target = $region3
    $region8: #{tpu_custom_call.1} parent=1 // loop_exit
      _
    %2979 = vsyncpa [#allocation4], 1
    %s2980 = scalar_lea.sflag [#allocation4], 1
    %2981 = vsyncpa %s2980, 1
    %2982 = vsyncpa [#allocation7], 1
    %s2983 = scalar_lea.sflag [#allocation7], 1
    %2984 = vsyncpa %s2983, 1
    %2985 = vsyncpa [#allocation10], 1
    %s2986 = scalar_lea.sflag [#allocation10], 1
    %2987 = vsyncpa %s2986, 1
    %2988 = vsyncpa [#allocation13], 1
    %2989 = vsyncpa [#allocation16], 1
    %2990 = vsyncpa [#allocation19], 1
    %2991 = vsyncpa [#allocation22], 1
    %2992 = vsyncpa [#allocation25], 1
    %2993 = vsyncpa [#allocation28], 1
    %2994 = vsyncpa [#allocation31], 1
    %2995 = vsyncpa [#allocation34], 1
    %2996 = vsyncpa [#allocation37], 1
    %2997 = vsyncpa [#allocation40], 1
    %2998 = vsyncpa [#allocation43], 1
    %2999 = vsyncpa [#allocation46], 1
    %3000 = vsyncpa [#allocation5], 1
    %s3001 = scalar_lea.sflag [#allocation5], 1
    %3002 = vsyncpa %s3001, 1

</llo_original>
